<compile_context>
chip_gen: v7x
topology: tpu7x:2x2x1
jax: 0.10.0
libtpu: 0.0.40
codegen_flags: <defaults>
</compile_context>

<pallas_src>
import functools
import math

import jax
import jax.numpy as jnp
from jax.experimental import pallas as pl
from jax.experimental.pallas import tpu as pltpu


# --------------------------------------------------------------------------
# In-kernel helpers
# --------------------------------------------------------------------------

def _ln(x, g, b, eps=1e-5):
    """LayerNorm in fp32 (torch default eps)."""
    mean = jnp.mean(x, axis=-1, keepdims=True)
    var = jnp.mean(jnp.square(x - mean), axis=-1, keepdims=True)
    return (x - mean) * jax.lax.rsqrt(var + eps) * g + b


def _mha(x, y, kv, wq_ref, wk_ref, wv_ref, bq, bk, bv, wo_ref, bo,
         q_sc, k_sc, v_sc, a_sc, *, n_heads, causal):
    """Fused multi-head attention + residual for one batch element.

    x : (L, D) residual input (fp32),  y : (L, D) LN'd query source (fp32),
    kv: (Lk, D) key/value source (fp32).  Weights: (in, out) bf16, biases fp32.
    Heads are split by slicing fp32 VMEM scratch refs (no XLA transposes)."""
    L, D = x.shape
    Lk = kv.shape[0]
    dh = D // n_heads
    scale = 1.0 / math.sqrt(dh)

    yb = y.astype(jnp.bfloat16)
    kvb = kv.astype(jnp.bfloat16)
    # Big MXU-friendly projections; results staged in fp32 VMEM scratch.
    q_sc[...] = (jnp.dot(yb, wq_ref[...],
                         preferred_element_type=jnp.float32) + bq) * scale
    k_sc[...] = jnp.dot(kvb, wk_ref[...],
                        preferred_element_type=jnp.float32) + bk
    v_sc[...] = jnp.dot(kvb, wv_ref[...],
                        preferred_element_type=jnp.float32) + bv

    if causal:
        row = jax.lax.broadcasted_iota(jnp.int32, (L, Lk), 0)
        col = jax.lax.broadcasted_iota(jnp.int32, (L, Lk), 1)
        neg = jnp.where(col > row, -1e30, 0.0).astype(jnp.float32)

    for h in range(n_heads):
        sl = slice(h * dh, (h + 1) * dh)
        qh = q_sc[:, sl].astype(jnp.bfloat16)
        kh = k_sc[:, sl].astype(jnp.bfloat16)
        vh = v_sc[:, sl].astype(jnp.bfloat16)
        # scores = qh @ kh^T  (contract on dh), fp32 accumulate
        s = jax.lax.dot_general(qh, kh, (((1,), (1,)), ((), ())),
                                preferred_element_type=jnp.float32)
        if causal:
            s = s + neg
        s = s - jnp.max(s, axis=-1, keepdims=True)
        p = jnp.exp(s)
        p = p * pl.reciprocal(jnp.sum(p, axis=-1, keepdims=True), approx=True)
        a_sc[:, sl] = jnp.dot(p.astype(jnp.bfloat16), vh,
                              preferred_element_type=jnp.float32)

    attn = jnp.dot(a_sc[...].astype(jnp.bfloat16), wo_ref[...],
                   preferred_element_type=jnp.float32) + bo
    return x + attn


# --------------------------------------------------------------------------
# Pallas kernels
# --------------------------------------------------------------------------

def _decoder_layer_kernel(x_ref, enc_ref,
                          ln1g_ref, ln1b_ref,
                          swq_ref, swk_ref, swv_ref, sbq_ref, sbk_ref, sbv_ref,
                          swo_ref, sbo_ref,
                          lncg_ref, lncb_ref,
                          cwq_ref, cwk_ref, cwv_ref, cbq_ref, cbk_ref, cbv_ref,
                          cwo_ref, cbo_ref,
                          ln2g_ref, ln2b_ref,
                          w1_ref, b1_ref, w2_ref, b2_ref,
                          o_ref,
                          q_sc, ks_sc, vs_sc, kc_sc, vc_sc, a_sc,
                          *, n_heads):
    """One full decoder layer (self-attn, cross-attn, MLP) for one batch elem."""
    x = x_ref[0]                                              # (L, D) fp32
    enc = enc_ref[0]                                          # (Lenc, D) fp32

    # ---- causal self-attention + residual ----
    y = _ln(x, ln1g_ref[...], ln1b_ref[...])
    x = _mha(x, y, y, swq_ref, swk_ref, swv_ref,
             sbq_ref[...], sbk_ref[...], sbv_ref[...], swo_ref, sbo_ref[...],
             q_sc, ks_sc, vs_sc, a_sc, n_heads=n_heads, causal=True)

    # ---- cross-attention over encoder states + residual ----
    y = _ln(x, lncg_ref[...], lncb_ref[...])
    x = _mha(x, y, enc, cwq_ref, cwk_ref, cwv_ref,
             cbq_ref[...], cbk_ref[...], cbv_ref[...], cwo_ref, cbo_ref[...],
             q_sc, kc_sc, vc_sc, a_sc, n_heads=n_heads, causal=False)

    # ---- MLP + residual ----
    y = _ln(x, ln2g_ref[...], ln2b_ref[...])
    h = jnp.dot(y.astype(jnp.bfloat16), w1_ref[...],
                preferred_element_type=jnp.float32) + b1_ref[...]
    h = h * jax.nn.sigmoid(1.702 * h)        # QuickGELU (see TODO at top)
    x = x + jnp.dot(h.astype(jnp.bfloat16), w2_ref[...],
                    preferred_element_type=jnp.float32) + b2_ref[...]

    o_ref[0] = x


def _final_proj_kernel(x_ref, lng_ref, lnb_ref, w_ref, b_ref, o_ref):
    # LN is recomputed per vocab tile (cheap VPU work vs. the MXU matmul).
    y = _ln(x_ref[...], lng_ref[...], lnb_ref[...])
    o_ref[...] = jnp.dot(y.astype(jnp.bfloat16), w_ref[...],
                         preferred_element_type=jnp.float32) + b_ref[...]


# --------------------------------------------------------------------------
# pallas_call wrappers
# --------------------------------------------------------------------------

_ROW_TILES = (512, 256, 128, 64, 32, 16, 8)
_COL_TILES = (2048, 1024, 512, 256, 128)


def _pick_tile(n, candidates):
    for t in candidates:
        if t <= n and n % t == 0:
            return t
    return n


def _const_spec(arr):
    nd = arr.ndim
    return pl.BlockSpec(arr.shape, lambda *_: (0,) * nd)


def decoder_layer(x, enc, lp, n_heads):
    B, L, D = x.shape
    Lenc = enc.shape[1]
    s, c = lp["self"], lp["cross"]
    weights = [
        lp["ln1_g"], lp["ln1_b"],
        s["wq"], s["wk"], s["wv"], s["bq"], s["bk"], s["bv"], s["wo"], s["bo"],
        lp["lnc_g"], lp["lnc_b"],
        c["wq"], c["wk"], c["wv"], c["bq"], c["bk"], c["bv"], c["wo"], c["bo"],
        lp["ln2_g"], lp["ln2_b"],
        lp["fc_w"], lp["fc_b"], lp["cproj_w"], lp["cproj_b"],
    ]
    in_specs = [pl.BlockSpec((1, L, D), lambda b: (b, 0, 0)),
                pl.BlockSpec((1, Lenc, D), lambda b: (b, 0, 0))]
    in_specs += [_const_spec(w) for w in weights]

    # TODO(synk): for very large width D, tile the hidden (4D) / sequence
    # dims with accumulator scratch to respect v7x's 64 MiB VMEM.
    return pl.pallas_call(
        functools.partial(_decoder_layer_kernel, n_heads=n_heads),
        grid=(B,),
        in_specs=in_specs,
        out_specs=pl.BlockSpec((1, L, D), lambda b: (b, 0, 0)),
        out_shape=jax.ShapeDtypeStruct((B, L, D), jnp.float32),
        scratch_shapes=[
            pltpu.VMEM((L, D), jnp.float32),      # q (pre-scaled)
            pltpu.VMEM((L, D), jnp.float32),      # k (self)
            pltpu.VMEM((L, D), jnp.float32),      # v (self)
            pltpu.VMEM((Lenc, D), jnp.float32),   # k (cross)
            pltpu.VMEM((Lenc, D), jnp.float32),   # v (cross)
            pltpu.VMEM((L, D), jnp.float32),      # merged per-head outputs
        ],
        compiler_params=pltpu.CompilerParams(dimension_semantics=("parallel",)),
    )(x, enc, *weights)


def final_projection(x, ln_g, ln_b, w, b):
    B, L, D = x.shape
    M = B * L
    V = w.shape[1]
    tm = _pick_tile(M, _ROW_TILES)
    tv = _pick_tile(V, _COL_TILES)
    xm = x.reshape(M, D)
    # TODO(synk): for very large width D, also tile the contraction axis
    # (K last, "arbitrary") with an f32 accumulator scratch.
    out = pl.pallas_call(
        _final_proj_kernel,
        grid=(M // tm, V // tv),
        in_specs=[
            pl.BlockSpec((tm, D), lambda i, j: (i, 0)),
            pl.BlockSpec((1, D), lambda i, j: (0, 0)),
            pl.BlockSpec((1, D), lambda i, j: (0, 0)),
            pl.BlockSpec((D, tv), lambda i, j: (0, j)),
            pl.BlockSpec((1, tv), lambda i, j: (0, j)),
        ],
        out_specs=pl.BlockSpec((tm, tv), lambda i, j: (i, j)),
        out_shape=jax.ShapeDtypeStruct((M, V), jnp.float32),
        compiler_params=pltpu.CompilerParams(
            dimension_semantics=("parallel", "parallel")),
    )(xm, ln_g, ln_b, w, b)
    return out.reshape(B, L, V)


# --------------------------------------------------------------------------
# Forward pass (glue: only the embedding gather + positional add stay in XLA)
# --------------------------------------------------------------------------

def bart_decoder_forward(params, tokens, encoder_hidden_states, *, n_heads):
    x = jnp.take(params["token_embedding"], tokens, axis=0)        # (B, L, D)
    L = x.shape[1]
    x = x + params["positional_embedding"][None, :L, :]

    for lp in params["layers"]:
        x = decoder_layer(x, encoder_hidden_states, lp, n_heads)

    return final_projection(x, params["lnf_g"], params["lnf_b"],
                            params["proj_w"], params["proj_b"])


# --------------------------------------------------------------------------
# Deterministic parameter init (mirrors initialize_parameters stds); weights
# for matmuls are pre-transposed to (in, out) and stored in bf16 once here.
# --------------------------------------------------------------------------

def init_params(key, vocab, ctx, width, n_layers):
    attn_std = width ** (-0.5)
    proj_std = width ** (-0.5) * (2 * n_layers) ** (-0.5)
    fc_std = (2 * width) ** (-0.5)

    def normal(k, shape, std):
        return std * jax.random.normal(k, shape, jnp.float32)

    def w_t(k, shape, std):           # torch (out, in) -> stored (in, out) bf16
        return normal(k, shape, std).T.astype(jnp.bfloat16)

    keys = jax.random.split(key, 3 + n_layers)
    params = {
        "token_embedding": normal(keys[0], (vocab, width), 0.02),
        "positional_embedding": normal(keys[1], (ctx, width), 0.01),
        "lnf_g": jnp.ones((1, width), jnp.float32),
        "lnf_b": jnp.zeros((1, width), jnp.float32),
        "proj_w": w_t(keys[2], (vocab, width), width ** (-0.5)),
        "proj_b": jnp.zeros((1, vocab), jnp.float32),
        "layers": [],
    }

    def attn_params(k_in, k_out):
        in_w = normal(k_in, (3 * width, width), attn_std)     # torch (3D, D)
        wq, wk, wv = jnp.split(in_w, 3, axis=0)
        return {
            "wq": wq.T.astype(jnp.bfloat16),
            "wk": wk.T.astype(jnp.bfloat16),
            "wv": wv.T.astype(jnp.bfloat16),
            "bq": jnp.zeros((1, width), jnp.float32),
            "bk": jnp.zeros((1, width), jnp.float32),
            "bv": jnp.zeros((1, width), jnp.float32),
            "wo": w_t(k_out, (width, width), proj_std),
            "bo": jnp.zeros((1, width), jnp.float32),
        }

    for i in range(n_layers):
        lk = jax.random.split(keys[3 + i], 6)
        params["layers"].append({
            "ln1_g": jnp.ones((1, width), jnp.float32),
            "ln1_b": jnp.zeros((1, width), jnp.float32),
            "lnc_g": jnp.ones((1, width), jnp.float32),
            "lnc_b": jnp.zeros((1, width), jnp.float32),
            "ln2_g": jnp.ones((1, width), jnp.float32),
            "ln2_b": jnp.zeros((1, width), jnp.float32),
            "self": attn_params(lk[0], lk[1]),
            "cross": attn_params(lk[2], lk[3]),
            "fc_w": w_t(lk[4], (4 * width, width), fc_std),
            "fc_b": jnp.zeros((1, 4 * width), jnp.float32),
            "cproj_w": w_t(lk[5], (width, 4 * width), proj_std),
            "cproj_b": jnp.zeros((1, width), jnp.float32),
        })
    return params


# --------------------------------------------------------------------------

if __name__ == "__main__":
    B = 2
    context_length = 8
    width = 32
    n_heads = 4
    n_layers = 2
    vocab_size = 64

    root = jax.random.PRNGKey(0)
    kp, kt, ke = jax.random.split(root, 3)

    params = init_params(kp, vocab_size, context_length, width, n_layers)
    tokens = jax.random.randint(kt, (B, context_length), 0, vocab_size,
                                dtype=jnp.int32)
    encoder_hidden_states = jax.random.normal(
        ke, (B, context_length, width), jnp.float32)

    fwd = jax.jit(functools.partial(bart_decoder_forward, n_heads=n_heads))
    logits = fwd(params, tokens, encoder_hidden_states)
    jax.block_until_ready(logits)

    assert logits.shape == (B, context_length, vocab_size), logits.shape
    assert logits.dtype == jnp.float32
    print("KERNEL_OK")
</pallas_src>

<mosaic_0001>
module attributes {stable_mosaic.version = 11 : i64} {
  func.func @_final_proj_kernel(%arg0: i32, %arg1: i32, %arg2: memref<16x32xf32, #tpu.memory_space<vmem>>, %arg3: memref<1x32xf32, #tpu.memory_space<vmem>>, %arg4: memref<1x32xf32, #tpu.memory_space<vmem>>, %arg5: memref<32x64xbf16, #tpu.memory_space<vmem>>, %arg6: memref<1x64xf32, #tpu.memory_space<vmem>>, %arg7: memref<16x64xf32, #tpu.memory_space<vmem>>) attributes {dimension_semantics = [#tpu.dimension_semantics<parallel>, #tpu.dimension_semantics<parallel>], iteration_bounds = array<i64: 1, 1>, scalar_prefetch = 0 : i64, scratch_operands = 0 : i64, tpu.core_type = #tpu.core_type<tc>, window_params = [{transform_indices = @transform_0, window_bounds = array<i64: 16, 32>}, {pipeline_mode = #tpu.pipeline_mode<synchronous>, transform_indices = @transform_1, window_bounds = array<i64: 1, 32>}, {pipeline_mode = #tpu.pipeline_mode<synchronous>, transform_indices = @transform_2, window_bounds = array<i64: 1, 32>}, {transform_indices = @transform_3, window_bounds = array<i64: 32, 64>}, {transform_indices = @transform_4, window_bounds = array<i64: 1, 64>}, {transform_indices = @transform_5, window_bounds = array<i64: 16, 64>}]} {
    %c0 = arith.constant 0 : index
    %c0_0 = arith.constant 0 : index
    %0 = vector.load %arg2[%c0, %c0_0] : memref<16x32xf32, #tpu.memory_space<vmem>>, vector<16x32xf32>
    %c0_1 = arith.constant 0 : index
    %c0_2 = arith.constant 0 : index
    %1 = vector.load %arg3[%c0_1, %c0_2] : memref<1x32xf32, #tpu.memory_space<vmem>>, vector<1x32xf32>
    %c0_3 = arith.constant 0 : index
    %c0_4 = arith.constant 0 : index
    %2 = vector.load %arg4[%c0_3, %c0_4] : memref<1x32xf32, #tpu.memory_space<vmem>>, vector<1x32xf32>
    %cst = arith.constant dense<0.000000e+00> : vector<16xf32>
    %3 = vector.multi_reduction <add>, %0, %cst [1] : vector<16x32xf32> to vector<16xf32>
    %4 = vector.shape_cast %3 : vector<16xf32> to vector<16x1xf32>
    %cst_5 = arith.constant 3.200000e+01 : f32
    %5 = vector.broadcast %cst_5 : f32 to vector<16x1xf32>
    %6 = arith.divf %4, %5 : vector<16x1xf32>
    %7 = vector.broadcast %6 : vector<16x1xf32> to vector<16x32xf32>
    %8 = arith.subf %0, %7 : vector<16x32xf32>
    %9 = arith.mulf %8, %8 : vector<16x32xf32>
    %cst_6 = arith.constant dense<0.000000e+00> : vector<16xf32>
    %10 = vector.multi_reduction <add>, %9, %cst_6 [1] : vector<16x32xf32> to vector<16xf32>
    %11 = vector.shape_cast %10 : vector<16xf32> to vector<16x1xf32>
    %cst_7 = arith.constant 3.200000e+01 : f32
    %12 = vector.broadcast %cst_7 : f32 to vector<16x1xf32>
    %13 = arith.divf %11, %12 : vector<16x1xf32>
    %14 = vector.broadcast %6 : vector<16x1xf32> to vector<16x32xf32>
    %15 = arith.subf %0, %14 : vector<16x32xf32>
    %cst_8 = arith.constant 9.99999974E-6 : f32
    %16 = vector.broadcast %cst_8 : f32 to vector<16x1xf32>
    %17 = arith.addf %13, %16 : vector<16x1xf32>
    %18 = math.rsqrt %17 : vector<16x1xf32>
    %19 = vector.broadcast %18 : vector<16x1xf32> to vector<16x32xf32>
    %20 = arith.mulf %15, %19 : vector<16x32xf32>
    %21 = vector.broadcast %1 : vector<1x32xf32> to vector<16x32xf32>
    %22 = arith.mulf %20, %21 : vector<16x32xf32>
    %23 = vector.broadcast %2 : vector<1x32xf32> to vector<16x32xf32>
    %24 = arith.addf %22, %23 : vector<16x32xf32>
    %25 = arith.truncf %24 : vector<16x32xf32> to vector<16x32xbf16>
    %c0_9 = arith.constant 0 : index
    %c0_10 = arith.constant 0 : index
    %26 = vector.load %arg5[%c0_9, %c0_10] : memref<32x64xbf16, #tpu.memory_space<vmem>>, vector<32x64xbf16>
    %cst_11 = arith.constant dense<0.000000e+00> : vector<16x64xf32>
    %27 = tpu.matmul %25, %26, %cst_11 {dimension_numbers = #tpu.dot_dimension_numbers<[1], [0], [0], [1], [0, 0, 1, 1], [], []>} : vector<16x32xbf16>, vector<32x64xbf16>, vector<16x64xf32> -> vector<16x64xf32>
    %c0_12 = arith.constant 0 : index
    %c0_13 = arith.constant 0 : index
    %28 = vector.load %arg6[%c0_12, %c0_13] : memref<1x64xf32, #tpu.memory_space<vmem>>, vector<1x64xf32>
    %29 = vector.broadcast %28 : vector<1x64xf32> to vector<16x64xf32>
    %30 = arith.addf %27, %29 : vector<16x64xf32>
    %c0_14 = arith.constant 0 : index
    %c0_15 = arith.constant 0 : index
    %31 = vector.load %arg7[%c0_14, %c0_15] : memref<16x64xf32, #tpu.memory_space<vmem>>, vector<16x64xf32>
    tpu.vector_store %arg7[%c0_14, %c0_15], %30 {strides = array<i32>} : memref<16x64xf32, #tpu.memory_space<vmem>>, vector<16x64xf32>,
    return
  }
  func.func @transform_0(%arg0: i32, %arg1: i32) -> (i32, i32) {
    %c0_i32 = arith.constant 0 : i32
    %c0_i32_0 = arith.constant 0 : i32
    return %arg0, %c0_i32 : i32, i32
  }
  func.func @transform_1(%arg0: i32, %arg1: i32) -> (i32, i32) {
    %c0_i32 = arith.constant 0 : i32
    %c0_i32_0 = arith.constant 0 : i32
    %c0_i32_1 = arith.constant 0 : i32
    return %c0_i32, %c0_i32_0 : i32, i32
  }
  func.func @transform_2(%arg0: i32, %arg1: i32) -> (i32, i32) {
    %c0_i32 = arith.constant 0 : i32
    %c0_i32_0 = arith.constant 0 : i32
    %c0_i32_1 = arith.constant 0 : i32
    return %c0_i32, %c0_i32_0 : i32, i32
  }
  func.func @transform_3(%arg0: i32, %arg1: i32) -> (i32, i32) {
    %c0_i32 = arith.constant 0 : i32
    %c0_i32_0 = arith.constant 0 : i32
    return %c0_i32, %arg1 : i32, i32
  }
  func.func @transform_4(%arg0: i32, %arg1: i32) -> (i32, i32) {
    %c0_i32 = arith.constant 0 : i32
    %c0_i32_0 = arith.constant 0 : i32
    return %c0_i32, %arg1 : i32, i32
  }
  func.func @transform_5(%arg0: i32, %arg1: i32) -> (i32, i32) {
    %c0_i32 = arith.constant 0 : i32
    return %arg0, %arg1 : i32, i32
  }
}

module attributes {stable_mosaic.version = 11 : i64} {
  func.func @_decoder_layer_kernel(%arg0: i32, %arg1: memref<1x8x32xf32, #tpu.memory_space<vmem>>, %arg2: memref<1x8x32xf32, #tpu.memory_space<vmem>>, %arg3: memref<1x32xf32, #tpu.memory_space<vmem>>, %arg4: memref<1x32xf32, #tpu.memory_space<vmem>>, %arg5: memref<32x32xbf16, #tpu.memory_space<vmem>>, %arg6: memref<32x32xbf16, #tpu.memory_space<vmem>>, %arg7: memref<32x32xbf16, #tpu.memory_space<vmem>>, %arg8: memref<1x32xf32, #tpu.memory_space<vmem>>, %arg9: memref<1x32xf32, #tpu.memory_space<vmem>>, %arg10: memref<1x32xf32, #tpu.memory_space<vmem>>, %arg11: memref<32x32xbf16, #tpu.memory_space<vmem>>, %arg12: memref<1x32xf32, #tpu.memory_space<vmem>>, %arg13: memref<1x32xf32, #tpu.memory_space<vmem>>, %arg14: memref<1x32xf32, #tpu.memory_space<vmem>>, %arg15: memref<32x32xbf16, #tpu.memory_space<vmem>>, %arg16: memref<32x32xbf16, #tpu.memory_space<vmem>>, %arg17: memref<32x32xbf16, #tpu.memory_space<vmem>>, %arg18: memref<1x32xf32, #tpu.memory_space<vmem>>, %arg19: memref<1x32xf32, #tpu.memory_space<vmem>>, %arg20: memref<1x32xf32, #tpu.memory_space<vmem>>, %arg21: memref<32x32xbf16, #tpu.memory_space<vmem>>, %arg22: memref<1x32xf32, #tpu.memory_space<vmem>>, %arg23: memref<1x32xf32, #tpu.memory_space<vmem>>, %arg24: memref<1x32xf32, #tpu.memory_space<vmem>>, %arg25: memref<32x128xbf16, #tpu.memory_space<vmem>>, %arg26: memref<1x128xf32, #tpu.memory_space<vmem>>, %arg27: memref<128x32xbf16, #tpu.memory_space<vmem>>, %arg28: memref<1x32xf32, #tpu.memory_space<vmem>>, %arg29: memref<1x8x32xf32, #tpu.memory_space<vmem>>, %arg30: memref<8x32xf32, #tpu.memory_space<vmem>>, %arg31: memref<8x32xf32, #tpu.memory_space<vmem>>, %arg32: memref<8x32xf32, #tpu.memory_space<vmem>>, %arg33: memref<8x32xf32, #tpu.memory_space<vmem>>, %arg34: memref<8x32xf32, #tpu.memory_space<vmem>>, %arg35: memref<8x32xf32, #tpu.memory_space<vmem>>) attributes {dimension_semantics = [#tpu.dimension_semantics<parallel>], iteration_bounds = array<i64: 2>, scalar_prefetch = 0 : i64, scratch_operands = 6 : i64, tpu.core_type = #tpu.core_type<tc>, window_params = [{transform_indices = @transform_0, window_bounds = array<i64: 1, 8, 32>}, {transform_indices = @transform_1, window_bounds = array<i64: 1, 8, 32>}, {pipeline_mode = #tpu.pipeline_mode<synchronous>, transform_indices = @transform_2, window_bounds = array<i64: 1, 32>}, {pipeline_mode = #tpu.pipeline_mode<synchronous>, transform_indices = @transform_3, window_bounds = array<i64: 1, 32>}, {pipeline_mode = #tpu.pipeline_mode<synchronous>, transform_indices = @transform_4, window_bounds = array<i64: 32, 32>}, {pipeline_mode = #tpu.pipeline_mode<synchronous>, transform_indices = @transform_5, window_bounds = array<i64: 32, 32>}, {pipeline_mode = #tpu.pipeline_mode<synchronous>, transform_indices = @transform_6, window_bounds = array<i64: 32, 32>}, {pipeline_mode = #tpu.pipeline_mode<synchronous>, transform_indices = @transform_7, window_bounds = array<i64: 1, 32>}, {pipeline_mode = #tpu.pipeline_mode<synchronous>, transform_indices = @transform_8, window_bounds = array<i64: 1, 32>}, {pipeline_mode = #tpu.pipeline_mode<synchronous>, transform_indices = @transform_9, window_bounds = array<i64: 1, 32>}, {pipeline_mode = #tpu.pipeline_mode<synchronous>, transform_indices = @transform_10, window_bounds = array<i64: 32, 32>}, {pipeline_mode = #tpu.pipeline_mode<synchronous>, transform_indices = @transform_11, window_bounds = array<i64: 1, 32>}, {pipeline_mode = #tpu.pipeline_mode<synchronous>, transform_indices = @transform_12, window_bounds = array<i64: 1, 32>}, {pipeline_mode = #tpu.pipeline_mode<synchronous>, transform_indices = @transform_13, window_bounds = array<i64: 1, 32>}, {pipeline_mode = #tpu.pipeline_mode<synchronous>, transform_indices = @transform_14, window_bounds = array<i64: 32, 32>}, {pipeline_mode = #tpu.pipeline_mode<synchronous>, transform_indices = @transform_15, window_bounds = array<i64: 32, 32>}, {pipeline_mode = #tpu.pipeline_mode<synchronous>, transform_indices = @transform_16, window_bounds = array<i64: 32, 32>}, {pipeline_mode = #tpu.pipeline_mode<synchronous>, transform_indices = @transform_17, window_bounds = array<i64: 1, 32>}, {pipeline_mode = #tpu.pipeline_mode<synchronous>, transform_indices = @transform_18, window_bounds = array<i64: 1, 32>}, {pipeline_mode = #tpu.pipeline_mode<synchronous>, transform_indices = @transform_19, window_bounds = array<i64: 1, 32>}, {pipeline_mode = #tpu.pipeline_mode<synchronous>, transform_indices = @transform_20, window_bounds = array<i64: 32, 32>}, {pipeline_mode = #tpu.pipeline_mode<synchronous>, transform_indices = @transform_21, window_bounds = array<i64: 1, 32>}, {pipeline_mode = #tpu.pipeline_mode<synchronous>, transform_indices = @transform_22, window_bounds = array<i64: 1, 32>}, {pipeline_mode = #tpu.pipeline_mode<synchronous>, transform_indices = @transform_23, window_bounds = array<i64: 1, 32>}, {pipeline_mode = #tpu.pipeline_mode<synchronous>, transform_indices = @transform_24, window_bounds = array<i64: 32, 128>}, {pipeline_mode = #tpu.pipeline_mode<synchronous>, transform_indices = @transform_25, window_bounds = array<i64: 1, 128>}, {pipeline_mode = #tpu.pipeline_mode<synchronous>, transform_indices = @transform_26, window_bounds = array<i64: 128, 32>}, {pipeline_mode = #tpu.pipeline_mode<synchronous>, transform_indices = @transform_27, window_bounds = array<i64: 1, 32>}, {transform_indices = @transform_28, window_bounds = array<i64: 1, 8, 32>}]} {
    %c0 = arith.constant 0 : index
    %c0_0 = arith.constant 0 : index
    %c0_1 = arith.constant 0 : index
    %0 = vector.load %arg1[%c0, %c0_0, %c0_1] : memref<1x8x32xf32, #tpu.memory_space<vmem>>, vector<1x8x32xf32>
    %1 = vector.shape_cast %0 : vector<1x8x32xf32> to vector<8x32xf32>
    %c0_2 = arith.constant 0 : index
    %c0_3 = arith.constant 0 : index
    %c0_4 = arith.constant 0 : index
    %2 = vector.load %arg2[%c0_2, %c0_3, %c0_4] : memref<1x8x32xf32, #tpu.memory_space<vmem>>, vector<1x8x32xf32>
    %3 = vector.shape_cast %2 : vector<1x8x32xf32> to vector<8x32xf32>
    %c0_5 = arith.constant 0 : index
    %c0_6 = arith.constant 0 : index
    %4 = vector.load %arg3[%c0_5, %c0_6] : memref<1x32xf32, #tpu.memory_space<vmem>>, vector<1x32xf32>
    %c0_7 = arith.constant 0 : index
    %c0_8 = arith.constant 0 : index
    %5 = vector.load %arg4[%c0_7, %c0_8] : memref<1x32xf32, #tpu.memory_space<vmem>>, vector<1x32xf32>
    %cst = arith.constant dense<0.000000e+00> : vector<8xf32>
    %6 = vector.multi_reduction <add>, %1, %cst [1] : vector<8x32xf32> to vector<8xf32>
    %7 = vector.shape_cast %6 : vector<8xf32> to vector<8x1xf32>
    %cst_9 = arith.constant 3.200000e+01 : f32
    %8 = vector.broadcast %cst_9 : f32 to vector<8x1xf32>
    %9 = arith.divf %7, %8 : vector<8x1xf32>
    %10 = vector.broadcast %9 : vector<8x1xf32> to vector<8x32xf32>
    %11 = arith.subf %1, %10 : vector<8x32xf32>
    %12 = arith.mulf %11, %11 : vector<8x32xf32>
    %cst_10 = arith.constant dense<0.000000e+00> : vector<8xf32>
    %13 = vector.multi_reduction <add>, %12, %cst_10 [1] : vector<8x32xf32> to vector<8xf32>
    %14 = vector.shape_cast %13 : vector<8xf32> to vector<8x1xf32>
    %cst_11 = arith.constant 3.200000e+01 : f32
    %15 = vector.broadcast %cst_11 : f32 to vector<8x1xf32>
    %16 = arith.divf %14, %15 : vector<8x1xf32>
    %17 = vector.broadcast %9 : vector<8x1xf32> to vector<8x32xf32>
    %18 = arith.subf %1, %17 : vector<8x32xf32>
    %cst_12 = arith.constant 9.99999974E-6 : f32
    %19 = vector.broadcast %cst_12 : f32 to vector<8x1xf32>
    %20 = arith.addf %16, %19 : vector<8x1xf32>
    %21 = math.rsqrt %20 : vector<8x1xf32>
    %22 = vector.broadcast %21 : vector<8x1xf32> to vector<8x32xf32>
    %23 = arith.mulf %18, %22 : vector<8x32xf32>
    %24 = vector.broadcast %4 : vector<1x32xf32> to vector<8x32xf32>
    %25 = arith.mulf %23, %24 : vector<8x32xf32>
    %26 = vector.broadcast %5 : vector<1x32xf32> to vector<8x32xf32>
    %27 = arith.addf %25, %26 : vector<8x32xf32>
    %c0_13 = arith.constant 0 : index
    %c0_14 = arith.constant 0 : index
    %28 = vector.load %arg8[%c0_13, %c0_14] : memref<1x32xf32, #tpu.memory_space<vmem>>, vector<1x32xf32>
    %c0_15 = arith.constant 0 : index
    %c0_16 = arith.constant 0 : index
    %29 = vector.load %arg9[%c0_15, %c0_16] : memref<1x32xf32, #tpu.memory_space<vmem>>, vector<1x32xf32>
    %c0_17 = arith.constant 0 : index
    %c0_18 = arith.constant 0 : index
    %30 = vector.load %arg10[%c0_17, %c0_18] : memref<1x32xf32, #tpu.memory_space<vmem>>, vector<1x32xf32>
    %c0_19 = arith.constant 0 : index
    %c0_20 = arith.constant 0 : index
    %31 = vector.load %arg12[%c0_19, %c0_20] : memref<1x32xf32, #tpu.memory_space<vmem>>, vector<1x32xf32>
    %32 = arith.truncf %27 : vector<8x32xf32> to vector<8x32xbf16>
    %33 = arith.truncf %27 : vector<8x32xf32> to vector<8x32xbf16>
    %c0_21 = arith.constant 0 : index
    %c0_22 = arith.constant 0 : index
    %34 = vector.load %arg5[%c0_21, %c0_22] : memref<32x32xbf16, #tpu.memory_space<vmem>>, vector<32x32xbf16>
    %cst_23 = arith.constant dense<0.000000e+00> : vector<8x32xf32>
    %35 = tpu.matmul %32, %34, %cst_23 {dimension_numbers = #tpu.dot_dimension_numbers<[1], [0], [0], [1], [0, 0, 1, 1], [], []>} : vector<8x32xbf16>, vector<32x32xbf16>, vector<8x32xf32> -> vector<8x32xf32>
    %36 = vector.broadcast %28 : vector<1x32xf32> to vector<8x32xf32>
    %37 = arith.addf %35, %36 : vector<8x32xf32>
    %cst_24 = arith.constant 0.353553385 : f32
    %38 = vector.broadcast %cst_24 : f32 to vector<8x32xf32>
    %39 = arith.mulf %37, %38 : vector<8x32xf32>
    %c0_25 = arith.constant 0 : index
    %c0_26 = arith.constant 0 : index
    %40 = vector.load %arg30[%c0_25, %c0_26] : memref<8x32xf32, #tpu.memory_space<vmem>>, vector<8x32xf32>
    tpu.vector_store %arg30[%c0_25, %c0_26], %39 {strides = array<i32>} : memref<8x32xf32, #tpu.memory_space<vmem>>, vector<8x32xf32>,
    %c0_27 = arith.constant 0 : index
    %c0_28 = arith.constant 0 : index
    %41 = vector.load %arg6[%c0_27, %c0_28] : memref<32x32xbf16, #tpu.memory_space<vmem>>, vector<32x32xbf16>
    %cst_29 = arith.constant dense<0.000000e+00> : vector<8x32xf32>
    %42 = tpu.matmul %33, %41, %cst_29 {dimension_numbers = #tpu.dot_dimension_numbers<[1], [0], [0], [1], [0, 0, 1, 1], [], []>} : vector<8x32xbf16>, vector<32x32xbf16>, vector<8x32xf32> -> vector<8x32xf32>
    %43 = vector.broadcast %29 : vector<1x32xf32> to vector<8x32xf32>
    %44 = arith.addf %42, %43 : vector<8x32xf32>
    %c0_30 = arith.constant 0 : index
    %c0_31 = arith.constant 0 : index
    %45 = vector.load %arg31[%c0_30, %c0_31] : memref<8x32xf32, #tpu.memory_space<vmem>>, vector<8x32xf32>
    tpu.vector_store %arg31[%c0_30, %c0_31], %44 {strides = array<i32>} : memref<8x32xf32, #tpu.memory_space<vmem>>, vector<8x32xf32>,
    %c0_32 = arith.constant 0 : index
    %c0_33 = arith.constant 0 : index
    %46 = vector.load %arg7[%c0_32, %c0_33] : memref<32x32xbf16, #tpu.memory_space<vmem>>, vector<32x32xbf16>
    %cst_34 = arith.constant dense<0.000000e+00> : vector<8x32xf32>
    %47 = tpu.matmul %33, %46, %cst_34 {dimension_numbers = #tpu.dot_dimension_numbers<[1], [0], [0], [1], [0, 0, 1, 1], [], []>} : vector<8x32xbf16>, vector<32x32xbf16>, vector<8x32xf32> -> vector<8x32xf32>
    %48 = vector.broadcast %30 : vector<1x32xf32> to vector<8x32xf32>
    %49 = arith.addf %47, %48 : vector<8x32xf32>
    %c0_35 = arith.constant 0 : index
    %c0_36 = arith.constant 0 : index
    %50 = vector.load %arg32[%c0_35, %c0_36] : memref<8x32xf32, #tpu.memory_space<vmem>>, vector<8x32xf32>
    tpu.vector_store %arg32[%c0_35, %c0_36], %49 {strides = array<i32>} : memref<8x32xf32, #tpu.memory_space<vmem>>, vector<8x32xf32>,
    %51 = tpu.iota {dimensions = array<i32: 0>} : vector<8x8xi32>
    %52 = tpu.iota {dimensions = array<i32: 1>} : vector<8x8xi32>
    %53 = arith.cmpi sgt, %52, %51 : vector<8x8xi32>
    %cst_37 = arith.constant -1.000000e+30 : f32
    %cst_38 = arith.constant 0.000000e+00 : f32
    %54 = vector.broadcast %cst_37 : f32 to vector<8x8xf32>
    %55 = vector.broadcast %cst_38 : f32 to vector<8x8xf32>
    %56 = arith.select %53, %54, %55 : vector<8x8xi1>, vector<8x8xf32>
    %c0_39 = arith.constant 0 : index
    %c0_40 = arith.constant 0 : index
    %57 = vector.load %arg30[%c0_39, %c0_40] : memref<8x32xf32, #tpu.memory_space<vmem>>, vector<8x8xf32>
    %58 = arith.truncf %57 : vector<8x8xf32> to vector<8x8xbf16>
    %c0_41 = arith.constant 0 : index
    %c0_42 = arith.constant 0 : index
    %59 = vector.load %arg31[%c0_41, %c0_42] : memref<8x32xf32, #tpu.memory_space<vmem>>, vector<8x8xf32>
    %60 = arith.truncf %59 : vector<8x8xf32> to vector<8x8xbf16>
    %c0_43 = arith.constant 0 : index
    %c0_44 = arith.constant 0 : index
    %61 = vector.load %arg32[%c0_43, %c0_44] : memref<8x32xf32, #tpu.memory_space<vmem>>, vector<8x8xf32>
    %62 = arith.truncf %61 : vector<8x8xf32> to vector<8x8xbf16>
    %cst_45 = arith.constant dense<0.000000e+00> : vector<8x8xf32>
    %63 = tpu.matmul %58, %60, %cst_45 {dimension_numbers = #tpu.dot_dimension_numbers<[1], [1], [0], [0], [0, 0, 1, 0], [], []>} : vector<8x8xbf16>, vector<8x8xbf16>, vector<8x8xf32> -> vector<8x8xf32>
    %64 = arith.addf %63, %56 : vector<8x8xf32>
    %cst_46 = arith.constant dense<0xFF800000> : vector<8xf32>
    %65 = vector.multi_reduction <maximumf>, %64, %cst_46 [1] : vector<8x8xf32> to vector<8xf32>
    %66 = vector.shape_cast %65 : vector<8xf32> to vector<8x1xf32>
    %67 = vector.broadcast %66 : vector<8x1xf32> to vector<8x8xf32>
    %68 = arith.subf %64, %67 : vector<8x8xf32>
    %69 = math.exp %68 : vector<8x8xf32>
    %cst_47 = arith.constant dense<0.000000e+00> : vector<8xf32>
    %70 = vector.multi_reduction <add>, %69, %cst_47 [1] : vector<8x8xf32> to vector<8xf32>
    %71 = vector.shape_cast %70 : vector<8xf32> to vector<8x1xf32>
    %72 = tpu.reciprocal %71 {approx = true} : vector<8x1xf32> -> vector<8x1xf32>
    %73 = vector.broadcast %72 : vector<8x1xf32> to vector<8x8xf32>
    %74 = arith.mulf %69, %73 : vector<8x8xf32>
    %75 = arith.truncf %74 : vector<8x8xf32> to vector<8x8xbf16>
    %cst_48 = arith.constant dense<0.000000e+00> : vector<8x8xf32>
    %76 = tpu.matmul %75, %62, %cst_48 {dimension_numbers = #tpu.dot_dimension_numbers<[1], [0], [0], [1], [0, 0, 1, 1], [], []>} : vector<8x8xbf16>, vector<8x8xbf16>, vector<8x8xf32> -> vector<8x8xf32>
    %c0_49 = arith.constant 0 : index
    %c0_50 = arith.constant 0 : index
    %77 = vector.load %arg35[%c0_49, %c0_50] : memref<8x32xf32, #tpu.memory_space<vmem>>, vector<8x8xf32>
    tpu.vector_store %arg35[%c0_49, %c0_50], %76 {strides = array<i32>} : memref<8x32xf32, #tpu.memory_space<vmem>>, vector<8x8xf32>,
    %c0_51 = arith.constant 0 : index
    %c8 = arith.constant 8 : index
    %78 = vector.load %arg30[%c0_51, %c8] : memref<8x32xf32, #tpu.memory_space<vmem>>, vector<8x8xf32>
    %79 = arith.truncf %78 : vector<8x8xf32> to vector<8x8xbf16>
    %c0_52 = arith.constant 0 : index
    %c8_53 = arith.constant 8 : index
    %80 = vector.load %arg31[%c0_52, %c8_53] : memref<8x32xf32, #tpu.memory_space<vmem>>, vector<8x8xf32>
    %81 = arith.truncf %80 : vector<8x8xf32> to vector<8x8xbf16>
    %c0_54 = arith.constant 0 : index
    %c8_55 = arith.constant 8 : index
    %82 = vector.load %arg32[%c0_54, %c8_55] : memref<8x32xf32, #tpu.memory_space<vmem>>, vector<8x8xf32>
    %83 = arith.truncf %82 : vector<8x8xf32> to vector<8x8xbf16>
    %cst_56 = arith.constant dense<0.000000e+00> : vector<8x8xf32>
    %84 = tpu.matmul %79, %81, %cst_56 {dimension_numbers = #tpu.dot_dimension_numbers<[1], [1], [0], [0], [0, 0, 1, 0], [], []>} : vector<8x8xbf16>, vector<8x8xbf16>, vector<8x8xf32> -> vector<8x8xf32>
    %85 = arith.addf %84, %56 : vector<8x8xf32>
    %cst_57 = arith.constant dense<0xFF800000> : vector<8xf32>
    %86 = vector.multi_reduction <maximumf>, %85, %cst_57 [1] : vector<8x8xf32> to vector<8xf32>
    %87 = vector.shape_cast %86 : vector<8xf32> to vector<8x1xf32>
    %88 = vector.broadcast %87 : vector<8x1xf32> to vector<8x8xf32>
    %89 = arith.subf %85, %88 : vector<8x8xf32>
    %90 = math.exp %89 : vector<8x8xf32>
    %cst_58 = arith.constant dense<0.000000e+00> : vector<8xf32>
    %91 = vector.multi_reduction <add>, %90, %cst_58 [1] : vector<8x8xf32> to vector<8xf32>
    %92 = vector.shape_cast %91 : vector<8xf32> to vector<8x1xf32>
    %93 = tpu.reciprocal %92 {approx = true} : vector<8x1xf32> -> vector<8x1xf32>
    %94 = vector.broadcast %93 : vector<8x1xf32> to vector<8x8xf32>
    %95 = arith.mulf %90, %94 : vector<8x8xf32>
    %96 = arith.truncf %95 : vector<8x8xf32> to vector<8x8xbf16>
    %cst_59 = arith.constant dense<0.000000e+00> : vector<8x8xf32>
    %97 = tpu.matmul %96, %83, %cst_59 {dimension_numbers = #tpu.dot_dimension_numbers<[1], [0], [0], [1], [0, 0, 1, 1], [], []>} : vector<8x8xbf16>, vector<8x8xbf16>, vector<8x8xf32> -> vector<8x8xf32>
    %c0_60 = arith.constant 0 : index
    %c8_61 = arith.constant 8 : index
    %98 = vector.load %arg35[%c0_60, %c8_61] : memref<8x32xf32, #tpu.memory_space<vmem>>, vector<8x8xf32>
    tpu.vector_store %arg35[%c0_60, %c8_61], %97 {strides = array<i32>} : memref<8x32xf32, #tpu.memory_space<vmem>>, vector<8x8xf32>,
    %c0_62 = arith.constant 0 : index
    %c16 = arith.constant 16 : index
    %99 = vector.load %arg30[%c0_62, %c16] : memref<8x32xf32, #tpu.memory_space<vmem>>, vector<8x8xf32>
    %100 = arith.truncf %99 : vector<8x8xf32> to vector<8x8xbf16>
    %c0_63 = arith.constant 0 : index
    %c16_64 = arith.constant 16 : index
    %101 = vector.load %arg31[%c0_63, %c16_64] : memref<8x32xf32, #tpu.memory_space<vmem>>, vector<8x8xf32>
    %102 = arith.truncf %101 : vector<8x8xf32> to vector<8x8xbf16>
    %c0_65 = arith.constant 0 : index
    %c16_66 = arith.constant 16 : index
    %103 = vector.load %arg32[%c0_65, %c16_66] : memref<8x32xf32, #tpu.memory_space<vmem>>, vector<8x8xf32>
    %104 = arith.truncf %103 : vector<8x8xf32> to vector<8x8xbf16>
    %cst_67 = arith.constant dense<0.000000e+00> : vector<8x8xf32>
    %105 = tpu.matmul %100, %102, %cst_67 {dimension_numbers = #tpu.dot_dimension_numbers<[1], [1], [0], [0], [0, 0, 1, 0], [], []>} : vector<8x8xbf16>, vector<8x8xbf16>, vector<8x8xf32> -> vector<8x8xf32>
    %106 = arith.addf %105, %56 : vector<8x8xf32>
    %cst_68 = arith.constant dense<0xFF800000> : vector<8xf32>
    %107 = vector.multi_reduction <maximumf>, %106, %cst_68 [1] : vector<8x8xf32> to vector<8xf32>
    %108 = vector.shape_cast %107 : vector<8xf32> to vector<8x1xf32>
    %109 = vector.broadcast %108 : vector<8x1xf32> to vector<8x8xf32>
    %110 = arith.subf %106, %109 : vector<8x8xf32>
    %111 = math.exp %110 : vector<8x8xf32>
    %cst_69 = arith.constant dense<0.000000e+00> : vector<8xf32>
    %112 = vector.multi_reduction <add>, %111, %cst_69 [1] : vector<8x8xf32> to vector<8xf32>
    %113 = vector.shape_cast %112 : vector<8xf32> to vector<8x1xf32>
    %114 = tpu.reciprocal %113 {approx = true} : vector<8x1xf32> -> vector<8x1xf32>
    %115 = vector.broadcast %114 : vector<8x1xf32> to vector<8x8xf32>
    %116 = arith.mulf %111, %115 : vector<8x8xf32>
    %117 = arith.truncf %116 : vector<8x8xf32> to vector<8x8xbf16>
    %cst_70 = arith.constant dense<0.000000e+00> : vector<8x8xf32>
    %118 = tpu.matmul %117, %104, %cst_70 {dimension_numbers = #tpu.dot_dimension_numbers<[1], [0], [0], [1], [0, 0, 1, 1], [], []>} : vector<8x8xbf16>, vector<8x8xbf16>, vector<8x8xf32> -> vector<8x8xf32>
    %c0_71 = arith.constant 0 : index
    %c16_72 = arith.constant 16 : index
    %119 = vector.load %arg35[%c0_71, %c16_72] : memref<8x32xf32, #tpu.memory_space<vmem>>, vector<8x8xf32>
    tpu.vector_store %arg35[%c0_71, %c16_72], %118 {strides = array<i32>} : memref<8x32xf32, #tpu.memory_space<vmem>>, vector<8x8xf32>,
    %c0_73 = arith.constant 0 : index
    %c24 = arith.constant 24 : index
    %120 = vector.load %arg30[%c0_73, %c24] : memref<8x32xf32, #tpu.memory_space<vmem>>, vector<8x8xf32>
    %121 = arith.truncf %120 : vector<8x8xf32> to vector<8x8xbf16>
    %c0_74 = arith.constant 0 : index
    %c24_75 = arith.constant 24 : index
    %122 = vector.load %arg31[%c0_74, %c24_75] : memref<8x32xf32, #tpu.memory_space<vmem>>, vector<8x8xf32>
    %123 = arith.truncf %122 : vector<8x8xf32> to vector<8x8xbf16>
    %c0_76 = arith.constant 0 : index
    %c24_77 = arith.constant 24 : index
    %124 = vector.load %arg32[%c0_76, %c24_77] : memref<8x32xf32, #tpu.memory_space<vmem>>, vector<8x8xf32>
    %125 = arith.truncf %124 : vector<8x8xf32> to vector<8x8xbf16>
    %cst_78 = arith.constant dense<0.000000e+00> : vector<8x8xf32>
    %126 = tpu.matmul %121, %123, %cst_78 {dimension_numbers = #tpu.dot_dimension_numbers<[1], [1], [0], [0], [0, 0, 1, 0], [], []>} : vector<8x8xbf16>, vector<8x8xbf16>, vector<8x8xf32> -> vector<8x8xf32>
    %127 = arith.addf %126, %56 : vector<8x8xf32>
    %cst_79 = arith.constant dense<0xFF800000> : vector<8xf32>
    %128 = vector.multi_reduction <maximumf>, %127, %cst_79 [1] : vector<8x8xf32> to vector<8xf32>
    %129 = vector.shape_cast %128 : vector<8xf32> to vector<8x1xf32>
    %130 = vector.broadcast %129 : vector<8x1xf32> to vector<8x8xf32>
    %131 = arith.subf %127, %130 : vector<8x8xf32>
    %132 = math.exp %131 : vector<8x8xf32>
    %cst_80 = arith.constant dense<0.000000e+00> : vector<8xf32>
    %133 = vector.multi_reduction <add>, %132, %cst_80 [1] : vector<8x8xf32> to vector<8xf32>
    %134 = vector.shape_cast %133 : vector<8xf32> to vector<8x1xf32>
    %135 = tpu.reciprocal %134 {approx = true} : vector<8x1xf32> -> vector<8x1xf32>
    %136 = vector.broadcast %135 : vector<8x1xf32> to vector<8x8xf32>
    %137 = arith.mulf %132, %136 : vector<8x8xf32>
    %138 = arith.truncf %137 : vector<8x8xf32> to vector<8x8xbf16>
    %cst_81 = arith.constant dense<0.000000e+00> : vector<8x8xf32>
    %139 = tpu.matmul %138, %125, %cst_81 {dimension_numbers = #tpu.dot_dimension_numbers<[1], [0], [0], [1], [0, 0, 1, 1], [], []>} : vector<8x8xbf16>, vector<8x8xbf16>, vector<8x8xf32> -> vector<8x8xf32>
    %c0_82 = arith.constant 0 : index
    %c24_83 = arith.constant 24 : index
    %140 = vector.load %arg35[%c0_82, %c24_83] : memref<8x32xf32, #tpu.memory_space<vmem>>, vector<8x8xf32>
    tpu.vector_store %arg35[%c0_82, %c24_83], %139 {strides = array<i32>} : memref<8x32xf32, #tpu.memory_space<vmem>>, vector<8x8xf32>,
    %c0_84 = arith.constant 0 : index
    %c0_85 = arith.constant 0 : index
    %141 = vector.load %arg35[%c0_84, %c0_85] : memref<8x32xf32, #tpu.memory_space<vmem>>, vector<8x32xf32>
    %142 = arith.truncf %141 : vector<8x32xf32> to vector<8x32xbf16>
    %c0_86 = arith.constant 0 : index
    %c0_87 = arith.constant 0 : index
    %143 = vector.load %arg11[%c0_86, %c0_87] : memref<32x32xbf16, #tpu.memory_space<vmem>>, vector<32x32xbf16>
    %cst_88 = arith.constant dense<0.000000e+00> : vector<8x32xf32>
    %144 = tpu.matmul %142, %143, %cst_88 {dimension_numbers = #tpu.dot_dimension_numbers<[1], [0], [0], [1], [0, 0, 1, 1], [], []>} : vector<8x32xbf16>, vector<32x32xbf16>, vector<8x32xf32> -> vector<8x32xf32>
    %145 = vector.broadcast %31 : vector<1x32xf32> to vector<8x32xf32>
    %146 = arith.addf %144, %145 : vector<8x32xf32>
    %147 = arith.addf %1, %146 : vector<8x32xf32>
    %c0_89 = arith.constant 0 : index
    %c0_90 = arith.constant 0 : index
    %148 = vector.load %arg13[%c0_89, %c0_90] : memref<1x32xf32, #tpu.memory_space<vmem>>, vector<1x32xf32>
    %c0_91 = arith.constant 0 : index
    %c0_92 = arith.constant 0 : index
    %149 = vector.load %arg14[%c0_91, %c0_92] : memref<1x32xf32, #tpu.memory_space<vmem>>, vector<1x32xf32>
    %cst_93 = arith.constant dense<0.000000e+00> : vector<8xf32>
    %150 = vector.multi_reduction <add>, %147, %cst_93 [1] : vector<8x32xf32> to vector<8xf32>
    %151 = vector.shape_cast %150 : vector<8xf32> to vector<8x1xf32>
    %cst_94 = arith.constant 3.200000e+01 : f32
    %152 = vector.broadcast %cst_94 : f32 to vector<8x1xf32>
    %153 = arith.divf %151, %152 : vector<8x1xf32>
    %154 = vector.broadcast %153 : vector<8x1xf32> to vector<8x32xf32>
    %155 = arith.subf %147, %154 : vector<8x32xf32>
    %156 = arith.mulf %155, %155 : vector<8x32xf32>
    %cst_95 = arith.constant dense<0.000000e+00> : vector<8xf32>
    %157 = vector.multi_reduction <add>, %156, %cst_95 [1] : vector<8x32xf32> to vector<8xf32>
    %158 = vector.shape_cast %157 : vector<8xf32> to vector<8x1xf32>
    %cst_96 = arith.constant 3.200000e+01 : f32
    %159 = vector.broadcast %cst_96 : f32 to vector<8x1xf32>
    %160 = arith.divf %158, %159 : vector<8x1xf32>
    %161 = vector.broadcast %153 : vector<8x1xf32> to vector<8x32xf32>
    %162 = arith.subf %147, %161 : vector<8x32xf32>
    %cst_97 = arith.constant 9.99999974E-6 : f32
    %163 = vector.broadcast %cst_97 : f32 to vector<8x1xf32>
    %164 = arith.addf %160, %163 : vector<8x1xf32>
    %165 = math.rsqrt %164 : vector<8x1xf32>
    %166 = vector.broadcast %165 : vector<8x1xf32> to vector<8x32xf32>
    %167 = arith.mulf %162, %166 : vector<8x32xf32>
    %168 = vector.broadcast %148 : vector<1x32xf32> to vector<8x32xf32>
    %169 = arith.mulf %167, %168 : vector<8x32xf32>
    %170 = vector.broadcast %149 : vector<1x32xf32> to vector<8x32xf32>
    %171 = arith.addf %169, %170 : vector<8x32xf32>
    %c0_98 = arith.constant 0 : index
    %c0_99 = arith.constant 0 : index
    %172 = vector.load %arg18[%c0_98, %c0_99] : memref<1x32xf32, #tpu.memory_space<vmem>>, vector<1x32xf32>
    %c0_100 = arith.constant 0 : index
    %c0_101 = arith.constant 0 : index
    %173 = vector.load %arg19[%c0_100, %c0_101] : memref<1x32xf32, #tpu.memory_space<vmem>>, vector<1x32xf32>
    %c0_102 = arith.constant 0 : index
    %c0_103 = arith.constant 0 : index
    %174 = vector.load %arg20[%c0_102, %c0_103] : memref<1x32xf32, #tpu.memory_space<vmem>>, vector<1x32xf32>
    %c0_104 = arith.constant 0 : index
    %c0_105 = arith.constant 0 : index
    %175 = vector.load %arg22[%c0_104, %c0_105] : memref<1x32xf32, #tpu.memory_space<vmem>>, vector<1x32xf32>
    %176 = arith.truncf %171 : vector<8x32xf32> to vector<8x32xbf16>
    %177 = arith.truncf %3 : vector<8x32xf32> to vector<8x32xbf16>
    %c0_106 = arith.constant 0 : index
    %c0_107 = arith.constant 0 : index
    %178 = vector.load %arg15[%c0_106, %c0_107] : memref<32x32xbf16, #tpu.memory_space<vmem>>, vector<32x32xbf16>
    %cst_108 = arith.constant dense<0.000000e+00> : vector<8x32xf32>
    %179 = tpu.matmul %176, %178, %cst_108 {dimension_numbers = #tpu.dot_dimension_numbers<[1], [0], [0], [1], [0, 0, 1, 1], [], []>} : vector<8x32xbf16>, vector<32x32xbf16>, vector<8x32xf32> -> vector<8x32xf32>
    %180 = vector.broadcast %172 : vector<1x32xf32> to vector<8x32xf32>
    %181 = arith.addf %179, %180 : vector<8x32xf32>
    %cst_109 = arith.constant 0.353553385 : f32
    %182 = vector.broadcast %cst_109 : f32 to vector<8x32xf32>
    %183 = arith.mulf %181, %182 : vector<8x32xf32>
    %c0_110 = arith.constant 0 : index
    %c0_111 = arith.constant 0 : index
    %184 = vector.load %arg30[%c0_110, %c0_111] : memref<8x32xf32, #tpu.memory_space<vmem>>, vector<8x32xf32>
    tpu.vector_store %arg30[%c0_110, %c0_111], %183 {strides = array<i32>} : memref<8x32xf32, #tpu.memory_space<vmem>>, vector<8x32xf32>,
    %c0_112 = arith.constant 0 : index
    %c0_113 = arith.constant 0 : index
    %185 = vector.load %arg16[%c0_112, %c0_113] : memref<32x32xbf16, #tpu.memory_space<vmem>>, vector<32x32xbf16>
    %cst_114 = arith.constant dense<0.000000e+00> : vector<8x32xf32>
    %186 = tpu.matmul %177, %185, %cst_114 {dimension_numbers = #tpu.dot_dimension_numbers<[1], [0], [0], [1], [0, 0, 1, 1], [], []>} : vector<8x32xbf16>, vector<32x32xbf16>, vector<8x32xf32> -> vector<8x32xf32>
    %187 = vector.broadcast %173 : vector<1x32xf32> to vector<8x32xf32>
    %188 = arith.addf %186, %187 : vector<8x32xf32>
    %c0_115 = arith.constant 0 : index
    %c0_116 = arith.constant 0 : index
    %189 = vector.load %arg33[%c0_115, %c0_116] : memref<8x32xf32, #tpu.memory_space<vmem>>, vector<8x32xf32>
    tpu.vector_store %arg33[%c0_115, %c0_116], %188 {strides = array<i32>} : memref<8x32xf32, #tpu.memory_space<vmem>>, vector<8x32xf32>,
    %c0_117 = arith.constant 0 : index
    %c0_118 = arith.constant 0 : index
    %190 = vector.load %arg17[%c0_117, %c0_118] : memref<32x32xbf16, #tpu.memory_space<vmem>>, vector<32x32xbf16>
    %cst_119 = arith.constant dense<0.000000e+00> : vector<8x32xf32>
    %191 = tpu.matmul %177, %190, %cst_119 {dimension_numbers = #tpu.dot_dimension_numbers<[1], [0], [0], [1], [0, 0, 1, 1], [], []>} : vector<8x32xbf16>, vector<32x32xbf16>, vector<8x32xf32> -> vector<8x32xf32>
    %192 = vector.broadcast %174 : vector<1x32xf32> to vector<8x32xf32>
    %193 = arith.addf %191, %192 : vector<8x32xf32>
    %c0_120 = arith.constant 0 : index
    %c0_121 = arith.constant 0 : index
    %194 = vector.load %arg34[%c0_120, %c0_121] : memref<8x32xf32, #tpu.memory_space<vmem>>, vector<8x32xf32>
    tpu.vector_store %arg34[%c0_120, %c0_121], %193 {strides = array<i32>} : memref<8x32xf32, #tpu.memory_space<vmem>>, vector<8x32xf32>,
    %c0_122 = arith.constant 0 : index
    %c0_123 = arith.constant 0 : index
    %195 = vector.load %arg30[%c0_122, %c0_123] : memref<8x32xf32, #tpu.memory_space<vmem>>, vector<8x8xf32>
    %196 = arith.truncf %195 : vector<8x8xf32> to vector<8x8xbf16>
    %c0_124 = arith.constant 0 : index
    %c0_125 = arith.constant 0 : index
    %197 = vector.load %arg33[%c0_124, %c0_125] : memref<8x32xf32, #tpu.memory_space<vmem>>, vector<8x8xf32>
    %198 = arith.truncf %197 : vector<8x8xf32> to vector<8x8xbf16>
    %c0_126 = arith.constant 0 : index
    %c0_127 = arith.constant 0 : index
    %199 = vector.load %arg34[%c0_126, %c0_127] : memref<8x32xf32, #tpu.memory_space<vmem>>, vector<8x8xf32>
    %200 = arith.truncf %199 : vector<8x8xf32> to vector<8x8xbf16>
    %cst_128 = arith.constant dense<0.000000e+00> : vector<8x8xf32>
    %201 = tpu.matmul %196, %198, %cst_128 {dimension_numbers = #tpu.dot_dimension_numbers<[1], [1], [0], [0], [0, 0, 1, 0], [], []>} : vector<8x8xbf16>, vector<8x8xbf16>, vector<8x8xf32> -> vector<8x8xf32>
    %cst_129 = arith.constant dense<0xFF800000> : vector<8xf32>
    %202 = vector.multi_reduction <maximumf>, %201, %cst_129 [1] : vector<8x8xf32> to vector<8xf32>
    %203 = vector.shape_cast %202 : vector<8xf32> to vector<8x1xf32>
    %204 = vector.broadcast %203 : vector<8x1xf32> to vector<8x8xf32>
    %205 = arith.subf %201, %204 : vector<8x8xf32>
    %206 = math.exp %205 : vector<8x8xf32>
    %cst_130 = arith.constant dense<0.000000e+00> : vector<8xf32>
    %207 = vector.multi_reduction <add>, %206, %cst_130 [1] : vector<8x8xf32> to vector<8xf32>
    %208 = vector.shape_cast %207 : vector<8xf32> to vector<8x1xf32>
    %209 = tpu.reciprocal %208 {approx = true} : vector<8x1xf32> -> vector<8x1xf32>
    %210 = vector.broadcast %209 : vector<8x1xf32> to vector<8x8xf32>
    %211 = arith.mulf %206, %210 : vector<8x8xf32>
    %212 = arith.truncf %211 : vector<8x8xf32> to vector<8x8xbf16>
    %cst_131 = arith.constant dense<0.000000e+00> : vector<8x8xf32>
    %213 = tpu.matmul %212, %200, %cst_131 {dimension_numbers = #tpu.dot_dimension_numbers<[1], [0], [0], [1], [0, 0, 1, 1], [], []>} : vector<8x8xbf16>, vector<8x8xbf16>, vector<8x8xf32> -> vector<8x8xf32>
    %c0_132 = arith.constant 0 : index
    %c0_133 = arith.constant 0 : index
    %214 = vector.load %arg35[%c0_132, %c0_133] : memref<8x32xf32, #tpu.memory_space<vmem>>, vector<8x8xf32>
    tpu.vector_store %arg35[%c0_132, %c0_133], %213 {strides = array<i32>} : memref<8x32xf32, #tpu.memory_space<vmem>>, vector<8x8xf32>,
    %c0_134 = arith.constant 0 : index
    %c8_135 = arith.constant 8 : index
    %215 = vector.load %arg30[%c0_134, %c8_135] : memref<8x32xf32, #tpu.memory_space<vmem>>, vector<8x8xf32>
    %216 = arith.truncf %215 : vector<8x8xf32> to vector<8x8xbf16>
    %c0_136 = arith.constant 0 : index
    %c8_137 = arith.constant 8 : index
    %217 = vector.load %arg33[%c0_136, %c8_137] : memref<8x32xf32, #tpu.memory_space<vmem>>, vector<8x8xf32>
    %218 = arith.truncf %217 : vector<8x8xf32> to vector<8x8xbf16>
    %c0_138 = arith.constant 0 : index
    %c8_139 = arith.constant 8 : index
    %219 = vector.load %arg34[%c0_138, %c8_139] : memref<8x32xf32, #tpu.memory_space<vmem>>, vector<8x8xf32>
    %220 = arith.truncf %219 : vector<8x8xf32> to vector<8x8xbf16>
    %cst_140 = arith.constant dense<0.000000e+00> : vector<8x8xf32>
    %221 = tpu.matmul %216, %218, %cst_140 {dimension_numbers = #tpu.dot_dimension_numbers<[1], [1], [0], [0], [0, 0, 1, 0], [], []>} : vector<8x8xbf16>, vector<8x8xbf16>, vector<8x8xf32> -> vector<8x8xf32>
    %cst_141 = arith.constant dense<0xFF800000> : vector<8xf32>
    %222 = vector.multi_reduction <maximumf>, %221, %cst_141 [1] : vector<8x8xf32> to vector<8xf32>
    %223 = vector.shape_cast %222 : vector<8xf32> to vector<8x1xf32>
    %224 = vector.broadcast %223 : vector<8x1xf32> to vector<8x8xf32>
    %225 = arith.subf %221, %224 : vector<8x8xf32>
    %226 = math.exp %225 : vector<8x8xf32>
    %cst_142 = arith.constant dense<0.000000e+00> : vector<8xf32>
    %227 = vector.multi_reduction <add>, %226, %cst_142 [1] : vector<8x8xf32> to vector<8xf32>
    %228 = vector.shape_cast %227 : vector<8xf32> to vector<8x1xf32>
    %229 = tpu.reciprocal %228 {approx = true} : vector<8x1xf32> -> vector<8x1xf32>
    %230 = vector.broadcast %229 : vector<8x1xf32> to vector<8x8xf32>
    %231 = arith.mulf %226, %230 : vector<8x8xf32>
    %232 = arith.truncf %231 : vector<8x8xf32> to vector<8x8xbf16>
    %cst_143 = arith.constant dense<0.000000e+00> : vector<8x8xf32>
    %233 = tpu.matmul %232, %220, %cst_143 {dimension_numbers = #tpu.dot_dimension_numbers<[1], [0], [0], [1], [0, 0, 1, 1], [], []>} : vector<8x8xbf16>, vector<8x8xbf16>, vector<8x8xf32> -> vector<8x8xf32>
    %c0_144 = arith.constant 0 : index
    %c8_145 = arith.constant 8 : index
    %234 = vector.load %arg35[%c0_144, %c8_145] : memref<8x32xf32, #tpu.memory_space<vmem>>, vector<8x8xf32>
    tpu.vector_store %arg35[%c0_144, %c8_145], %233 {strides = array<i32>} : memref<8x32xf32, #tpu.memory_space<vmem>>, vector<8x8xf32>,
    %c0_146 = arith.constant 0 : index
    %c16_147 = arith.constant 16 : index
    %235 = vector.load %arg30[%c0_146, %c16_147] : memref<8x32xf32, #tpu.memory_space<vmem>>, vector<8x8xf32>
    %236 = arith.truncf %235 : vector<8x8xf32> to vector<8x8xbf16>
    %c0_148 = arith.constant 0 : index
    %c16_149 = arith.constant 16 : index
    %237 = vector.load %arg33[%c0_148, %c16_149] : memref<8x32xf32, #tpu.memory_space<vmem>>, vector<8x8xf32>
    %238 = arith.truncf %237 : vector<8x8xf32> to vector<8x8xbf16>
    %c0_150 = arith.constant 0 : index
    %c16_151 = arith.constant 16 : index
    %239 = vector.load %arg34[%c0_150, %c16_151] : memref<8x32xf32, #tpu.memory_space<vmem>>, vector<8x8xf32>
    %240 = arith.truncf %239 : vector<8x8xf32> to vector<8x8xbf16>
    %cst_152 = arith.constant dense<0.000000e+00> : vector<8x8xf32>
    %241 = tpu.matmul %236, %238, %cst_152 {dimension_numbers = #tpu.dot_dimension_numbers<[1], [1], [0], [0], [0, 0, 1, 0], [], []>} : vector<8x8xbf16>, vector<8x8xbf16>, vector<8x8xf32> -> vector<8x8xf32>
    %cst_153 = arith.constant dense<0xFF800000> : vector<8xf32>
    %242 = vector.multi_reduction <maximumf>, %241, %cst_153 [1] : vector<8x8xf32> to vector<8xf32>
    %243 = vector.shape_cast %242 : vector<8xf32> to vector<8x1xf32>
    %244 = vector.broadcast %243 : vector<8x1xf32> to vector<8x8xf32>
    %245 = arith.subf %241, %244 : vector<8x8xf32>
    %246 = math.exp %245 : vector<8x8xf32>
    %cst_154 = arith.constant dense<0.000000e+00> : vector<8xf32>
    %247 = vector.multi_reduction <add>, %246, %cst_154 [1] : vector<8x8xf32> to vector<8xf32>
    %248 = vector.shape_cast %247 : vector<8xf32> to vector<8x1xf32>
    %249 = tpu.reciprocal %248 {approx = true} : vector<8x1xf32> -> vector<8x1xf32>
    %250 = vector.broadcast %249 : vector<8x1xf32> to vector<8x8xf32>
    %251 = arith.mulf %246, %250 : vector<8x8xf32>
    %252 = arith.truncf %251 : vector<8x8xf32> to vector<8x8xbf16>
    %cst_155 = arith.constant dense<0.000000e+00> : vector<8x8xf32>
    %253 = tpu.matmul %252, %240, %cst_155 {dimension_numbers = #tpu.dot_dimension_numbers<[1], [0], [0], [1], [0, 0, 1, 1], [], []>} : vector<8x8xbf16>, vector<8x8xbf16>, vector<8x8xf32> -> vector<8x8xf32>
    %c0_156 = arith.constant 0 : index
    %c16_157 = arith.constant 16 : index
    %254 = vector.load %arg35[%c0_156, %c16_157] : memref<8x32xf32, #tpu.memory_space<vmem>>, vector<8x8xf32>
    tpu.vector_store %arg35[%c0_156, %c16_157], %253 {strides = array<i32>} : memref<8x32xf32, #tpu.memory_space<vmem>>, vector<8x8xf32>,
    %c0_158 = arith.constant 0 : index
    %c24_159 = arith.constant 24 : index
    %255 = vector.load %arg30[%c0_158, %c24_159] : memref<8x32xf32, #tpu.memory_space<vmem>>, vector<8x8xf32>
    %256 = arith.truncf %255 : vector<8x8xf32> to vector<8x8xbf16>
    %c0_160 = arith.constant 0 : index
    %c24_161 = arith.constant 24 : index
    %257 = vector.load %arg33[%c0_160, %c24_161] : memref<8x32xf32, #tpu.memory_space<vmem>>, vector<8x8xf32>
    %258 = arith.truncf %257 : vector<8x8xf32> to vector<8x8xbf16>
    %c0_162 = arith.constant 0 : index
    %c24_163 = arith.constant 24 : index
    %259 = vector.load %arg34[%c0_162, %c24_163] : memref<8x32xf32, #tpu.memory_space<vmem>>, vector<8x8xf32>
    %260 = arith.truncf %259 : vector<8x8xf32> to vector<8x8xbf16>
    %cst_164 = arith.constant dense<0.000000e+00> : vector<8x8xf32>
    %261 = tpu.matmul %256, %258, %cst_164 {dimension_numbers = #tpu.dot_dimension_numbers<[1], [1], [0], [0], [0, 0, 1, 0], [], []>} : vector<8x8xbf16>, vector<8x8xbf16>, vector<8x8xf32> -> vector<8x8xf32>
    %cst_165 = arith.constant dense<0xFF800000> : vector<8xf32>
    %262 = vector.multi_reduction <maximumf>, %261, %cst_165 [1] : vector<8x8xf32> to vector<8xf32>
    %263 = vector.shape_cast %262 : vector<8xf32> to vector<8x1xf32>
    %264 = vector.broadcast %263 : vector<8x1xf32> to vector<8x8xf32>
    %265 = arith.subf %261, %264 : vector<8x8xf32>
    %266 = math.exp %265 : vector<8x8xf32>
    %cst_166 = arith.constant dense<0.000000e+00> : vector<8xf32>
    %267 = vector.multi_reduction <add>, %266, %cst_166 [1] : vector<8x8xf32> to vector<8xf32>
    %268 = vector.shape_cast %267 : vector<8xf32> to vector<8x1xf32>
    %269 = tpu.reciprocal %268 {approx = true} : vector<8x1xf32> -> vector<8x1xf32>
    %270 = vector.broadcast %269 : vector<8x1xf32> to vector<8x8xf32>
    %271 = arith.mulf %266, %270 : vector<8x8xf32>
    %272 = arith.truncf %271 : vector<8x8xf32> to vector<8x8xbf16>
    %cst_167 = arith.constant dense<0.000000e+00> : vector<8x8xf32>
    %273 = tpu.matmul %272, %260, %cst_167 {dimension_numbers = #tpu.dot_dimension_numbers<[1], [0], [0], [1], [0, 0, 1, 1], [], []>} : vector<8x8xbf16>, vector<8x8xbf16>, vector<8x8xf32> -> vector<8x8xf32>
    %c0_168 = arith.constant 0 : index
    %c24_169 = arith.constant 24 : index
    %274 = vector.load %arg35[%c0_168, %c24_169] : memref<8x32xf32, #tpu.memory_space<vmem>>, vector<8x8xf32>
    tpu.vector_store %arg35[%c0_168, %c24_169], %273 {strides = array<i32>} : memref<8x32xf32, #tpu.memory_space<vmem>>, vector<8x8xf32>,
    %c0_170 = arith.constant 0 : index
    %c0_171 = arith.constant 0 : index
    %275 = vector.load %arg35[%c0_170, %c0_171] : memref<8x32xf32, #tpu.memory_space<vmem>>, vector<8x32xf32>
    %276 = arith.truncf %275 : vector<8x32xf32> to vector<8x32xbf16>
    %c0_172 = arith.constant 0 : index
    %c0_173 = arith.constant 0 : index
    %277 = vector.load %arg21[%c0_172, %c0_173] : memref<32x32xbf16, #tpu.memory_space<vmem>>, vector<32x32xbf16>
    %cst_174 = arith.constant dense<0.000000e+00> : vector<8x32xf32>
    %278 = tpu.matmul %276, %277, %cst_174 {dimension_numbers = #tpu.dot_dimension_numbers<[1], [0], [0], [1], [0, 0, 1, 1], [], []>} : vector<8x32xbf16>, vector<32x32xbf16>, vector<8x32xf32> -> vector<8x32xf32>
    %279 = vector.broadcast %175 : vector<1x32xf32> to vector<8x32xf32>
    %280 = arith.addf %278, %279 : vector<8x32xf32>
    %281 = arith.addf %147, %280 : vector<8x32xf32>
    %c0_175 = arith.constant 0 : index
    %c0_176 = arith.constant 0 : index
    %282 = vector.load %arg23[%c0_175, %c0_176] : memref<1x32xf32, #tpu.memory_space<vmem>>, vector<1x32xf32>
    %c0_177 = arith.constant 0 : index
    %c0_178 = arith.constant 0 : index
    %283 = vector.load %arg24[%c0_177, %c0_178] : memref<1x32xf32, #tpu.memory_space<vmem>>, vector<1x32xf32>
    %cst_179 = arith.constant dense<0.000000e+00> : vector<8xf32>
    %284 = vector.multi_reduction <add>, %281, %cst_179 [1] : vector<8x32xf32> to vector<8xf32>
    %285 = vector.shape_cast %284 : vector<8xf32> to vector<8x1xf32>
    %cst_180 = arith.constant 3.200000e+01 : f32
    %286 = vector.broadcast %cst_180 : f32 to vector<8x1xf32>
    %287 = arith.divf %285, %286 : vector<8x1xf32>
    %288 = vector.broadcast %287 : vector<8x1xf32> to vector<8x32xf32>
    %289 = arith.subf %281, %288 : vector<8x32xf32>
    %290 = arith.mulf %289, %289 : vector<8x32xf32>
    %cst_181 = arith.constant dense<0.000000e+00> : vector<8xf32>
    %291 = vector.multi_reduction <add>, %290, %cst_181 [1] : vector<8x32xf32> to vector<8xf32>
    %292 = vector.shape_cast %291 : vector<8xf32> to vector<8x1xf32>
    %cst_182 = arith.constant 3.200000e+01 : f32
    %293 = vector.broadcast %cst_182 : f32 to vector<8x1xf32>
    %294 = arith.divf %292, %293 : vector<8x1xf32>
    %295 = vector.broadcast %287 : vector<8x1xf32> to vector<8x32xf32>
    %296 = arith.subf %281, %295 : vector<8x32xf32>
    %cst_183 = arith.constant 9.99999974E-6 : f32
    %297 = vector.broadcast %cst_183 : f32 to vector<8x1xf32>
    %298 = arith.addf %294, %297 : vector<8x1xf32>
    %299 = math.rsqrt %298 : vector<8x1xf32>
    %300 = vector.broadcast %299 : vector<8x1xf32> to vector<8x32xf32>
    %301 = arith.mulf %296, %300 : vector<8x32xf32>
    %302 = vector.broadcast %282 : vector<1x32xf32> to vector<8x32xf32>
    %303 = arith.mulf %301, %302 : vector<8x32xf32>
    %304 = vector.broadcast %283 : vector<1x32xf32> to vector<8x32xf32>
    %305 = arith.addf %303, %304 : vector<8x32xf32>
    %306 = arith.truncf %305 : vector<8x32xf32> to vector<8x32xbf16>
    %c0_184 = arith.constant 0 : index
    %c0_185 = arith.constant 0 : index
    %307 = vector.load %arg25[%c0_184, %c0_185] : memref<32x128xbf16, #tpu.memory_space<vmem>>, vector<32x128xbf16>
    %cst_186 = arith.constant dense<0.000000e+00> : vector<8x128xf32>
    %308 = tpu.matmul %306, %307, %cst_186 {dimension_numbers = #tpu.dot_dimension_numbers<[1], [0], [0], [1], [0, 0, 1, 1], [], []>} : vector<8x32xbf16>, vector<32x128xbf16>, vector<8x128xf32> -> vector<8x128xf32>
    %c0_187 = arith.constant 0 : index
    %c0_188 = arith.constant 0 : index
    %309 = vector.load %arg26[%c0_187, %c0_188] : memref<1x128xf32, #tpu.memory_space<vmem>>, vector<1x128xf32>
    %310 = vector.broadcast %309 : vector<1x128xf32> to vector<8x128xf32>
    %311 = arith.addf %308, %310 : vector<8x128xf32>
    %cst_189 = arith.constant 1.702000e+00 : f32
    %312 = vector.broadcast %cst_189 : f32 to vector<8x128xf32>
    %313 = arith.mulf %312, %311 : vector<8x128xf32>
    %314 = arith.negf %313 : vector<8x128xf32>
    %315 = math.exp %314 : vector<8x128xf32>
    %cst_190 = arith.constant 1.000000e+00 : f32
    %316 = vector.broadcast %cst_190 : f32 to vector<8x128xf32>
    %317 = arith.addf %316, %315 : vector<8x128xf32>
    %318 = arith.divf %316, %317 : vector<8x128xf32>
    %319 = arith.mulf %311, %318 : vector<8x128xf32>
    %320 = arith.truncf %319 : vector<8x128xf32> to vector<8x128xbf16>
    %c0_191 = arith.constant 0 : index
    %c0_192 = arith.constant 0 : index
    %321 = vector.load %arg27[%c0_191, %c0_192] : memref<128x32xbf16, #tpu.memory_space<vmem>>, vector<128x32xbf16>
    %cst_193 = arith.constant dense<0.000000e+00> : vector<8x32xf32>
    %322 = tpu.matmul %320, %321, %cst_193 {dimension_numbers = #tpu.dot_dimension_numbers<[1], [0], [0], [1], [0, 0, 1, 1], [], []>} : vector<8x128xbf16>, vector<128x32xbf16>, vector<8x32xf32> -> vector<8x32xf32>
    %323 = arith.addf %281, %322 : vector<8x32xf32>
    %c0_194 = arith.constant 0 : index
    %c0_195 = arith.constant 0 : index
    %324 = vector.load %arg28[%c0_194, %c0_195] : memref<1x32xf32, #tpu.memory_space<vmem>>, vector<1x32xf32>
    %325 = vector.broadcast %324 : vector<1x32xf32> to vector<8x32xf32>
    %326 = arith.addf %323, %325 : vector<8x32xf32>
    %c0_196 = arith.constant 0 : index
    %c0_197 = arith.constant 0 : index
    %c0_198 = arith.constant 0 : index
    %327 = vector.load %arg29[%c0_196, %c0_197, %c0_198] : memref<1x8x32xf32, #tpu.memory_space<vmem>>, vector<1x8x32xf32>
    %328 = vector.shape_cast %327 : vector<1x8x32xf32> to vector<8x32xf32>
    %329 = vector.shape_cast %326 : vector<8x32xf32> to vector<1x8x32xf32>
    tpu.vector_store %arg29[%c0_196, %c0_197, %c0_198], %329 {strides = array<i32>} : memref<1x8x32xf32, #tpu.memory_space<vmem>>, vector<1x8x32xf32>,
    return
  }
  func.func @transform_0(%arg0: i32) -> (i32, i32, i32) {
    %c0_i32 = arith.constant 0 : i32
    %c0_i32_0 = arith.constant 0 : i32
    %c0_i32_1 = arith.constant 0 : i32
    return %arg0, %c0_i32, %c0_i32_0 : i32, i32, i32
  }
  func.func @transform_1(%arg0: i32) -> (i32, i32, i32) {
    %c0_i32 = arith.constant 0 : i32
    %c0_i32_0 = arith.constant 0 : i32
    %c0_i32_1 = arith.constant 0 : i32
    return %arg0, %c0_i32, %c0_i32_0 : i32, i32, i32
  }
  func.func @transform_2(%arg0: i32) -> (i32, i32) {
    %c0_i32 = arith.constant 0 : i32
    %c0_i32_0 = arith.constant 0 : i32
    %c0_i32_1 = arith.constant 0 : i32
    return %c0_i32, %c0_i32_0 : i32, i32
  }
  func.func @transform_3(%arg0: i32) -> (i32, i32) {
    %c0_i32 = arith.constant 0 : i32
    %c0_i32_0 = arith.constant 0 : i32
    %c0_i32_1 = arith.constant 0 : i32
    return %c0_i32, %c0_i32_0 : i32, i32
  }
  func.func @transform_4(%arg0: i32) -> (i32, i32) {
    %c0_i32 = arith.constant 0 : i32
    %c0_i32_0 = arith.constant 0 : i32
    %c0_i32_1 = arith.constant 0 : i32
    return %c0_i32, %c0_i32_0 : i32, i32
  }
  func.func @transform_5(%arg0: i32) -> (i32, i32) {
    %c0_i32 = arith.constant 0 : i32
    %c0_i32_0 = arith.constant 0 : i32
    %c0_i32_1 = arith.constant 0 : i32
    return %c0_i32, %c0_i32_0 : i32, i32
  }
  func.func @transform_6(%arg0: i32) -> (i32, i32) {
    %c0_i32 = arith.constant 0 : i32
    %c0_i32_0 = arith.constant 0 : i32
    %c0_i32_1 = arith.constant 0 : i32
    return %c0_i32, %c0_i32_0 : i32, i32
  }
  func.func @transform_7(%arg0: i32) -> (i32, i32) {
    %c0_i32 = arith.constant 0 : i32
    %c0_i32_0 = arith.constant 0 : i32
    %c0_i32_1 = arith.constant 0 : i32
    return %c0_i32, %c0_i32_0 : i32, i32
  }
  func.func @transform_8(%arg0: i32) -> (i32, i32) {
    %c0_i32 = arith.constant 0 : i32
    %c0_i32_0 = arith.constant 0 : i32
    %c0_i32_1 = arith.constant 0 : i32
    return %c0_i32, %c0_i32_0 : i32, i32
  }
  func.func @transform_9(%arg0: i32) -> (i32, i32) {
    %c0_i32 = arith.constant 0 : i32
    %c0_i32_0 = arith.constant 0 : i32
    %c0_i32_1 = arith.constant 0 : i32
    return %c0_i32, %c0_i32_0 : i32, i32
  }
  func.func @transform_10(%arg0: i32) -> (i32, i32) {
    %c0_i32 = arith.constant 0 : i32
    %c0_i32_0 = arith.constant 0 : i32
    %c0_i32_1 = arith.constant 0 : i32
    return %c0_i32, %c0_i32_0 : i32, i32
  }
  func.func @transform_11(%arg0: i32) -> (i32, i32) {
    %c0_i32 = arith.constant 0 : i32
    %c0_i32_0 = arith.constant 0 : i32
    %c0_i32_1 = arith.constant 0 : i32
    return %c0_i32, %c0_i32_0 : i32, i32
  }
  func.func @transform_12(%arg0: i32) -> (i32, i32) {
    %c0_i32 = arith.constant 0 : i32
    %c0_i32_0 = arith.constant 0 : i32
    %c0_i32_1 = arith.constant 0 : i32
    return %c0_i32, %c0_i32_0 : i32, i32
  }
  func.func @transform_13(%arg0: i32) -> (i32, i32) {
    %c0_i32 = arith.constant 0 : i32
    %c0_i32_0 = arith.constant 0 : i32
    %c0_i32_1 = arith.constant 0 : i32
    return %c0_i32, %c0_i32_0 : i32, i32
  }
  func.func @transform_14(%arg0: i32) -> (i32, i32) {
    %c0_i32 = arith.constant 0 : i32
    %c0_i32_0 = arith.constant 0 : i32
    %c0_i32_1 = arith.constant 0 : i32
    return %c0_i32, %c0_i32_0 : i32, i32
  }
  func.func @transform_15(%arg0: i32) -> (i32, i32) {
    %c0_i32 = arith.constant 0 : i32
    %c0_i32_0 = arith.constant 0 : i32
    %c0_i32_1 = arith.constant 0 : i32
    return %c0_i32, %c0_i32_0 : i32, i32
  }
  func.func @transform_16(%arg0: i32) -> (i32, i32) {
    %c0_i32 = arith.constant 0 : i32
    %c0_i32_0 = arith.constant 0 : i32
    %c0_i32_1 = arith.constant 0 : i32
    return %c0_i32, %c0_i32_0 : i32, i32
  }
  func.func @transform_17(%arg0: i32) -> (i32, i32) {
    %c0_i32 = arith.constant 0 : i32
    %c0_i32_0 = arith.constant 0 : i32
    %c0_i32_1 = arith.constant 0 : i32
    return %c0_i32, %c0_i32_0 : i32, i32
  }
  func.func @transform_18(%arg0: i32) -> (i32, i32) {
    %c0_i32 = arith.constant 0 : i32
    %c0_i32_0 = arith.constant 0 : i32
    %c0_i32_1 = arith.constant 0 : i32
    return %c0_i32, %c0_i32_0 : i32, i32
  }
  func.func @transform_19(%arg0: i32) -> (i32, i32) {
    %c0_i32 = arith.constant 0 : i32
    %c0_i32_0 = arith.constant 0 : i32
    %c0_i32_1 = arith.constant 0 : i32
    return %c0_i32, %c0_i32_0 : i32, i32
  }
  func.func @transform_20(%arg0: i32) -> (i32, i32) {
    %c0_i32 = arith.constant 0 : i32
    %c0_i32_0 = arith.constant 0 : i32
    %c0_i32_1 = arith.constant 0 : i32
    return %c0_i32, %c0_i32_0 : i32, i32
  }
  func.func @transform_21(%arg0: i32) -> (i32, i32) {
    %c0_i32 = arith.constant 0 : i32
    %c0_i32_0 = arith.constant 0 : i32
    %c0_i32_1 = arith.constant 0 : i32
    return %c0_i32, %c0_i32_0 : i32, i32
  }
  func.func @transform_22(%arg0: i32) -> (i32, i32) {
    %c0_i32 = arith.constant 0 : i32
    %c0_i32_0 = arith.constant 0 : i32
    %c0_i32_1 = arith.constant 0 : i32
    return %c0_i32, %c0_i32_0 : i32, i32
  }
  func.func @transform_23(%arg0: i32) -> (i32, i32) {
    %c0_i32 = arith.constant 0 : i32
    %c0_i32_0 = arith.constant 0 : i32
    %c0_i32_1 = arith.constant 0 : i32
    return %c0_i32, %c0_i32_0 : i32, i32
  }
  func.func @transform_24(%arg0: i32) -> (i32, i32) {
    %c0_i32 = arith.constant 0 : i32
    %c0_i32_0 = arith.constant 0 : i32
    %c0_i32_1 = arith.constant 0 : i32
    return %c0_i32, %c0_i32_0 : i32, i32
  }
  func.func @transform_25(%arg0: i32) -> (i32, i32) {
    %c0_i32 = arith.constant 0 : i32
    %c0_i32_0 = arith.constant 0 : i32
    %c0_i32_1 = arith.constant 0 : i32
    return %c0_i32, %c0_i32_0 : i32, i32
  }
  func.func @transform_26(%arg0: i32) -> (i32, i32) {
    %c0_i32 = arith.constant 0 : i32
    %c0_i32_0 = arith.constant 0 : i32
    %c0_i32_1 = arith.constant 0 : i32
    return %c0_i32, %c0_i32_0 : i32, i32
  }
  func.func @transform_27(%arg0: i32) -> (i32, i32) {
    %c0_i32 = arith.constant 0 : i32
    %c0_i32_0 = arith.constant 0 : i32
    %c0_i32_1 = arith.constant 0 : i32
    return %c0_i32, %c0_i32_0 : i32, i32
  }
  func.func @transform_28(%arg0: i32) -> (i32, i32, i32) {
    %c0_i32 = arith.constant 0 : i32
    %c0_i32_0 = arith.constant 0 : i32
    %c0_i32_1 = arith.constant 0 : i32
    return %arg0, %c0_i32, %c0_i32_0 : i32, i32, i32
  }
}

module attributes {stable_mosaic.version = 11 : i64} {
  func.func @_decoder_layer_kernel(%arg0: i32, %arg1: memref<1x8x32xf32, #tpu.memory_space<vmem>>, %arg2: memref<1x8x32xf32, #tpu.memory_space<vmem>>, %arg3: memref<1x32xf32, #tpu.memory_space<vmem>>, %arg4: memref<1x32xf32, #tpu.memory_space<vmem>>, %arg5: memref<32x32xbf16, #tpu.memory_space<vmem>>, %arg6: memref<32x32xbf16, #tpu.memory_space<vmem>>, %arg7: memref<32x32xbf16, #tpu.memory_space<vmem>>, %arg8: memref<1x32xf32, #tpu.memory_space<vmem>>, %arg9: memref<1x32xf32, #tpu.memory_space<vmem>>, %arg10: memref<1x32xf32, #tpu.memory_space<vmem>>, %arg11: memref<32x32xbf16, #tpu.memory_space<vmem>>, %arg12: memref<1x32xf32, #tpu.memory_space<vmem>>, %arg13: memref<1x32xf32, #tpu.memory_space<vmem>>, %arg14: memref<1x32xf32, #tpu.memory_space<vmem>>, %arg15: memref<32x32xbf16, #tpu.memory_space<vmem>>, %arg16: memref<32x32xbf16, #tpu.memory_space<vmem>>, %arg17: memref<32x32xbf16, #tpu.memory_space<vmem>>, %arg18: memref<1x32xf32, #tpu.memory_space<vmem>>, %arg19: memref<1x32xf32, #tpu.memory_space<vmem>>, %arg20: memref<1x32xf32, #tpu.memory_space<vmem>>, %arg21: memref<32x32xbf16, #tpu.memory_space<vmem>>, %arg22: memref<1x32xf32, #tpu.memory_space<vmem>>, %arg23: memref<1x32xf32, #tpu.memory_space<vmem>>, %arg24: memref<1x32xf32, #tpu.memory_space<vmem>>, %arg25: memref<32x128xbf16, #tpu.memory_space<vmem>>, %arg26: memref<1x128xf32, #tpu.memory_space<vmem>>, %arg27: memref<128x32xbf16, #tpu.memory_space<vmem>>, %arg28: memref<1x32xf32, #tpu.memory_space<vmem>>, %arg29: memref<1x8x32xf32, #tpu.memory_space<vmem>>, %arg30: memref<8x32xf32, #tpu.memory_space<vmem>>, %arg31: memref<8x32xf32, #tpu.memory_space<vmem>>, %arg32: memref<8x32xf32, #tpu.memory_space<vmem>>, %arg33: memref<8x32xf32, #tpu.memory_space<vmem>>, %arg34: memref<8x32xf32, #tpu.memory_space<vmem>>, %arg35: memref<8x32xf32, #tpu.memory_space<vmem>>) attributes {dimension_semantics = [#tpu.dimension_semantics<parallel>], iteration_bounds = array<i64: 2>, scalar_prefetch = 0 : i64, scratch_operands = 6 : i64, tpu.core_type = #tpu.core_type<tc>, window_params = [{transform_indices = @transform_0, window_bounds = array<i64: 1, 8, 32>}, {transform_indices = @transform_1, window_bounds = array<i64: 1, 8, 32>}, {pipeline_mode = #tpu.pipeline_mode<synchronous>, transform_indices = @transform_2, window_bounds = array<i64: 1, 32>}, {pipeline_mode = #tpu.pipeline_mode<synchronous>, transform_indices = @transform_3, window_bounds = array<i64: 1, 32>}, {pipeline_mode = #tpu.pipeline_mode<synchronous>, transform_indices = @transform_4, window_bounds = array<i64: 32, 32>}, {pipeline_mode = #tpu.pipeline_mode<synchronous>, transform_indices = @transform_5, window_bounds = array<i64: 32, 32>}, {pipeline_mode = #tpu.pipeline_mode<synchronous>, transform_indices = @transform_6, window_bounds = array<i64: 32, 32>}, {pipeline_mode = #tpu.pipeline_mode<synchronous>, transform_indices = @transform_7, window_bounds = array<i64: 1, 32>}, {pipeline_mode = #tpu.pipeline_mode<synchronous>, transform_indices = @transform_8, window_bounds = array<i64: 1, 32>}, {pipeline_mode = #tpu.pipeline_mode<synchronous>, transform_indices = @transform_9, window_bounds = array<i64: 1, 32>}, {pipeline_mode = #tpu.pipeline_mode<synchronous>, transform_indices = @transform_10, window_bounds = array<i64: 32, 32>}, {pipeline_mode = #tpu.pipeline_mode<synchronous>, transform_indices = @transform_11, window_bounds = array<i64: 1, 32>}, {pipeline_mode = #tpu.pipeline_mode<synchronous>, transform_indices = @transform_12, window_bounds = array<i64: 1, 32>}, {pipeline_mode = #tpu.pipeline_mode<synchronous>, transform_indices = @transform_13, window_bounds = array<i64: 1, 32>}, {pipeline_mode = #tpu.pipeline_mode<synchronous>, transform_indices = @transform_14, window_bounds = array<i64: 32, 32>}, {pipeline_mode = #tpu.pipeline_mode<synchronous>, transform_indices = @transform_15, window_bounds = array<i64: 32, 32>}, {pipeline_mode = #tpu.pipeline_mode<synchronous>, transform_indices = @transform_16, window_bounds = array<i64: 32, 32>}, {pipeline_mode = #tpu.pipeline_mode<synchronous>, transform_indices = @transform_17, window_bounds = array<i64: 1, 32>}, {pipeline_mode = #tpu.pipeline_mode<synchronous>, transform_indices = @transform_18, window_bounds = array<i64: 1, 32>}, {pipeline_mode = #tpu.pipeline_mode<synchronous>, transform_indices = @transform_19, window_bounds = array<i64: 1, 32>}, {pipeline_mode = #tpu.pipeline_mode<synchronous>, transform_indices = @transform_20, window_bounds = array<i64: 32, 32>}, {pipeline_mode = #tpu.pipeline_mode<synchronous>, transform_indices = @transform_21, window_bounds = array<i64: 1, 32>}, {pipeline_mode = #tpu.pipeline_mode<synchronous>, transform_indices = @transform_22, window_bounds = array<i64: 1, 32>}, {pipeline_mode = #tpu.pipeline_mode<synchronous>, transform_indices = @transform_23, window_bounds = array<i64: 1, 32>}, {pipeline_mode = #tpu.pipeline_mode<synchronous>, transform_indices = @transform_24, window_bounds = array<i64: 32, 128>}, {pipeline_mode = #tpu.pipeline_mode<synchronous>, transform_indices = @transform_25, window_bounds = array<i64: 1, 128>}, {pipeline_mode = #tpu.pipeline_mode<synchronous>, transform_indices = @transform_26, window_bounds = array<i64: 128, 32>}, {pipeline_mode = #tpu.pipeline_mode<synchronous>, transform_indices = @transform_27, window_bounds = array<i64: 1, 32>}, {transform_indices = @transform_28, window_bounds = array<i64: 1, 8, 32>}]} {
    %c0 = arith.constant 0 : index
    %c0_0 = arith.constant 0 : index
    %c0_1 = arith.constant 0 : index
    %0 = vector.load %arg1[%c0, %c0_0, %c0_1] : memref<1x8x32xf32, #tpu.memory_space<vmem>>, vector<1x8x32xf32>
    %1 = vector.shape_cast %0 : vector<1x8x32xf32> to vector<8x32xf32>
    %c0_2 = arith.constant 0 : index
    %c0_3 = arith.constant 0 : index
    %c0_4 = arith.constant 0 : index
    %2 = vector.load %arg2[%c0_2, %c0_3, %c0_4] : memref<1x8x32xf32, #tpu.memory_space<vmem>>, vector<1x8x32xf32>
    %3 = vector.shape_cast %2 : vector<1x8x32xf32> to vector<8x32xf32>
    %c0_5 = arith.constant 0 : index
    %c0_6 = arith.constant 0 : index
    %4 = vector.load %arg3[%c0_5, %c0_6] : memref<1x32xf32, #tpu.memory_space<vmem>>, vector<1x32xf32>
    %c0_7 = arith.constant 0 : index
    %c0_8 = arith.constant 0 : index
    %5 = vector.load %arg4[%c0_7, %c0_8] : memref<1x32xf32, #tpu.memory_space<vmem>>, vector<1x32xf32>
    %cst = arith.constant dense<0.000000e+00> : vector<8xf32>
    %6 = vector.multi_reduction <add>, %1, %cst [1] : vector<8x32xf32> to vector<8xf32>
    %7 = vector.shape_cast %6 : vector<8xf32> to vector<8x1xf32>
    %cst_9 = arith.constant 3.200000e+01 : f32
    %8 = vector.broadcast %cst_9 : f32 to vector<8x1xf32>
    %9 = arith.divf %7, %8 : vector<8x1xf32>
    %10 = vector.broadcast %9 : vector<8x1xf32> to vector<8x32xf32>
    %11 = arith.subf %1, %10 : vector<8x32xf32>
    %12 = arith.mulf %11, %11 : vector<8x32xf32>
    %cst_10 = arith.constant dense<0.000000e+00> : vector<8xf32>
    %13 = vector.multi_reduction <add>, %12, %cst_10 [1] : vector<8x32xf32> to vector<8xf32>
    %14 = vector.shape_cast %13 : vector<8xf32> to vector<8x1xf32>
    %cst_11 = arith.constant 3.200000e+01 : f32
    %15 = vector.broadcast %cst_11 : f32 to vector<8x1xf32>
    %16 = arith.divf %14, %15 : vector<8x1xf32>
    %17 = vector.broadcast %9 : vector<8x1xf32> to vector<8x32xf32>
    %18 = arith.subf %1, %17 : vector<8x32xf32>
    %cst_12 = arith.constant 9.99999974E-6 : f32
    %19 = vector.broadcast %cst_12 : f32 to vector<8x1xf32>
    %20 = arith.addf %16, %19 : vector<8x1xf32>
    %21 = math.rsqrt %20 : vector<8x1xf32>
    %22 = vector.broadcast %21 : vector<8x1xf32> to vector<8x32xf32>
    %23 = arith.mulf %18, %22 : vector<8x32xf32>
    %24 = vector.broadcast %4 : vector<1x32xf32> to vector<8x32xf32>
    %25 = arith.mulf %23, %24 : vector<8x32xf32>
    %26 = vector.broadcast %5 : vector<1x32xf32> to vector<8x32xf32>
    %27 = arith.addf %25, %26 : vector<8x32xf32>
    %c0_13 = arith.constant 0 : index
    %c0_14 = arith.constant 0 : index
    %28 = vector.load %arg8[%c0_13, %c0_14] : memref<1x32xf32, #tpu.memory_space<vmem>>, vector<1x32xf32>
    %c0_15 = arith.constant 0 : index
    %c0_16 = arith.constant 0 : index
    %29 = vector.load %arg9[%c0_15, %c0_16] : memref<1x32xf32, #tpu.memory_space<vmem>>, vector<1x32xf32>
    %c0_17 = arith.constant 0 : index
    %c0_18 = arith.constant 0 : index
    %30 = vector.load %arg10[%c0_17, %c0_18] : memref<1x32xf32, #tpu.memory_space<vmem>>, vector<1x32xf32>
    %c0_19 = arith.constant 0 : index
    %c0_20 = arith.constant 0 : index
    %31 = vector.load %arg12[%c0_19, %c0_20] : memref<1x32xf32, #tpu.memory_space<vmem>>, vector<1x32xf32>
    %32 = arith.truncf %27 : vector<8x32xf32> to vector<8x32xbf16>
    %33 = arith.truncf %27 : vector<8x32xf32> to vector<8x32xbf16>
    %c0_21 = arith.constant 0 : index
    %c0_22 = arith.constant 0 : index
    %34 = vector.load %arg5[%c0_21, %c0_22] : memref<32x32xbf16, #tpu.memory_space<vmem>>, vector<32x32xbf16>
    %cst_23 = arith.constant dense<0.000000e+00> : vector<8x32xf32>
    %35 = tpu.matmul %32, %34, %cst_23 {dimension_numbers = #tpu.dot_dimension_numbers<[1], [0], [0], [1], [0, 0, 1, 1], [], []>} : vector<8x32xbf16>, vector<32x32xbf16>, vector<8x32xf32> -> vector<8x32xf32>
    %36 = vector.broadcast %28 : vector<1x32xf32> to vector<8x32xf32>
    %37 = arith.addf %35, %36 : vector<8x32xf32>
    %cst_24 = arith.constant 0.353553385 : f32
    %38 = vector.broadcast %cst_24 : f32 to vector<8x32xf32>
    %39 = arith.mulf %37, %38 : vector<8x32xf32>
    %c0_25 = arith.constant 0 : index
    %c0_26 = arith.constant 0 : index
    %40 = vector.load %arg30[%c0_25, %c0_26] : memref<8x32xf32, #tpu.memory_space<vmem>>, vector<8x32xf32>
    tpu.vector_store %arg30[%c0_25, %c0_26], %39 {strides = array<i32>} : memref<8x32xf32, #tpu.memory_space<vmem>>, vector<8x32xf32>,
    %c0_27 = arith.constant 0 : index
    %c0_28 = arith.constant 0 : index
    %41 = vector.load %arg6[%c0_27, %c0_28] : memref<32x32xbf16, #tpu.memory_space<vmem>>, vector<32x32xbf16>
    %cst_29 = arith.constant dense<0.000000e+00> : vector<8x32xf32>
    %42 = tpu.matmul %33, %41, %cst_29 {dimension_numbers = #tpu.dot_dimension_numbers<[1], [0], [0], [1], [0, 0, 1, 1], [], []>} : vector<8x32xbf16>, vector<32x32xbf16>, vector<8x32xf32> -> vector<8x32xf32>
    %43 = vector.broadcast %29 : vector<1x32xf32> to vector<8x32xf32>
    %44 = arith.addf %42, %43 : vector<8x32xf32>
    %c0_30 = arith.constant 0 : index
    %c0_31 = arith.constant 0 : index
    %45 = vector.load %arg31[%c0_30, %c0_31] : memref<8x32xf32, #tpu.memory_space<vmem>>, vector<8x32xf32>
    tpu.vector_store %arg31[%c0_30, %c0_31], %44 {strides = array<i32>} : memref<8x32xf32, #tpu.memory_space<vmem>>, vector<8x32xf32>,
    %c0_32 = arith.constant 0 : index
    %c0_33 = arith.constant 0 : index
    %46 = vector.load %arg7[%c0_32, %c0_33] : memref<32x32xbf16, #tpu.memory_space<vmem>>, vector<32x32xbf16>
    %cst_34 = arith.constant dense<0.000000e+00> : vector<8x32xf32>
    %47 = tpu.matmul %33, %46, %cst_34 {dimension_numbers = #tpu.dot_dimension_numbers<[1], [0], [0], [1], [0, 0, 1, 1], [], []>} : vector<8x32xbf16>, vector<32x32xbf16>, vector<8x32xf32> -> vector<8x32xf32>
    %48 = vector.broadcast %30 : vector<1x32xf32> to vector<8x32xf32>
    %49 = arith.addf %47, %48 : vector<8x32xf32>
    %c0_35 = arith.constant 0 : index
    %c0_36 = arith.constant 0 : index
    %50 = vector.load %arg32[%c0_35, %c0_36] : memref<8x32xf32, #tpu.memory_space<vmem>>, vector<8x32xf32>
    tpu.vector_store %arg32[%c0_35, %c0_36], %49 {strides = array<i32>} : memref<8x32xf32, #tpu.memory_space<vmem>>, vector<8x32xf32>,
    %51 = tpu.iota {dimensions = array<i32: 0>} : vector<8x8xi32>
    %52 = tpu.iota {dimensions = array<i32: 1>} : vector<8x8xi32>
    %53 = arith.cmpi sgt, %52, %51 : vector<8x8xi32>
    %cst_37 = arith.constant -1.000000e+30 : f32
    %cst_38 = arith.constant 0.000000e+00 : f32
    %54 = vector.broadcast %cst_37 : f32 to vector<8x8xf32>
    %55 = vector.broadcast %cst_38 : f32 to vector<8x8xf32>
    %56 = arith.select %53, %54, %55 : vector<8x8xi1>, vector<8x8xf32>
    %c0_39 = arith.constant 0 : index
    %c0_40 = arith.constant 0 : index
    %57 = vector.load %arg30[%c0_39, %c0_40] : memref<8x32xf32, #tpu.memory_space<vmem>>, vector<8x8xf32>
    %58 = arith.truncf %57 : vector<8x8xf32> to vector<8x8xbf16>
    %c0_41 = arith.constant 0 : index
    %c0_42 = arith.constant 0 : index
    %59 = vector.load %arg31[%c0_41, %c0_42] : memref<8x32xf32, #tpu.memory_space<vmem>>, vector<8x8xf32>
    %60 = arith.truncf %59 : vector<8x8xf32> to vector<8x8xbf16>
    %c0_43 = arith.constant 0 : index
    %c0_44 = arith.constant 0 : index
    %61 = vector.load %arg32[%c0_43, %c0_44] : memref<8x32xf32, #tpu.memory_space<vmem>>, vector<8x8xf32>
    %62 = arith.truncf %61 : vector<8x8xf32> to vector<8x8xbf16>
    %cst_45 = arith.constant dense<0.000000e+00> : vector<8x8xf32>
    %63 = tpu.matmul %58, %60, %cst_45 {dimension_numbers = #tpu.dot_dimension_numbers<[1], [1], [0], [0], [0, 0, 1, 0], [], []>} : vector<8x8xbf16>, vector<8x8xbf16>, vector<8x8xf32> -> vector<8x8xf32>
    %64 = arith.addf %63, %56 : vector<8x8xf32>
    %cst_46 = arith.constant dense<0xFF800000> : vector<8xf32>
    %65 = vector.multi_reduction <maximumf>, %64, %cst_46 [1] : vector<8x8xf32> to vector<8xf32>
    %66 = vector.shape_cast %65 : vector<8xf32> to vector<8x1xf32>
    %67 = vector.broadcast %66 : vector<8x1xf32> to vector<8x8xf32>
    %68 = arith.subf %64, %67 : vector<8x8xf32>
    %69 = math.exp %68 : vector<8x8xf32>
    %cst_47 = arith.constant dense<0.000000e+00> : vector<8xf32>
    %70 = vector.multi_reduction <add>, %69, %cst_47 [1] : vector<8x8xf32> to vector<8xf32>
    %71 = vector.shape_cast %70 : vector<8xf32> to vector<8x1xf32>
    %72 = tpu.reciprocal %71 {approx = true} : vector<8x1xf32> -> vector<8x1xf32>
    %73 = vector.broadcast %72 : vector<8x1xf32> to vector<8x8xf32>
    %74 = arith.mulf %69, %73 : vector<8x8xf32>
    %75 = arith.truncf %74 : vector<8x8xf32> to vector<8x8xbf16>
    %cst_48 = arith.constant dense<0.000000e+00> : vector<8x8xf32>
    %76 = tpu.matmul %75, %62, %cst_48 {dimension_numbers = #tpu.dot_dimension_numbers<[1], [0], [0], [1], [0, 0, 1, 1], [], []>} : vector<8x8xbf16>, vector<8x8xbf16>, vector<8x8xf32> -> vector<8x8xf32>
    %c0_49 = arith.constant 0 : index
    %c0_50 = arith.constant 0 : index
    %77 = vector.load %arg35[%c0_49, %c0_50] : memref<8x32xf32, #tpu.memory_space<vmem>>, vector<8x8xf32>
    tpu.vector_store %arg35[%c0_49, %c0_50], %76 {strides = array<i32>} : memref<8x32xf32, #tpu.memory_space<vmem>>, vector<8x8xf32>,
    %c0_51 = arith.constant 0 : index
    %c8 = arith.constant 8 : index
    %78 = vector.load %arg30[%c0_51, %c8] : memref<8x32xf32, #tpu.memory_space<vmem>>, vector<8x8xf32>
    %79 = arith.truncf %78 : vector<8x8xf32> to vector<8x8xbf16>
    %c0_52 = arith.constant 0 : index
    %c8_53 = arith.constant 8 : index
    %80 = vector.load %arg31[%c0_52, %c8_53] : memref<8x32xf32, #tpu.memory_space<vmem>>, vector<8x8xf32>
    %81 = arith.truncf %80 : vector<8x8xf32> to vector<8x8xbf16>
    %c0_54 = arith.constant 0 : index
    %c8_55 = arith.constant 8 : index
    %82 = vector.load %arg32[%c0_54, %c8_55] : memref<8x32xf32, #tpu.memory_space<vmem>>, vector<8x8xf32>
    %83 = arith.truncf %82 : vector<8x8xf32> to vector<8x8xbf16>
    %cst_56 = arith.constant dense<0.000000e+00> : vector<8x8xf32>
    %84 = tpu.matmul %79, %81, %cst_56 {dimension_numbers = #tpu.dot_dimension_numbers<[1], [1], [0], [0], [0, 0, 1, 0], [], []>} : vector<8x8xbf16>, vector<8x8xbf16>, vector<8x8xf32> -> vector<8x8xf32>
    %85 = arith.addf %84, %56 : vector<8x8xf32>
    %cst_57 = arith.constant dense<0xFF800000> : vector<8xf32>
    %86 = vector.multi_reduction <maximumf>, %85, %cst_57 [1] : vector<8x8xf32> to vector<8xf32>
    %87 = vector.shape_cast %86 : vector<8xf32> to vector<8x1xf32>
    %88 = vector.broadcast %87 : vector<8x1xf32> to vector<8x8xf32>
    %89 = arith.subf %85, %88 : vector<8x8xf32>
    %90 = math.exp %89 : vector<8x8xf32>
    %cst_58 = arith.constant dense<0.000000e+00> : vector<8xf32>
    %91 = vector.multi_reduction <add>, %90, %cst_58 [1] : vector<8x8xf32> to vector<8xf32>
    %92 = vector.shape_cast %91 : vector<8xf32> to vector<8x1xf32>
    %93 = tpu.reciprocal %92 {approx = true} : vector<8x1xf32> -> vector<8x1xf32>
    %94 = vector.broadcast %93 : vector<8x1xf32> to vector<8x8xf32>
    %95 = arith.mulf %90, %94 : vector<8x8xf32>
    %96 = arith.truncf %95 : vector<8x8xf32> to vector<8x8xbf16>
    %cst_59 = arith.constant dense<0.000000e+00> : vector<8x8xf32>
    %97 = tpu.matmul %96, %83, %cst_59 {dimension_numbers = #tpu.dot_dimension_numbers<[1], [0], [0], [1], [0, 0, 1, 1], [], []>} : vector<8x8xbf16>, vector<8x8xbf16>, vector<8x8xf32> -> vector<8x8xf32>
    %c0_60 = arith.constant 0 : index
    %c8_61 = arith.constant 8 : index
    %98 = vector.load %arg35[%c0_60, %c8_61] : memref<8x32xf32, #tpu.memory_space<vmem>>, vector<8x8xf32>
    tpu.vector_store %arg35[%c0_60, %c8_61], %97 {strides = array<i32>} : memref<8x32xf32, #tpu.memory_space<vmem>>, vector<8x8xf32>,
    %c0_62 = arith.constant 0 : index
    %c16 = arith.constant 16 : index
    %99 = vector.load %arg30[%c0_62, %c16] : memref<8x32xf32, #tpu.memory_space<vmem>>, vector<8x8xf32>
    %100 = arith.truncf %99 : vector<8x8xf32> to vector<8x8xbf16>
    %c0_63 = arith.constant 0 : index
    %c16_64 = arith.constant 16 : index
    %101 = vector.load %arg31[%c0_63, %c16_64] : memref<8x32xf32, #tpu.memory_space<vmem>>, vector<8x8xf32>
    %102 = arith.truncf %101 : vector<8x8xf32> to vector<8x8xbf16>
    %c0_65 = arith.constant 0 : index
    %c16_66 = arith.constant 16 : index
    %103 = vector.load %arg32[%c0_65, %c16_66] : memref<8x32xf32, #tpu.memory_space<vmem>>, vector<8x8xf32>
    %104 = arith.truncf %103 : vector<8x8xf32> to vector<8x8xbf16>
    %cst_67 = arith.constant dense<0.000000e+00> : vector<8x8xf32>
    %105 = tpu.matmul %100, %102, %cst_67 {dimension_numbers = #tpu.dot_dimension_numbers<[1], [1], [0], [0], [0, 0, 1, 0], [], []>} : vector<8x8xbf16>, vector<8x8xbf16>, vector<8x8xf32> -> vector<8x8xf32>
    %106 = arith.addf %105, %56 : vector<8x8xf32>
    %cst_68 = arith.constant dense<0xFF800000> : vector<8xf32>
    %107 = vector.multi_reduction <maximumf>, %106, %cst_68 [1] : vector<8x8xf32> to vector<8xf32>
    %108 = vector.shape_cast %107 : vector<8xf32> to vector<8x1xf32>
    %109 = vector.broadcast %108 : vector<8x1xf32> to vector<8x8xf32>
    %110 = arith.subf %106, %109 : vector<8x8xf32>
    %111 = math.exp %110 : vector<8x8xf32>
    %cst_69 = arith.constant dense<0.000000e+00> : vector<8xf32>
    %112 = vector.multi_reduction <add>, %111, %cst_69 [1] : vector<8x8xf32> to vector<8xf32>
    %113 = vector.shape_cast %112 : vector<8xf32> to vector<8x1xf32>
    %114 = tpu.reciprocal %113 {approx = true} : vector<8x1xf32> -> vector<8x1xf32>
    %115 = vector.broadcast %114 : vector<8x1xf32> to vector<8x8xf32>
    %116 = arith.mulf %111, %115 : vector<8x8xf32>
    %117 = arith.truncf %116 : vector<8x8xf32> to vector<8x8xbf16>
    %cst_70 = arith.constant dense<0.000000e+00> : vector<8x8xf32>
    %118 = tpu.matmul %117, %104, %cst_70 {dimension_numbers = #tpu.dot_dimension_numbers<[1], [0], [0], [1], [0, 0, 1, 1], [], []>} : vector<8x8xbf16>, vector<8x8xbf16>, vector<8x8xf32> -> vector<8x8xf32>
    %c0_71 = arith.constant 0 : index
    %c16_72 = arith.constant 16 : index
    %119 = vector.load %arg35[%c0_71, %c16_72] : memref<8x32xf32, #tpu.memory_space<vmem>>, vector<8x8xf32>
    tpu.vector_store %arg35[%c0_71, %c16_72], %118 {strides = array<i32>} : memref<8x32xf32, #tpu.memory_space<vmem>>, vector<8x8xf32>,
    %c0_73 = arith.constant 0 : index
    %c24 = arith.constant 24 : index
    %120 = vector.load %arg30[%c0_73, %c24] : memref<8x32xf32, #tpu.memory_space<vmem>>, vector<8x8xf32>
    %121 = arith.truncf %120 : vector<8x8xf32> to vector<8x8xbf16>
    %c0_74 = arith.constant 0 : index
    %c24_75 = arith.constant 24 : index
    %122 = vector.load %arg31[%c0_74, %c24_75] : memref<8x32xf32, #tpu.memory_space<vmem>>, vector<8x8xf32>
    %123 = arith.truncf %122 : vector<8x8xf32> to vector<8x8xbf16>
    %c0_76 = arith.constant 0 : index
    %c24_77 = arith.constant 24 : index
    %124 = vector.load %arg32[%c0_76, %c24_77] : memref<8x32xf32, #tpu.memory_space<vmem>>, vector<8x8xf32>
    %125 = arith.truncf %124 : vector<8x8xf32> to vector<8x8xbf16>
    %cst_78 = arith.constant dense<0.000000e+00> : vector<8x8xf32>
    %126 = tpu.matmul %121, %123, %cst_78 {dimension_numbers = #tpu.dot_dimension_numbers<[1], [1], [0], [0], [0, 0, 1, 0], [], []>} : vector<8x8xbf16>, vector<8x8xbf16>, vector<8x8xf32> -> vector<8x8xf32>
    %127 = arith.addf %126, %56 : vector<8x8xf32>
    %cst_79 = arith.constant dense<0xFF800000> : vector<8xf32>
    %128 = vector.multi_reduction <maximumf>, %127, %cst_79 [1] : vector<8x8xf32> to vector<8xf32>
    %129 = vector.shape_cast %128 : vector<8xf32> to vector<8x1xf32>
    %130 = vector.broadcast %129 : vector<8x1xf32> to vector<8x8xf32>
    %131 = arith.subf %127, %130 : vector<8x8xf32>
    %132 = math.exp %131 : vector<8x8xf32>
    %cst_80 = arith.constant dense<0.000000e+00> : vector<8xf32>
    %133 = vector.multi_reduction <add>, %132, %cst_80 [1] : vector<8x8xf32> to vector<8xf32>
    %134 = vector.shape_cast %133 : vector<8xf32> to vector<8x1xf32>
    %135 = tpu.reciprocal %134 {approx = true} : vector<8x1xf32> -> vector<8x1xf32>
    %136 = vector.broadcast %135 : vector<8x1xf32> to vector<8x8xf32>
    %137 = arith.mulf %132, %136 : vector<8x8xf32>
    %138 = arith.truncf %137 : vector<8x8xf32> to vector<8x8xbf16>
    %cst_81 = arith.constant dense<0.000000e+00> : vector<8x8xf32>
    %139 = tpu.matmul %138, %125, %cst_81 {dimension_numbers = #tpu.dot_dimension_numbers<[1], [0], [0], [1], [0, 0, 1, 1], [], []>} : vector<8x8xbf16>, vector<8x8xbf16>, vector<8x8xf32> -> vector<8x8xf32>
    %c0_82 = arith.constant 0 : index
    %c24_83 = arith.constant 24 : index
    %140 = vector.load %arg35[%c0_82, %c24_83] : memref<8x32xf32, #tpu.memory_space<vmem>>, vector<8x8xf32>
    tpu.vector_store %arg35[%c0_82, %c24_83], %139 {strides = array<i32>} : memref<8x32xf32, #tpu.memory_space<vmem>>, vector<8x8xf32>,
    %c0_84 = arith.constant 0 : index
    %c0_85 = arith.constant 0 : index
    %141 = vector.load %arg35[%c0_84, %c0_85] : memref<8x32xf32, #tpu.memory_space<vmem>>, vector<8x32xf32>
    %142 = arith.truncf %141 : vector<8x32xf32> to vector<8x32xbf16>
    %c0_86 = arith.constant 0 : index
    %c0_87 = arith.constant 0 : index
    %143 = vector.load %arg11[%c0_86, %c0_87] : memref<32x32xbf16, #tpu.memory_space<vmem>>, vector<32x32xbf16>
    %cst_88 = arith.constant dense<0.000000e+00> : vector<8x32xf32>
    %144 = tpu.matmul %142, %143, %cst_88 {dimension_numbers = #tpu.dot_dimension_numbers<[1], [0], [0], [1], [0, 0, 1, 1], [], []>} : vector<8x32xbf16>, vector<32x32xbf16>, vector<8x32xf32> -> vector<8x32xf32>
    %145 = vector.broadcast %31 : vector<1x32xf32> to vector<8x32xf32>
    %146 = arith.addf %144, %145 : vector<8x32xf32>
    %147 = arith.addf %1, %146 : vector<8x32xf32>
    %c0_89 = arith.constant 0 : index
    %c0_90 = arith.constant 0 : index
    %148 = vector.load %arg13[%c0_89, %c0_90] : memref<1x32xf32, #tpu.memory_space<vmem>>, vector<1x32xf32>
    %c0_91 = arith.constant 0 : index
    %c0_92 = arith.constant 0 : index
    %149 = vector.load %arg14[%c0_91, %c0_92] : memref<1x32xf32, #tpu.memory_space<vmem>>, vector<1x32xf32>
    %cst_93 = arith.constant dense<0.000000e+00> : vector<8xf32>
    %150 = vector.multi_reduction <add>, %147, %cst_93 [1] : vector<8x32xf32> to vector<8xf32>
    %151 = vector.shape_cast %150 : vector<8xf32> to vector<8x1xf32>
    %cst_94 = arith.constant 3.200000e+01 : f32
    %152 = vector.broadcast %cst_94 : f32 to vector<8x1xf32>
    %153 = arith.divf %151, %152 : vector<8x1xf32>
    %154 = vector.broadcast %153 : vector<8x1xf32> to vector<8x32xf32>
    %155 = arith.subf %147, %154 : vector<8x32xf32>
    %156 = arith.mulf %155, %155 : vector<8x32xf32>
    %cst_95 = arith.constant dense<0.000000e+00> : vector<8xf32>
    %157 = vector.multi_reduction <add>, %156, %cst_95 [1] : vector<8x32xf32> to vector<8xf32>
    %158 = vector.shape_cast %157 : vector<8xf32> to vector<8x1xf32>
    %cst_96 = arith.constant 3.200000e+01 : f32
    %159 = vector.broadcast %cst_96 : f32 to vector<8x1xf32>
    %160 = arith.divf %158, %159 : vector<8x1xf32>
    %161 = vector.broadcast %153 : vector<8x1xf32> to vector<8x32xf32>
    %162 = arith.subf %147, %161 : vector<8x32xf32>
    %cst_97 = arith.constant 9.99999974E-6 : f32
    %163 = vector.broadcast %cst_97 : f32 to vector<8x1xf32>
    %164 = arith.addf %160, %163 : vector<8x1xf32>
    %165 = math.rsqrt %164 : vector<8x1xf32>
    %166 = vector.broadcast %165 : vector<8x1xf32> to vector<8x32xf32>
    %167 = arith.mulf %162, %166 : vector<8x32xf32>
    %168 = vector.broadcast %148 : vector<1x32xf32> to vector<8x32xf32>
    %169 = arith.mulf %167, %168 : vector<8x32xf32>
    %170 = vector.broadcast %149 : vector<1x32xf32> to vector<8x32xf32>
    %171 = arith.addf %169, %170 : vector<8x32xf32>
    %c0_98 = arith.constant 0 : index
    %c0_99 = arith.constant 0 : index
    %172 = vector.load %arg18[%c0_98, %c0_99] : memref<1x32xf32, #tpu.memory_space<vmem>>, vector<1x32xf32>
    %c0_100 = arith.constant 0 : index
    %c0_101 = arith.constant 0 : index
    %173 = vector.load %arg19[%c0_100, %c0_101] : memref<1x32xf32, #tpu.memory_space<vmem>>, vector<1x32xf32>
    %c0_102 = arith.constant 0 : index
    %c0_103 = arith.constant 0 : index
    %174 = vector.load %arg20[%c0_102, %c0_103] : memref<1x32xf32, #tpu.memory_space<vmem>>, vector<1x32xf32>
    %c0_104 = arith.constant 0 : index
    %c0_105 = arith.constant 0 : index
    %175 = vector.load %arg22[%c0_104, %c0_105] : memref<1x32xf32, #tpu.memory_space<vmem>>, vector<1x32xf32>
    %176 = arith.truncf %171 : vector<8x32xf32> to vector<8x32xbf16>
    %177 = arith.truncf %3 : vector<8x32xf32> to vector<8x32xbf16>
    %c0_106 = arith.constant 0 : index
    %c0_107 = arith.constant 0 : index
    %178 = vector.load %arg15[%c0_106, %c0_107] : memref<32x32xbf16, #tpu.memory_space<vmem>>, vector<32x32xbf16>
    %cst_108 = arith.constant dense<0.000000e+00> : vector<8x32xf32>
    %179 = tpu.matmul %176, %178, %cst_108 {dimension_numbers = #tpu.dot_dimension_numbers<[1], [0], [0], [1], [0, 0, 1, 1], [], []>} : vector<8x32xbf16>, vector<32x32xbf16>, vector<8x32xf32> -> vector<8x32xf32>
    %180 = vector.broadcast %172 : vector<1x32xf32> to vector<8x32xf32>
    %181 = arith.addf %179, %180 : vector<8x32xf32>
    %cst_109 = arith.constant 0.353553385 : f32
    %182 = vector.broadcast %cst_109 : f32 to vector<8x32xf32>
    %183 = arith.mulf %181, %182 : vector<8x32xf32>
    %c0_110 = arith.constant 0 : index
    %c0_111 = arith.constant 0 : index
    %184 = vector.load %arg30[%c0_110, %c0_111] : memref<8x32xf32, #tpu.memory_space<vmem>>, vector<8x32xf32>
    tpu.vector_store %arg30[%c0_110, %c0_111], %183 {strides = array<i32>} : memref<8x32xf32, #tpu.memory_space<vmem>>, vector<8x32xf32>,
    %c0_112 = arith.constant 0 : index
    %c0_113 = arith.constant 0 : index
    %185 = vector.load %arg16[%c0_112, %c0_113] : memref<32x32xbf16, #tpu.memory_space<vmem>>, vector<32x32xbf16>
    %cst_114 = arith.constant dense<0.000000e+00> : vector<8x32xf32>
    %186 = tpu.matmul %177, %185, %cst_114 {dimension_numbers = #tpu.dot_dimension_numbers<[1], [0], [0], [1], [0, 0, 1, 1], [], []>} : vector<8x32xbf16>, vector<32x32xbf16>, vector<8x32xf32> -> vector<8x32xf32>
    %187 = vector.broadcast %173 : vector<1x32xf32> to vector<8x32xf32>
    %188 = arith.addf %186, %187 : vector<8x32xf32>
    %c0_115 = arith.constant 0 : index
    %c0_116 = arith.constant 0 : index
    %189 = vector.load %arg33[%c0_115, %c0_116] : memref<8x32xf32, #tpu.memory_space<vmem>>, vector<8x32xf32>
    tpu.vector_store %arg33[%c0_115, %c0_116], %188 {strides = array<i32>} : memref<8x32xf32, #tpu.memory_space<vmem>>, vector<8x32xf32>,
    %c0_117 = arith.constant 0 : index
    %c0_118 = arith.constant 0 : index
    %190 = vector.load %arg17[%c0_117, %c0_118] : memref<32x32xbf16, #tpu.memory_space<vmem>>, vector<32x32xbf16>
    %cst_119 = arith.constant dense<0.000000e+00> : vector<8x32xf32>
    %191 = tpu.matmul %177, %190, %cst_119 {dimension_numbers = #tpu.dot_dimension_numbers<[1], [0], [0], [1], [0, 0, 1, 1], [], []>} : vector<8x32xbf16>, vector<32x32xbf16>, vector<8x32xf32> -> vector<8x32xf32>
    %192 = vector.broadcast %174 : vector<1x32xf32> to vector<8x32xf32>
    %193 = arith.addf %191, %192 : vector<8x32xf32>
    %c0_120 = arith.constant 0 : index
    %c0_121 = arith.constant 0 : index
    %194 = vector.load %arg34[%c0_120, %c0_121] : memref<8x32xf32, #tpu.memory_space<vmem>>, vector<8x32xf32>
    tpu.vector_store %arg34[%c0_120, %c0_121], %193 {strides = array<i32>} : memref<8x32xf32, #tpu.memory_space<vmem>>, vector<8x32xf32>,
    %c0_122 = arith.constant 0 : index
    %c0_123 = arith.constant 0 : index
    %195 = vector.load %arg30[%c0_122, %c0_123] : memref<8x32xf32, #tpu.memory_space<vmem>>, vector<8x8xf32>
    %196 = arith.truncf %195 : vector<8x8xf32> to vector<8x8xbf16>
    %c0_124 = arith.constant 0 : index
    %c0_125 = arith.constant 0 : index
    %197 = vector.load %arg33[%c0_124, %c0_125] : memref<8x32xf32, #tpu.memory_space<vmem>>, vector<8x8xf32>
    %198 = arith.truncf %197 : vector<8x8xf32> to vector<8x8xbf16>
    %c0_126 = arith.constant 0 : index
    %c0_127 = arith.constant 0 : index
    %199 = vector.load %arg34[%c0_126, %c0_127] : memref<8x32xf32, #tpu.memory_space<vmem>>, vector<8x8xf32>
    %200 = arith.truncf %199 : vector<8x8xf32> to vector<8x8xbf16>
    %cst_128 = arith.constant dense<0.000000e+00> : vector<8x8xf32>
    %201 = tpu.matmul %196, %198, %cst_128 {dimension_numbers = #tpu.dot_dimension_numbers<[1], [1], [0], [0], [0, 0, 1, 0], [], []>} : vector<8x8xbf16>, vector<8x8xbf16>, vector<8x8xf32> -> vector<8x8xf32>
    %cst_129 = arith.constant dense<0xFF800000> : vector<8xf32>
    %202 = vector.multi_reduction <maximumf>, %201, %cst_129 [1] : vector<8x8xf32> to vector<8xf32>
    %203 = vector.shape_cast %202 : vector<8xf32> to vector<8x1xf32>
    %204 = vector.broadcast %203 : vector<8x1xf32> to vector<8x8xf32>
    %205 = arith.subf %201, %204 : vector<8x8xf32>
    %206 = math.exp %205 : vector<8x8xf32>
    %cst_130 = arith.constant dense<0.000000e+00> : vector<8xf32>
    %207 = vector.multi_reduction <add>, %206, %cst_130 [1] : vector<8x8xf32> to vector<8xf32>
    %208 = vector.shape_cast %207 : vector<8xf32> to vector<8x1xf32>
    %209 = tpu.reciprocal %208 {approx = true} : vector<8x1xf32> -> vector<8x1xf32>
    %210 = vector.broadcast %209 : vector<8x1xf32> to vector<8x8xf32>
    %211 = arith.mulf %206, %210 : vector<8x8xf32>
    %212 = arith.truncf %211 : vector<8x8xf32> to vector<8x8xbf16>
    %cst_131 = arith.constant dense<0.000000e+00> : vector<8x8xf32>
    %213 = tpu.matmul %212, %200, %cst_131 {dimension_numbers = #tpu.dot_dimension_numbers<[1], [0], [0], [1], [0, 0, 1, 1], [], []>} : vector<8x8xbf16>, vector<8x8xbf16>, vector<8x8xf32> -> vector<8x8xf32>
    %c0_132 = arith.constant 0 : index
    %c0_133 = arith.constant 0 : index
    %214 = vector.load %arg35[%c0_132, %c0_133] : memref<8x32xf32, #tpu.memory_space<vmem>>, vector<8x8xf32>
    tpu.vector_store %arg35[%c0_132, %c0_133], %213 {strides = array<i32>} : memref<8x32xf32, #tpu.memory_space<vmem>>, vector<8x8xf32>,
    %c0_134 = arith.constant 0 : index
    %c8_135 = arith.constant 8 : index
    %215 = vector.load %arg30[%c0_134, %c8_135] : memref<8x32xf32, #tpu.memory_space<vmem>>, vector<8x8xf32>
    %216 = arith.truncf %215 : vector<8x8xf32> to vector<8x8xbf16>
    %c0_136 = arith.constant 0 : index
    %c8_137 = arith.constant 8 : index
    %217 = vector.load %arg33[%c0_136, %c8_137] : memref<8x32xf32, #tpu.memory_space<vmem>>, vector<8x8xf32>
    %218 = arith.truncf %217 : vector<8x8xf32> to vector<8x8xbf16>
    %c0_138 = arith.constant 0 : index
    %c8_139 = arith.constant 8 : index
    %219 = vector.load %arg34[%c0_138, %c8_139] : memref<8x32xf32, #tpu.memory_space<vmem>>, vector<8x8xf32>
    %220 = arith.truncf %219 : vector<8x8xf32> to vector<8x8xbf16>
    %cst_140 = arith.constant dense<0.000000e+00> : vector<8x8xf32>
    %221 = tpu.matmul %216, %218, %cst_140 {dimension_numbers = #tpu.dot_dimension_numbers<[1], [1], [0], [0], [0, 0, 1, 0], [], []>} : vector<8x8xbf16>, vector<8x8xbf16>, vector<8x8xf32> -> vector<8x8xf32>
    %cst_141 = arith.constant dense<0xFF800000> : vector<8xf32>
    %222 = vector.multi_reduction <maximumf>, %221, %cst_141 [1] : vector<8x8xf32> to vector<8xf32>
    %223 = vector.shape_cast %222 : vector<8xf32> to vector<8x1xf32>
    %224 = vector.broadcast %223 : vector<8x1xf32> to vector<8x8xf32>
    %225 = arith.subf %221, %224 : vector<8x8xf32>
    %226 = math.exp %225 : vector<8x8xf32>
    %cst_142 = arith.constant dense<0.000000e+00> : vector<8xf32>
    %227 = vector.multi_reduction <add>, %226, %cst_142 [1] : vector<8x8xf32> to vector<8xf32>
    %228 = vector.shape_cast %227 : vector<8xf32> to vector<8x1xf32>
    %229 = tpu.reciprocal %228 {approx = true} : vector<8x1xf32> -> vector<8x1xf32>
    %230 = vector.broadcast %229 : vector<8x1xf32> to vector<8x8xf32>
    %231 = arith.mulf %226, %230 : vector<8x8xf32>
    %232 = arith.truncf %231 : vector<8x8xf32> to vector<8x8xbf16>
    %cst_143 = arith.constant dense<0.000000e+00> : vector<8x8xf32>
    %233 = tpu.matmul %232, %220, %cst_143 {dimension_numbers = #tpu.dot_dimension_numbers<[1], [0], [0], [1], [0, 0, 1, 1], [], []>} : vector<8x8xbf16>, vector<8x8xbf16>, vector<8x8xf32> -> vector<8x8xf32>
    %c0_144 = arith.constant 0 : index
    %c8_145 = arith.constant 8 : index
    %234 = vector.load %arg35[%c0_144, %c8_145] : memref<8x32xf32, #tpu.memory_space<vmem>>, vector<8x8xf32>
    tpu.vector_store %arg35[%c0_144, %c8_145], %233 {strides = array<i32>} : memref<8x32xf32, #tpu.memory_space<vmem>>, vector<8x8xf32>,
    %c0_146 = arith.constant 0 : index
    %c16_147 = arith.constant 16 : index
    %235 = vector.load %arg30[%c0_146, %c16_147] : memref<8x32xf32, #tpu.memory_space<vmem>>, vector<8x8xf32>
    %236 = arith.truncf %235 : vector<8x8xf32> to vector<8x8xbf16>
    %c0_148 = arith.constant 0 : index
    %c16_149 = arith.constant 16 : index
    %237 = vector.load %arg33[%c0_148, %c16_149] : memref<8x32xf32, #tpu.memory_space<vmem>>, vector<8x8xf32>
    %238 = arith.truncf %237 : vector<8x8xf32> to vector<8x8xbf16>
    %c0_150 = arith.constant 0 : index
    %c16_151 = arith.constant 16 : index
    %239 = vector.load %arg34[%c0_150, %c16_151] : memref<8x32xf32, #tpu.memory_space<vmem>>, vector<8x8xf32>
    %240 = arith.truncf %239 : vector<8x8xf32> to vector<8x8xbf16>
    %cst_152 = arith.constant dense<0.000000e+00> : vector<8x8xf32>
    %241 = tpu.matmul %236, %238, %cst_152 {dimension_numbers = #tpu.dot_dimension_numbers<[1], [1], [0], [0], [0, 0, 1, 0], [], []>} : vector<8x8xbf16>, vector<8x8xbf16>, vector<8x8xf32> -> vector<8x8xf32>
    %cst_153 = arith.constant dense<0xFF800000> : vector<8xf32>
    %242 = vector.multi_reduction <maximumf>, %241, %cst_153 [1] : vector<8x8xf32> to vector<8xf32>
    %243 = vector.shape_cast %242 : vector<8xf32> to vector<8x1xf32>
    %244 = vector.broadcast %243 : vector<8x1xf32> to vector<8x8xf32>
    %245 = arith.subf %241, %244 : vector<8x8xf32>
    %246 = math.exp %245 : vector<8x8xf32>
    %cst_154 = arith.constant dense<0.000000e+00> : vector<8xf32>
    %247 = vector.multi_reduction <add>, %246, %cst_154 [1] : vector<8x8xf32> to vector<8xf32>
    %248 = vector.shape_cast %247 : vector<8xf32> to vector<8x1xf32>
    %249 = tpu.reciprocal %248 {approx = true} : vector<8x1xf32> -> vector<8x1xf32>
    %250 = vector.broadcast %249 : vector<8x1xf32> to vector<8x8xf32>
    %251 = arith.mulf %246, %250 : vector<8x8xf32>
    %252 = arith.truncf %251 : vector<8x8xf32> to vector<8x8xbf16>
    %cst_155 = arith.constant dense<0.000000e+00> : vector<8x8xf32>
    %253 = tpu.matmul %252, %240, %cst_155 {dimension_numbers = #tpu.dot_dimension_numbers<[1], [0], [0], [1], [0, 0, 1, 1], [], []>} : vector<8x8xbf16>, vector<8x8xbf16>, vector<8x8xf32> -> vector<8x8xf32>
    %c0_156 = arith.constant 0 : index
    %c16_157 = arith.constant 16 : index
    %254 = vector.load %arg35[%c0_156, %c16_157] : memref<8x32xf32, #tpu.memory_space<vmem>>, vector<8x8xf32>
    tpu.vector_store %arg35[%c0_156, %c16_157], %253 {strides = array<i32>} : memref<8x32xf32, #tpu.memory_space<vmem>>, vector<8x8xf32>,
    %c0_158 = arith.constant 0 : index
    %c24_159 = arith.constant 24 : index
    %255 = vector.load %arg30[%c0_158, %c24_159] : memref<8x32xf32, #tpu.memory_space<vmem>>, vector<8x8xf32>
    %256 = arith.truncf %255 : vector<8x8xf32> to vector<8x8xbf16>
    %c0_160 = arith.constant 0 : index
    %c24_161 = arith.constant 24 : index
    %257 = vector.load %arg33[%c0_160, %c24_161] : memref<8x32xf32, #tpu.memory_space<vmem>>, vector<8x8xf32>
    %258 = arith.truncf %257 : vector<8x8xf32> to vector<8x8xbf16>
    %c0_162 = arith.constant 0 : index
    %c24_163 = arith.constant 24 : index
    %259 = vector.load %arg34[%c0_162, %c24_163] : memref<8x32xf32, #tpu.memory_space<vmem>>, vector<8x8xf32>
    %260 = arith.truncf %259 : vector<8x8xf32> to vector<8x8xbf16>
    %cst_164 = arith.constant dense<0.000000e+00> : vector<8x8xf32>
    %261 = tpu.matmul %256, %258, %cst_164 {dimension_numbers = #tpu.dot_dimension_numbers<[1], [1], [0], [0], [0, 0, 1, 0], [], []>} : vector<8x8xbf16>, vector<8x8xbf16>, vector<8x8xf32> -> vector<8x8xf32>
    %cst_165 = arith.constant dense<0xFF800000> : vector<8xf32>
    %262 = vector.multi_reduction <maximumf>, %261, %cst_165 [1] : vector<8x8xf32> to vector<8xf32>
    %263 = vector.shape_cast %262 : vector<8xf32> to vector<8x1xf32>
    %264 = vector.broadcast %263 : vector<8x1xf32> to vector<8x8xf32>
    %265 = arith.subf %261, %264 : vector<8x8xf32>
    %266 = math.exp %265 : vector<8x8xf32>
    %cst_166 = arith.constant dense<0.000000e+00> : vector<8xf32>
    %267 = vector.multi_reduction <add>, %266, %cst_166 [1] : vector<8x8xf32> to vector<8xf32>
    %268 = vector.shape_cast %267 : vector<8xf32> to vector<8x1xf32>
    %269 = tpu.reciprocal %268 {approx = true} : vector<8x1xf32> -> vector<8x1xf32>
    %270 = vector.broadcast %269 : vector<8x1xf32> to vector<8x8xf32>
    %271 = arith.mulf %266, %270 : vector<8x8xf32>
    %272 = arith.truncf %271 : vector<8x8xf32> to vector<8x8xbf16>
    %cst_167 = arith.constant dense<0.000000e+00> : vector<8x8xf32>
    %273 = tpu.matmul %272, %260, %cst_167 {dimension_numbers = #tpu.dot_dimension_numbers<[1], [0], [0], [1], [0, 0, 1, 1], [], []>} : vector<8x8xbf16>, vector<8x8xbf16>, vector<8x8xf32> -> vector<8x8xf32>
    %c0_168 = arith.constant 0 : index
    %c24_169 = arith.constant 24 : index
    %274 = vector.load %arg35[%c0_168, %c24_169] : memref<8x32xf32, #tpu.memory_space<vmem>>, vector<8x8xf32>
    tpu.vector_store %arg35[%c0_168, %c24_169], %273 {strides = array<i32>} : memref<8x32xf32, #tpu.memory_space<vmem>>, vector<8x8xf32>,
    %c0_170 = arith.constant 0 : index
    %c0_171 = arith.constant 0 : index
    %275 = vector.load %arg35[%c0_170, %c0_171] : memref<8x32xf32, #tpu.memory_space<vmem>>, vector<8x32xf32>
    %276 = arith.truncf %275 : vector<8x32xf32> to vector<8x32xbf16>
    %c0_172 = arith.constant 0 : index
    %c0_173 = arith.constant 0 : index
    %277 = vector.load %arg21[%c0_172, %c0_173] : memref<32x32xbf16, #tpu.memory_space<vmem>>, vector<32x32xbf16>
    %cst_174 = arith.constant dense<0.000000e+00> : vector<8x32xf32>
    %278 = tpu.matmul %276, %277, %cst_174 {dimension_numbers = #tpu.dot_dimension_numbers<[1], [0], [0], [1], [0, 0, 1, 1], [], []>} : vector<8x32xbf16>, vector<32x32xbf16>, vector<8x32xf32> -> vector<8x32xf32>
    %279 = vector.broadcast %175 : vector<1x32xf32> to vector<8x32xf32>
    %280 = arith.addf %278, %279 : vector<8x32xf32>
    %281 = arith.addf %147, %280 : vector<8x32xf32>
    %c0_175 = arith.constant 0 : index
    %c0_176 = arith.constant 0 : index
    %282 = vector.load %arg23[%c0_175, %c0_176] : memref<1x32xf32, #tpu.memory_space<vmem>>, vector<1x32xf32>
    %c0_177 = arith.constant 0 : index
    %c0_178 = arith.constant 0 : index
    %283 = vector.load %arg24[%c0_177, %c0_178] : memref<1x32xf32, #tpu.memory_space<vmem>>, vector<1x32xf32>
    %cst_179 = arith.constant dense<0.000000e+00> : vector<8xf32>
    %284 = vector.multi_reduction <add>, %281, %cst_179 [1] : vector<8x32xf32> to vector<8xf32>
    %285 = vector.shape_cast %284 : vector<8xf32> to vector<8x1xf32>
    %cst_180 = arith.constant 3.200000e+01 : f32
    %286 = vector.broadcast %cst_180 : f32 to vector<8x1xf32>
    %287 = arith.divf %285, %286 : vector<8x1xf32>
    %288 = vector.broadcast %287 : vector<8x1xf32> to vector<8x32xf32>
    %289 = arith.subf %281, %288 : vector<8x32xf32>
    %290 = arith.mulf %289, %289 : vector<8x32xf32>
    %cst_181 = arith.constant dense<0.000000e+00> : vector<8xf32>
    %291 = vector.multi_reduction <add>, %290, %cst_181 [1] : vector<8x32xf32> to vector<8xf32>
    %292 = vector.shape_cast %291 : vector<8xf32> to vector<8x1xf32>
    %cst_182 = arith.constant 3.200000e+01 : f32
    %293 = vector.broadcast %cst_182 : f32 to vector<8x1xf32>
    %294 = arith.divf %292, %293 : vector<8x1xf32>
    %295 = vector.broadcast %287 : vector<8x1xf32> to vector<8x32xf32>
    %296 = arith.subf %281, %295 : vector<8x32xf32>
    %cst_183 = arith.constant 9.99999974E-6 : f32
    %297 = vector.broadcast %cst_183 : f32 to vector<8x1xf32>
    %298 = arith.addf %294, %297 : vector<8x1xf32>
    %299 = math.rsqrt %298 : vector<8x1xf32>
    %300 = vector.broadcast %299 : vector<8x1xf32> to vector<8x32xf32>
    %301 = arith.mulf %296, %300 : vector<8x32xf32>
    %302 = vector.broadcast %282 : vector<1x32xf32> to vector<8x32xf32>
    %303 = arith.mulf %301, %302 : vector<8x32xf32>
    %304 = vector.broadcast %283 : vector<1x32xf32> to vector<8x32xf32>
    %305 = arith.addf %303, %304 : vector<8x32xf32>
    %306 = arith.truncf %305 : vector<8x32xf32> to vector<8x32xbf16>
    %c0_184 = arith.constant 0 : index
    %c0_185 = arith.constant 0 : index
    %307 = vector.load %arg25[%c0_184, %c0_185] : memref<32x128xbf16, #tpu.memory_space<vmem>>, vector<32x128xbf16>
    %cst_186 = arith.constant dense<0.000000e+00> : vector<8x128xf32>
    %308 = tpu.matmul %306, %307, %cst_186 {dimension_numbers = #tpu.dot_dimension_numbers<[1], [0], [0], [1], [0, 0, 1, 1], [], []>} : vector<8x32xbf16>, vector<32x128xbf16>, vector<8x128xf32> -> vector<8x128xf32>
    %c0_187 = arith.constant 0 : index
    %c0_188 = arith.constant 0 : index
    %309 = vector.load %arg26[%c0_187, %c0_188] : memref<1x128xf32, #tpu.memory_space<vmem>>, vector<1x128xf32>
    %310 = vector.broadcast %309 : vector<1x128xf32> to vector<8x128xf32>
    %311 = arith.addf %308, %310 : vector<8x128xf32>
    %cst_189 = arith.constant 1.702000e+00 : f32
    %312 = vector.broadcast %cst_189 : f32 to vector<8x128xf32>
    %313 = arith.mulf %312, %311 : vector<8x128xf32>
    %314 = arith.negf %313 : vector<8x128xf32>
    %315 = math.exp %314 : vector<8x128xf32>
    %cst_190 = arith.constant 1.000000e+00 : f32
    %316 = vector.broadcast %cst_190 : f32 to vector<8x128xf32>
    %317 = arith.addf %316, %315 : vector<8x128xf32>
    %318 = arith.divf %316, %317 : vector<8x128xf32>
    %319 = arith.mulf %311, %318 : vector<8x128xf32>
    %320 = arith.truncf %319 : vector<8x128xf32> to vector<8x128xbf16>
    %c0_191 = arith.constant 0 : index
    %c0_192 = arith.constant 0 : index
    %321 = vector.load %arg27[%c0_191, %c0_192] : memref<128x32xbf16, #tpu.memory_space<vmem>>, vector<128x32xbf16>
    %cst_193 = arith.constant dense<0.000000e+00> : vector<8x32xf32>
    %322 = tpu.matmul %320, %321, %cst_193 {dimension_numbers = #tpu.dot_dimension_numbers<[1], [0], [0], [1], [0, 0, 1, 1], [], []>} : vector<8x128xbf16>, vector<128x32xbf16>, vector<8x32xf32> -> vector<8x32xf32>
    %323 = arith.addf %281, %322 : vector<8x32xf32>
    %c0_194 = arith.constant 0 : index
    %c0_195 = arith.constant 0 : index
    %324 = vector.load %arg28[%c0_194, %c0_195] : memref<1x32xf32, #tpu.memory_space<vmem>>, vector<1x32xf32>
    %325 = vector.broadcast %324 : vector<1x32xf32> to vector<8x32xf32>
    %326 = arith.addf %323, %325 : vector<8x32xf32>
    %c0_196 = arith.constant 0 : index
    %c0_197 = arith.constant 0 : index
    %c0_198 = arith.constant 0 : index
    %327 = vector.load %arg29[%c0_196, %c0_197, %c0_198] : memref<1x8x32xf32, #tpu.memory_space<vmem>>, vector<1x8x32xf32>
    %328 = vector.shape_cast %327 : vector<1x8x32xf32> to vector<8x32xf32>
    %329 = vector.shape_cast %326 : vector<8x32xf32> to vector<1x8x32xf32>
    tpu.vector_store %arg29[%c0_196, %c0_197, %c0_198], %329 {strides = array<i32>} : memref<1x8x32xf32, #tpu.memory_space<vmem>>, vector<1x8x32xf32>,
    return
  }
  func.func @transform_0(%arg0: i32) -> (i32, i32, i32) {
    %c0_i32 = arith.constant 0 : i32
    %c0_i32_0 = arith.constant 0 : i32
    %c0_i32_1 = arith.constant 0 : i32
    return %arg0, %c0_i32, %c0_i32_0 : i32, i32, i32
  }
  func.func @transform_1(%arg0: i32) -> (i32, i32, i32) {
    %c0_i32 = arith.constant 0 : i32
    %c0_i32_0 = arith.constant 0 : i32
    %c0_i32_1 = arith.constant 0 : i32
    return %arg0, %c0_i32, %c0_i32_0 : i32, i32, i32
  }
  func.func @transform_2(%arg0: i32) -> (i32, i32) {
    %c0_i32 = arith.constant 0 : i32
    %c0_i32_0 = arith.constant 0 : i32
    %c0_i32_1 = arith.constant 0 : i32
    return %c0_i32, %c0_i32_0 : i32, i32
  }
  func.func @transform_3(%arg0: i32) -> (i32, i32) {
    %c0_i32 = arith.constant 0 : i32
    %c0_i32_0 = arith.constant 0 : i32
    %c0_i32_1 = arith.constant 0 : i32
    return %c0_i32, %c0_i32_0 : i32, i32
  }
  func.func @transform_4(%arg0: i32) -> (i32, i32) {
    %c0_i32 = arith.constant 0 : i32
    %c0_i32_0 = arith.constant 0 : i32
    %c0_i32_1 = arith.constant 0 : i32
    return %c0_i32, %c0_i32_0 : i32, i32
  }
  func.func @transform_5(%arg0: i32) -> (i32, i32) {
    %c0_i32 = arith.constant 0 : i32
    %c0_i32_0 = arith.constant 0 : i32
    %c0_i32_1 = arith.constant 0 : i32
    return %c0_i32, %c0_i32_0 : i32, i32
  }
  func.func @transform_6(%arg0: i32) -> (i32, i32) {
    %c0_i32 = arith.constant 0 : i32
    %c0_i32_0 = arith.constant 0 : i32
    %c0_i32_1 = arith.constant 0 : i32
    return %c0_i32, %c0_i32_0 : i32, i32
  }
  func.func @transform_7(%arg0: i32) -> (i32, i32) {
    %c0_i32 = arith.constant 0 : i32
    %c0_i32_0 = arith.constant 0 : i32
    %c0_i32_1 = arith.constant 0 : i32
    return %c0_i32, %c0_i32_0 : i32, i32
  }
  func.func @transform_8(%arg0: i32) -> (i32, i32) {
    %c0_i32 = arith.constant 0 : i32
    %c0_i32_0 = arith.constant 0 : i32
    %c0_i32_1 = arith.constant 0 : i32
    return %c0_i32, %c0_i32_0 : i32, i32
  }
  func.func @transform_9(%arg0: i32) -> (i32, i32) {
    %c0_i32 = arith.constant 0 : i32
    %c0_i32_0 = arith.constant 0 : i32
    %c0_i32_1 = arith.constant 0 : i32
    return %c0_i32, %c0_i32_0 : i32, i32
  }
  func.func @transform_10(%arg0: i32) -> (i32, i32) {
    %c0_i32 = arith.constant 0 : i32
    %c0_i32_0 = arith.constant 0 : i32
    %c0_i32_1 = arith.constant 0 : i32
    return %c0_i32, %c0_i32_0 : i32, i32
  }
  func.func @transform_11(%arg0: i32) -> (i32, i32) {
    %c0_i32 = arith.constant 0 : i32
    %c0_i32_0 = arith.constant 0 : i32
    %c0_i32_1 = arith.constant 0 : i32
    return %c0_i32, %c0_i32_0 : i32, i32
  }
  func.func @transform_12(%arg0: i32) -> (i32, i32) {
    %c0_i32 = arith.constant 0 : i32
    %c0_i32_0 = arith.constant 0 : i32
    %c0_i32_1 = arith.constant 0 : i32
    return %c0_i32, %c0_i32_0 : i32, i32
  }
  func.func @transform_13(%arg0: i32) -> (i32, i32) {
    %c0_i32 = arith.constant 0 : i32
    %c0_i32_0 = arith.constant 0 : i32
    %c0_i32_1 = arith.constant 0 : i32
    return %c0_i32, %c0_i32_0 : i32, i32
  }
  func.func @transform_14(%arg0: i32) -> (i32, i32) {
    %c0_i32 = arith.constant 0 : i32
    %c0_i32_0 = arith.constant 0 : i32
    %c0_i32_1 = arith.constant 0 : i32
    return %c0_i32, %c0_i32_0 : i32, i32
  }
  func.func @transform_15(%arg0: i32) -> (i32, i32) {
    %c0_i32 = arith.constant 0 : i32
    %c0_i32_0 = arith.constant 0 : i32
    %c0_i32_1 = arith.constant 0 : i32
    return %c0_i32, %c0_i32_0 : i32, i32
  }
  func.func @transform_16(%arg0: i32) -> (i32, i32) {
    %c0_i32 = arith.constant 0 : i32
    %c0_i32_0 = arith.constant 0 : i32
    %c0_i32_1 = arith.constant 0 : i32
    return %c0_i32, %c0_i32_0 : i32, i32
  }
  func.func @transform_17(%arg0: i32) -> (i32, i32) {
    %c0_i32 = arith.constant 0 : i32
    %c0_i32_0 = arith.constant 0 : i32
    %c0_i32_1 = arith.constant 0 : i32
    return %c0_i32, %c0_i32_0 : i32, i32
  }
  func.func @transform_18(%arg0: i32) -> (i32, i32) {
    %c0_i32 = arith.constant 0 : i32
    %c0_i32_0 = arith.constant 0 : i32
    %c0_i32_1 = arith.constant 0 : i32
    return %c0_i32, %c0_i32_0 : i32, i32
  }
  func.func @transform_19(%arg0: i32) -> (i32, i32) {
    %c0_i32 = arith.constant 0 : i32
    %c0_i32_0 = arith.constant 0 : i32
    %c0_i32_1 = arith.constant 0 : i32
    return %c0_i32, %c0_i32_0 : i32, i32
  }
  func.func @transform_20(%arg0: i32) -> (i32, i32) {
    %c0_i32 = arith.constant 0 : i32
    %c0_i32_0 = arith.constant 0 : i32
    %c0_i32_1 = arith.constant 0 : i32
    return %c0_i32, %c0_i32_0 : i32, i32
  }
  func.func @transform_21(%arg0: i32) -> (i32, i32) {
    %c0_i32 = arith.constant 0 : i32
    %c0_i32_0 = arith.constant 0 : i32
    %c0_i32_1 = arith.constant 0 : i32
    return %c0_i32, %c0_i32_0 : i32, i32
  }
  func.func @transform_22(%arg0: i32) -> (i32, i32) {
    %c0_i32 = arith.constant 0 : i32
    %c0_i32_0 = arith.constant 0 : i32
    %c0_i32_1 = arith.constant 0 : i32
    return %c0_i32, %c0_i32_0 : i32, i32
  }
  func.func @transform_23(%arg0: i32) -> (i32, i32) {
    %c0_i32 = arith.constant 0 : i32
    %c0_i32_0 = arith.constant 0 : i32
    %c0_i32_1 = arith.constant 0 : i32
    return %c0_i32, %c0_i32_0 : i32, i32
  }
  func.func @transform_24(%arg0: i32) -> (i32, i32) {
    %c0_i32 = arith.constant 0 : i32
    %c0_i32_0 = arith.constant 0 : i32
    %c0_i32_1 = arith.constant 0 : i32
    return %c0_i32, %c0_i32_0 : i32, i32
  }
  func.func @transform_25(%arg0: i32) -> (i32, i32) {
    %c0_i32 = arith.constant 0 : i32
    %c0_i32_0 = arith.constant 0 : i32
    %c0_i32_1 = arith.constant 0 : i32
    return %c0_i32, %c0_i32_0 : i32, i32
  }
  func.func @transform_26(%arg0: i32) -> (i32, i32) {
    %c0_i32 = arith.constant 0 : i32
    %c0_i32_0 = arith.constant 0 : i32
    %c0_i32_1 = arith.constant 0 : i32
    return %c0_i32, %c0_i32_0 : i32, i32
  }
  func.func @transform_27(%arg0: i32) -> (i32, i32) {
    %c0_i32 = arith.constant 0 : i32
    %c0_i32_0 = arith.constant 0 : i32
    %c0_i32_1 = arith.constant 0 : i32
    return %c0_i32, %c0_i32_0 : i32, i32
  }
  func.func @transform_28(%arg0: i32) -> (i32, i32, i32) {
    %c0_i32 = arith.constant 0 : i32
    %c0_i32_0 = arith.constant 0 : i32
    %c0_i32_1 = arith.constant 0 : i32
    return %arg0, %c0_i32, %c0_i32_0 : i32, i32, i32
  }
}

</mosaic_0001>

<llo_original>
// kernel: bart_decoder_forward.5
$region0: #{bart_decoder_forward.5}
  #allocation0 [shape = 'u32[]', space=smem, size = 0x4, offset = 0x4, fixed_abs, tag = 'smem constant byte address 0x4 - core index']
  #allocation1 [shape = 'u32[144,128]{1,0:T(1,128)}', space=vmem, size = 0x12000, scoped, tag = 'internal scratch']
  %s0 = inlined_call_operand.vmem [shape: f32[16,32], index: 0, kind: input, shape index: {}]
  %s1 = inlined_call_operand.vmem [shape: f32[1,32], index: 1, kind: input, shape index: {}]
  %s2 = inlined_call_operand.vmem [shape: f32[1,32], index: 2, kind: input, shape index: {}]
  %s3 = inlined_call_operand.vmem [shape: bf16[32,64], index: 3, kind: input, shape index: {}]
  %s4 = inlined_call_operand.vmem [shape: f32[1,64], index: 4, kind: input, shape index: {}]
  %s5 = inlined_call_operand.hbm [shape: f32[16,64], index: 5, kind: output, shape index: {}]
  %s6 = sld [smem:[#allocation0]]
  $region30: #{bart_decoder_forward.5} parent=0
    _
  %s8 = ssub.s32 1, %s6
  %s9 = scalar_select 0, %s8, %s6
  $region1: #{bart_decoder_forward.5} parent=0
    #allocation2 [shape = 'u8[8192]{0}', space=vmem, size = 0x2000, scoped, tag = 'output window, operand 0, single buffered']
    #allocation3 [shape = 's32[1]{0}', space=sflag, size = 0x4, scoped, tag = 'scoped memory for bart_decoder_forward.5']
    %10 = vsyncpa [#allocation3], 0
    // Predicated region
    $region2: #{bart_decoder_forward.5} parent=1 // pred_check
      _
    $region3: #{bart_decoder_forward.5} parent=1 // pred_check_branch
      %12 = sbr.rel (0) target = $region5
    $region4: #{bart_decoder_forward.5} parent=1 // pred_region
      _
    $region5: #{bart_decoder_forward.5} parent=1 // pred_fallthru
      _
    // Predicated region
    $region6: #{bart_decoder_forward.5} parent=1 // pred_check
      _
    $region7: #{bart_decoder_forward.5} parent=1 // pred_check_branch
      %14 = sbr.rel (0) target = $region9
    $region8: #{bart_decoder_forward.5} parent=1 // pred_region
      _
    $region9: #{bart_decoder_forward.5} parent=1 // pred_fallthru
      _
    // Predicated region
    $region10: #{bart_decoder_forward.5} parent=1 // pred_check
      _
    $region11: #{bart_decoder_forward.5} parent=1 // pred_check_branch
      %16 = sbr.rel (0) target = $region13
    $region12: #{bart_decoder_forward.5} parent=1 // pred_region
      _
    $region13: #{bart_decoder_forward.5} parent=1 // pred_fallthru
      _
    // Predicated region
    $region14: #{bart_decoder_forward.5} parent=1 // pred_check
      _
    $region15: #{bart_decoder_forward.5} parent=1 // pred_check_branch
      %18 = sbr.rel (0) target = $region17
    $region16: #{bart_decoder_forward.5} parent=1 // pred_region
      _
    $region17: #{bart_decoder_forward.5} parent=1 // pred_fallthru
      _
    // Predicated region
    $region18: #{bart_decoder_forward.5} parent=1 // pred_check
      _
    $region19: #{bart_decoder_forward.5} parent=1 // pred_check_branch
      %20 = sbr.rel (0) target = $region21
    $region20: #{bart_decoder_forward.5} parent=1 // pred_region
      _
    $region21: #{bart_decoder_forward.5} parent=1 // pred_fallthru
      _
    %v22 = vld [vmem:[%s0] sm:$0xff]
    %v23 = vld [vmem:[%s0 + $0x8] sm:$0xff]
    %v24 = vld [vmem:[%s1] sm:$0x1]
    %v25 = vld [vmem:[%s2] sm:$0x1]
    %vm26 = vcmask 261120
    %v27 = vsel %vm26, %v22, 0.0
    %28 = vadd.xlane.f32.xlu0 %v27
    %v29 = vpop.xlane.xlu0 %28
    %v30 = vsel %vm26, %v23, 0.0
    %31 = vadd.xlane.f32.xlu0 %v30
    %v32 = vpop.xlane.xlu0 %31
    %v33 = vrcp.pop 32.0
    %v34 = vmul.f32 %v29, %v33
    %v35 = vmul.f32 %v32, %v33
    %v36 = vsub.f32 %v22, %v34
    %v37 = vsub.f32 %v23, %v35
    %v38 = vmul.f32 %v36, %v36
    %v39 = vmul.f32 %v37, %v37
    %v40 = vsel %vm26, %v38, 0.0
    %41 = vadd.xlane.f32.xlu0 %v40
    %v42 = vpop.xlane.xlu0 %41
    %v43 = vsel %vm26, %v39, 0.0
    %44 = vadd.xlane.f32.xlu0 %v43
    %v45 = vpop.xlane.xlu0 %44
    %v46 = vmul.f32 %v42, %v33
    %v47 = vmul.f32 %v45, %v33
    %v48 = vadd.f32 %v46, 1e-05
    %v49 = vadd.f32 %v47, 1e-05
    %v50 = vrsqrt.pop %v48
    %v51 = vrsqrt.pop %v49
    %v52 = vmul.f32 %v36, %v50
    %v53 = vmul.f32 %v37, %v51
    %v55 = vlaneseq
    %v56 = vshrl.u32 %v55, 7
    %v57 = vsub.s32 0, %v56
    %v58 = vrot.slane %v24, %v57
    %v60 = vmul.f32 %v52, %v58
    %v61 = vmul.f32 %v53, %v58
    %v63 = vlaneseq
    %v64 = vshrl.u32 %v63, 7
    %v65 = vsub.s32 0, %v64
    %v66 = vrot.slane %v25, %v65
    %v68 = vadd.f32 %v60, %v66
    %v69 = vadd.f32 %v61, %v66
    %v70 = vpack.c.bf16 %v69, %v68
    %v71 = vld [vmem:[%s3] sm:$0xf]
    %v72 = vld [vmem:[%s3 + $0x4] sm:$0xf]
    %v73 = vld [vmem:[%s3 + $0x8] sm:$0xf]
    %v74 = vld [vmem:[%s3 + $0xc] sm:$0xf]
    %v75 = vld [vmem:[%s4] sm:$0x1]
    %v77 = vlaneseq
    %v78 = vshrl.u32 %v77, 7
    %v79 = vsub.s32 0, %v78
    %v80 = vrot.slane %v75, %v79
    %v86 = vunpack.c.l.b16 %v71
    %v87 = vunpack.c.l.b16 %v72
    %v88 = vunpack.c.l.b16 %v73
    %v89 = vunpack.c.l.b16 %v74
    %v90 = vpack.c.b16 %v87, %v86
    %v91 = vpack.c.b16 %v89, %v88
    %v95 = vsel %vm26, %v70, 0
    %97 = vmatprep.subr.bf16.mxu0 0
    %98 = vmatpush1.bf16.msra.mxu0 %v90
    %99 = vmatprep.subr.bf16.mxu0 0
    %100 = vmatpush1.bf16.msra.mxu0 %v91
    %101 = vmatprep.subr.bf16.mxu0 0
    %102 = vmatpush1.bf16.msra.mxu0 0
    %103 = vmatprep.subr.bf16.mxu0 0
    %104 = vmatpush1.bf16.msra.mxu0 0
    %105 = vmatprep.subr.bf16.mxu0 0
    %106 = vmatpush1.bf16.msra.mxu0 0
    %107 = vmatprep.subr.bf16.mxu0 0
    %108 = vmatpush1.bf16.msra.mxu0 0
    %109 = vmatprep.subr.bf16.mxu0 0
    %110 = vmatpush1.bf16.msra.mxu0 0
    %111 = vmatprep.subr.bf16.mxu0 0
    %112 = vmatpush1.bf16.msra.mxu0 0
    %113 = vmatprep.subr.bf16.mxu0 0
    %114 = vmatpush1.bf16.msra.mxu0 0
    %115 = vmatprep.subr.bf16.mxu0 0
    %116 = vmatpush1.bf16.msra.mxu0 0
    %117 = vmatprep.subr.bf16.mxu0 0
    %118 = vmatpush1.bf16.msra.mxu0 0
    %119 = vmatprep.subr.bf16.mxu0 0
    %120 = vmatpush1.bf16.msra.mxu0 0
    %121 = vmatprep.subr.bf16.mxu0 0
    %122 = vmatpush1.bf16.msra.mxu0 0
    %123 = vmatprep.subr.bf16.mxu0 0
    %124 = vmatpush1.bf16.msra.mxu0 0
    %125 = vmatprep.subr.bf16.mxu0 0
    %126 = vmatpush1.bf16.msra.mxu0 0
    %127 = vmatprep.subr.bf16.mxu0 0
    %128 = vmatpush1.bf16.msra.mxu0 0
    %129 = vmatprep.mubr.bf16.mxu0 0
    %130 = vmatmul.mubr.bf16.gmra.mrb[0].mxu0 %v95
    %v131 = vpop.f32.mrb[0].mxu0
    %v132 = vadd.f32 %v80, %v131
    %v133 = vpop.f32.mrb[0].mxu0
    %v134 = vpop.f32.mrb[0].mxu0
    %v135 = vadd.f32 %v80, %v134
    %v136 = vpop.f32.mrb[0].mxu0
    %137 = vdwg.mxu0
    %vm138 = vcmask 523264
    %139 = vst.msk [vmem:[#allocation2] sm:$0xff] %vm138, %v132
    %140 = vst.msk [vmem:[#allocation2 + $0x8] sm:$0xff] %vm138, %v135
    // Predicated region
    $region22: #{bart_decoder_forward.5} parent=1 // pred_check
      _
    $region23: #{bart_decoder_forward.5} parent=1 // pred_check_branch
      %142 = sbr.rel (0) target = $region25
    $region24: #{bart_decoder_forward.5} parent=1 // pred_region
      %s144 = ssub.s32 256, 256
      %145 = vsyncadd [#allocation3], %s144
      %s146 = sshll.u32 [#allocation2], 4
      %s147 = int_to_ptr.vmem [resolvable:$true] %s146
      %152 = dma.vmem_to_hbm [thread:$0]  %s147, 256, %s5, [#allocation3], 128, 128, 8
    $region25: #{bart_decoder_forward.5} parent=1 // pred_fallthru
      _
    // Predicated region
    $region26: #{bart_decoder_forward.5} parent=1 // pred_check
      _
    $region27: #{bart_decoder_forward.5} parent=1 // pred_check_branch
      %154 = sbr.rel (0) target = $region29
    $region28: #{bart_decoder_forward.5} parent=1 // pred_region
      %155 = dma.done [#allocation3], 256
    $region29: #{bart_decoder_forward.5} parent=1 // pred_fallthru
      _
    %156 = vsyncpa [#allocation3], 1

// kernel: bart_decoder_forward.4
$region0: #{bart_decoder_forward.4}
  #allocation0 [shape = 'u32[]', space=smem, size = 0x4, offset = 0x4, fixed_abs, tag = 'smem constant byte address 0x4 - core index']
  #allocation1 [shape = 'u32[144,128]{1,0:T(1,128)}', space=vmem, size = 0x12000, scoped, tag = 'internal scratch']
  #allocation2 [shape = 'f32[8,32]{1,0:T(8,128)}', space=vmem, size = 0x1000, scoped, tag = 'scratch operand']
  #allocation3 [shape = 'f32[8,32]{1,0:T(8,128)}', space=vmem, size = 0x1000, scoped, tag = 'scratch operand']
  #allocation4 [shape = 'f32[8,32]{1,0:T(8,128)}', space=vmem, size = 0x1000, scoped, tag = 'scratch operand']
  #allocation5 [shape = 'f32[8,32]{1,0:T(8,128)}', space=vmem, size = 0x1000, scoped, tag = 'scratch operand']
  #allocation6 [shape = 'f32[8,32]{1,0:T(8,128)}', space=vmem, size = 0x1000, scoped, tag = 'scratch operand']
  #allocation7 [shape = 'f32[8,32]{1,0:T(8,128)}', space=vmem, size = 0x1000, scoped, tag = 'scratch operand']
  %s0 = inlined_call_operand.vmem [shape: f32[2,8,32], index: 0, kind: input, shape index: {}]
  %s1 = inlined_call_operand.vmem [shape: f32[2,8,32], index: 1, kind: input, shape index: {}]
  %s2 = inlined_call_operand.vmem [shape: f32[1,32], index: 2, kind: input, shape index: {}]
  %s3 = inlined_call_operand.vmem [shape: f32[1,32], index: 3, kind: input, shape index: {}]
  %s4 = inlined_call_operand.vmem [shape: bf16[32,32], index: 4, kind: input, shape index: {}]
  %s5 = inlined_call_operand.vmem [shape: bf16[32,32], index: 5, kind: input, shape index: {}]
  %s6 = inlined_call_operand.vmem [shape: bf16[32,32], index: 6, kind: input, shape index: {}]
  %s7 = inlined_call_operand.hbm [shape: f32[1,32], index: 7, kind: input, shape index: {}]
  %s8 = inlined_call_operand.hbm [shape: f32[1,32], index: 8, kind: input, shape index: {}]
  %s9 = inlined_call_operand.hbm [shape: f32[1,32], index: 9, kind: input, shape index: {}]
  %s10 = inlined_call_operand.vmem [shape: bf16[32,32], index: 10, kind: input, shape index: {}]
  %s11 = inlined_call_operand.hbm [shape: f32[1,32], index: 11, kind: input, shape index: {}]
  %s12 = inlined_call_operand.hbm [shape: f32[1,32], index: 12, kind: input, shape index: {}]
  %s13 = inlined_call_operand.hbm [shape: f32[1,32], index: 13, kind: input, shape index: {}]
  %s14 = inlined_call_operand.vmem [shape: bf16[32,32], index: 14, kind: input, shape index: {}]
  %s15 = inlined_call_operand.vmem [shape: bf16[32,32], index: 15, kind: input, shape index: {}]
  %s16 = inlined_call_operand.vmem [shape: bf16[32,32], index: 16, kind: input, shape index: {}]
  %s17 = inlined_call_operand.hbm [shape: f32[1,32], index: 17, kind: input, shape index: {}]
  %s18 = inlined_call_operand.hbm [shape: f32[1,32], index: 18, kind: input, shape index: {}]
  %s19 = inlined_call_operand.hbm [shape: f32[1,32], index: 19, kind: input, shape index: {}]
  %s20 = inlined_call_operand.vmem [shape: bf16[32,32], index: 20, kind: input, shape index: {}]
  %s21 = inlined_call_operand.hbm [shape: f32[1,32], index: 21, kind: input, shape index: {}]
  %s22 = inlined_call_operand.hbm [shape: f32[1,32], index: 22, kind: input, shape index: {}]
  %s23 = inlined_call_operand.hbm [shape: f32[1,32], index: 23, kind: input, shape index: {}]
  %s24 = inlined_call_operand.vmem [shape: bf16[32,128], index: 24, kind: input, shape index: {}]
  %s25 = inlined_call_operand.hbm [shape: f32[1,128], index: 25, kind: input, shape index: {}]
  %s26 = inlined_call_operand.vmem [shape: bf16[128,32], index: 26, kind: input, shape index: {}]
  %s27 = inlined_call_operand.hbm [shape: f32[1,32], index: 27, kind: input, shape index: {}]
  %s28 = inlined_call_operand.vmem [shape: f32[2,8,32], index: 28, kind: output, shape index: {}]
  %s29 = sld [smem:[#allocation0]]
  $region201: #{bart_decoder_forward.4} parent=0
    _
  %s31 = ssub.s32 1, %s29
  %s32 = scalar_select 0, %s31, %s29
  $region1: #{bart_decoder_forward.4} parent=0
    #allocation8 [shape = 'u8[512]{0}', space=vmem, size = 0x400, scoped, tag = 'input window, operand 7, single buffered']
    #allocation9 [shape = 's32[2]{0}', space=sflag, size = 0x8, scoped, tag = 'scoped memory for bart_decoder_forward.4']
    #allocation10 [shape = 'u8[512]{0}', space=vmem, size = 0x400, scoped, tag = 'input window, operand 8, single buffered']
    #allocation11 [shape = 's32[1]{0}', space=sflag, size = 0x4, scoped, tag = 'scoped memory for bart_decoder_forward.4']
    #allocation12 [shape = 'u8[512]{0}', space=vmem, size = 0x400, scoped, tag = 'input window, operand 9, single buffered']
    #allocation13 [shape = 'u8[512]{0}', space=vmem, size = 0x400, scoped, tag = 'input window, operand 11, single buffered']
    #allocation14 [shape = 's32[1]{0}', space=sflag, size = 0x4, scoped, tag = 'scoped memory for bart_decoder_forward.4']
    #allocation15 [shape = 'u8[512]{0}', space=vmem, size = 0x400, scoped, tag = 'input window, operand 12, single buffered']
    #allocation16 [shape = 'u8[512]{0}', space=vmem, size = 0x400, scoped, tag = 'input window, operand 13, single buffered']
    #allocation17 [shape = 's32[1]{0}', space=sflag, size = 0x4, scoped, tag = 'scoped memory for bart_decoder_forward.4']
    #allocation18 [shape = 'u8[512]{0}', space=vmem, size = 0x400, scoped, tag = 'input window, operand 17, single buffered']
    #allocation19 [shape = 'u8[512]{0}', space=vmem, size = 0x400, scoped, tag = 'input window, operand 18, single buffered']
    #allocation20 [shape = 's32[1]{0}', space=sflag, size = 0x4, scoped, tag = 'scoped memory for bart_decoder_forward.4']
    #allocation21 [shape = 'u8[512]{0}', space=vmem, size = 0x400, scoped, tag = 'input window, operand 19, single buffered']
    #allocation22 [shape = 'u8[512]{0}', space=vmem, size = 0x400, scoped, tag = 'input window, operand 21, single buffered']
    #allocation23 [shape = 's32[1]{0}', space=sflag, size = 0x4, scoped, tag = 'scoped memory for bart_decoder_forward.4']
    #allocation24 [shape = 'u8[512]{0}', space=vmem, size = 0x400, scoped, tag = 'input window, operand 22, single buffered']
    #allocation25 [shape = 'u8[512]{0}', space=vmem, size = 0x400, scoped, tag = 'input window, operand 23, single buffered']
    #allocation26 [shape = 's32[1]{0}', space=sflag, size = 0x4, scoped, tag = 'scoped memory for bart_decoder_forward.4']
    #allocation27 [shape = 'u8[512]{0}', space=vmem, size = 0x400, scoped, tag = 'input window, operand 25, single buffered']
    #allocation28 [shape = 'u8[512]{0}', space=vmem, size = 0x400, scoped, tag = 'input window, operand 27, single buffered']
    #allocation29 [shape = 's32[1]{0}', space=sflag, size = 0x4, scoped, tag = 'scoped memory for bart_decoder_forward.4']
    %33 = vsyncpa [#allocation9], 0
    %34 = vsyncpa [#allocation11], 0
    %35 = vsyncpa [#allocation14], 0
    %36 = vsyncpa [#allocation17], 0
    %37 = vsyncpa [#allocation20], 0
    %38 = vsyncpa [#allocation23], 0
    %39 = vsyncpa [#allocation26], 0
    %40 = vsyncpa [#allocation29], 0
    loop: start=0, step=1, limit=4
    $region2: #{bart_decoder_forward.4} parent=1 // loop_pre_header
      _
    $region3: #{bart_decoder_forward.4} parent=1 // loop_header
      %s42 = sphi 0, %s46
      %p43 = scmp.ge.s32.totalorder %s42, 4
      %s52 = sphi 0, %s54
      %s55 = sphi 0, %s52
      %s56 = sphi 0, %s55
      %s72 = sphi 0, %s56
      %s78 = sphi 0, %s80
      %s81 = sphi 0, %s78
      %s82 = sphi 0, %s81
      %s98 = sphi 0, %s82
      %s102 = sphi 0, %s102
      %s104 = sphi 0, %s102
      %s105 = sphi 0, %s104
      %s119 = sphi 0, %s105
      %s123 = sphi 0, %s123
      %s125 = sphi 0, %s123
      %s126 = sphi 0, %s125
      %s140 = sphi 0, %s126
      %s144 = sphi 0, %s144
      %s146 = sphi 0, %s144
      %s147 = sphi 0, %s146
      %s161 = sphi 0, %s147
      %s165 = sphi 0, %s165
      %s167 = sphi 0, %s165
      %s168 = sphi 0, %s167
      %s182 = sphi 0, %s168
      %s186 = sphi 0, %s186
      %s188 = sphi 0, %s186
      %s189 = sphi 0, %s188
      %s203 = sphi 0, %s189
      %s207 = sphi 0, %s207
      %s209 = sphi 0, %s207
      %s210 = sphi 0, %s209
      %s224 = sphi 0, %s210
      %s228 = sphi 0, %s228
      %s230 = sphi 0, %s228
      %s231 = sphi 0, %s230
      %s245 = sphi 0, %s231
      %s249 = sphi 0, %s249
      %s251 = sphi 0, %s249
      %s252 = sphi 0, %s251
      %s266 = sphi 0, %s252
      %s270 = sphi 0, %s270
      %s272 = sphi 0, %s270
      %s273 = sphi 0, %s272
      %s287 = sphi 0, %s273
      %s291 = sphi 0, %s291
      %s293 = sphi 0, %s291
      %s294 = sphi 0, %s293
      %s308 = sphi 0, %s294
      %s312 = sphi 0, %s312
      %s314 = sphi 0, %s312
      %s315 = sphi 0, %s314
      %s329 = sphi 0, %s315
      %s333 = sphi 0, %s333
      %s335 = sphi 0, %s333
      %s336 = sphi 0, %s335
      %s350 = sphi 0, %s336
      %s354 = sphi 0, %s354
      %s356 = sphi 0, %s354
      %s357 = sphi 0, %s356
      %s371 = sphi 0, %s357
      %s375 = sphi 0, %s375
      %s377 = sphi 0, %s375
      %s378 = sphi 0, %s377
      %s392 = sphi 0, %s378
      %s396 = sphi 0, %s396
      %s398 = sphi 0, %s396
      %s399 = sphi 0, %s398
      %s413 = sphi 0, %s399
      %s417 = sphi 0, %s417
      %s419 = sphi 0, %s417
      %s420 = sphi 0, %s419
      %s434 = sphi 0, %s420
      %s438 = sphi 0, %s438
      %s440 = sphi 0, %s438
      %s441 = sphi 0, %s440
      %s455 = sphi 0, %s441
      %s459 = sphi 0, %s459
      %s461 = sphi 0, %s459
      %s462 = sphi 0, %s461
      %s476 = sphi 0, %s462
      %s480 = sphi 0, %s480
      %s482 = sphi 0, %s480
      %s483 = sphi 0, %s482
      %s497 = sphi 0, %s483
      %s501 = sphi 0, %s501
      %s503 = sphi 0, %s501
      %s504 = sphi 0, %s503
      %s518 = sphi 0, %s504
      %s522 = sphi 0, %s522
      %s524 = sphi 0, %s522
      %s525 = sphi 0, %s524
      %s539 = sphi 0, %s525
      %s543 = sphi 0, %s543
      %s545 = sphi 0, %s543
      %s546 = sphi 0, %s545
      %s560 = sphi 0, %s546
      %s564 = sphi 0, %s564
      %s566 = sphi 0, %s564
      %s567 = sphi 0, %s566
      %s581 = sphi 0, %s567
      %s585 = sphi 0, %s585
      %s587 = sphi 0, %s585
      %s588 = sphi 0, %s587
      %s602 = sphi 0, %s588
      %s606 = sphi 0, %s606
      %s608 = sphi 0, %s606
      %s609 = sphi 0, %s608
      %s623 = sphi 0, %s609
      %s627 = sphi 0, %s627
      %s629 = sphi 0, %s627
      %s630 = sphi 0, %s629
      %s644 = sphi 0, %s630
      %s650 = sphi 0, %s652
      %s653 = sphi 0, %s650
      %s654 = sphi 0, %s653
      %s670 = sphi 0, %s654
    $region4: #{bart_decoder_forward.4} parent=1 // loop_header_branch
      %45 = sbr.rel (%p43) target = $region8
    $region5: #{bart_decoder_forward.4} parent=1 // loop_body
      %s47 = ssub.s32 %s42, 1
      %s48 = ssub.s32 %s42, 2
      %s49 = sadd.s32 %s42, 1
      %s50 = ssub.s32 %s42, %s49
      %p51 = scmp.eq.s32.totalorder %s50, 0
      %s53 = sadd.s32 %s52, 1
      %s54 = scalar_select %p51, %s52, %s53
      %p57 = pneg %p51
      %p58 = scmp.eq.s32.totalorder %s42, 1
      %p59 = por %p57, %p58
      %p60 = scmp.ne.s32.totalorder %s52, %s55
      %p61 = scmp.eq.s32.totalorder %s42, 0
      %p62 = por %p60, %p61
      %p63 = scmp.ne.s32.totalorder %s52, %s55
      %p64 = scmp.eq.s32.totalorder %s47, 1
      %p65 = por %p63, %p64
      %p66 = scmp.ne.s32.totalorder %s55, %s56
      %p67 = scmp.eq.s32.totalorder %s47, 0
      %p68 = por %p66, %p67
      %p69 = scmp.ne.s32.totalorder %s55, %s56
      %p70 = scmp.eq.s32.totalorder %s48, 1
      %p71 = por %p69, %p70
      %p73 = scmp.ne.s32.totalorder %s56, %s72
      %p74 = scmp.eq.s32.totalorder %s48, 0
      %p75 = por %p73, %p74
      %s76 = ssub.s32 %s42, %s49
      %p77 = scmp.eq.s32.totalorder %s76, 0
      %s79 = sadd.s32 %s78, 1
      %s80 = scalar_select %p77, %s78, %s79
      %p83 = pneg %p77
      %p84 = scmp.eq.s32.totalorder %s42, 1
      %p85 = por %p83, %p84
      %p86 = scmp.ne.s32.totalorder %s78, %s81
      %p87 = scmp.eq.s32.totalorder %s42, 0
      %p88 = por %p86, %p87
      %p89 = scmp.ne.s32.totalorder %s78, %s81
      %p90 = scmp.eq.s32.totalorder %s47, 1
      %p91 = por %p89, %p90
      %p92 = scmp.ne.s32.totalorder %s81, %s82
      %p93 = scmp.eq.s32.totalorder %s47, 0
      %p94 = por %p92, %p93
      %p95 = scmp.ne.s32.totalorder %s81, %s82
      %p96 = scmp.eq.s32.totalorder %s48, 1
      %p97 = por %p95, %p96
      %p99 = scmp.ne.s32.totalorder %s82, %s98
      %p100 = scmp.eq.s32.totalorder %s48, 0
      %p101 = por %p99, %p100
      %s103 = sadd.s32 %s102, 1
      %p106 = scmp.eq.s32.totalorder %s42, 1
      %p107 = scmp.ne.s32.totalorder %s102, %s104
      %p108 = scmp.eq.s32.totalorder %s42, 0
      %p109 = por %p107, %p108
      %p110 = scmp.ne.s32.totalorder %s102, %s104
      %p111 = scmp.eq.s32.totalorder %s47, 1
      %p112 = por %p110, %p111
      %p113 = scmp.ne.s32.totalorder %s104, %s105
      %p114 = scmp.eq.s32.totalorder %s47, 0
      %p115 = por %p113, %p114
      %p116 = scmp.ne.s32.totalorder %s104, %s105
      %p117 = scmp.eq.s32.totalorder %s48, 1
      %p118 = por %p116, %p117
      %p120 = scmp.ne.s32.totalorder %s105, %s119
      %p121 = scmp.eq.s32.totalorder %s48, 0
      %p122 = por %p120, %p121
      %s124 = sadd.s32 %s123, 1
      %p127 = scmp.eq.s32.totalorder %s42, 1
      %p128 = scmp.ne.s32.totalorder %s123, %s125
      %p129 = scmp.eq.s32.totalorder %s42, 0
      %p130 = por %p128, %p129
      %p131 = scmp.ne.s32.totalorder %s123, %s125
      %p132 = scmp.eq.s32.totalorder %s47, 1
      %p133 = por %p131, %p132
      %p134 = scmp.ne.s32.totalorder %s125, %s126
      %p135 = scmp.eq.s32.totalorder %s47, 0
      %p136 = por %p134, %p135
      %p137 = scmp.ne.s32.totalorder %s125, %s126
      %p138 = scmp.eq.s32.totalorder %s48, 1
      %p139 = por %p137, %p138
      %p141 = scmp.ne.s32.totalorder %s126, %s140
      %p142 = scmp.eq.s32.totalorder %s48, 0
      %p143 = por %p141, %p142
      %s145 = sadd.s32 %s144, 1
      %p148 = scmp.eq.s32.totalorder %s42, 1
      %p149 = scmp.ne.s32.totalorder %s144, %s146
      %p150 = scmp.eq.s32.totalorder %s42, 0
      %p151 = por %p149, %p150
      %p152 = scmp.ne.s32.totalorder %s144, %s146
      %p153 = scmp.eq.s32.totalorder %s47, 1
      %p154 = por %p152, %p153
      %p155 = scmp.ne.s32.totalorder %s146, %s147
      %p156 = scmp.eq.s32.totalorder %s47, 0
      %p157 = por %p155, %p156
      %p158 = scmp.ne.s32.totalorder %s146, %s147
      %p159 = scmp.eq.s32.totalorder %s48, 1
      %p160 = por %p158, %p159
      %p162 = scmp.ne.s32.totalorder %s147, %s161
      %p163 = scmp.eq.s32.totalorder %s48, 0
      %p164 = por %p162, %p163
      %s166 = sadd.s32 %s165, 1
      %p169 = scmp.eq.s32.totalorder %s42, 1
      %p170 = scmp.ne.s32.totalorder %s165, %s167
      %p171 = scmp.eq.s32.totalorder %s42, 0
      %p172 = por %p170, %p171
      %p173 = scmp.ne.s32.totalorder %s165, %s167
      %p174 = scmp.eq.s32.totalorder %s47, 1
      %p175 = por %p173, %p174
      %p176 = scmp.ne.s32.totalorder %s167, %s168
      %p177 = scmp.eq.s32.totalorder %s47, 0
      %p178 = por %p176, %p177
      %p179 = scmp.ne.s32.totalorder %s167, %s168
      %p180 = scmp.eq.s32.totalorder %s48, 1
      %p181 = por %p179, %p180
      %p183 = scmp.ne.s32.totalorder %s168, %s182
      %p184 = scmp.eq.s32.totalorder %s48, 0
      %p185 = por %p183, %p184
      %s187 = sadd.s32 %s186, 1
      %p190 = scmp.eq.s32.totalorder %s42, 1
      %p191 = scmp.ne.s32.totalorder %s186, %s188
      %p192 = scmp.eq.s32.totalorder %s42, 0
      %p193 = por %p191, %p192
      %p194 = scmp.ne.s32.totalorder %s186, %s188
      %p195 = scmp.eq.s32.totalorder %s47, 1
      %p196 = por %p194, %p195
      %p197 = scmp.ne.s32.totalorder %s188, %s189
      %p198 = scmp.eq.s32.totalorder %s47, 0
      %p199 = por %p197, %p198
      %p200 = scmp.ne.s32.totalorder %s188, %s189
      %p201 = scmp.eq.s32.totalorder %s48, 1
      %p202 = por %p200, %p201
      %p204 = scmp.ne.s32.totalorder %s189, %s203
      %p205 = scmp.eq.s32.totalorder %s48, 0
      %p206 = por %p204, %p205
      %s208 = sadd.s32 %s207, 1
      %p211 = scmp.eq.s32.totalorder %s42, 1
      %p212 = scmp.ne.s32.totalorder %s207, %s209
      %p213 = scmp.eq.s32.totalorder %s42, 0
      %p214 = por %p212, %p213
      %p215 = scmp.ne.s32.totalorder %s207, %s209
      %p216 = scmp.eq.s32.totalorder %s47, 1
      %p217 = por %p215, %p216
      %p218 = scmp.ne.s32.totalorder %s209, %s210
      %p219 = scmp.eq.s32.totalorder %s47, 0
      %p220 = por %p218, %p219
      %p221 = scmp.ne.s32.totalorder %s209, %s210
      %p222 = scmp.eq.s32.totalorder %s48, 1
      %p223 = por %p221, %p222
      %p225 = scmp.ne.s32.totalorder %s210, %s224
      %p226 = scmp.eq.s32.totalorder %s48, 0
      %p227 = por %p225, %p226
      %s229 = sadd.s32 %s228, 1
      %p232 = scmp.eq.s32.totalorder %s42, 1
      %p233 = scmp.ne.s32.totalorder %s228, %s230
      %p234 = scmp.eq.s32.totalorder %s42, 0
      %p235 = por %p233, %p234
      %p236 = scmp.ne.s32.totalorder %s228, %s230
      %p237 = scmp.eq.s32.totalorder %s47, 1
      %p238 = por %p236, %p237
      %p239 = scmp.ne.s32.totalorder %s230, %s231
      %p240 = scmp.eq.s32.totalorder %s47, 0
      %p241 = por %p239, %p240
      %p242 = scmp.ne.s32.totalorder %s230, %s231
      %p243 = scmp.eq.s32.totalorder %s48, 1
      %p244 = por %p242, %p243
      %p246 = scmp.ne.s32.totalorder %s231, %s245
      %p247 = scmp.eq.s32.totalorder %s48, 0
      %p248 = por %p246, %p247
      %s250 = sadd.s32 %s249, 1
      %p253 = scmp.eq.s32.totalorder %s42, 1
      %p254 = scmp.ne.s32.totalorder %s249, %s251
      %p255 = scmp.eq.s32.totalorder %s42, 0
      %p256 = por %p254, %p255
      %p257 = scmp.ne.s32.totalorder %s249, %s251
      %p258 = scmp.eq.s32.totalorder %s47, 1
      %p259 = por %p257, %p258
      %p260 = scmp.ne.s32.totalorder %s251, %s252
      %p261 = scmp.eq.s32.totalorder %s47, 0
      %p262 = por %p260, %p261
      %p263 = scmp.ne.s32.totalorder %s251, %s252
      %p264 = scmp.eq.s32.totalorder %s48, 1
      %p265 = por %p263, %p264
      %p267 = scmp.ne.s32.totalorder %s252, %s266
      %p268 = scmp.eq.s32.totalorder %s48, 0
      %p269 = por %p267, %p268
      %s271 = sadd.s32 %s270, 1
      %p274 = scmp.eq.s32.totalorder %s42, 1
      %p275 = scmp.ne.s32.totalorder %s270, %s272
      %p276 = scmp.eq.s32.totalorder %s42, 0
      %p277 = por %p275, %p276
      %p278 = scmp.ne.s32.totalorder %s270, %s272
      %p279 = scmp.eq.s32.totalorder %s47, 1
      %p280 = por %p278, %p279
      %p281 = scmp.ne.s32.totalorder %s272, %s273
      %p282 = scmp.eq.s32.totalorder %s47, 0
      %p283 = por %p281, %p282
      %p284 = scmp.ne.s32.totalorder %s272, %s273
      %p285 = scmp.eq.s32.totalorder %s48, 1
      %p286 = por %p284, %p285
      %p288 = scmp.ne.s32.totalorder %s273, %s287
      %p289 = scmp.eq.s32.totalorder %s48, 0
      %p290 = por %p288, %p289
      %s292 = sadd.s32 %s291, 1
      %p295 = scmp.eq.s32.totalorder %s42, 1
      %p296 = scmp.ne.s32.totalorder %s291, %s293
      %p297 = scmp.eq.s32.totalorder %s42, 0
      %p298 = por %p296, %p297
      %p299 = scmp.ne.s32.totalorder %s291, %s293
      %p300 = scmp.eq.s32.totalorder %s47, 1
      %p301 = por %p299, %p300
      %p302 = scmp.ne.s32.totalorder %s293, %s294
      %p303 = scmp.eq.s32.totalorder %s47, 0
      %p304 = por %p302, %p303
      %p305 = scmp.ne.s32.totalorder %s293, %s294
      %p306 = scmp.eq.s32.totalorder %s48, 1
      %p307 = por %p305, %p306
      %p309 = scmp.ne.s32.totalorder %s294, %s308
      %p310 = scmp.eq.s32.totalorder %s48, 0
      %p311 = por %p309, %p310
      %s313 = sadd.s32 %s312, 1
      %p316 = scmp.eq.s32.totalorder %s42, 1
      %p317 = scmp.ne.s32.totalorder %s312, %s314
      %p318 = scmp.eq.s32.totalorder %s42, 0
      %p319 = por %p317, %p318
      %p320 = scmp.ne.s32.totalorder %s312, %s314
      %p321 = scmp.eq.s32.totalorder %s47, 1
      %p322 = por %p320, %p321
      %p323 = scmp.ne.s32.totalorder %s314, %s315
      %p324 = scmp.eq.s32.totalorder %s47, 0
      %p325 = por %p323, %p324
      %p326 = scmp.ne.s32.totalorder %s314, %s315
      %p327 = scmp.eq.s32.totalorder %s48, 1
      %p328 = por %p326, %p327
      %p330 = scmp.ne.s32.totalorder %s315, %s329
      %p331 = scmp.eq.s32.totalorder %s48, 0
      %p332 = por %p330, %p331
      %s334 = sadd.s32 %s333, 1
      %p337 = scmp.eq.s32.totalorder %s42, 1
      %p338 = scmp.ne.s32.totalorder %s333, %s335
      %p339 = scmp.eq.s32.totalorder %s42, 0
      %p340 = por %p338, %p339
      %p341 = scmp.ne.s32.totalorder %s333, %s335
      %p342 = scmp.eq.s32.totalorder %s47, 1
      %p343 = por %p341, %p342
      %p344 = scmp.ne.s32.totalorder %s335, %s336
      %p345 = scmp.eq.s32.totalorder %s47, 0
      %p346 = por %p344, %p345
      %p347 = scmp.ne.s32.totalorder %s335, %s336
      %p348 = scmp.eq.s32.totalorder %s48, 1
      %p349 = por %p347, %p348
      %p351 = scmp.ne.s32.totalorder %s336, %s350
      %p352 = scmp.eq.s32.totalorder %s48, 0
      %p353 = por %p351, %p352
      %s355 = sadd.s32 %s354, 1
      %p358 = scmp.eq.s32.totalorder %s42, 1
      %p359 = scmp.ne.s32.totalorder %s354, %s356
      %p360 = scmp.eq.s32.totalorder %s42, 0
      %p361 = por %p359, %p360
      %p362 = scmp.ne.s32.totalorder %s354, %s356
      %p363 = scmp.eq.s32.totalorder %s47, 1
      %p364 = por %p362, %p363
      %p365 = scmp.ne.s32.totalorder %s356, %s357
      %p366 = scmp.eq.s32.totalorder %s47, 0
      %p367 = por %p365, %p366
      %p368 = scmp.ne.s32.totalorder %s356, %s357
      %p369 = scmp.eq.s32.totalorder %s48, 1
      %p370 = por %p368, %p369
      %p372 = scmp.ne.s32.totalorder %s357, %s371
      %p373 = scmp.eq.s32.totalorder %s48, 0
      %p374 = por %p372, %p373
      %s376 = sadd.s32 %s375, 1
      %p379 = scmp.eq.s32.totalorder %s42, 1
      %p380 = scmp.ne.s32.totalorder %s375, %s377
      %p381 = scmp.eq.s32.totalorder %s42, 0
      %p382 = por %p380, %p381
      %p383 = scmp.ne.s32.totalorder %s375, %s377
      %p384 = scmp.eq.s32.totalorder %s47, 1
      %p385 = por %p383, %p384
      %p386 = scmp.ne.s32.totalorder %s377, %s378
      %p387 = scmp.eq.s32.totalorder %s47, 0
      %p388 = por %p386, %p387
      %p389 = scmp.ne.s32.totalorder %s377, %s378
      %p390 = scmp.eq.s32.totalorder %s48, 1
      %p391 = por %p389, %p390
      %p393 = scmp.ne.s32.totalorder %s378, %s392
      %p394 = scmp.eq.s32.totalorder %s48, 0
      %p395 = por %p393, %p394
      %s397 = sadd.s32 %s396, 1
      %p400 = scmp.eq.s32.totalorder %s42, 1
      %p401 = scmp.ne.s32.totalorder %s396, %s398
      %p402 = scmp.eq.s32.totalorder %s42, 0
      %p403 = por %p401, %p402
      %p404 = scmp.ne.s32.totalorder %s396, %s398
      %p405 = scmp.eq.s32.totalorder %s47, 1
      %p406 = por %p404, %p405
      %p407 = scmp.ne.s32.totalorder %s398, %s399
      %p408 = scmp.eq.s32.totalorder %s47, 0
      %p409 = por %p407, %p408
      %p410 = scmp.ne.s32.totalorder %s398, %s399
      %p411 = scmp.eq.s32.totalorder %s48, 1
      %p412 = por %p410, %p411
      %p414 = scmp.ne.s32.totalorder %s399, %s413
      %p415 = scmp.eq.s32.totalorder %s48, 0
      %p416 = por %p414, %p415
      %s418 = sadd.s32 %s417, 1
      %p421 = scmp.eq.s32.totalorder %s42, 1
      %p422 = scmp.ne.s32.totalorder %s417, %s419
      %p423 = scmp.eq.s32.totalorder %s42, 0
      %p424 = por %p422, %p423
      %p425 = scmp.ne.s32.totalorder %s417, %s419
      %p426 = scmp.eq.s32.totalorder %s47, 1
      %p427 = por %p425, %p426
      %p428 = scmp.ne.s32.totalorder %s419, %s420
      %p429 = scmp.eq.s32.totalorder %s47, 0
      %p430 = por %p428, %p429
      %p431 = scmp.ne.s32.totalorder %s419, %s420
      %p432 = scmp.eq.s32.totalorder %s48, 1
      %p433 = por %p431, %p432
      %p435 = scmp.ne.s32.totalorder %s420, %s434
      %p436 = scmp.eq.s32.totalorder %s48, 0
      %p437 = por %p435, %p436
      %s439 = sadd.s32 %s438, 1
      %p442 = scmp.eq.s32.totalorder %s42, 1
      %p443 = scmp.ne.s32.totalorder %s438, %s440
      %p444 = scmp.eq.s32.totalorder %s42, 0
      %p445 = por %p443, %p444
      %p446 = scmp.ne.s32.totalorder %s438, %s440
      %p447 = scmp.eq.s32.totalorder %s47, 1
      %p448 = por %p446, %p447
      %p449 = scmp.ne.s32.totalorder %s440, %s441
      %p450 = scmp.eq.s32.totalorder %s47, 0
      %p451 = por %p449, %p450
      %p452 = scmp.ne.s32.totalorder %s440, %s441
      %p453 = scmp.eq.s32.totalorder %s48, 1
      %p454 = por %p452, %p453
      %p456 = scmp.ne.s32.totalorder %s441, %s455
      %p457 = scmp.eq.s32.totalorder %s48, 0
      %p458 = por %p456, %p457
      %s460 = sadd.s32 %s459, 1
      %p463 = scmp.eq.s32.totalorder %s42, 1
      %p464 = scmp.ne.s32.totalorder %s459, %s461
      %p465 = scmp.eq.s32.totalorder %s42, 0
      %p466 = por %p464, %p465
      %p467 = scmp.ne.s32.totalorder %s459, %s461
      %p468 = scmp.eq.s32.totalorder %s47, 1
      %p469 = por %p467, %p468
      %p470 = scmp.ne.s32.totalorder %s461, %s462
      %p471 = scmp.eq.s32.totalorder %s47, 0
      %p472 = por %p470, %p471
      %p473 = scmp.ne.s32.totalorder %s461, %s462
      %p474 = scmp.eq.s32.totalorder %s48, 1
      %p475 = por %p473, %p474
      %p477 = scmp.ne.s32.totalorder %s462, %s476
      %p478 = scmp.eq.s32.totalorder %s48, 0
      %p479 = por %p477, %p478
      %s481 = sadd.s32 %s480, 1
      %p484 = scmp.eq.s32.totalorder %s42, 1
      %p485 = scmp.ne.s32.totalorder %s480, %s482
      %p486 = scmp.eq.s32.totalorder %s42, 0
      %p487 = por %p485, %p486
      %p488 = scmp.ne.s32.totalorder %s480, %s482
      %p489 = scmp.eq.s32.totalorder %s47, 1
      %p490 = por %p488, %p489
      %p491 = scmp.ne.s32.totalorder %s482, %s483
      %p492 = scmp.eq.s32.totalorder %s47, 0
      %p493 = por %p491, %p492
      %p494 = scmp.ne.s32.totalorder %s482, %s483
      %p495 = scmp.eq.s32.totalorder %s48, 1
      %p496 = por %p494, %p495
      %p498 = scmp.ne.s32.totalorder %s483, %s497
      %p499 = scmp.eq.s32.totalorder %s48, 0
      %p500 = por %p498, %p499
      %s502 = sadd.s32 %s501, 1
      %p505 = scmp.eq.s32.totalorder %s42, 1
      %p506 = scmp.ne.s32.totalorder %s501, %s503
      %p507 = scmp.eq.s32.totalorder %s42, 0
      %p508 = por %p506, %p507
      %p509 = scmp.ne.s32.totalorder %s501, %s503
      %p510 = scmp.eq.s32.totalorder %s47, 1
      %p511 = por %p509, %p510
      %p512 = scmp.ne.s32.totalorder %s503, %s504
      %p513 = scmp.eq.s32.totalorder %s47, 0
      %p514 = por %p512, %p513
      %p515 = scmp.ne.s32.totalorder %s503, %s504
      %p516 = scmp.eq.s32.totalorder %s48, 1
      %p517 = por %p515, %p516
      %p519 = scmp.ne.s32.totalorder %s504, %s518
      %p520 = scmp.eq.s32.totalorder %s48, 0
      %p521 = por %p519, %p520
      %s523 = sadd.s32 %s522, 1
      %p526 = scmp.eq.s32.totalorder %s42, 1
      %p527 = scmp.ne.s32.totalorder %s522, %s524
      %p528 = scmp.eq.s32.totalorder %s42, 0
      %p529 = por %p527, %p528
      %p530 = scmp.ne.s32.totalorder %s522, %s524
      %p531 = scmp.eq.s32.totalorder %s47, 1
      %p532 = por %p530, %p531
      %p533 = scmp.ne.s32.totalorder %s524, %s525
      %p534 = scmp.eq.s32.totalorder %s47, 0
      %p535 = por %p533, %p534
      %p536 = scmp.ne.s32.totalorder %s524, %s525
      %p537 = scmp.eq.s32.totalorder %s48, 1
      %p538 = por %p536, %p537
      %p540 = scmp.ne.s32.totalorder %s525, %s539
      %p541 = scmp.eq.s32.totalorder %s48, 0
      %p542 = por %p540, %p541
      %s544 = sadd.s32 %s543, 1
      %p547 = scmp.eq.s32.totalorder %s42, 1
      %p548 = scmp.ne.s32.totalorder %s543, %s545
      %p549 = scmp.eq.s32.totalorder %s42, 0
      %p550 = por %p548, %p549
      %p551 = scmp.ne.s32.totalorder %s543, %s545
      %p552 = scmp.eq.s32.totalorder %s47, 1
      %p553 = por %p551, %p552
      %p554 = scmp.ne.s32.totalorder %s545, %s546
      %p555 = scmp.eq.s32.totalorder %s47, 0
      %p556 = por %p554, %p555
      %p557 = scmp.ne.s32.totalorder %s545, %s546
      %p558 = scmp.eq.s32.totalorder %s48, 1
      %p559 = por %p557, %p558
      %p561 = scmp.ne.s32.totalorder %s546, %s560
      %p562 = scmp.eq.s32.totalorder %s48, 0
      %p563 = por %p561, %p562
      %s565 = sadd.s32 %s564, 1
      %p568 = scmp.eq.s32.totalorder %s42, 1
      %p569 = scmp.ne.s32.totalorder %s564, %s566
      %p570 = scmp.eq.s32.totalorder %s42, 0
      %p571 = por %p569, %p570
      %p572 = scmp.ne.s32.totalorder %s564, %s566
      %p573 = scmp.eq.s32.totalorder %s47, 1
      %p574 = por %p572, %p573
      %p575 = scmp.ne.s32.totalorder %s566, %s567
      %p576 = scmp.eq.s32.totalorder %s47, 0
      %p577 = por %p575, %p576
      %p578 = scmp.ne.s32.totalorder %s566, %s567
      %p579 = scmp.eq.s32.totalorder %s48, 1
      %p580 = por %p578, %p579
      %p582 = scmp.ne.s32.totalorder %s567, %s581
      %p583 = scmp.eq.s32.totalorder %s48, 0
      %p584 = por %p582, %p583
      %s586 = sadd.s32 %s585, 1
      %p589 = scmp.eq.s32.totalorder %s42, 1
      %p590 = scmp.ne.s32.totalorder %s585, %s587
      %p591 = scmp.eq.s32.totalorder %s42, 0
      %p592 = por %p590, %p591
      %p593 = scmp.ne.s32.totalorder %s585, %s587
      %p594 = scmp.eq.s32.totalorder %s47, 1
      %p595 = por %p593, %p594
      %p596 = scmp.ne.s32.totalorder %s587, %s588
      %p597 = scmp.eq.s32.totalorder %s47, 0
      %p598 = por %p596, %p597
      %p599 = scmp.ne.s32.totalorder %s587, %s588
      %p600 = scmp.eq.s32.totalorder %s48, 1
      %p601 = por %p599, %p600
      %p603 = scmp.ne.s32.totalorder %s588, %s602
      %p604 = scmp.eq.s32.totalorder %s48, 0
      %p605 = por %p603, %p604
      %s607 = sadd.s32 %s606, 1
      %p610 = scmp.eq.s32.totalorder %s42, 1
      %p611 = scmp.ne.s32.totalorder %s606, %s608
      %p612 = scmp.eq.s32.totalorder %s42, 0
      %p613 = por %p611, %p612
      %p614 = scmp.ne.s32.totalorder %s606, %s608
      %p615 = scmp.eq.s32.totalorder %s47, 1
      %p616 = por %p614, %p615
      %p617 = scmp.ne.s32.totalorder %s608, %s609
      %p618 = scmp.eq.s32.totalorder %s47, 0
      %p619 = por %p617, %p618
      %p620 = scmp.ne.s32.totalorder %s608, %s609
      %p621 = scmp.eq.s32.totalorder %s48, 1
      %p622 = por %p620, %p621
      %p624 = scmp.ne.s32.totalorder %s609, %s623
      %p625 = scmp.eq.s32.totalorder %s48, 0
      %p626 = por %p624, %p625
      %s628 = sadd.s32 %s627, 1
      %p631 = scmp.eq.s32.totalorder %s42, 1
      %p632 = scmp.ne.s32.totalorder %s627, %s629
      %p633 = scmp.eq.s32.totalorder %s42, 0
      %p634 = por %p632, %p633
      %p635 = scmp.ne.s32.totalorder %s627, %s629
      %p636 = scmp.eq.s32.totalorder %s47, 1
      %p637 = por %p635, %p636
      %p638 = scmp.ne.s32.totalorder %s629, %s630
      %p639 = scmp.eq.s32.totalorder %s47, 0
      %p640 = por %p638, %p639
      %p641 = scmp.ne.s32.totalorder %s629, %s630
      %p642 = scmp.eq.s32.totalorder %s48, 1
      %p643 = por %p641, %p642
      %p645 = scmp.ne.s32.totalorder %s630, %s644
      %p646 = scmp.eq.s32.totalorder %s48, 0
      %p647 = por %p645, %p646
      %s648 = ssub.s32 %s42, %s49
      %p649 = scmp.eq.s32.totalorder %s648, 0
      %s651 = sadd.s32 %s650, 1
      %s652 = scalar_select %p649, %s650, %s651
      %p655 = pneg %p649
      %p656 = scmp.eq.s32.totalorder %s42, 1
      %p657 = por %p655, %p656
      %p658 = scmp.ne.s32.totalorder %s650, %s653
      %p659 = scmp.eq.s32.totalorder %s42, 0
      %p660 = por %p658, %p659
      %p661 = scmp.ne.s32.totalorder %s650, %s653
      %p662 = scmp.eq.s32.totalorder %s47, 1
      %p663 = por %p661, %p662
      %p664 = scmp.ne.s32.totalorder %s653, %s654
      %p665 = scmp.eq.s32.totalorder %s47, 0
      %p666 = por %p664, %p665
      %p667 = scmp.ne.s32.totalorder %s653, %s654
      %p668 = scmp.eq.s32.totalorder %s48, 1
      %p669 = por %p667, %p668
      %p671 = scmp.ne.s32.totalorder %s654, %s670
      %p672 = scmp.eq.s32.totalorder %s48, 0
      %p673 = por %p671, %p672
      %p674 = scmp.le.s32.totalorder 1, %s42
      %p675 = scmp.lt.s32.totalorder %s42, 3
      %p676 = pnand %p674, %p675
      %p677 = pneg %p676
      // Predicated region
      $region9: #{bart_decoder_forward.4} parent=5 // pred_check
        _
      $region10: #{bart_decoder_forward.4} parent=5 // pred_check_branch
        %679 = sbr.rel (%p676) target = $region12
      $region11: #{bart_decoder_forward.4} parent=5 // pred_region
        %s680 = ssub.s32 %s42, 1
        // Predicated region
        $region13: #{bart_decoder_forward.4} parent=11 // pred_check
          %p681 = pneg %p115
        $region14: #{bart_decoder_forward.4} parent=11 // pred_check_branch
          %683 = sbr.rel (%p681) target = $region16
        $region15: #{bart_decoder_forward.4} parent=11 // pred_region
          _
        $region16: #{bart_decoder_forward.4} parent=11 // pred_fallthru
          _
        // Predicated region
        $region17: #{bart_decoder_forward.4} parent=11 // pred_check
          %p684 = pneg %p136
        $region18: #{bart_decoder_forward.4} parent=11 // pred_check_branch
          %686 = sbr.rel (%p684) target = $region20
        $region19: #{bart_decoder_forward.4} parent=11 // pred_region
          _
        $region20: #{bart_decoder_forward.4} parent=11 // pred_fallthru
          _
        // Predicated region
        $region21: #{bart_decoder_forward.4} parent=11 // pred_check
          %p687 = pneg %p157
        $region22: #{bart_decoder_forward.4} parent=11 // pred_check_branch
          %689 = sbr.rel (%p687) target = $region24
        $region23: #{bart_decoder_forward.4} parent=11 // pred_region
          _
        $region24: #{bart_decoder_forward.4} parent=11 // pred_fallthru
          _
        // Predicated region
        $region25: #{bart_decoder_forward.4} parent=11 // pred_check
          %p690 = pneg %p178
        $region26: #{bart_decoder_forward.4} parent=11 // pred_check_branch
          %692 = sbr.rel (%p690) target = $region28
        $region27: #{bart_decoder_forward.4} parent=11 // pred_region
          _
        $region28: #{bart_decoder_forward.4} parent=11 // pred_fallthru
          _
        // Predicated region
        $region29: #{bart_decoder_forward.4} parent=11 // pred_check
          %p693 = pneg %p199
        $region30: #{bart_decoder_forward.4} parent=11 // pred_check_branch
          %695 = sbr.rel (%p693) target = $region32
        $region31: #{bart_decoder_forward.4} parent=11 // pred_region
          _
        $region32: #{bart_decoder_forward.4} parent=11 // pred_fallthru
          _
        // Predicated region
        $region33: #{bart_decoder_forward.4} parent=11 // pred_check
          %p696 = pneg %p220
        $region34: #{bart_decoder_forward.4} parent=11 // pred_check_branch
          %698 = sbr.rel (%p696) target = $region36
        $region35: #{bart_decoder_forward.4} parent=11 // pred_region
          %s700 = ssub.s32 16, 16
          %701 = vsyncadd [#allocation9], %s700
          %s703 = sshll.u32 [#allocation8], 4
          %s704 = int_to_ptr.vmem [resolvable:$true] %s703
          %706 = dma.hbm_to_vmem [thread:$0]  %s7, 16, %s704, [#allocation9]
        $region36: #{bart_decoder_forward.4} parent=11 // pred_fallthru
          _
        // Predicated region
        $region37: #{bart_decoder_forward.4} parent=11 // pred_check
          %p707 = pneg %p241
        $region38: #{bart_decoder_forward.4} parent=11 // pred_check_branch
          %709 = sbr.rel (%p707) target = $region40
        $region39: #{bart_decoder_forward.4} parent=11 // pred_region
          %s711 = ssub.s32 16, 16
          %712 = vsyncadd [#allocation11], %s711
          %s714 = sshll.u32 [#allocation10], 4
          %s715 = int_to_ptr.vmem [resolvable:$true] %s714
          %717 = dma.hbm_to_vmem [thread:$0]  %s8, 16, %s715, [#allocation11]
        $region40: #{bart_decoder_forward.4} parent=11 // pred_fallthru
          _
        // Predicated region
        $region41: #{bart_decoder_forward.4} parent=11 // pred_check
          %p718 = pneg %p262
        $region42: #{bart_decoder_forward.4} parent=11 // pred_check_branch
          %720 = sbr.rel (%p718) target = $region44
        $region43: #{bart_decoder_forward.4} parent=11 // pred_region
          %s722 = ssub.s32 16, 16
          %723 = vsyncadd [#allocation11], %s722
          %s725 = sshll.u32 [#allocation12], 4
          %s726 = int_to_ptr.vmem [resolvable:$true] %s725
          %728 = dma.hbm_to_vmem [thread:$0]  %s9, 16, %s726, [#allocation11]
        $region44: #{bart_decoder_forward.4} parent=11 // pred_fallthru
          _
        // Predicated region
        $region45: #{bart_decoder_forward.4} parent=11 // pred_check
          %p729 = pneg %p283
        $region46: #{bart_decoder_forward.4} parent=11 // pred_check_branch
          %731 = sbr.rel (%p729) target = $region48
        $region47: #{bart_decoder_forward.4} parent=11 // pred_region
          _
        $region48: #{bart_decoder_forward.4} parent=11 // pred_fallthru
          _
        // Predicated region
        $region49: #{bart_decoder_forward.4} parent=11 // pred_check
          %p732 = pneg %p304
        $region50: #{bart_decoder_forward.4} parent=11 // pred_check_branch
          %734 = sbr.rel (%p732) target = $region52
        $region51: #{bart_decoder_forward.4} parent=11 // pred_region
          %s736 = ssub.s32 16, 16
          %737 = vsyncadd [#allocation14], %s736
          %s739 = sshll.u32 [#allocation13], 4
          %s740 = int_to_ptr.vmem [resolvable:$true] %s739
          %742 = dma.hbm_to_vmem [thread:$0]  %s11, 16, %s740, [#allocation14]
        $region52: #{bart_decoder_forward.4} parent=11 // pred_fallthru
          _
        // Predicated region
        $region53: #{bart_decoder_forward.4} parent=11 // pred_check
          %p743 = pneg %p325
        $region54: #{bart_decoder_forward.4} parent=11 // pred_check_branch
          %745 = sbr.rel (%p743) target = $region56
        $region55: #{bart_decoder_forward.4} parent=11 // pred_region
          %s747 = ssub.s32 16, 16
          %748 = vsyncadd [#allocation14], %s747
          %s750 = sshll.u32 [#allocation15], 4
          %s751 = int_to_ptr.vmem [resolvable:$true] %s750
          %753 = dma.hbm_to_vmem [thread:$0]  %s12, 16, %s751, [#allocation14]
        $region56: #{bart_decoder_forward.4} parent=11 // pred_fallthru
          _
        // Predicated region
        $region57: #{bart_decoder_forward.4} parent=11 // pred_check
          %p754 = pneg %p346
        $region58: #{bart_decoder_forward.4} parent=11 // pred_check_branch
          %756 = sbr.rel (%p754) target = $region60
        $region59: #{bart_decoder_forward.4} parent=11 // pred_region
          %s758 = ssub.s32 16, 16
          %759 = vsyncadd [#allocation17], %s758
          %s761 = sshll.u32 [#allocation16], 4
          %s762 = int_to_ptr.vmem [resolvable:$true] %s761
          %764 = dma.hbm_to_vmem [thread:$0]  %s13, 16, %s762, [#allocation17]
        $region60: #{bart_decoder_forward.4} parent=11 // pred_fallthru
          _
        // Predicated region
        $region61: #{bart_decoder_forward.4} parent=11 // pred_check
          %p765 = pneg %p367
        $region62: #{bart_decoder_forward.4} parent=11 // pred_check_branch
          %767 = sbr.rel (%p765) target = $region64
        $region63: #{bart_decoder_forward.4} parent=11 // pred_region
          _
        $region64: #{bart_decoder_forward.4} parent=11 // pred_fallthru
          _
        // Predicated region
        $region65: #{bart_decoder_forward.4} parent=11 // pred_check
          %p768 = pneg %p388
        $region66: #{bart_decoder_forward.4} parent=11 // pred_check_branch
          %770 = sbr.rel (%p768) target = $region68
        $region67: #{bart_decoder_forward.4} parent=11 // pred_region
          _
        $region68: #{bart_decoder_forward.4} parent=11 // pred_fallthru
          _
        // Predicated region
        $region69: #{bart_decoder_forward.4} parent=11 // pred_check
          %p771 = pneg %p409
        $region70: #{bart_decoder_forward.4} parent=11 // pred_check_branch
          %773 = sbr.rel (%p771) target = $region72
        $region71: #{bart_decoder_forward.4} parent=11 // pred_region
          _
        $region72: #{bart_decoder_forward.4} parent=11 // pred_fallthru
          _
        // Predicated region
        $region73: #{bart_decoder_forward.4} parent=11 // pred_check
          %p774 = pneg %p430
        $region74: #{bart_decoder_forward.4} parent=11 // pred_check_branch
          %776 = sbr.rel (%p774) target = $region76
        $region75: #{bart_decoder_forward.4} parent=11 // pred_region
          %s778 = ssub.s32 16, 16
          %779 = vsyncadd [#allocation17], %s778
          %s781 = sshll.u32 [#allocation18], 4
          %s782 = int_to_ptr.vmem [resolvable:$true] %s781
          %784 = dma.hbm_to_vmem [thread:$0]  %s17, 16, %s782, [#allocation17]
        $region76: #{bart_decoder_forward.4} parent=11 // pred_fallthru
          _
        // Predicated region
        $region77: #{bart_decoder_forward.4} parent=11 // pred_check
          %p785 = pneg %p451
        $region78: #{bart_decoder_forward.4} parent=11 // pred_check_branch
          %787 = sbr.rel (%p785) target = $region80
        $region79: #{bart_decoder_forward.4} parent=11 // pred_region
          %s789 = ssub.s32 16, 16
          %790 = vsyncadd [#allocation20], %s789
          %s792 = sshll.u32 [#allocation19], 4
          %s793 = int_to_ptr.vmem [resolvable:$true] %s792
          %795 = dma.hbm_to_vmem [thread:$0]  %s18, 16, %s793, [#allocation20]
        $region80: #{bart_decoder_forward.4} parent=11 // pred_fallthru
          _
        // Predicated region
        $region81: #{bart_decoder_forward.4} parent=11 // pred_check
          %p796 = pneg %p472
        $region82: #{bart_decoder_forward.4} parent=11 // pred_check_branch
          %798 = sbr.rel (%p796) target = $region84
        $region83: #{bart_decoder_forward.4} parent=11 // pred_region
          %s800 = ssub.s32 16, 16
          %801 = vsyncadd [#allocation20], %s800
          %s803 = sshll.u32 [#allocation21], 4
          %s804 = int_to_ptr.vmem [resolvable:$true] %s803
          %806 = dma.hbm_to_vmem [thread:$0]  %s19, 16, %s804, [#allocation20]
        $region84: #{bart_decoder_forward.4} parent=11 // pred_fallthru
          _
        // Predicated region
        $region85: #{bart_decoder_forward.4} parent=11 // pred_check
          %p807 = pneg %p493
        $region86: #{bart_decoder_forward.4} parent=11 // pred_check_branch
          %809 = sbr.rel (%p807) target = $region88
        $region87: #{bart_decoder_forward.4} parent=11 // pred_region
          _
        $region88: #{bart_decoder_forward.4} parent=11 // pred_fallthru
          _
        // Predicated region
        $region89: #{bart_decoder_forward.4} parent=11 // pred_check
          %p810 = pneg %p514
        $region90: #{bart_decoder_forward.4} parent=11 // pred_check_branch
          %812 = sbr.rel (%p810) target = $region92
        $region91: #{bart_decoder_forward.4} parent=11 // pred_region
          %s814 = ssub.s32 16, 16
          %815 = vsyncadd [#allocation23], %s814
          %s817 = sshll.u32 [#allocation22], 4
          %s818 = int_to_ptr.vmem [resolvable:$true] %s817
          %820 = dma.hbm_to_vmem [thread:$0]  %s21, 16, %s818, [#allocation23]
        $region92: #{bart_decoder_forward.4} parent=11 // pred_fallthru
          _
        // Predicated region
        $region93: #{bart_decoder_forward.4} parent=11 // pred_check
          %p821 = pneg %p535
        $region94: #{bart_decoder_forward.4} parent=11 // pred_check_branch
          %823 = sbr.rel (%p821) target = $region96
        $region95: #{bart_decoder_forward.4} parent=11 // pred_region
          %s825 = ssub.s32 16, 16
          %826 = vsyncadd [#allocation23], %s825
          %s828 = sshll.u32 [#allocation24], 4
          %s829 = int_to_ptr.vmem [resolvable:$true] %s828
          %831 = dma.hbm_to_vmem [thread:$0]  %s22, 16, %s829, [#allocation23]
        $region96: #{bart_decoder_forward.4} parent=11 // pred_fallthru
          _
        // Predicated region
        $region97: #{bart_decoder_forward.4} parent=11 // pred_check
          %p832 = pneg %p556
        $region98: #{bart_decoder_forward.4} parent=11 // pred_check_branch
          %834 = sbr.rel (%p832) target = $region100
        $region99: #{bart_decoder_forward.4} parent=11 // pred_region
          %s836 = ssub.s32 16, 16
          %837 = vsyncadd [#allocation26], %s836
          %s839 = sshll.u32 [#allocation25], 4
          %s840 = int_to_ptr.vmem [resolvable:$true] %s839
          %842 = dma.hbm_to_vmem [thread:$0]  %s23, 16, %s840, [#allocation26]
        $region100: #{bart_decoder_forward.4} parent=11 // pred_fallthru
          _
        // Predicated region
        $region101: #{bart_decoder_forward.4} parent=11 // pred_check
          %p843 = pneg %p577
        $region102: #{bart_decoder_forward.4} parent=11 // pred_check_branch
          %845 = sbr.rel (%p843) target = $region104
        $region103: #{bart_decoder_forward.4} parent=11 // pred_region
          _
        $region104: #{bart_decoder_forward.4} parent=11 // pred_fallthru
          _
        // Predicated region
        $region105: #{bart_decoder_forward.4} parent=11 // pred_check
          %p846 = pneg %p598
        $region106: #{bart_decoder_forward.4} parent=11 // pred_check_branch
          %848 = sbr.rel (%p846) target = $region108
        $region107: #{bart_decoder_forward.4} parent=11 // pred_region
          %s850 = ssub.s32 16, 16
          %851 = vsyncadd [#allocation26], %s850
          %s853 = sshll.u32 [#allocation27], 4
          %s854 = int_to_ptr.vmem [resolvable:$true] %s853
          %856 = dma.hbm_to_vmem [thread:$0]  %s25, 16, %s854, [#allocation26]
        $region108: #{bart_decoder_forward.4} parent=11 // pred_fallthru
          _
        // Predicated region
        $region109: #{bart_decoder_forward.4} parent=11 // pred_check
          %p857 = pneg %p619
        $region110: #{bart_decoder_forward.4} parent=11 // pred_check_branch
          %859 = sbr.rel (%p857) target = $region112
        $region111: #{bart_decoder_forward.4} parent=11 // pred_region
          _
        $region112: #{bart_decoder_forward.4} parent=11 // pred_fallthru
          _
        // Predicated region
        $region113: #{bart_decoder_forward.4} parent=11 // pred_check
          %p860 = pneg %p640
        $region114: #{bart_decoder_forward.4} parent=11 // pred_check_branch
          %862 = sbr.rel (%p860) target = $region116
        $region115: #{bart_decoder_forward.4} parent=11 // pred_region
          %s864 = ssub.s32 16, 16
          %865 = vsyncadd [#allocation29], %s864
          %s867 = sshll.u32 [#allocation28], 4
          %s868 = int_to_ptr.vmem [resolvable:$true] %s867
          %870 = dma.hbm_to_vmem [thread:$0]  %s27, 16, %s868, [#allocation29]
        $region116: #{bart_decoder_forward.4} parent=11 // pred_fallthru
          _
      $region12: #{bart_decoder_forward.4} parent=5 // pred_fallthru
        _
      %p871 = scmp.lt.s32.totalorder %s42, 2
      // Predicated region
      $region117: #{bart_decoder_forward.4} parent=5 // pred_check
        %p872 = pneg %p871
      $region118: #{bart_decoder_forward.4} parent=5 // pred_check_branch
        %874 = sbr.rel (%p872) target = $region120
      $region119: #{bart_decoder_forward.4} parent=5 // pred_region
        // Predicated region
        $region121: #{bart_decoder_forward.4} parent=119 // pred_check
          %p875 = pneg %p62
        $region122: #{bart_decoder_forward.4} parent=119 // pred_check_branch
          %877 = sbr.rel (%p875) target = $region124
        $region123: #{bart_decoder_forward.4} parent=119 // pred_region
          %p878 = scmp.lt.s32.totalorder %s42, 1
          %s879 = scalar_select %p878, %s42, 1
          %s880 = smul.addr %s879, 8
          %s881 = scalar_lea.vmem %s0, %s880
        $region124: #{bart_decoder_forward.4} parent=119 // pred_fallthru
          _
        // Predicated region
        $region125: #{bart_decoder_forward.4} parent=119 // pred_check
          %p882 = pneg %p88
        $region126: #{bart_decoder_forward.4} parent=119 // pred_check_branch
          %884 = sbr.rel (%p882) target = $region128
        $region127: #{bart_decoder_forward.4} parent=119 // pred_region
          %p885 = scmp.lt.s32.totalorder %s42, 1
          %s886 = scalar_select %p885, %s42, 1
          %s887 = smul.addr %s886, 8
          %s888 = scalar_lea.vmem %s1, %s887
        $region128: #{bart_decoder_forward.4} parent=119 // pred_fallthru
          _
      $region120: #{bart_decoder_forward.4} parent=5 // pred_fallthru
        _
      %p889 = scmp.le.s32.totalorder 1, %s42
      %p890 = scmp.lt.s32.totalorder %s42, 3
      %p891 = pnand %p889, %p890
      %p892 = pneg %p891
      // Predicated region
      $region129: #{bart_decoder_forward.4} parent=5 // pred_check
        _
      $region130: #{bart_decoder_forward.4} parent=5 // pred_check_branch
        %894 = sbr.rel (%p891) target = $region132
      $region131: #{bart_decoder_forward.4} parent=5 // pred_region
        %s895 = ssub.s32 %s42, 1
        // Predicated region
        $region133: #{bart_decoder_forward.4} parent=131 // pred_check
          %p896 = pneg %p220
        $region134: #{bart_decoder_forward.4} parent=131 // pred_check_branch
          %898 = sbr.rel (%p896) target = $region136
        $region135: #{bart_decoder_forward.4} parent=131 // pred_region
          %899 = dma.done [#allocation9], 16
        $region136: #{bart_decoder_forward.4} parent=131 // pred_fallthru
          _
        // Predicated region
        $region137: #{bart_decoder_forward.4} parent=131 // pred_check
          %p900 = pneg %p241
        $region138: #{bart_decoder_forward.4} parent=131 // pred_check_branch
          %902 = sbr.rel (%p900) target = $region140
        $region139: #{bart_decoder_forward.4} parent=131 // pred_region
          %903 = dma.done [#allocation11], 16
        $region140: #{bart_decoder_forward.4} parent=131 // pred_fallthru
          _
        // Predicated region
        $region141: #{bart_decoder_forward.4} parent=131 // pred_check
          %p904 = pneg %p262
        $region142: #{bart_decoder_forward.4} parent=131 // pred_check_branch
          %906 = sbr.rel (%p904) target = $region144
        $region143: #{bart_decoder_forward.4} parent=131 // pred_region
          %907 = dma.done [#allocation11], 16
        $region144: #{bart_decoder_forward.4} parent=131 // pred_fallthru
          _
        // Predicated region
        $region145: #{bart_decoder_forward.4} parent=131 // pred_check
          %p908 = pneg %p304
        $region146: #{bart_decoder_forward.4} parent=131 // pred_check_branch
          %910 = sbr.rel (%p908) target = $region148
        $region147: #{bart_decoder_forward.4} parent=131 // pred_region
          %911 = dma.done [#allocation14], 16
        $region148: #{bart_decoder_forward.4} parent=131 // pred_fallthru
          _
        // Predicated region
        $region149: #{bart_decoder_forward.4} parent=131 // pred_check
          %p912 = pneg %p325
        $region150: #{bart_decoder_forward.4} parent=131 // pred_check_branch
          %914 = sbr.rel (%p912) target = $region152
        $region151: #{bart_decoder_forward.4} parent=131 // pred_region
          %915 = dma.done [#allocation14], 16
        $region152: #{bart_decoder_forward.4} parent=131 // pred_fallthru
          _
        // Predicated region
        $region153: #{bart_decoder_forward.4} parent=131 // pred_check
          %p916 = pneg %p346
        $region154: #{bart_decoder_forward.4} parent=131 // pred_check_branch
          %918 = sbr.rel (%p916) target = $region156
        $region155: #{bart_decoder_forward.4} parent=131 // pred_region
          %919 = dma.done [#allocation17], 16
        $region156: #{bart_decoder_forward.4} parent=131 // pred_fallthru
          _
        // Predicated region
        $region157: #{bart_decoder_forward.4} parent=131 // pred_check
          %p920 = pneg %p430
        $region158: #{bart_decoder_forward.4} parent=131 // pred_check_branch
          %922 = sbr.rel (%p920) target = $region160
        $region159: #{bart_decoder_forward.4} parent=131 // pred_region
          %923 = dma.done [#allocation17], 16
        $region160: #{bart_decoder_forward.4} parent=131 // pred_fallthru
          _
        // Predicated region
        $region161: #{bart_decoder_forward.4} parent=131 // pred_check
          %p924 = pneg %p451
        $region162: #{bart_decoder_forward.4} parent=131 // pred_check_branch
          %926 = sbr.rel (%p924) target = $region164
        $region163: #{bart_decoder_forward.4} parent=131 // pred_region
          %927 = dma.done [#allocation20], 16
        $region164: #{bart_decoder_forward.4} parent=131 // pred_fallthru
          _
        // Predicated region
        $region165: #{bart_decoder_forward.4} parent=131 // pred_check
          %p928 = pneg %p472
        $region166: #{bart_decoder_forward.4} parent=131 // pred_check_branch
          %930 = sbr.rel (%p928) target = $region168
        $region167: #{bart_decoder_forward.4} parent=131 // pred_region
          %931 = dma.done [#allocation20], 16
        $region168: #{bart_decoder_forward.4} parent=131 // pred_fallthru
          _
        // Predicated region
        $region169: #{bart_decoder_forward.4} parent=131 // pred_check
          %p932 = pneg %p514
        $region170: #{bart_decoder_forward.4} parent=131 // pred_check_branch
          %934 = sbr.rel (%p932) target = $region172
        $region171: #{bart_decoder_forward.4} parent=131 // pred_region
          %935 = dma.done [#allocation23], 16
        $region172: #{bart_decoder_forward.4} parent=131 // pred_fallthru
          _
        // Predicated region
        $region173: #{bart_decoder_forward.4} parent=131 // pred_check
          %p936 = pneg %p535
        $region174: #{bart_decoder_forward.4} parent=131 // pred_check_branch
          %938 = sbr.rel (%p936) target = $region176
        $region175: #{bart_decoder_forward.4} parent=131 // pred_region
          %939 = dma.done [#allocation23], 16
        $region176: #{bart_decoder_forward.4} parent=131 // pred_fallthru
          _
        // Predicated region
        $region177: #{bart_decoder_forward.4} parent=131 // pred_check
          %p940 = pneg %p556
        $region178: #{bart_decoder_forward.4} parent=131 // pred_check_branch
          %942 = sbr.rel (%p940) target = $region180
        $region179: #{bart_decoder_forward.4} parent=131 // pred_region
          %943 = dma.done [#allocation26], 16
        $region180: #{bart_decoder_forward.4} parent=131 // pred_fallthru
          _
        // Predicated region
        $region181: #{bart_decoder_forward.4} parent=131 // pred_check
          %p944 = pneg %p598
        $region182: #{bart_decoder_forward.4} parent=131 // pred_check_branch
          %946 = sbr.rel (%p944) target = $region184
        $region183: #{bart_decoder_forward.4} parent=131 // pred_region
          %947 = dma.done [#allocation26], 16
        $region184: #{bart_decoder_forward.4} parent=131 // pred_fallthru
          _
        // Predicated region
        $region185: #{bart_decoder_forward.4} parent=131 // pred_check
          %p948 = pneg %p640
        $region186: #{bart_decoder_forward.4} parent=131 // pred_check_branch
          %950 = sbr.rel (%p948) target = $region188
        $region187: #{bart_decoder_forward.4} parent=131 // pred_region
          %951 = dma.done [#allocation29], 16
        $region188: #{bart_decoder_forward.4} parent=131 // pred_fallthru
          _
        %p952 = scmp.lt.s32.totalorder %s47, 1
        %s953 = scalar_select %p952, %s47, 1
        %s954 = smul.addr %s953, 8
        %s955 = scalar_lea.vmem %s0, %s954
        %p956 = pneg %p68
        %p957 = pneg %p65
        %p958 = scmp.lt.s32.totalorder %s47, 1
        %s959 = scalar_select %p958, %s47, 1
        %s960 = smul.addr %s959, 8
        %s961 = scalar_lea.vmem %s1, %s960
        %p962 = pneg %p94
        %p963 = pneg %p91
        %p964 = pneg %p115
        %p965 = pneg %p112
        %p966 = pneg %p136
        %p967 = pneg %p133
        %p968 = pneg %p157
        %p969 = pneg %p154
        %p970 = pneg %p178
        %p971 = pneg %p175
        %p972 = pneg %p199
        %p973 = pneg %p196
        %p974 = pneg %p220
        %p975 = pneg %p217
        %p976 = pneg %p241
        %p977 = pneg %p238
        %p978 = pneg %p262
        %p979 = pneg %p259
        %p980 = pneg %p283
        %p981 = pneg %p280
        %p982 = pneg %p304
        %p983 = pneg %p301
        %p984 = pneg %p325
        %p985 = pneg %p322
        %p986 = pneg %p346
        %p987 = pneg %p343
        %p988 = pneg %p367
        %p989 = pneg %p364
        %p990 = pneg %p388
        %p991 = pneg %p385
        %p992 = pneg %p409
        %p993 = pneg %p406
        %p994 = pneg %p430
        %p995 = pneg %p427
        %p996 = pneg %p451
        %p997 = pneg %p448
        %p998 = pneg %p472
        %p999 = pneg %p469
        %p1000 = pneg %p493
        %p1001 = pneg %p490
        %p1002 = pneg %p514
        %p1003 = pneg %p511
        %p1004 = pneg %p535
        %p1005 = pneg %p532
        %p1006 = pneg %p556
        %p1007 = pneg %p553
        %p1008 = pneg %p577
        %p1009 = pneg %p574
        %p1010 = pneg %p598
        %p1011 = pneg %p595
        %p1012 = pneg %p619
        %p1013 = pneg %p616
        %p1014 = pneg %p640
        %p1015 = pneg %p637
        %p1016 = pneg %p666
        %p1017 = pneg %p663
        %p1018 = scmp.lt.s32.totalorder %s47, 1
        %s1019 = scalar_select %p1018, %s47, 1
        %s1020 = smul.addr %s1019, 8
        %s1021 = scalar_lea.vmem %s28, %s1020
        %p1022 = scmp.lt.s32.totalorder %s47, 1
        %s1023 = scalar_select %p1022, %s47, 1
        %s1024 = smul.addr %s1023, 8
        %s1025 = scalar_lea.vmem %s0, %s1024
        %p1026 = scmp.lt.s32.totalorder %s47, 1
        %s1027 = scalar_select %p1026, %s47, 1
        %s1028 = smul.addr %s1027, 8
        %s1029 = scalar_lea.vmem %s1, %s1028
        %p1030 = scmp.lt.s32.totalorder %s47, 1
        %s1031 = scalar_select %p1030, %s47, 1
        %s1032 = smul.addr %s1031, 8
        %s1033 = scalar_lea.vmem %s28, %s1032
        %v1035 = vld [vmem:[%s1025] sm:$0xff]
        %v1036 = vld [vmem:[%s1029] sm:$0xff]
        %v1037 = vld [vmem:[%s2] sm:$0x1]
        %v1038 = vld [vmem:[%s3] sm:$0x1]
        %vm1039 = vcmask 261120
        %v1040 = vsel %vm1039, %v1035, 0.0
        %1041 = vadd.xlane.f32.xlu0 %v1040
        %v1042 = vpop.xlane.xlu0 %1041
        %v1043 = vrcp.pop 32.0
        %v1044 = vmul.f32 %v1042, %v1043
        %v1045 = vsub.f32 %v1035, %v1044
        %v1046 = vmul.f32 %v1045, %v1045
        %v1047 = vsel %vm1039, %v1046, 0.0
        %1048 = vadd.xlane.f32.xlu0 %v1047
        %v1049 = vpop.xlane.xlu0 %1048
        %v1050 = vmul.f32 %v1049, %v1043
        %v1051 = vadd.f32 %v1050, 1e-05
        %v1052 = vrsqrt.pop %v1051
        %v1053 = vmul.f32 %v1045, %v1052
        %v1055 = vlaneseq
        %v1056 = vshrl.u32 %v1055, 7
        %v1057 = vsub.s32 0, %v1056
        %v1058 = vrot.slane %v1037, %v1057
        %v1060 = vmul.f32 %v1053, %v1058
        %v1062 = vlaneseq
        %v1063 = vshrl.u32 %v1062, 7
        %v1064 = vsub.s32 0, %v1063
        %v1065 = vrot.slane %v1038, %v1064
        %v1067 = vadd.f32 %v1060, %v1065
        %v1068 = vld [vmem:[#allocation8] sm:$0x1]
        %v1069 = vld [vmem:[#allocation10] sm:$0x1]
        %v1070 = vld [vmem:[#allocation12] sm:$0x1]
        %v1071 = vld [vmem:[#allocation13] sm:$0x1]
        %v1072 = vpack.c.bf16 %v1067, %v1067
        %v1073 = vld [vmem:[%s4] sm:$0xf]
        %v1074 = vld [vmem:[%s4 + $0x4] sm:$0xf]
        %v1075 = vld [vmem:[%s4 + $0x8] sm:$0xf]
        %v1076 = vld [vmem:[%s4 + $0xc] sm:$0xf]
        %v1078 = vlaneseq
        %v1079 = vshrl.u32 %v1078, 7
        %v1080 = vsub.s32 0, %v1079
        %v1081 = vrot.slane %v1068, %v1080
        %v1087 = vunpack.c.l.b16 %v1073
        %v1088 = vunpack.c.l.b16 %v1074
        %v1089 = vunpack.c.l.b16 %v1075
        %v1090 = vunpack.c.l.b16 %v1076
        %v1091 = vpack.c.b16 %v1088, %v1087
        %v1092 = vpack.c.b16 %v1090, %v1089
        %v1096 = vsel %vm1039, %v1072, 0
        %1098 = vmatprep.subr.bf16.mxu0 0
        %1099 = vmatpush1.bf16.msra.mxu0 %v1091
        %1100 = vmatprep.subr.bf16.mxu0 0
        %1101 = vmatpush1.bf16.msra.mxu0 %v1092
        %1102 = vmatprep.subr.bf16.mxu0 0
        %1103 = vmatpush1.bf16.msra.mxu0 0
        %1104 = vmatprep.subr.bf16.mxu0 0
        %1105 = vmatpush1.bf16.msra.mxu0 0
        %1106 = vmatprep.subr.bf16.mxu0 0
        %1107 = vmatpush1.bf16.msra.mxu0 0
        %1108 = vmatprep.subr.bf16.mxu0 0
        %1109 = vmatpush1.bf16.msra.mxu0 0
        %1110 = vmatprep.subr.bf16.mxu0 0
        %1111 = vmatpush1.bf16.msra.mxu0 0
        %1112 = vmatprep.subr.bf16.mxu0 0
        %1113 = vmatpush1.bf16.msra.mxu0 0
        %1114 = vmatprep.subr.bf16.mxu0 0
        %1115 = vmatpush1.bf16.msra.mxu0 0
        %1116 = vmatprep.subr.bf16.mxu0 0
        %1117 = vmatpush1.bf16.msra.mxu0 0
        %1118 = vmatprep.subr.bf16.mxu0 0
        %1119 = vmatpush1.bf16.msra.mxu0 0
        %1120 = vmatprep.subr.bf16.mxu0 0
        %1121 = vmatpush1.bf16.msra.mxu0 0
        %1122 = vmatprep.subr.bf16.mxu0 0
        %1123 = vmatpush1.bf16.msra.mxu0 0
        %1124 = vmatprep.subr.bf16.mxu0 0
        %1125 = vmatpush1.bf16.msra.mxu0 0
        %1126 = vmatprep.subr.bf16.mxu0 0
        %1127 = vmatpush1.bf16.msra.mxu0 0
        %1128 = vmatprep.subr.bf16.mxu0 0
        %1129 = vmatpush1.bf16.msra.mxu0 0
        %1130 = vmatprep.mubr.bf16.mxu0 0
        %1131 = vmatmul.mubr.bf16.gmra.mrb[0].mxu0 %v1096
        %v1132 = vpop.f32.mrb[0].mxu0
        %v1133 = vadd.f32 %v1081, %v1132
        %v1134 = vpop.f32.mrb[0].mxu0
        %v1135 = vpop.f32.mrb[0].mxu0
        %v1136 = vpop.f32.mrb[0].mxu0
        %1137 = vdwg.mxu0
        %v1138 = vmul.f32 %v1133, 0.35355338
        %1139 = vst.msk [vmem:[#allocation2] sm:$0xff] %vm1039, %v1138
        %v1140 = vld [vmem:[%s5] sm:$0xf]
        %v1141 = vld [vmem:[%s5 + $0x4] sm:$0xf]
        %v1142 = vld [vmem:[%s5 + $0x8] sm:$0xf]
        %v1143 = vld [vmem:[%s5 + $0xc] sm:$0xf]
        %v1145 = vlaneseq
        %v1146 = vshrl.u32 %v1145, 7
        %v1147 = vsub.s32 0, %v1146
        %v1148 = vrot.slane %v1069, %v1147
        %v1154 = vunpack.c.l.b16 %v1140
        %v1155 = vunpack.c.l.b16 %v1141
        %v1156 = vunpack.c.l.b16 %v1142
        %v1157 = vunpack.c.l.b16 %v1143
        %v1158 = vpack.c.b16 %v1155, %v1154
        %v1159 = vpack.c.b16 %v1157, %v1156
        %1162 = vmatprep.subr.bf16.mxu0 0
        %1163 = vmatpush1.bf16.msra.mxu0 %v1158
        %1164 = vmatprep.subr.bf16.mxu0 0
        %1165 = vmatpush1.bf16.msra.mxu0 %v1159
        %1166 = vmatprep.subr.bf16.mxu0 0
        %1167 = vmatpush1.bf16.msra.mxu0 0
        %1168 = vmatprep.subr.bf16.mxu0 0
        %1169 = vmatpush1.bf16.msra.mxu0 0
        %1170 = vmatprep.subr.bf16.mxu0 0
        %1171 = vmatpush1.bf16.msra.mxu0 0
        %1172 = vmatprep.subr.bf16.mxu0 0
        %1173 = vmatpush1.bf16.msra.mxu0 0
        %1174 = vmatprep.subr.bf16.mxu0 0
        %1175 = vmatpush1.bf16.msra.mxu0 0
        %1176 = vmatprep.subr.bf16.mxu0 0
        %1177 = vmatpush1.bf16.msra.mxu0 0
        %1178 = vmatprep.subr.bf16.mxu0 0
        %1179 = vmatpush1.bf16.msra.mxu0 0
        %1180 = vmatprep.subr.bf16.mxu0 0
        %1181 = vmatpush1.bf16.msra.mxu0 0
        %1182 = vmatprep.subr.bf16.mxu0 0
        %1183 = vmatpush1.bf16.msra.mxu0 0
        %1184 = vmatprep.subr.bf16.mxu0 0
        %1185 = vmatpush1.bf16.msra.mxu0 0
        %1186 = vmatprep.subr.bf16.mxu0 0
        %1187 = vmatpush1.bf16.msra.mxu0 0
        %1188 = vmatprep.subr.bf16.mxu0 0
        %1189 = vmatpush1.bf16.msra.mxu0 0
        %1190 = vmatprep.subr.bf16.mxu0 0
        %1191 = vmatpush1.bf16.msra.mxu0 0
        %1192 = vmatprep.subr.bf16.mxu0 0
        %1193 = vmatpush1.bf16.msra.mxu0 0
        %1194 = vmatprep.mubr.bf16.mxu0 0
        %1195 = vmatmul.mubr.bf16.gmra.mrb[0].mxu0 %v1096
        %v1196 = vpop.f32.mrb[0].mxu0
        %v1197 = vadd.f32 %v1148, %v1196
        %v1198 = vpop.f32.mrb[0].mxu0
        %v1199 = vpop.f32.mrb[0].mxu0
        %v1200 = vpop.f32.mrb[0].mxu0
        %1201 = vdwg.mxu0
        %1202 = vst.msk [vmem:[#allocation3] sm:$0xff] %vm1039, %v1197
        %v1203 = vld [vmem:[%s6] sm:$0xf]
        %v1204 = vld [vmem:[%s6 + $0x4] sm:$0xf]
        %v1205 = vld [vmem:[%s6 + $0x8] sm:$0xf]
        %v1206 = vld [vmem:[%s6 + $0xc] sm:$0xf]
        %v1208 = vlaneseq
        %v1209 = vshrl.u32 %v1208, 7
        %v1210 = vsub.s32 0, %v1209
        %v1211 = vrot.slane %v1070, %v1210
        %v1217 = vunpack.c.l.b16 %v1203
        %v1218 = vunpack.c.l.b16 %v1204
        %v1219 = vunpack.c.l.b16 %v1205
        %v1220 = vunpack.c.l.b16 %v1206
        %v1221 = vpack.c.b16 %v1218, %v1217
        %v1222 = vpack.c.b16 %v1220, %v1219
        %1225 = vmatprep.subr.bf16.mxu0 0
        %1226 = vmatpush1.bf16.msra.mxu0 %v1221
        %1227 = vmatprep.subr.bf16.mxu0 0
        %1228 = vmatpush1.bf16.msra.mxu0 %v1222
        %1229 = vmatprep.subr.bf16.mxu0 0
        %1230 = vmatpush1.bf16.msra.mxu0 0
        %1231 = vmatprep.subr.bf16.mxu0 0
        %1232 = vmatpush1.bf16.msra.mxu0 0
        %1233 = vmatprep.subr.bf16.mxu0 0
        %1234 = vmatpush1.bf16.msra.mxu0 0
        %1235 = vmatprep.subr.bf16.mxu0 0
        %1236 = vmatpush1.bf16.msra.mxu0 0
        %1237 = vmatprep.subr.bf16.mxu0 0
        %1238 = vmatpush1.bf16.msra.mxu0 0
        %1239 = vmatprep.subr.bf16.mxu0 0
        %1240 = vmatpush1.bf16.msra.mxu0 0
        %1241 = vmatprep.subr.bf16.mxu0 0
        %1242 = vmatpush1.bf16.msra.mxu0 0
        %1243 = vmatprep.subr.bf16.mxu0 0
        %1244 = vmatpush1.bf16.msra.mxu0 0
        %1245 = vmatprep.subr.bf16.mxu0 0
        %1246 = vmatpush1.bf16.msra.mxu0 0
        %1247 = vmatprep.subr.bf16.mxu0 0
        %1248 = vmatpush1.bf16.msra.mxu0 0
        %1249 = vmatprep.subr.bf16.mxu0 0
        %1250 = vmatpush1.bf16.msra.mxu0 0
        %1251 = vmatprep.subr.bf16.mxu0 0
        %1252 = vmatpush1.bf16.msra.mxu0 0
        %1253 = vmatprep.subr.bf16.mxu0 0
        %1254 = vmatpush1.bf16.msra.mxu0 0
        %1255 = vmatprep.subr.bf16.mxu0 0
        %1256 = vmatpush1.bf16.msra.mxu0 0
        %1257 = vmatprep.mubr.bf16.mxu0 0
        %1258 = vmatmul.mubr.bf16.gmra.mrb[0].mxu0 %v1096
        %v1259 = vpop.f32.mrb[0].mxu0
        %v1260 = vadd.f32 %v1211, %v1259
        %v1261 = vpop.f32.mrb[0].mxu0
        %v1262 = vpop.f32.mrb[0].mxu0
        %v1263 = vpop.f32.mrb[0].mxu0
        %1264 = vdwg.mxu0
        %1265 = vst.msk [vmem:[#allocation4] sm:$0xff] %vm1039, %v1260
        %v1266 = vlaneseq
        %v1267 = vshrl.u32 %v1266, 7
        %v1268 = vlaneseq
        %v1269 = vand.u32 %v1268, 127
        %vm1270 = vcmp.gt.s32.totalorder %v1269, %v1267
        %v1271 = vsel %vm1270, -1e+30, 0.0
        %v1272 = vld [vmem:[#allocation2] sm:$0xff]
        %v1273 = vpack.c.bf16 %v1272, %v1272
        %v1274 = vld [vmem:[#allocation3] sm:$0xff]
        %v1275 = vpack.c.bf16 %v1274, %v1274
        %v1276 = vld [vmem:[#allocation4] sm:$0xff]
        %v1277 = vpack.c.bf16 %v1276, %v1276
        %vm1278 = vcmask 64512
        %v1280 = vsel %vm1278, %v1273, 0
        %v1283 = vsel %vm1278, %v1275, 0
        %1285 = vmatprep.subr.bf16.mxu0 0
        %1286 = vmatpush1.bf16.xpose.msra.mxu0 %v1283
        %1287 = vmatprep.subr.bf16.mxu0 0
        %1288 = vmatpush1.bf16.xpose.msra.mxu0 0
        %1289 = vmatprep.subr.bf16.mxu0 0
        %1290 = vmatpush1.bf16.xpose.msra.mxu0 0
        %1291 = vmatprep.subr.bf16.mxu0 0
        %1292 = vmatpush1.bf16.xpose.msra.mxu0 0
        %1293 = vmatprep.subr.bf16.mxu0 0
        %1294 = vmatpush1.bf16.xpose.msra.mxu0 0
        %1295 = vmatprep.subr.bf16.mxu0 0
        %1296 = vmatpush1.bf16.xpose.msra.mxu0 0
        %1297 = vmatprep.subr.bf16.mxu0 0
        %1298 = vmatpush1.bf16.xpose.msra.mxu0 0
        %1299 = vmatprep.subr.bf16.mxu0 0
        %1300 = vmatpush1.bf16.xpose.msra.mxu0 0
        %1301 = vmatprep.subr.bf16.mxu0 0
        %1302 = vmatpush1.bf16.xpose.msra.mxu0 0
        %1303 = vmatprep.subr.bf16.mxu0 0
        %1304 = vmatpush1.bf16.xpose.msra.mxu0 0
        %1305 = vmatprep.subr.bf16.mxu0 0
        %1306 = vmatpush1.bf16.xpose.msra.mxu0 0
        %1307 = vmatprep.subr.bf16.mxu0 0
        %1308 = vmatpush1.bf16.xpose.msra.mxu0 0
        %1309 = vmatprep.subr.bf16.mxu0 0
        %1310 = vmatpush1.bf16.xpose.msra.mxu0 0
        %1311 = vmatprep.subr.bf16.mxu0 0
        %1312 = vmatpush1.bf16.xpose.msra.mxu0 0
        %1313 = vmatprep.subr.bf16.mxu0 0
        %1314 = vmatpush1.bf16.xpose.msra.mxu0 0
        %1315 = vmatprep.subr.bf16.mxu0 0
        %1316 = vmatpush1.bf16.xpose.msra.mxu0 0
        %1317 = vmatprep.mubr.bf16.mxu0 0
        %1318 = vmatmul.mubr.bf16.gmra.mrb[0].mxu0 %v1280
        %v1319 = vpop.f32.mrb[0].mxu0
        %v1320 = vadd.f32 %v1271, %v1319
        %v1321 = vpop.f32.mrb[0].mxu0
        %v1322 = vpop.f32.mrb[0].mxu0
        %v1323 = vpop.f32.mrb[0].mxu0
        %1324 = vdwg.mxu0
        %v1325 = vsel %vm1278, %v1320, -inf
        %1326 = vmax.xlane.f32.xlu0 %v1325
        %v1327 = vpop.xlane.xlu0 %1326
        %v1328 = vsub.f32 %v1320, %v1327
        %v1329 = vmul.f32 %v1328, 1.442695
        %v1330 = vpow.pop %v1329
        %v1331 = vsel %vm1278, %v1330, 0.0
        %1332 = vadd.xlane.f32.xlu0 %v1331
        %v1333 = vpop.xlane.xlu0 %1332
        %v1334 = vrcp.pop %v1333
        %v1335 = vmul.f32 %v1330, %v1334
        %v1336 = vpack.c.bf16 %v1335, %v1335
        %v1338 = vsel %vm1278, %v1336, 0
        %vm1340 = vcmask 1043456
        %v1342 = vsel %vm1340, %v1277, 0
        %1344 = vmatprep.subr.bf16.mxu0 0
        %1345 = vmatpush1.bf16.msra.mxu0 %v1342
        %1346 = vmatprep.subr.bf16.mxu0 0
        %1347 = vmatpush1.bf16.msra.mxu0 0
        %1348 = vmatprep.subr.bf16.mxu0 0
        %1349 = vmatpush1.bf16.msra.mxu0 0
        %1350 = vmatprep.subr.bf16.mxu0 0
        %1351 = vmatpush1.bf16.msra.mxu0 0
        %1352 = vmatprep.subr.bf16.mxu0 0
        %1353 = vmatpush1.bf16.msra.mxu0 0
        %1354 = vmatprep.subr.bf16.mxu0 0
        %1355 = vmatpush1.bf16.msra.mxu0 0
        %1356 = vmatprep.subr.bf16.mxu0 0
        %1357 = vmatpush1.bf16.msra.mxu0 0
        %1358 = vmatprep.subr.bf16.mxu0 0
        %1359 = vmatpush1.bf16.msra.mxu0 0
        %1360 = vmatprep.subr.bf16.mxu0 0
        %1361 = vmatpush1.bf16.msra.mxu0 0
        %1362 = vmatprep.subr.bf16.mxu0 0
        %1363 = vmatpush1.bf16.msra.mxu0 0
        %1364 = vmatprep.subr.bf16.mxu0 0
        %1365 = vmatpush1.bf16.msra.mxu0 0
        %1366 = vmatprep.subr.bf16.mxu0 0
        %1367 = vmatpush1.bf16.msra.mxu0 0
        %1368 = vmatprep.subr.bf16.mxu0 0
        %1369 = vmatpush1.bf16.msra.mxu0 0
        %1370 = vmatprep.subr.bf16.mxu0 0
        %1371 = vmatpush1.bf16.msra.mxu0 0
        %1372 = vmatprep.subr.bf16.mxu0 0
        %1373 = vmatpush1.bf16.msra.mxu0 0
        %1374 = vmatprep.subr.bf16.mxu0 0
        %1375 = vmatpush1.bf16.msra.mxu0 0
        %1376 = vmatprep.mubr.bf16.mxu0 0
        %1377 = vmatmul.mubr.bf16.gmra.mrb[0].mxu0 %v1338
        %v1378 = vpop.f32.mrb[0].mxu0
        %v1379 = vadd.f32 0.0, %v1378
        %v1380 = vpop.f32.mrb[0].mxu0
        %v1381 = vpop.f32.mrb[0].mxu0
        %v1382 = vpop.f32.mrb[0].mxu0
        %1383 = vdwg.mxu0
        %1384 = vst.msk [vmem:[#allocation7] sm:$0xff] %vm1278, %v1379
        %v1385 = vld [vmem:[#allocation2] sm:$0xff]
        %v1386 = vpack.c.bf16 %v1385, %v1385
        %v1387 = vld [vmem:[#allocation3] sm:$0xff]
        %v1388 = vpack.c.bf16 %v1387, %v1387
        %v1389 = vld [vmem:[#allocation4] sm:$0xff]
        %v1390 = vpack.c.bf16 %v1389, %v1389
        %1392 = vrot.lane.b32.xlu0 %v1386, 120
        %v1393 = vpop.permute.xlu0 %1392
        %1395 = vrot.lane.b32.xlu0 %v1388, 120
        %v1396 = vpop.permute.xlu0 %1395
        %v1398 = vsel %vm1278, %v1393, 0
        %v1401 = vsel %vm1278, %v1396, 0
        %1403 = vmatprep.subr.bf16.mxu0 0
        %1404 = vmatpush1.bf16.xpose.msra.mxu0 %v1401
        %1405 = vmatprep.subr.bf16.mxu0 0
        %1406 = vmatpush1.bf16.xpose.msra.mxu0 0
        %1407 = vmatprep.subr.bf16.mxu0 0
        %1408 = vmatpush1.bf16.xpose.msra.mxu0 0
        %1409 = vmatprep.subr.bf16.mxu0 0
        %1410 = vmatpush1.bf16.xpose.msra.mxu0 0
        %1411 = vmatprep.subr.bf16.mxu0 0
        %1412 = vmatpush1.bf16.xpose.msra.mxu0 0
        %1413 = vmatprep.subr.bf16.mxu0 0
        %1414 = vmatpush1.bf16.xpose.msra.mxu0 0
        %1415 = vmatprep.subr.bf16.mxu0 0
        %1416 = vmatpush1.bf16.xpose.msra.mxu0 0
        %1417 = vmatprep.subr.bf16.mxu0 0
        %1418 = vmatpush1.bf16.xpose.msra.mxu0 0
        %1419 = vmatprep.subr.bf16.mxu0 0
        %1420 = vmatpush1.bf16.xpose.msra.mxu0 0
        %1421 = vmatprep.subr.bf16.mxu0 0
        %1422 = vmatpush1.bf16.xpose.msra.mxu0 0
        %1423 = vmatprep.subr.bf16.mxu0 0
        %1424 = vmatpush1.bf16.xpose.msra.mxu0 0
        %1425 = vmatprep.subr.bf16.mxu0 0
        %1426 = vmatpush1.bf16.xpose.msra.mxu0 0
        %1427 = vmatprep.subr.bf16.mxu0 0
        %1428 = vmatpush1.bf16.xpose.msra.mxu0 0
        %1429 = vmatprep.subr.bf16.mxu0 0
        %1430 = vmatpush1.bf16.xpose.msra.mxu0 0
        %1431 = vmatprep.subr.bf16.mxu0 0
        %1432 = vmatpush1.bf16.xpose.msra.mxu0 0
        %1433 = vmatprep.subr.bf16.mxu0 0
        %1434 = vmatpush1.bf16.xpose.msra.mxu0 0
        %1435 = vmatprep.mubr.bf16.mxu0 0
        %1436 = vmatmul.mubr.bf16.gmra.mrb[0].mxu0 %v1398
        %v1437 = vpop.f32.mrb[0].mxu0
        %v1438 = vadd.f32 %v1271, %v1437
        %v1439 = vpop.f32.mrb[0].mxu0
        %v1440 = vpop.f32.mrb[0].mxu0
        %v1441 = vpop.f32.mrb[0].mxu0
        %1442 = vdwg.mxu0
        %v1443 = vsel %vm1278, %v1438, -inf
        %1444 = vmax.xlane.f32.xlu0 %v1443
        %v1445 = vpop.xlane.xlu0 %1444
        %v1446 = vsub.f32 %v1438, %v1445
        %v1447 = vmul.f32 %v1446, 1.442695
        %v1448 = vpow.pop %v1447
        %v1449 = vsel %vm1278, %v1448, 0.0
        %1450 = vadd.xlane.f32.xlu0 %v1449
        %v1451 = vpop.xlane.xlu0 %1450
        %v1452 = vrcp.pop %v1451
        %v1453 = vmul.f32 %v1448, %v1452
        %v1454 = vpack.c.bf16 %v1453, %v1453
        %1456 = vrot.lane.b32.xlu0 %v1390, 120
        %v1457 = vpop.permute.xlu0 %1456
        %v1459 = vsel %vm1278, %v1454, 0
        %v1462 = vsel %vm1340, %v1457, 0
        %1464 = vmatprep.subr.bf16.mxu0 0
        %1465 = vmatpush1.bf16.msra.mxu0 %v1462
        %1466 = vmatprep.subr.bf16.mxu0 0
        %1467 = vmatpush1.bf16.msra.mxu0 0
        %1468 = vmatprep.subr.bf16.mxu0 0
        %1469 = vmatpush1.bf16.msra.mxu0 0
        %1470 = vmatprep.subr.bf16.mxu0 0
        %1471 = vmatpush1.bf16.msra.mxu0 0
        %1472 = vmatprep.subr.bf16.mxu0 0
        %1473 = vmatpush1.bf16.msra.mxu0 0
        %1474 = vmatprep.subr.bf16.mxu0 0
        %1475 = vmatpush1.bf16.msra.mxu0 0
        %1476 = vmatprep.subr.bf16.mxu0 0
        %1477 = vmatpush1.bf16.msra.mxu0 0
        %1478 = vmatprep.subr.bf16.mxu0 0
        %1479 = vmatpush1.bf16.msra.mxu0 0
        %1480 = vmatprep.subr.bf16.mxu0 0
        %1481 = vmatpush1.bf16.msra.mxu0 0
        %1482 = vmatprep.subr.bf16.mxu0 0
        %1483 = vmatpush1.bf16.msra.mxu0 0
        %1484 = vmatprep.subr.bf16.mxu0 0
        %1485 = vmatpush1.bf16.msra.mxu0 0
        %1486 = vmatprep.subr.bf16.mxu0 0
        %1487 = vmatpush1.bf16.msra.mxu0 0
        %1488 = vmatprep.subr.bf16.mxu0 0
        %1489 = vmatpush1.bf16.msra.mxu0 0
        %1490 = vmatprep.subr.bf16.mxu0 0
        %1491 = vmatpush1.bf16.msra.mxu0 0
        %1492 = vmatprep.subr.bf16.mxu0 0
        %1493 = vmatpush1.bf16.msra.mxu0 0
        %1494 = vmatprep.subr.bf16.mxu0 0
        %1495 = vmatpush1.bf16.msra.mxu0 0
        %1496 = vmatprep.mubr.bf16.mxu0 0
        %1497 = vmatmul.mubr.bf16.gmra.mrb[0].mxu0 %v1459
        %v1498 = vpop.f32.mrb[0].mxu0
        %v1499 = vadd.f32 0.0, %v1498
        %v1500 = vpop.f32.mrb[0].mxu0
        %v1501 = vpop.f32.mrb[0].mxu0
        %v1502 = vpop.f32.mrb[0].mxu0
        %1503 = vdwg.mxu0
        %1505 = vrot.lane.b32.xlu0 %v1499, 8
        %v1506 = vpop.permute.xlu0 %1505
        %vm1508 = vcmask 130112
        %1509 = vst.msk [vmem:[#allocation7] sm:$0xff] %vm1508, %v1506
        %v1510 = vld [vmem:[#allocation2] sm:$0xff]
        %v1511 = vpack.c.bf16 %v1510, %v1510
        %v1512 = vld [vmem:[#allocation3] sm:$0xff]
        %v1513 = vpack.c.bf16 %v1512, %v1512
        %v1514 = vld [vmem:[#allocation4] sm:$0xff]
        %v1515 = vpack.c.bf16 %v1514, %v1514
        %1517 = vrot.lane.b32.xlu0 %v1511, 112
        %v1518 = vpop.permute.xlu0 %1517
        %1520 = vrot.lane.b32.xlu0 %v1513, 112
        %v1521 = vpop.permute.xlu0 %1520
        %v1523 = vsel %vm1278, %v1518, 0
        %v1526 = vsel %vm1278, %v1521, 0
        %1528 = vmatprep.subr.bf16.mxu0 0
        %1529 = vmatpush1.bf16.xpose.msra.mxu0 %v1526
        %1530 = vmatprep.subr.bf16.mxu0 0
        %1531 = vmatpush1.bf16.xpose.msra.mxu0 0
        %1532 = vmatprep.subr.bf16.mxu0 0
        %1533 = vmatpush1.bf16.xpose.msra.mxu0 0
        %1534 = vmatprep.subr.bf16.mxu0 0
        %1535 = vmatpush1.bf16.xpose.msra.mxu0 0
        %1536 = vmatprep.subr.bf16.mxu0 0
        %1537 = vmatpush1.bf16.xpose.msra.mxu0 0
        %1538 = vmatprep.subr.bf16.mxu0 0
        %1539 = vmatpush1.bf16.xpose.msra.mxu0 0
        %1540 = vmatprep.subr.bf16.mxu0 0
        %1541 = vmatpush1.bf16.xpose.msra.mxu0 0
        %1542 = vmatprep.subr.bf16.mxu0 0
        %1543 = vmatpush1.bf16.xpose.msra.mxu0 0
        %1544 = vmatprep.subr.bf16.mxu0 0
        %1545 = vmatpush1.bf16.xpose.msra.mxu0 0
        %1546 = vmatprep.subr.bf16.mxu0 0
        %1547 = vmatpush1.bf16.xpose.msra.mxu0 0
        %1548 = vmatprep.subr.bf16.mxu0 0
        %1549 = vmatpush1.bf16.xpose.msra.mxu0 0
        %1550 = vmatprep.subr.bf16.mxu0 0
        %1551 = vmatpush1.bf16.xpose.msra.mxu0 0
        %1552 = vmatprep.subr.bf16.mxu0 0
        %1553 = vmatpush1.bf16.xpose.msra.mxu0 0
        %1554 = vmatprep.subr.bf16.mxu0 0
        %1555 = vmatpush1.bf16.xpose.msra.mxu0 0
        %1556 = vmatprep.subr.bf16.mxu0 0
        %1557 = vmatpush1.bf16.xpose.msra.mxu0 0
        %1558 = vmatprep.subr.bf16.mxu0 0
        %1559 = vmatpush1.bf16.xpose.msra.mxu0 0
        %1560 = vmatprep.mubr.bf16.mxu0 0
        %1561 = vmatmul.mubr.bf16.gmra.mrb[0].mxu0 %v1523
        %v1562 = vpop.f32.mrb[0].mxu0
        %v1563 = vadd.f32 %v1271, %v1562
        %v1564 = vpop.f32.mrb[0].mxu0
        %v1565 = vpop.f32.mrb[0].mxu0
        %v1566 = vpop.f32.mrb[0].mxu0
        %1567 = vdwg.mxu0
        %v1568 = vsel %vm1278, %v1563, -inf
        %1569 = vmax.xlane.f32.xlu0 %v1568
        %v1570 = vpop.xlane.xlu0 %1569
        %v1571 = vsub.f32 %v1563, %v1570
        %v1572 = vmul.f32 %v1571, 1.442695
        %v1573 = vpow.pop %v1572
        %v1574 = vsel %vm1278, %v1573, 0.0
        %1575 = vadd.xlane.f32.xlu0 %v1574
        %v1576 = vpop.xlane.xlu0 %1575
        %v1577 = vrcp.pop %v1576
        %v1578 = vmul.f32 %v1573, %v1577
        %v1579 = vpack.c.bf16 %v1578, %v1578
        %1581 = vrot.lane.b32.xlu0 %v1515, 112
        %v1582 = vpop.permute.xlu0 %1581
        %v1584 = vsel %vm1278, %v1579, 0
        %v1587 = vsel %vm1340, %v1582, 0
        %1589 = vmatprep.subr.bf16.mxu0 0
        %1590 = vmatpush1.bf16.msra.mxu0 %v1587
        %1591 = vmatprep.subr.bf16.mxu0 0
        %1592 = vmatpush1.bf16.msra.mxu0 0
        %1593 = vmatprep.subr.bf16.mxu0 0
        %1594 = vmatpush1.bf16.msra.mxu0 0
        %1595 = vmatprep.subr.bf16.mxu0 0
        %1596 = vmatpush1.bf16.msra.mxu0 0
        %1597 = vmatprep.subr.bf16.mxu0 0
        %1598 = vmatpush1.bf16.msra.mxu0 0
        %1599 = vmatprep.subr.bf16.mxu0 0
        %1600 = vmatpush1.bf16.msra.mxu0 0
        %1601 = vmatprep.subr.bf16.mxu0 0
        %1602 = vmatpush1.bf16.msra.mxu0 0
        %1603 = vmatprep.subr.bf16.mxu0 0
        %1604 = vmatpush1.bf16.msra.mxu0 0
        %1605 = vmatprep.subr.bf16.mxu0 0
        %1606 = vmatpush1.bf16.msra.mxu0 0
        %1607 = vmatprep.subr.bf16.mxu0 0
        %1608 = vmatpush1.bf16.msra.mxu0 0
        %1609 = vmatprep.subr.bf16.mxu0 0
        %1610 = vmatpush1.bf16.msra.mxu0 0
        %1611 = vmatprep.subr.bf16.mxu0 0
        %1612 = vmatpush1.bf16.msra.mxu0 0
        %1613 = vmatprep.subr.bf16.mxu0 0
        %1614 = vmatpush1.bf16.msra.mxu0 0
        %1615 = vmatprep.subr.bf16.mxu0 0
        %1616 = vmatpush1.bf16.msra.mxu0 0
        %1617 = vmatprep.subr.bf16.mxu0 0
        %1618 = vmatpush1.bf16.msra.mxu0 0
        %1619 = vmatprep.subr.bf16.mxu0 0
        %1620 = vmatpush1.bf16.msra.mxu0 0
        %1621 = vmatprep.mubr.bf16.mxu0 0
        %1622 = vmatmul.mubr.bf16.gmra.mrb[0].mxu0 %v1584
        %v1623 = vpop.f32.mrb[0].mxu0
        %v1624 = vadd.f32 0.0, %v1623
        %v1625 = vpop.f32.mrb[0].mxu0
        %v1626 = vpop.f32.mrb[0].mxu0
        %v1627 = vpop.f32.mrb[0].mxu0
        %1628 = vdwg.mxu0
        %1630 = vrot.lane.b32.xlu0 %v1624, 16
        %v1631 = vpop.permute.xlu0 %1630
        %vm1633 = vcmask 195712
        %1634 = vst.msk [vmem:[#allocation7] sm:$0xff] %vm1633, %v1631
        %v1635 = vld [vmem:[#allocation2] sm:$0xff]
        %v1636 = vpack.c.bf16 %v1635, %v1635
        %v1637 = vld [vmem:[#allocation3] sm:$0xff]
        %v1638 = vpack.c.bf16 %v1637, %v1637
        %v1639 = vld [vmem:[#allocation4] sm:$0xff]
        %v1640 = vpack.c.bf16 %v1639, %v1639
        %1642 = vrot.lane.b32.xlu0 %v1636, 104
        %v1643 = vpop.permute.xlu0 %1642
        %1645 = vrot.lane.b32.xlu0 %v1638, 104
        %v1646 = vpop.permute.xlu0 %1645
        %v1648 = vsel %vm1278, %v1643, 0
        %v1651 = vsel %vm1278, %v1646, 0
        %1653 = vmatprep.subr.bf16.mxu0 0
        %1654 = vmatpush1.bf16.xpose.msra.mxu0 %v1651
        %1655 = vmatprep.subr.bf16.mxu0 0
        %1656 = vmatpush1.bf16.xpose.msra.mxu0 0
        %1657 = vmatprep.subr.bf16.mxu0 0
        %1658 = vmatpush1.bf16.xpose.msra.mxu0 0
        %1659 = vmatprep.subr.bf16.mxu0 0
        %1660 = vmatpush1.bf16.xpose.msra.mxu0 0
        %1661 = vmatprep.subr.bf16.mxu0 0
        %1662 = vmatpush1.bf16.xpose.msra.mxu0 0
        %1663 = vmatprep.subr.bf16.mxu0 0
        %1664 = vmatpush1.bf16.xpose.msra.mxu0 0
        %1665 = vmatprep.subr.bf16.mxu0 0
        %1666 = vmatpush1.bf16.xpose.msra.mxu0 0
        %1667 = vmatprep.subr.bf16.mxu0 0
        %1668 = vmatpush1.bf16.xpose.msra.mxu0 0
        %1669 = vmatprep.subr.bf16.mxu0 0
        %1670 = vmatpush1.bf16.xpose.msra.mxu0 0
        %1671 = vmatprep.subr.bf16.mxu0 0
        %1672 = vmatpush1.bf16.xpose.msra.mxu0 0
        %1673 = vmatprep.subr.bf16.mxu0 0
        %1674 = vmatpush1.bf16.xpose.msra.mxu0 0
        %1675 = vmatprep.subr.bf16.mxu0 0
        %1676 = vmatpush1.bf16.xpose.msra.mxu0 0
        %1677 = vmatprep.subr.bf16.mxu0 0
        %1678 = vmatpush1.bf16.xpose.msra.mxu0 0
        %1679 = vmatprep.subr.bf16.mxu0 0
        %1680 = vmatpush1.bf16.xpose.msra.mxu0 0
        %1681 = vmatprep.subr.bf16.mxu0 0
        %1682 = vmatpush1.bf16.xpose.msra.mxu0 0
        %1683 = vmatprep.subr.bf16.mxu0 0
        %1684 = vmatpush1.bf16.xpose.msra.mxu0 0
        %1685 = vmatprep.mubr.bf16.mxu0 0
        %1686 = vmatmul.mubr.bf16.gmra.mrb[0].mxu0 %v1648
        %v1687 = vpop.f32.mrb[0].mxu0
        %v1688 = vadd.f32 %v1271, %v1687
        %v1689 = vpop.f32.mrb[0].mxu0
        %v1690 = vpop.f32.mrb[0].mxu0
        %v1691 = vpop.f32.mrb[0].mxu0
        %1692 = vdwg.mxu0
        %v1693 = vsel %vm1278, %v1688, -inf
        %1694 = vmax.xlane.f32.xlu0 %v1693
        %v1695 = vpop.xlane.xlu0 %1694
        %v1696 = vsub.f32 %v1688, %v1695
        %v1697 = vmul.f32 %v1696, 1.442695
        %v1698 = vpow.pop %v1697
        %v1699 = vsel %vm1278, %v1698, 0.0
        %1700 = vadd.xlane.f32.xlu0 %v1699
        %v1701 = vpop.xlane.xlu0 %1700
        %v1702 = vrcp.pop %v1701
        %v1703 = vmul.f32 %v1698, %v1702
        %v1704 = vpack.c.bf16 %v1703, %v1703
        %1706 = vrot.lane.b32.xlu0 %v1640, 104
        %v1707 = vpop.permute.xlu0 %1706
        %v1709 = vsel %vm1278, %v1704, 0
        %v1712 = vsel %vm1340, %v1707, 0
        %1714 = vmatprep.subr.bf16.mxu0 0
        %1715 = vmatpush1.bf16.msra.mxu0 %v1712
        %1716 = vmatprep.subr.bf16.mxu0 0
        %1717 = vmatpush1.bf16.msra.mxu0 0
        %1718 = vmatprep.subr.bf16.mxu0 0
        %1719 = vmatpush1.bf16.msra.mxu0 0
        %1720 = vmatprep.subr.bf16.mxu0 0
        %1721 = vmatpush1.bf16.msra.mxu0 0
        %1722 = vmatprep.subr.bf16.mxu0 0
        %1723 = vmatpush1.bf16.msra.mxu0 0
        %1724 = vmatprep.subr.bf16.mxu0 0
        %1725 = vmatpush1.bf16.msra.mxu0 0
        %1726 = vmatprep.subr.bf16.mxu0 0
        %1727 = vmatpush1.bf16.msra.mxu0 0
        %1728 = vmatprep.subr.bf16.mxu0 0
        %1729 = vmatpush1.bf16.msra.mxu0 0
        %1730 = vmatprep.subr.bf16.mxu0 0
        %1731 = vmatpush1.bf16.msra.mxu0 0
        %1732 = vmatprep.subr.bf16.mxu0 0
        %1733 = vmatpush1.bf16.msra.mxu0 0
        %1734 = vmatprep.subr.bf16.mxu0 0
        %1735 = vmatpush1.bf16.msra.mxu0 0
        %1736 = vmatprep.subr.bf16.mxu0 0
        %1737 = vmatpush1.bf16.msra.mxu0 0
        %1738 = vmatprep.subr.bf16.mxu0 0
        %1739 = vmatpush1.bf16.msra.mxu0 0
        %1740 = vmatprep.subr.bf16.mxu0 0
        %1741 = vmatpush1.bf16.msra.mxu0 0
        %1742 = vmatprep.subr.bf16.mxu0 0
        %1743 = vmatpush1.bf16.msra.mxu0 0
        %1744 = vmatprep.subr.bf16.mxu0 0
        %1745 = vmatpush1.bf16.msra.mxu0 0
        %1746 = vmatprep.mubr.bf16.mxu0 0
        %1747 = vmatmul.mubr.bf16.gmra.mrb[0].mxu0 %v1709
        %v1748 = vpop.f32.mrb[0].mxu0
        %v1749 = vadd.f32 0.0, %v1748
        %v1750 = vpop.f32.mrb[0].mxu0
        %v1751 = vpop.f32.mrb[0].mxu0
        %v1752 = vpop.f32.mrb[0].mxu0
        %1753 = vdwg.mxu0
        %1755 = vrot.lane.b32.xlu0 %v1749, 24
        %v1756 = vpop.permute.xlu0 %1755
        %vm1758 = vcmask 261312
        %1759 = vst.msk [vmem:[#allocation7] sm:$0xff] %vm1758, %v1756
        %v1760 = vld [vmem:[#allocation7] sm:$0xff]
        %v1761 = vpack.c.bf16 %v1760, %v1760
        %v1762 = vld [vmem:[%s10] sm:$0xf]
        %v1763 = vld [vmem:[%s10 + $0x4] sm:$0xf]
        %v1764 = vld [vmem:[%s10 + $0x8] sm:$0xf]
        %v1765 = vld [vmem:[%s10 + $0xc] sm:$0xf]
        %v1767 = vlaneseq
        %v1768 = vshrl.u32 %v1767, 7
        %v1769 = vsub.s32 0, %v1768
        %v1770 = vrot.slane %v1071, %v1769
        %v1776 = vunpack.c.l.b16 %v1762
        %v1777 = vunpack.c.l.b16 %v1763
        %v1778 = vunpack.c.l.b16 %v1764
        %v1779 = vunpack.c.l.b16 %v1765
        %v1780 = vpack.c.b16 %v1777, %v1776
        %v1781 = vpack.c.b16 %v1779, %v1778
        %v1785 = vsel %vm1039, %v1761, 0
        %1787 = vmatprep.subr.bf16.mxu0 0
        %1788 = vmatpush1.bf16.msra.mxu0 %v1780
        %1789 = vmatprep.subr.bf16.mxu0 0
        %1790 = vmatpush1.bf16.msra.mxu0 %v1781
        %1791 = vmatprep.subr.bf16.mxu0 0
        %1792 = vmatpush1.bf16.msra.mxu0 0
        %1793 = vmatprep.subr.bf16.mxu0 0
        %1794 = vmatpush1.bf16.msra.mxu0 0
        %1795 = vmatprep.subr.bf16.mxu0 0
        %1796 = vmatpush1.bf16.msra.mxu0 0
        %1797 = vmatprep.subr.bf16.mxu0 0
        %1798 = vmatpush1.bf16.msra.mxu0 0
        %1799 = vmatprep.subr.bf16.mxu0 0
        %1800 = vmatpush1.bf16.msra.mxu0 0
        %1801 = vmatprep.subr.bf16.mxu0 0
        %1802 = vmatpush1.bf16.msra.mxu0 0
        %1803 = vmatprep.subr.bf16.mxu0 0
        %1804 = vmatpush1.bf16.msra.mxu0 0
        %1805 = vmatprep.subr.bf16.mxu0 0
        %1806 = vmatpush1.bf16.msra.mxu0 0
        %1807 = vmatprep.subr.bf16.mxu0 0
        %1808 = vmatpush1.bf16.msra.mxu0 0
        %1809 = vmatprep.subr.bf16.mxu0 0
        %1810 = vmatpush1.bf16.msra.mxu0 0
        %1811 = vmatprep.subr.bf16.mxu0 0
        %1812 = vmatpush1.bf16.msra.mxu0 0
        %1813 = vmatprep.subr.bf16.mxu0 0
        %1814 = vmatpush1.bf16.msra.mxu0 0
        %1815 = vmatprep.subr.bf16.mxu0 0
        %1816 = vmatpush1.bf16.msra.mxu0 0
        %1817 = vmatprep.subr.bf16.mxu0 0
        %1818 = vmatpush1.bf16.msra.mxu0 0
        %1819 = vmatprep.mubr.bf16.mxu0 0
        %1820 = vmatmul.mubr.bf16.gmra.mrb[0].mxu0 %v1785
        %v1821 = vpop.f32.mrb[0].mxu0
        %v1822 = vadd.f32 %v1770, %v1821
        %v1823 = vpop.f32.mrb[0].mxu0
        %v1824 = vpop.f32.mrb[0].mxu0
        %v1825 = vpop.f32.mrb[0].mxu0
        %1826 = vdwg.mxu0
        %v1827 = vadd.f32 %v1035, %v1822
        %v1828 = vld [vmem:[#allocation15] sm:$0x1]
        %v1829 = vld [vmem:[#allocation16] sm:$0x1]
        %v1830 = vsel %vm1039, %v1827, 0.0
        %1831 = vadd.xlane.f32.xlu0 %v1830
        %v1832 = vpop.xlane.xlu0 %1831
        %v1833 = vmul.f32 %v1832, %v1043
        %v1834 = vsub.f32 %v1827, %v1833
        %v1835 = vmul.f32 %v1834, %v1834
        %v1836 = vsel %vm1039, %v1835, 0.0
        %1837 = vadd.xlane.f32.xlu0 %v1836
        %v1838 = vpop.xlane.xlu0 %1837
        %v1839 = vmul.f32 %v1838, %v1043
        %v1840 = vadd.f32 %v1839, 1e-05
        %v1841 = vrsqrt.pop %v1840
        %v1842 = vmul.f32 %v1834, %v1841
        %v1844 = vlaneseq
        %v1845 = vshrl.u32 %v1844, 7
        %v1846 = vsub.s32 0, %v1845
        %v1847 = vrot.slane %v1828, %v1846
        %v1849 = vmul.f32 %v1842, %v1847
        %v1851 = vlaneseq
        %v1852 = vshrl.u32 %v1851, 7
        %v1853 = vsub.s32 0, %v1852
        %v1854 = vrot.slane %v1829, %v1853
        %v1856 = vadd.f32 %v1849, %v1854
        %v1857 = vld [vmem:[#allocation18] sm:$0x1]
        %v1858 = vld [vmem:[#allocation19] sm:$0x1]
        %v1859 = vld [vmem:[#allocation21] sm:$0x1]
        %v1860 = vld [vmem:[#allocation22] sm:$0x1]
        %v1861 = vpack.c.bf16 %v1856, %v1856
        %v1862 = vpack.c.bf16 %v1036, %v1036
        %v1863 = vld [vmem:[%s14] sm:$0xf]
        %v1864 = vld [vmem:[%s14 + $0x4] sm:$0xf]
        %v1865 = vld [vmem:[%s14 + $0x8] sm:$0xf]
        %v1866 = vld [vmem:[%s14 + $0xc] sm:$0xf]
        %v1868 = vlaneseq
        %v1869 = vshrl.u32 %v1868, 7
        %v1870 = vsub.s32 0, %v1869
        %v1871 = vrot.slane %v1857, %v1870
        %v1877 = vunpack.c.l.b16 %v1863
        %v1878 = vunpack.c.l.b16 %v1864
        %v1879 = vunpack.c.l.b16 %v1865
        %v1880 = vunpack.c.l.b16 %v1866
        %v1881 = vpack.c.b16 %v1878, %v1877
        %v1882 = vpack.c.b16 %v1880, %v1879
        %v1886 = vsel %vm1039, %v1861, 0
        %1888 = vmatprep.subr.bf16.mxu0 0
        %1889 = vmatpush1.bf16.msra.mxu0 %v1881
        %1890 = vmatprep.subr.bf16.mxu0 0
        %1891 = vmatpush1.bf16.msra.mxu0 %v1882
        %1892 = vmatprep.subr.bf16.mxu0 0
        %1893 = vmatpush1.bf16.msra.mxu0 0
        %1894 = vmatprep.subr.bf16.mxu0 0
        %1895 = vmatpush1.bf16.msra.mxu0 0
        %1896 = vmatprep.subr.bf16.mxu0 0
        %1897 = vmatpush1.bf16.msra.mxu0 0
        %1898 = vmatprep.subr.bf16.mxu0 0
        %1899 = vmatpush1.bf16.msra.mxu0 0
        %1900 = vmatprep.subr.bf16.mxu0 0
        %1901 = vmatpush1.bf16.msra.mxu0 0
        %1902 = vmatprep.subr.bf16.mxu0 0
        %1903 = vmatpush1.bf16.msra.mxu0 0
        %1904 = vmatprep.subr.bf16.mxu0 0
        %1905 = vmatpush1.bf16.msra.mxu0 0
        %1906 = vmatprep.subr.bf16.mxu0 0
        %1907 = vmatpush1.bf16.msra.mxu0 0
        %1908 = vmatprep.subr.bf16.mxu0 0
        %1909 = vmatpush1.bf16.msra.mxu0 0
        %1910 = vmatprep.subr.bf16.mxu0 0
        %1911 = vmatpush1.bf16.msra.mxu0 0
        %1912 = vmatprep.subr.bf16.mxu0 0
        %1913 = vmatpush1.bf16.msra.mxu0 0
        %1914 = vmatprep.subr.bf16.mxu0 0
        %1915 = vmatpush1.bf16.msra.mxu0 0
        %1916 = vmatprep.subr.bf16.mxu0 0
        %1917 = vmatpush1.bf16.msra.mxu0 0
        %1918 = vmatprep.subr.bf16.mxu0 0
        %1919 = vmatpush1.bf16.msra.mxu0 0
        %1920 = vmatprep.mubr.bf16.mxu0 0
        %1921 = vmatmul.mubr.bf16.gmra.mrb[0].mxu0 %v1886
        %v1922 = vpop.f32.mrb[0].mxu0
        %v1923 = vadd.f32 %v1871, %v1922
        %v1924 = vpop.f32.mrb[0].mxu0
        %v1925 = vpop.f32.mrb[0].mxu0
        %v1926 = vpop.f32.mrb[0].mxu0
        %1927 = vdwg.mxu0
        %v1928 = vmul.f32 %v1923, 0.35355338
        %1929 = vst.msk [vmem:[#allocation2] sm:$0xff] %vm1039, %v1928
        %v1930 = vld [vmem:[%s15] sm:$0xf]
        %v1931 = vld [vmem:[%s15 + $0x4] sm:$0xf]
        %v1932 = vld [vmem:[%s15 + $0x8] sm:$0xf]
        %v1933 = vld [vmem:[%s15 + $0xc] sm:$0xf]
        %v1935 = vlaneseq
        %v1936 = vshrl.u32 %v1935, 7
        %v1937 = vsub.s32 0, %v1936
        %v1938 = vrot.slane %v1858, %v1937
        %v1944 = vunpack.c.l.b16 %v1930
        %v1945 = vunpack.c.l.b16 %v1931
        %v1946 = vunpack.c.l.b16 %v1932
        %v1947 = vunpack.c.l.b16 %v1933
        %v1948 = vpack.c.b16 %v1945, %v1944
        %v1949 = vpack.c.b16 %v1947, %v1946
        %v1953 = vsel %vm1039, %v1862, 0
        %1955 = vmatprep.subr.bf16.mxu0 0
        %1956 = vmatpush1.bf16.msra.mxu0 %v1948
        %1957 = vmatprep.subr.bf16.mxu0 0
        %1958 = vmatpush1.bf16.msra.mxu0 %v1949
        %1959 = vmatprep.subr.bf16.mxu0 0
        %1960 = vmatpush1.bf16.msra.mxu0 0
        %1961 = vmatprep.subr.bf16.mxu0 0
        %1962 = vmatpush1.bf16.msra.mxu0 0
        %1963 = vmatprep.subr.bf16.mxu0 0
        %1964 = vmatpush1.bf16.msra.mxu0 0
        %1965 = vmatprep.subr.bf16.mxu0 0
        %1966 = vmatpush1.bf16.msra.mxu0 0
        %1967 = vmatprep.subr.bf16.mxu0 0
        %1968 = vmatpush1.bf16.msra.mxu0 0
        %1969 = vmatprep.subr.bf16.mxu0 0
        %1970 = vmatpush1.bf16.msra.mxu0 0
        %1971 = vmatprep.subr.bf16.mxu0 0
        %1972 = vmatpush1.bf16.msra.mxu0 0
        %1973 = vmatprep.subr.bf16.mxu0 0
        %1974 = vmatpush1.bf16.msra.mxu0 0
        %1975 = vmatprep.subr.bf16.mxu0 0
        %1976 = vmatpush1.bf16.msra.mxu0 0
        %1977 = vmatprep.subr.bf16.mxu0 0
        %1978 = vmatpush1.bf16.msra.mxu0 0
        %1979 = vmatprep.subr.bf16.mxu0 0
        %1980 = vmatpush1.bf16.msra.mxu0 0
        %1981 = vmatprep.subr.bf16.mxu0 0
        %1982 = vmatpush1.bf16.msra.mxu0 0
        %1983 = vmatprep.subr.bf16.mxu0 0
        %1984 = vmatpush1.bf16.msra.mxu0 0
        %1985 = vmatprep.subr.bf16.mxu0 0
        %1986 = vmatpush1.bf16.msra.mxu0 0
        %1987 = vmatprep.mubr.bf16.mxu0 0
        %1988 = vmatmul.mubr.bf16.gmra.mrb[0].mxu0 %v1953
        %v1989 = vpop.f32.mrb[0].mxu0
        %v1990 = vadd.f32 %v1938, %v1989
        %v1991 = vpop.f32.mrb[0].mxu0
        %v1992 = vpop.f32.mrb[0].mxu0
        %v1993 = vpop.f32.mrb[0].mxu0
        %1994 = vdwg.mxu0
        %1995 = vst.msk [vmem:[#allocation5] sm:$0xff] %vm1039, %v1990
        %v1996 = vld [vmem:[%s16] sm:$0xf]
        %v1997 = vld [vmem:[%s16 + $0x4] sm:$0xf]
        %v1998 = vld [vmem:[%s16 + $0x8] sm:$0xf]
        %v1999 = vld [vmem:[%s16 + $0xc] sm:$0xf]
        %v2001 = vlaneseq
        %v2002 = vshrl.u32 %v2001, 7
        %v2003 = vsub.s32 0, %v2002
        %v2004 = vrot.slane %v1859, %v2003
        %v2010 = vunpack.c.l.b16 %v1996
        %v2011 = vunpack.c.l.b16 %v1997
        %v2012 = vunpack.c.l.b16 %v1998
        %v2013 = vunpack.c.l.b16 %v1999
        %v2014 = vpack.c.b16 %v2011, %v2010
        %v2015 = vpack.c.b16 %v2013, %v2012
        %2018 = vmatprep.subr.bf16.mxu0 0
        %2019 = vmatpush1.bf16.msra.mxu0 %v2014
        %2020 = vmatprep.subr.bf16.mxu0 0
        %2021 = vmatpush1.bf16.msra.mxu0 %v2015
        %2022 = vmatprep.subr.bf16.mxu0 0
        %2023 = vmatpush1.bf16.msra.mxu0 0
        %2024 = vmatprep.subr.bf16.mxu0 0
        %2025 = vmatpush1.bf16.msra.mxu0 0
        %2026 = vmatprep.subr.bf16.mxu0 0
        %2027 = vmatpush1.bf16.msra.mxu0 0
        %2028 = vmatprep.subr.bf16.mxu0 0
        %2029 = vmatpush1.bf16.msra.mxu0 0
        %2030 = vmatprep.subr.bf16.mxu0 0
        %2031 = vmatpush1.bf16.msra.mxu0 0
        %2032 = vmatprep.subr.bf16.mxu0 0
        %2033 = vmatpush1.bf16.msra.mxu0 0
        %2034 = vmatprep.subr.bf16.mxu0 0
        %2035 = vmatpush1.bf16.msra.mxu0 0
        %2036 = vmatprep.subr.bf16.mxu0 0
        %2037 = vmatpush1.bf16.msra.mxu0 0
        %2038 = vmatprep.subr.bf16.mxu0 0
        %2039 = vmatpush1.bf16.msra.mxu0 0
        %2040 = vmatprep.subr.bf16.mxu0 0
        %2041 = vmatpush1.bf16.msra.mxu0 0
        %2042 = vmatprep.subr.bf16.mxu0 0
        %2043 = vmatpush1.bf16.msra.mxu0 0
        %2044 = vmatprep.subr.bf16.mxu0 0
        %2045 = vmatpush1.bf16.msra.mxu0 0
        %2046 = vmatprep.subr.bf16.mxu0 0
        %2047 = vmatpush1.bf16.msra.mxu0 0
        %2048 = vmatprep.subr.bf16.mxu0 0
        %2049 = vmatpush1.bf16.msra.mxu0 0
        %2050 = vmatprep.mubr.bf16.mxu0 0
        %2051 = vmatmul.mubr.bf16.gmra.mrb[0].mxu0 %v1953
        %v2052 = vpop.f32.mrb[0].mxu0
        %v2053 = vadd.f32 %v2004, %v2052
        %v2054 = vpop.f32.mrb[0].mxu0
        %v2055 = vpop.f32.mrb[0].mxu0
        %v2056 = vpop.f32.mrb[0].mxu0
        %2057 = vdwg.mxu0
        %2058 = vst.msk [vmem:[#allocation6] sm:$0xff] %vm1039, %v2053
        %v2059 = vld [vmem:[#allocation2] sm:$0xff]
        %v2060 = vpack.c.bf16 %v2059, %v2059
        %v2061 = vld [vmem:[#allocation5] sm:$0xff]
        %v2062 = vpack.c.bf16 %v2061, %v2061
        %v2063 = vld [vmem:[#allocation6] sm:$0xff]
        %v2064 = vpack.c.bf16 %v2063, %v2063
        %v2066 = vsel %vm1278, %v2060, 0
        %v2069 = vsel %vm1278, %v2062, 0
        %2071 = vmatprep.subr.bf16.mxu0 0
        %2072 = vmatpush1.bf16.xpose.msra.mxu0 %v2069
        %2073 = vmatprep.subr.bf16.mxu0 0
        %2074 = vmatpush1.bf16.xpose.msra.mxu0 0
        %2075 = vmatprep.subr.bf16.mxu0 0
        %2076 = vmatpush1.bf16.xpose.msra.mxu0 0
        %2077 = vmatprep.subr.bf16.mxu0 0
        %2078 = vmatpush1.bf16.xpose.msra.mxu0 0
        %2079 = vmatprep.subr.bf16.mxu0 0
        %2080 = vmatpush1.bf16.xpose.msra.mxu0 0
        %2081 = vmatprep.subr.bf16.mxu0 0
        %2082 = vmatpush1.bf16.xpose.msra.mxu0 0
        %2083 = vmatprep.subr.bf16.mxu0 0
        %2084 = vmatpush1.bf16.xpose.msra.mxu0 0
        %2085 = vmatprep.subr.bf16.mxu0 0
        %2086 = vmatpush1.bf16.xpose.msra.mxu0 0
        %2087 = vmatprep.subr.bf16.mxu0 0
        %2088 = vmatpush1.bf16.xpose.msra.mxu0 0
        %2089 = vmatprep.subr.bf16.mxu0 0
        %2090 = vmatpush1.bf16.xpose.msra.mxu0 0
        %2091 = vmatprep.subr.bf16.mxu0 0
        %2092 = vmatpush1.bf16.xpose.msra.mxu0 0
        %2093 = vmatprep.subr.bf16.mxu0 0
        %2094 = vmatpush1.bf16.xpose.msra.mxu0 0
        %2095 = vmatprep.subr.bf16.mxu0 0
        %2096 = vmatpush1.bf16.xpose.msra.mxu0 0
        %2097 = vmatprep.subr.bf16.mxu0 0
        %2098 = vmatpush1.bf16.xpose.msra.mxu0 0
        %2099 = vmatprep.subr.bf16.mxu0 0
        %2100 = vmatpush1.bf16.xpose.msra.mxu0 0
        %2101 = vmatprep.subr.bf16.mxu0 0
        %2102 = vmatpush1.bf16.xpose.msra.mxu0 0
        %2103 = vmatprep.mubr.bf16.mxu0 0
        %2104 = vmatmul.mubr.bf16.gmra.mrb[0].mxu0 %v2066
        %v2105 = vpop.f32.mrb[0].mxu0
        %v2106 = vadd.f32 0.0, %v2105
        %v2107 = vpop.f32.mrb[0].mxu0
        %v2108 = vpop.f32.mrb[0].mxu0
        %v2109 = vpop.f32.mrb[0].mxu0
        %2110 = vdwg.mxu0
        %v2111 = vsel %vm1278, %v2106, -inf
        %2112 = vmax.xlane.f32.xlu0 %v2111
        %v2113 = vpop.xlane.xlu0 %2112
        %v2114 = vsub.f32 %v2106, %v2113
        %v2115 = vmul.f32 %v2114, 1.442695
        %v2116 = vpow.pop %v2115
        %v2117 = vsel %vm1278, %v2116, 0.0
        %2118 = vadd.xlane.f32.xlu0 %v2117
        %v2119 = vpop.xlane.xlu0 %2118
        %v2120 = vrcp.pop %v2119
        %v2121 = vmul.f32 %v2116, %v2120
        %v2122 = vpack.c.bf16 %v2121, %v2121
        %v2124 = vsel %vm1278, %v2122, 0
        %v2127 = vsel %vm1340, %v2064, 0
        %2129 = vmatprep.subr.bf16.mxu0 0
        %2130 = vmatpush1.bf16.msra.mxu0 %v2127
        %2131 = vmatprep.subr.bf16.mxu0 0
        %2132 = vmatpush1.bf16.msra.mxu0 0
        %2133 = vmatprep.subr.bf16.mxu0 0
        %2134 = vmatpush1.bf16.msra.mxu0 0
        %2135 = vmatprep.subr.bf16.mxu0 0
        %2136 = vmatpush1.bf16.msra.mxu0 0
        %2137 = vmatprep.subr.bf16.mxu0 0
        %2138 = vmatpush1.bf16.msra.mxu0 0
        %2139 = vmatprep.subr.bf16.mxu0 0
        %2140 = vmatpush1.bf16.msra.mxu0 0
        %2141 = vmatprep.subr.bf16.mxu0 0
        %2142 = vmatpush1.bf16.msra.mxu0 0
        %2143 = vmatprep.subr.bf16.mxu0 0
        %2144 = vmatpush1.bf16.msra.mxu0 0
        %2145 = vmatprep.subr.bf16.mxu0 0
        %2146 = vmatpush1.bf16.msra.mxu0 0
        %2147 = vmatprep.subr.bf16.mxu0 0
        %2148 = vmatpush1.bf16.msra.mxu0 0
        %2149 = vmatprep.subr.bf16.mxu0 0
        %2150 = vmatpush1.bf16.msra.mxu0 0
        %2151 = vmatprep.subr.bf16.mxu0 0
        %2152 = vmatpush1.bf16.msra.mxu0 0
        %2153 = vmatprep.subr.bf16.mxu0 0
        %2154 = vmatpush1.bf16.msra.mxu0 0
        %2155 = vmatprep.subr.bf16.mxu0 0
        %2156 = vmatpush1.bf16.msra.mxu0 0
        %2157 = vmatprep.subr.bf16.mxu0 0
        %2158 = vmatpush1.bf16.msra.mxu0 0
        %2159 = vmatprep.subr.bf16.mxu0 0
        %2160 = vmatpush1.bf16.msra.mxu0 0
        %2161 = vmatprep.mubr.bf16.mxu0 0
        %2162 = vmatmul.mubr.bf16.gmra.mrb[0].mxu0 %v2124
        %v2163 = vpop.f32.mrb[0].mxu0
        %v2164 = vadd.f32 0.0, %v2163
        %v2165 = vpop.f32.mrb[0].mxu0
        %v2166 = vpop.f32.mrb[0].mxu0
        %v2167 = vpop.f32.mrb[0].mxu0
        %2168 = vdwg.mxu0
        %2169 = vst.msk [vmem:[#allocation7] sm:$0xff] %vm1278, %v2164
        %v2170 = vld [vmem:[#allocation2] sm:$0xff]
        %v2171 = vpack.c.bf16 %v2170, %v2170
        %v2172 = vld [vmem:[#allocation5] sm:$0xff]
        %v2173 = vpack.c.bf16 %v2172, %v2172
        %v2174 = vld [vmem:[#allocation6] sm:$0xff]
        %v2175 = vpack.c.bf16 %v2174, %v2174
        %2177 = vrot.lane.b32.xlu0 %v2171, 120
        %v2178 = vpop.permute.xlu0 %2177
        %2180 = vrot.lane.b32.xlu0 %v2173, 120
        %v2181 = vpop.permute.xlu0 %2180
        %v2183 = vsel %vm1278, %v2178, 0
        %v2186 = vsel %vm1278, %v2181, 0
        %2188 = vmatprep.subr.bf16.mxu0 0
        %2189 = vmatpush1.bf16.xpose.msra.mxu0 %v2186
        %2190 = vmatprep.subr.bf16.mxu0 0
        %2191 = vmatpush1.bf16.xpose.msra.mxu0 0
        %2192 = vmatprep.subr.bf16.mxu0 0
        %2193 = vmatpush1.bf16.xpose.msra.mxu0 0
        %2194 = vmatprep.subr.bf16.mxu0 0
        %2195 = vmatpush1.bf16.xpose.msra.mxu0 0
        %2196 = vmatprep.subr.bf16.mxu0 0
        %2197 = vmatpush1.bf16.xpose.msra.mxu0 0
        %2198 = vmatprep.subr.bf16.mxu0 0
        %2199 = vmatpush1.bf16.xpose.msra.mxu0 0
        %2200 = vmatprep.subr.bf16.mxu0 0
        %2201 = vmatpush1.bf16.xpose.msra.mxu0 0
        %2202 = vmatprep.subr.bf16.mxu0 0
        %2203 = vmatpush1.bf16.xpose.msra.mxu0 0
        %2204 = vmatprep.subr.bf16.mxu0 0
        %2205 = vmatpush1.bf16.xpose.msra.mxu0 0
        %2206 = vmatprep.subr.bf16.mxu0 0
        %2207 = vmatpush1.bf16.xpose.msra.mxu0 0
        %2208 = vmatprep.subr.bf16.mxu0 0
        %2209 = vmatpush1.bf16.xpose.msra.mxu0 0
        %2210 = vmatprep.subr.bf16.mxu0 0
        %2211 = vmatpush1.bf16.xpose.msra.mxu0 0
        %2212 = vmatprep.subr.bf16.mxu0 0
        %2213 = vmatpush1.bf16.xpose.msra.mxu0 0
        %2214 = vmatprep.subr.bf16.mxu0 0
        %2215 = vmatpush1.bf16.xpose.msra.mxu0 0
        %2216 = vmatprep.subr.bf16.mxu0 0
        %2217 = vmatpush1.bf16.xpose.msra.mxu0 0
        %2218 = vmatprep.subr.bf16.mxu0 0
        %2219 = vmatpush1.bf16.xpose.msra.mxu0 0
        %2220 = vmatprep.mubr.bf16.mxu0 0
        %2221 = vmatmul.mubr.bf16.gmra.mrb[0].mxu0 %v2183
        %v2222 = vpop.f32.mrb[0].mxu0
        %v2223 = vadd.f32 0.0, %v2222
        %v2224 = vpop.f32.mrb[0].mxu0
        %v2225 = vpop.f32.mrb[0].mxu0
        %v2226 = vpop.f32.mrb[0].mxu0
        %2227 = vdwg.mxu0
        %v2228 = vsel %vm1278, %v2223, -inf
        %2229 = vmax.xlane.f32.xlu0 %v2228
        %v2230 = vpop.xlane.xlu0 %2229
        %v2231 = vsub.f32 %v2223, %v2230
        %v2232 = vmul.f32 %v2231, 1.442695
        %v2233 = vpow.pop %v2232
        %v2234 = vsel %vm1278, %v2233, 0.0
        %2235 = vadd.xlane.f32.xlu0 %v2234
        %v2236 = vpop.xlane.xlu0 %2235
        %v2237 = vrcp.pop %v2236
        %v2238 = vmul.f32 %v2233, %v2237
        %v2239 = vpack.c.bf16 %v2238, %v2238
        %2241 = vrot.lane.b32.xlu0 %v2175, 120
        %v2242 = vpop.permute.xlu0 %2241
        %v2244 = vsel %vm1278, %v2239, 0
        %v2247 = vsel %vm1340, %v2242, 0
        %2249 = vmatprep.subr.bf16.mxu0 0
        %2250 = vmatpush1.bf16.msra.mxu0 %v2247
        %2251 = vmatprep.subr.bf16.mxu0 0
        %2252 = vmatpush1.bf16.msra.mxu0 0
        %2253 = vmatprep.subr.bf16.mxu0 0
        %2254 = vmatpush1.bf16.msra.mxu0 0
        %2255 = vmatprep.subr.bf16.mxu0 0
        %2256 = vmatpush1.bf16.msra.mxu0 0
        %2257 = vmatprep.subr.bf16.mxu0 0
        %2258 = vmatpush1.bf16.msra.mxu0 0
        %2259 = vmatprep.subr.bf16.mxu0 0
        %2260 = vmatpush1.bf16.msra.mxu0 0
        %2261 = vmatprep.subr.bf16.mxu0 0
        %2262 = vmatpush1.bf16.msra.mxu0 0
        %2263 = vmatprep.subr.bf16.mxu0 0
        %2264 = vmatpush1.bf16.msra.mxu0 0
        %2265 = vmatprep.subr.bf16.mxu0 0
        %2266 = vmatpush1.bf16.msra.mxu0 0
        %2267 = vmatprep.subr.bf16.mxu0 0
        %2268 = vmatpush1.bf16.msra.mxu0 0
        %2269 = vmatprep.subr.bf16.mxu0 0
        %2270 = vmatpush1.bf16.msra.mxu0 0
        %2271 = vmatprep.subr.bf16.mxu0 0
        %2272 = vmatpush1.bf16.msra.mxu0 0
        %2273 = vmatprep.subr.bf16.mxu0 0
        %2274 = vmatpush1.bf16.msra.mxu0 0
        %2275 = vmatprep.subr.bf16.mxu0 0
        %2276 = vmatpush1.bf16.msra.mxu0 0
        %2277 = vmatprep.subr.bf16.mxu0 0
        %2278 = vmatpush1.bf16.msra.mxu0 0
        %2279 = vmatprep.subr.bf16.mxu0 0
        %2280 = vmatpush1.bf16.msra.mxu0 0
        %2281 = vmatprep.mubr.bf16.mxu0 0
        %2282 = vmatmul.mubr.bf16.gmra.mrb[0].mxu0 %v2244
        %v2283 = vpop.f32.mrb[0].mxu0
        %v2284 = vadd.f32 0.0, %v2283
        %v2285 = vpop.f32.mrb[0].mxu0
        %v2286 = vpop.f32.mrb[0].mxu0
        %v2287 = vpop.f32.mrb[0].mxu0
        %2288 = vdwg.mxu0
        %2290 = vrot.lane.b32.xlu0 %v2284, 8
        %v2291 = vpop.permute.xlu0 %2290
        %2293 = vst.msk [vmem:[#allocation7] sm:$0xff] %vm1508, %v2291
        %v2294 = vld [vmem:[#allocation2] sm:$0xff]
        %v2295 = vpack.c.bf16 %v2294, %v2294
        %v2296 = vld [vmem:[#allocation5] sm:$0xff]
        %v2297 = vpack.c.bf16 %v2296, %v2296
        %v2298 = vld [vmem:[#allocation6] sm:$0xff]
        %v2299 = vpack.c.bf16 %v2298, %v2298
        %2301 = vrot.lane.b32.xlu0 %v2295, 112
        %v2302 = vpop.permute.xlu0 %2301
        %2304 = vrot.lane.b32.xlu0 %v2297, 112
        %v2305 = vpop.permute.xlu0 %2304
        %v2307 = vsel %vm1278, %v2302, 0
        %v2310 = vsel %vm1278, %v2305, 0
        %2312 = vmatprep.subr.bf16.mxu0 0
        %2313 = vmatpush1.bf16.xpose.msra.mxu0 %v2310
        %2314 = vmatprep.subr.bf16.mxu0 0
        %2315 = vmatpush1.bf16.xpose.msra.mxu0 0
        %2316 = vmatprep.subr.bf16.mxu0 0
        %2317 = vmatpush1.bf16.xpose.msra.mxu0 0
        %2318 = vmatprep.subr.bf16.mxu0 0
        %2319 = vmatpush1.bf16.xpose.msra.mxu0 0
        %2320 = vmatprep.subr.bf16.mxu0 0
        %2321 = vmatpush1.bf16.xpose.msra.mxu0 0
        %2322 = vmatprep.subr.bf16.mxu0 0
        %2323 = vmatpush1.bf16.xpose.msra.mxu0 0
        %2324 = vmatprep.subr.bf16.mxu0 0
        %2325 = vmatpush1.bf16.xpose.msra.mxu0 0
        %2326 = vmatprep.subr.bf16.mxu0 0
        %2327 = vmatpush1.bf16.xpose.msra.mxu0 0
        %2328 = vmatprep.subr.bf16.mxu0 0
        %2329 = vmatpush1.bf16.xpose.msra.mxu0 0
        %2330 = vmatprep.subr.bf16.mxu0 0
        %2331 = vmatpush1.bf16.xpose.msra.mxu0 0
        %2332 = vmatprep.subr.bf16.mxu0 0
        %2333 = vmatpush1.bf16.xpose.msra.mxu0 0
        %2334 = vmatprep.subr.bf16.mxu0 0
        %2335 = vmatpush1.bf16.xpose.msra.mxu0 0
        %2336 = vmatprep.subr.bf16.mxu0 0
        %2337 = vmatpush1.bf16.xpose.msra.mxu0 0
        %2338 = vmatprep.subr.bf16.mxu0 0
        %2339 = vmatpush1.bf16.xpose.msra.mxu0 0
        %2340 = vmatprep.subr.bf16.mxu0 0
        %2341 = vmatpush1.bf16.xpose.msra.mxu0 0
        %2342 = vmatprep.subr.bf16.mxu0 0
        %2343 = vmatpush1.bf16.xpose.msra.mxu0 0
        %2344 = vmatprep.mubr.bf16.mxu0 0
        %2345 = vmatmul.mubr.bf16.gmra.mrb[0].mxu0 %v2307
        %v2346 = vpop.f32.mrb[0].mxu0
        %v2347 = vadd.f32 0.0, %v2346
        %v2348 = vpop.f32.mrb[0].mxu0
        %v2349 = vpop.f32.mrb[0].mxu0
        %v2350 = vpop.f32.mrb[0].mxu0
        %2351 = vdwg.mxu0
        %v2352 = vsel %vm1278, %v2347, -inf
        %2353 = vmax.xlane.f32.xlu0 %v2352
        %v2354 = vpop.xlane.xlu0 %2353
        %v2355 = vsub.f32 %v2347, %v2354
        %v2356 = vmul.f32 %v2355, 1.442695
        %v2357 = vpow.pop %v2356
        %v2358 = vsel %vm1278, %v2357, 0.0
        %2359 = vadd.xlane.f32.xlu0 %v2358
        %v2360 = vpop.xlane.xlu0 %2359
        %v2361 = vrcp.pop %v2360
        %v2362 = vmul.f32 %v2357, %v2361
        %v2363 = vpack.c.bf16 %v2362, %v2362
        %2365 = vrot.lane.b32.xlu0 %v2299, 112
        %v2366 = vpop.permute.xlu0 %2365
        %v2368 = vsel %vm1278, %v2363, 0
        %v2371 = vsel %vm1340, %v2366, 0
        %2373 = vmatprep.subr.bf16.mxu0 0
        %2374 = vmatpush1.bf16.msra.mxu0 %v2371
        %2375 = vmatprep.subr.bf16.mxu0 0
        %2376 = vmatpush1.bf16.msra.mxu0 0
        %2377 = vmatprep.subr.bf16.mxu0 0
        %2378 = vmatpush1.bf16.msra.mxu0 0
        %2379 = vmatprep.subr.bf16.mxu0 0
        %2380 = vmatpush1.bf16.msra.mxu0 0
        %2381 = vmatprep.subr.bf16.mxu0 0
        %2382 = vmatpush1.bf16.msra.mxu0 0
        %2383 = vmatprep.subr.bf16.mxu0 0
        %2384 = vmatpush1.bf16.msra.mxu0 0
        %2385 = vmatprep.subr.bf16.mxu0 0
        %2386 = vmatpush1.bf16.msra.mxu0 0
        %2387 = vmatprep.subr.bf16.mxu0 0
        %2388 = vmatpush1.bf16.msra.mxu0 0
        %2389 = vmatprep.subr.bf16.mxu0 0
        %2390 = vmatpush1.bf16.msra.mxu0 0
        %2391 = vmatprep.subr.bf16.mxu0 0
        %2392 = vmatpush1.bf16.msra.mxu0 0
        %2393 = vmatprep.subr.bf16.mxu0 0
        %2394 = vmatpush1.bf16.msra.mxu0 0
        %2395 = vmatprep.subr.bf16.mxu0 0
        %2396 = vmatpush1.bf16.msra.mxu0 0
        %2397 = vmatprep.subr.bf16.mxu0 0
        %2398 = vmatpush1.bf16.msra.mxu0 0
        %2399 = vmatprep.subr.bf16.mxu0 0
        %2400 = vmatpush1.bf16.msra.mxu0 0
        %2401 = vmatprep.subr.bf16.mxu0 0
        %2402 = vmatpush1.bf16.msra.mxu0 0
        %2403 = vmatprep.subr.bf16.mxu0 0
        %2404 = vmatpush1.bf16.msra.mxu0 0
        %2405 = vmatprep.mubr.bf16.mxu0 0
        %2406 = vmatmul.mubr.bf16.gmra.mrb[0].mxu0 %v2368
        %v2407 = vpop.f32.mrb[0].mxu0
        %v2408 = vadd.f32 0.0, %v2407
        %v2409 = vpop.f32.mrb[0].mxu0
        %v2410 = vpop.f32.mrb[0].mxu0
        %v2411 = vpop.f32.mrb[0].mxu0
        %2412 = vdwg.mxu0
        %2414 = vrot.lane.b32.xlu0 %v2408, 16
        %v2415 = vpop.permute.xlu0 %2414
        %2417 = vst.msk [vmem:[#allocation7] sm:$0xff] %vm1633, %v2415
        %v2418 = vld [vmem:[#allocation2] sm:$0xff]
        %v2419 = vpack.c.bf16 %v2418, %v2418
        %v2420 = vld [vmem:[#allocation5] sm:$0xff]
        %v2421 = vpack.c.bf16 %v2420, %v2420
        %v2422 = vld [vmem:[#allocation6] sm:$0xff]
        %v2423 = vpack.c.bf16 %v2422, %v2422
        %2425 = vrot.lane.b32.xlu0 %v2419, 104
        %v2426 = vpop.permute.xlu0 %2425
        %2428 = vrot.lane.b32.xlu0 %v2421, 104
        %v2429 = vpop.permute.xlu0 %2428
        %v2431 = vsel %vm1278, %v2426, 0
        %v2434 = vsel %vm1278, %v2429, 0
        %2436 = vmatprep.subr.bf16.mxu0 0
        %2437 = vmatpush1.bf16.xpose.msra.mxu0 %v2434
        %2438 = vmatprep.subr.bf16.mxu0 0
        %2439 = vmatpush1.bf16.xpose.msra.mxu0 0
        %2440 = vmatprep.subr.bf16.mxu0 0
        %2441 = vmatpush1.bf16.xpose.msra.mxu0 0
        %2442 = vmatprep.subr.bf16.mxu0 0
        %2443 = vmatpush1.bf16.xpose.msra.mxu0 0
        %2444 = vmatprep.subr.bf16.mxu0 0
        %2445 = vmatpush1.bf16.xpose.msra.mxu0 0
        %2446 = vmatprep.subr.bf16.mxu0 0
        %2447 = vmatpush1.bf16.xpose.msra.mxu0 0
        %2448 = vmatprep.subr.bf16.mxu0 0
        %2449 = vmatpush1.bf16.xpose.msra.mxu0 0
        %2450 = vmatprep.subr.bf16.mxu0 0
        %2451 = vmatpush1.bf16.xpose.msra.mxu0 0
        %2452 = vmatprep.subr.bf16.mxu0 0
        %2453 = vmatpush1.bf16.xpose.msra.mxu0 0
        %2454 = vmatprep.subr.bf16.mxu0 0
        %2455 = vmatpush1.bf16.xpose.msra.mxu0 0
        %2456 = vmatprep.subr.bf16.mxu0 0
        %2457 = vmatpush1.bf16.xpose.msra.mxu0 0
        %2458 = vmatprep.subr.bf16.mxu0 0
        %2459 = vmatpush1.bf16.xpose.msra.mxu0 0
        %2460 = vmatprep.subr.bf16.mxu0 0
        %2461 = vmatpush1.bf16.xpose.msra.mxu0 0
        %2462 = vmatprep.subr.bf16.mxu0 0
        %2463 = vmatpush1.bf16.xpose.msra.mxu0 0
        %2464 = vmatprep.subr.bf16.mxu0 0
        %2465 = vmatpush1.bf16.xpose.msra.mxu0 0
        %2466 = vmatprep.subr.bf16.mxu0 0
        %2467 = vmatpush1.bf16.xpose.msra.mxu0 0
        %2468 = vmatprep.mubr.bf16.mxu0 0
        %2469 = vmatmul.mubr.bf16.gmra.mrb[0].mxu0 %v2431
        %v2470 = vpop.f32.mrb[0].mxu0
        %v2471 = vadd.f32 0.0, %v2470
        %v2472 = vpop.f32.mrb[0].mxu0
        %v2473 = vpop.f32.mrb[0].mxu0
        %v2474 = vpop.f32.mrb[0].mxu0
        %2475 = vdwg.mxu0
        %v2476 = vsel %vm1278, %v2471, -inf
        %2477 = vmax.xlane.f32.xlu0 %v2476
        %v2478 = vpop.xlane.xlu0 %2477
        %v2479 = vsub.f32 %v2471, %v2478
        %v2480 = vmul.f32 %v2479, 1.442695
        %v2481 = vpow.pop %v2480
        %v2482 = vsel %vm1278, %v2481, 0.0
        %2483 = vadd.xlane.f32.xlu0 %v2482
        %v2484 = vpop.xlane.xlu0 %2483
        %v2485 = vrcp.pop %v2484
        %v2486 = vmul.f32 %v2481, %v2485
        %v2487 = vpack.c.bf16 %v2486, %v2486
        %2489 = vrot.lane.b32.xlu0 %v2423, 104
        %v2490 = vpop.permute.xlu0 %2489
        %v2492 = vsel %vm1278, %v2487, 0
        %v2495 = vsel %vm1340, %v2490, 0
        %2497 = vmatprep.subr.bf16.mxu0 0
        %2498 = vmatpush1.bf16.msra.mxu0 %v2495
        %2499 = vmatprep.subr.bf16.mxu0 0
        %2500 = vmatpush1.bf16.msra.mxu0 0
        %2501 = vmatprep.subr.bf16.mxu0 0
        %2502 = vmatpush1.bf16.msra.mxu0 0
        %2503 = vmatprep.subr.bf16.mxu0 0
        %2504 = vmatpush1.bf16.msra.mxu0 0
        %2505 = vmatprep.subr.bf16.mxu0 0
        %2506 = vmatpush1.bf16.msra.mxu0 0
        %2507 = vmatprep.subr.bf16.mxu0 0
        %2508 = vmatpush1.bf16.msra.mxu0 0
        %2509 = vmatprep.subr.bf16.mxu0 0
        %2510 = vmatpush1.bf16.msra.mxu0 0
        %2511 = vmatprep.subr.bf16.mxu0 0
        %2512 = vmatpush1.bf16.msra.mxu0 0
        %2513 = vmatprep.subr.bf16.mxu0 0
        %2514 = vmatpush1.bf16.msra.mxu0 0
        %2515 = vmatprep.subr.bf16.mxu0 0
        %2516 = vmatpush1.bf16.msra.mxu0 0
        %2517 = vmatprep.subr.bf16.mxu0 0
        %2518 = vmatpush1.bf16.msra.mxu0 0
        %2519 = vmatprep.subr.bf16.mxu0 0
        %2520 = vmatpush1.bf16.msra.mxu0 0
        %2521 = vmatprep.subr.bf16.mxu0 0
        %2522 = vmatpush1.bf16.msra.mxu0 0
        %2523 = vmatprep.subr.bf16.mxu0 0
        %2524 = vmatpush1.bf16.msra.mxu0 0
        %2525 = vmatprep.subr.bf16.mxu0 0
        %2526 = vmatpush1.bf16.msra.mxu0 0
        %2527 = vmatprep.subr.bf16.mxu0 0
        %2528 = vmatpush1.bf16.msra.mxu0 0
        %2529 = vmatprep.mubr.bf16.mxu0 0
        %2530 = vmatmul.mubr.bf16.gmra.mrb[0].mxu0 %v2492
        %v2531 = vpop.f32.mrb[0].mxu0
        %v2532 = vadd.f32 0.0, %v2531
        %v2533 = vpop.f32.mrb[0].mxu0
        %v2534 = vpop.f32.mrb[0].mxu0
        %v2535 = vpop.f32.mrb[0].mxu0
        %2536 = vdwg.mxu0
        %2538 = vrot.lane.b32.xlu0 %v2532, 24
        %v2539 = vpop.permute.xlu0 %2538
        %2541 = vst.msk [vmem:[#allocation7] sm:$0xff] %vm1758, %v2539
        %v2542 = vld [vmem:[#allocation7] sm:$0xff]
        %v2543 = vpack.c.bf16 %v2542, %v2542
        %v2544 = vld [vmem:[%s20] sm:$0xf]
        %v2545 = vld [vmem:[%s20 + $0x4] sm:$0xf]
        %v2546 = vld [vmem:[%s20 + $0x8] sm:$0xf]
        %v2547 = vld [vmem:[%s20 + $0xc] sm:$0xf]
        %v2549 = vlaneseq
        %v2550 = vshrl.u32 %v2549, 7
        %v2551 = vsub.s32 0, %v2550
        %v2552 = vrot.slane %v1860, %v2551
        %v2558 = vunpack.c.l.b16 %v2544
        %v2559 = vunpack.c.l.b16 %v2545
        %v2560 = vunpack.c.l.b16 %v2546
        %v2561 = vunpack.c.l.b16 %v2547
        %v2562 = vpack.c.b16 %v2559, %v2558
        %v2563 = vpack.c.b16 %v2561, %v2560
        %v2567 = vsel %vm1039, %v2543, 0
        %2569 = vmatprep.subr.bf16.mxu0 0
        %2570 = vmatpush1.bf16.msra.mxu0 %v2562
        %2571 = vmatprep.subr.bf16.mxu0 0
        %2572 = vmatpush1.bf16.msra.mxu0 %v2563
        %2573 = vmatprep.subr.bf16.mxu0 0
        %2574 = vmatpush1.bf16.msra.mxu0 0
        %2575 = vmatprep.subr.bf16.mxu0 0
        %2576 = vmatpush1.bf16.msra.mxu0 0
        %2577 = vmatprep.subr.bf16.mxu0 0
        %2578 = vmatpush1.bf16.msra.mxu0 0
        %2579 = vmatprep.subr.bf16.mxu0 0
        %2580 = vmatpush1.bf16.msra.mxu0 0
        %2581 = vmatprep.subr.bf16.mxu0 0
        %2582 = vmatpush1.bf16.msra.mxu0 0
        %2583 = vmatprep.subr.bf16.mxu0 0
        %2584 = vmatpush1.bf16.msra.mxu0 0
        %2585 = vmatprep.subr.bf16.mxu0 0
        %2586 = vmatpush1.bf16.msra.mxu0 0
        %2587 = vmatprep.subr.bf16.mxu0 0
        %2588 = vmatpush1.bf16.msra.mxu0 0
        %2589 = vmatprep.subr.bf16.mxu0 0
        %2590 = vmatpush1.bf16.msra.mxu0 0
        %2591 = vmatprep.subr.bf16.mxu0 0
        %2592 = vmatpush1.bf16.msra.mxu0 0
        %2593 = vmatprep.subr.bf16.mxu0 0
        %2594 = vmatpush1.bf16.msra.mxu0 0
        %2595 = vmatprep.subr.bf16.mxu0 0
        %2596 = vmatpush1.bf16.msra.mxu0 0
        %2597 = vmatprep.subr.bf16.mxu0 0
        %2598 = vmatpush1.bf16.msra.mxu0 0
        %2599 = vmatprep.subr.bf16.mxu0 0
        %2600 = vmatpush1.bf16.msra.mxu0 0
        %2601 = vmatprep.mubr.bf16.mxu0 0
        %2602 = vmatmul.mubr.bf16.gmra.mrb[0].mxu0 %v2567
        %v2603 = vpop.f32.mrb[0].mxu0
        %v2604 = vadd.f32 %v2552, %v2603
        %v2605 = vpop.f32.mrb[0].mxu0
        %v2606 = vpop.f32.mrb[0].mxu0
        %v2607 = vpop.f32.mrb[0].mxu0
        %2608 = vdwg.mxu0
        %v2609 = vadd.f32 %v1827, %v2604
        %v2610 = vld [vmem:[#allocation24] sm:$0x1]
        %v2611 = vld [vmem:[#allocation25] sm:$0x1]
        %v2612 = vsel %vm1039, %v2609, 0.0
        %2613 = vadd.xlane.f32.xlu0 %v2612
        %v2614 = vpop.xlane.xlu0 %2613
        %v2615 = vmul.f32 %v2614, %v1043
        %v2616 = vsub.f32 %v2609, %v2615
        %v2617 = vmul.f32 %v2616, %v2616
        %v2618 = vsel %vm1039, %v2617, 0.0
        %2619 = vadd.xlane.f32.xlu0 %v2618
        %v2620 = vpop.xlane.xlu0 %2619
        %v2621 = vmul.f32 %v2620, %v1043
        %v2622 = vadd.f32 %v2621, 1e-05
        %v2623 = vrsqrt.pop %v2622
        %v2624 = vmul.f32 %v2616, %v2623
        %v2626 = vlaneseq
        %v2627 = vshrl.u32 %v2626, 7
        %v2628 = vsub.s32 0, %v2627
        %v2629 = vrot.slane %v2610, %v2628
        %v2631 = vmul.f32 %v2624, %v2629
        %v2633 = vlaneseq
        %v2634 = vshrl.u32 %v2633, 7
        %v2635 = vsub.s32 0, %v2634
        %v2636 = vrot.slane %v2611, %v2635
        %v2638 = vadd.f32 %v2631, %v2636
        %v2639 = vpack.c.bf16 %v2638, %v2638
        %v2640 = vld [vmem:[%s24] sm:$0xf]
        %v2641 = vld [vmem:[%s24 + $0x4] sm:$0xf]
        %v2642 = vld [vmem:[%s24 + $0x8] sm:$0xf]
        %v2643 = vld [vmem:[%s24 + $0xc] sm:$0xf]
        %v2644 = vld [vmem:[#allocation27] sm:$0x1]
        %v2646 = vlaneseq
        %v2647 = vshrl.u32 %v2646, 7
        %v2648 = vsub.s32 0, %v2647
        %v2649 = vrot.slane %v2644, %v2648
        %v2655 = vunpack.c.l.b16 %v2640
        %v2656 = vunpack.c.l.b16 %v2641
        %v2657 = vunpack.c.l.b16 %v2642
        %v2658 = vunpack.c.l.b16 %v2643
        %v2659 = vpack.c.b16 %v2656, %v2655
        %v2660 = vpack.c.b16 %v2658, %v2657
        %v2664 = vsel %vm1039, %v2639, 0
        %2666 = vmatprep.subr.bf16.mxu0 0
        %2667 = vmatpush1.bf16.msra.mxu0 %v2659
        %2668 = vmatprep.subr.bf16.mxu0 0
        %2669 = vmatpush1.bf16.msra.mxu0 %v2660
        %2670 = vmatprep.subr.bf16.mxu0 0
        %2671 = vmatpush1.bf16.msra.mxu0 0
        %2672 = vmatprep.subr.bf16.mxu0 0
        %2673 = vmatpush1.bf16.msra.mxu0 0
        %2674 = vmatprep.subr.bf16.mxu0 0
        %2675 = vmatpush1.bf16.msra.mxu0 0
        %2676 = vmatprep.subr.bf16.mxu0 0
        %2677 = vmatpush1.bf16.msra.mxu0 0
        %2678 = vmatprep.subr.bf16.mxu0 0
        %2679 = vmatpush1.bf16.msra.mxu0 0
        %2680 = vmatprep.subr.bf16.mxu0 0
        %2681 = vmatpush1.bf16.msra.mxu0 0
        %2682 = vmatprep.subr.bf16.mxu0 0
        %2683 = vmatpush1.bf16.msra.mxu0 0
        %2684 = vmatprep.subr.bf16.mxu0 0
        %2685 = vmatpush1.bf16.msra.mxu0 0
        %2686 = vmatprep.subr.bf16.mxu0 0
        %2687 = vmatpush1.bf16.msra.mxu0 0
        %2688 = vmatprep.subr.bf16.mxu0 0
        %2689 = vmatpush1.bf16.msra.mxu0 0
        %2690 = vmatprep.subr.bf16.mxu0 0
        %2691 = vmatpush1.bf16.msra.mxu0 0
        %2692 = vmatprep.subr.bf16.mxu0 0
        %2693 = vmatpush1.bf16.msra.mxu0 0
        %2694 = vmatprep.subr.bf16.mxu0 0
        %2695 = vmatpush1.bf16.msra.mxu0 0
        %2696 = vmatprep.subr.bf16.mxu0 0
        %2697 = vmatpush1.bf16.msra.mxu0 0
        %2698 = vmatprep.mubr.bf16.mxu0 0
        %2699 = vmatmul.mubr.bf16.gmra.mrb[0].mxu0 %v2664
        %v2700 = vpop.f32.mrb[0].mxu0
        %v2701 = vadd.f32 %v2649, %v2700
        %v2702 = vpop.f32.mrb[0].mxu0
        %v2703 = vpop.f32.mrb[0].mxu0
        %v2704 = vpop.f32.mrb[0].mxu0
        %2705 = vdwg.mxu0
        %v2706 = vmul.f32 %v2701, 1.702
        %v2707 = vxor.u32 %v2706, 2147483648
        %v2708 = vmul.f32 %v2707, 1.442695
        %v2709 = vpow.pop %v2708
        %v2710 = vadd.f32 %v2709, 1.0
        %v2711 = vrcp.pop %v2710
        %v2712 = vmul.f32 1.0, %v2711
        %v2713 = vmul.f32 %v2701, %v2712
        %v2714 = vpack.c.bf16 %v2713, %v2713
        %v2715 = vld [vmem:[%s26] sm:$0xf]
        %v2716 = vld [vmem:[%s26 + $0x4] sm:$0xf]
        %v2717 = vld [vmem:[%s26 + $0x8] sm:$0xf]
        %v2718 = vld [vmem:[%s26 + $0xc] sm:$0xf]
        %v2719 = vld [vmem:[%s26 + $0x10] sm:$0xf]
        %v2720 = vld [vmem:[%s26 + $0x14] sm:$0xf]
        %v2721 = vld [vmem:[%s26 + $0x18] sm:$0xf]
        %v2722 = vld [vmem:[%s26 + $0x1c] sm:$0xf]
        %v2723 = vld [vmem:[%s26 + $0x20] sm:$0xf]
        %v2724 = vld [vmem:[%s26 + $0x24] sm:$0xf]
        %v2725 = vld [vmem:[%s26 + $0x28] sm:$0xf]
        %v2726 = vld [vmem:[%s26 + $0x2c] sm:$0xf]
        %v2727 = vld [vmem:[%s26 + $0x30] sm:$0xf]
        %v2728 = vld [vmem:[%s26 + $0x34] sm:$0xf]
        %v2729 = vld [vmem:[%s26 + $0x38] sm:$0xf]
        %v2730 = vld [vmem:[%s26 + $0x3c] sm:$0xf]
        %v2747 = vunpack.c.l.b16 %v2715
        %v2748 = vunpack.c.l.b16 %v2716
        %v2749 = vunpack.c.l.b16 %v2717
        %v2750 = vunpack.c.l.b16 %v2718
        %v2751 = vunpack.c.l.b16 %v2719
        %v2752 = vunpack.c.l.b16 %v2720
        %v2753 = vunpack.c.l.b16 %v2721
        %v2754 = vunpack.c.l.b16 %v2722
        %v2755 = vunpack.c.l.b16 %v2723
        %v2756 = vunpack.c.l.b16 %v2724
        %v2757 = vunpack.c.l.b16 %v2725
        %v2758 = vunpack.c.l.b16 %v2726
        %v2759 = vunpack.c.l.b16 %v2727
        %v2760 = vunpack.c.l.b16 %v2728
        %v2761 = vunpack.c.l.b16 %v2729
        %v2762 = vunpack.c.l.b16 %v2730
        %v2763 = vpack.c.b16 %v2748, %v2747
        %v2764 = vpack.c.b16 %v2750, %v2749
        %v2765 = vpack.c.b16 %v2752, %v2751
        %v2766 = vpack.c.b16 %v2754, %v2753
        %v2767 = vpack.c.b16 %v2756, %v2755
        %v2768 = vpack.c.b16 %v2758, %v2757
        %v2769 = vpack.c.b16 %v2760, %v2759
        %v2770 = vpack.c.b16 %v2762, %v2761
        %2779 = vmatprep.subr.bf16.mxu0 0
        %2780 = vmatpush1.bf16.msra.mxu0 %v2763
        %2781 = vmatprep.subr.bf16.mxu0 0
        %2782 = vmatpush1.bf16.msra.mxu0 %v2764
        %2783 = vmatprep.subr.bf16.mxu0 0
        %2784 = vmatpush1.bf16.msra.mxu0 %v2765
        %2785 = vmatprep.subr.bf16.mxu0 0
        %2786 = vmatpush1.bf16.msra.mxu0 %v2766
        %2787 = vmatprep.subr.bf16.mxu0 0
        %2788 = vmatpush1.bf16.msra.mxu0 %v2767
        %2789 = vmatprep.subr.bf16.mxu0 0
        %2790 = vmatpush1.bf16.msra.mxu0 %v2768
        %2791 = vmatprep.subr.bf16.mxu0 0
        %2792 = vmatpush1.bf16.msra.mxu0 %v2769
        %2793 = vmatprep.subr.bf16.mxu0 0
        %2794 = vmatpush1.bf16.msra.mxu0 %v2770
        %2795 = vmatprep.subr.bf16.mxu0 0
        %2796 = vmatpush1.bf16.msra.mxu0 0
        %2797 = vmatprep.subr.bf16.mxu0 0
        %2798 = vmatpush1.bf16.msra.mxu0 0
        %2799 = vmatprep.subr.bf16.mxu0 0
        %2800 = vmatpush1.bf16.msra.mxu0 0
        %2801 = vmatprep.subr.bf16.mxu0 0
        %2802 = vmatpush1.bf16.msra.mxu0 0
        %2803 = vmatprep.subr.bf16.mxu0 0
        %2804 = vmatpush1.bf16.msra.mxu0 0
        %2805 = vmatprep.subr.bf16.mxu0 0
        %2806 = vmatpush1.bf16.msra.mxu0 0
        %2807 = vmatprep.subr.bf16.mxu0 0
        %2808 = vmatpush1.bf16.msra.mxu0 0
        %2809 = vmatprep.subr.bf16.mxu0 0
        %2810 = vmatpush1.bf16.msra.mxu0 0
        %2811 = vmatprep.mubr.bf16.mxu0 0
        %2812 = vmatmul.mubr.bf16.gmra.mrb[0].mxu0 %v2714
        %v2813 = vpop.f32.mrb[0].mxu0
        %v2814 = vadd.f32 0.0, %v2813
        %v2815 = vpop.f32.mrb[0].mxu0
        %v2816 = vpop.f32.mrb[0].mxu0
        %v2817 = vpop.f32.mrb[0].mxu0
        %2818 = vdwg.mxu0
        %v2819 = vadd.f32 %v2609, %v2814
        %v2820 = vld [vmem:[#allocation28] sm:$0x1]
        %v2822 = vlaneseq
        %v2823 = vshrl.u32 %v2822, 7
        %v2824 = vsub.s32 0, %v2823
        %v2825 = vrot.slane %v2820, %v2824
        %v2827 = vadd.f32 %v2819, %v2825
        %2828 = vst.msk [vmem:[%s1033] sm:$0xff] %vm1039, %v2827
        %p2829 = scmp.lt.s32.totalorder %s47, 1
        %s2830 = scalar_select %p2829, %s47, 1
        %s2831 = smul.addr %s2830, 8
        %s2832 = scalar_lea.vmem %s28, %s2831
        // Predicated region
        $region189: #{bart_decoder_forward.4} parent=131 // pred_check
          %p2833 = pneg %p663
        $region190: #{bart_decoder_forward.4} parent=131 // pred_check_branch
          %2835 = sbr.rel (%p2833) target = $region192
        $region191: #{bart_decoder_forward.4} parent=131 // pred_region
          _
        $region192: #{bart_decoder_forward.4} parent=131 // pred_fallthru
          _
      $region132: #{bart_decoder_forward.4} parent=5 // pred_fallthru
        _
      %p2836 = scmp.le.s32.totalorder 2, %s42
      // Predicated region
      $region193: #{bart_decoder_forward.4} parent=5 // pred_check
        %p2837 = pneg %p2836
      $region194: #{bart_decoder_forward.4} parent=5 // pred_check_branch
        %2839 = sbr.rel (%p2837) target = $region196
      $region195: #{bart_decoder_forward.4} parent=5 // pred_region
        %s2840 = ssub.s32 %s42, 2
        // Predicated region
        $region197: #{bart_decoder_forward.4} parent=195 // pred_check
          %p2841 = pneg %p669
        $region198: #{bart_decoder_forward.4} parent=195 // pred_check_branch
          %2843 = sbr.rel (%p2841) target = $region200
        $region199: #{bart_decoder_forward.4} parent=195 // pred_region
          %p2844 = scmp.lt.s32.totalorder %s48, 1
          %s2845 = scalar_select %p2844, %s48, 1
          %s2846 = smul.addr %s2845, 8
          %s2847 = scalar_lea.vmem %s28, %s2846
        $region200: #{bart_decoder_forward.4} parent=195 // pred_fallthru
          _
      $region196: #{bart_decoder_forward.4} parent=5 // pred_fallthru
        _
    $region6: #{bart_decoder_forward.4} parent=1 // loop_footer
      %s46 = sadd.s32 1, %s42
    $region7: #{bart_decoder_forward.4} parent=1 // loop_footer_branch
      %41 = sbr.rel target = $region3
    $region8: #{bart_decoder_forward.4} parent=1 // loop_exit
      _
    %2848 = vsyncpa [#allocation9], 1
    %s2849 = scalar_lea.sflag [#allocation9], 1
    %2850 = vsyncpa %s2849, 1
    %2851 = vsyncpa [#allocation11], 1
    %2852 = vsyncpa [#allocation14], 1
    %2853 = vsyncpa [#allocation17], 1
    %2854 = vsyncpa [#allocation20], 1
    %2855 = vsyncpa [#allocation23], 1
    %2856 = vsyncpa [#allocation26], 1
    %2857 = vsyncpa [#allocation29], 1

// kernel: bart_decoder_forward.3
$region0: #{bart_decoder_forward.3}
  #allocation0 [shape = 'u32[]', space=smem, size = 0x4, offset = 0x4, fixed_abs, tag = 'smem constant byte address 0x4 - core index']
  #allocation1 [shape = 'u32[144,128]{1,0:T(1,128)}', space=vmem, size = 0x12000, scoped, tag = 'internal scratch']
  #allocation2 [shape = 'f32[8,32]{1,0:T(8,128)}', space=vmem, size = 0x1000, scoped, tag = 'scratch operand']
  #allocation3 [shape = 'f32[8,32]{1,0:T(8,128)}', space=vmem, size = 0x1000, scoped, tag = 'scratch operand']
  #allocation4 [shape = 'f32[8,32]{1,0:T(8,128)}', space=vmem, size = 0x1000, scoped, tag = 'scratch operand']
  #allocation5 [shape = 'f32[8,32]{1,0:T(8,128)}', space=vmem, size = 0x1000, scoped, tag = 'scratch operand']
  #allocation6 [shape = 'f32[8,32]{1,0:T(8,128)}', space=vmem, size = 0x1000, scoped, tag = 'scratch operand']
  #allocation7 [shape = 'f32[8,32]{1,0:T(8,128)}', space=vmem, size = 0x1000, scoped, tag = 'scratch operand']
  %s0 = inlined_call_operand.vmem [shape: f32[2,8,32], index: 0, kind: input, shape index: {}]
  %s1 = inlined_call_operand.vmem [shape: f32[2,8,32], index: 1, kind: input, shape index: {}]
  %s2 = inlined_call_operand.vmem [shape: f32[1,32], index: 2, kind: input, shape index: {}]
  %s3 = inlined_call_operand.vmem [shape: f32[1,32], index: 3, kind: input, shape index: {}]
  %s4 = inlined_call_operand.vmem [shape: bf16[32,32], index: 4, kind: input, shape index: {}]
  %s5 = inlined_call_operand.vmem [shape: bf16[32,32], index: 5, kind: input, shape index: {}]
  %s6 = inlined_call_operand.vmem [shape: bf16[32,32], index: 6, kind: input, shape index: {}]
  %s7 = inlined_call_operand.vmem [shape: f32[1,32], index: 7, kind: input, shape index: {}]
  %s8 = inlined_call_operand.vmem [shape: f32[1,32], index: 8, kind: input, shape index: {}]
  %s9 = inlined_call_operand.vmem [shape: f32[1,32], index: 9, kind: input, shape index: {}]
  %s10 = inlined_call_operand.vmem [shape: bf16[32,32], index: 10, kind: input, shape index: {}]
  %s11 = inlined_call_operand.vmem [shape: f32[1,32], index: 11, kind: input, shape index: {}]
  %s12 = inlined_call_operand.vmem [shape: f32[1,32], index: 12, kind: input, shape index: {}]
  %s13 = inlined_call_operand.vmem [shape: f32[1,32], index: 13, kind: input, shape index: {}]
  %s14 = inlined_call_operand.vmem [shape: bf16[32,32], index: 14, kind: input, shape index: {}]
  %s15 = inlined_call_operand.vmem [shape: bf16[32,32], index: 15, kind: input, shape index: {}]
  %s16 = inlined_call_operand.vmem [shape: bf16[32,32], index: 16, kind: input, shape index: {}]
  %s17 = inlined_call_operand.vmem [shape: f32[1,32], index: 17, kind: input, shape index: {}]
  %s18 = inlined_call_operand.vmem [shape: f32[1,32], index: 18, kind: input, shape index: {}]
  %s19 = inlined_call_operand.vmem [shape: f32[1,32], index: 19, kind: input, shape index: {}]
  %s20 = inlined_call_operand.vmem [shape: bf16[32,32], index: 20, kind: input, shape index: {}]
  %s21 = inlined_call_operand.vmem [shape: f32[1,32], index: 21, kind: input, shape index: {}]
  %s22 = inlined_call_operand.vmem [shape: f32[1,32], index: 22, kind: input, shape index: {}]
  %s23 = inlined_call_operand.vmem [shape: f32[1,32], index: 23, kind: input, shape index: {}]
  %s24 = inlined_call_operand.vmem [shape: bf16[32,128], index: 24, kind: input, shape index: {}]
  %s25 = inlined_call_operand.vmem [shape: f32[1,128], index: 25, kind: input, shape index: {}]
  %s26 = inlined_call_operand.vmem [shape: bf16[128,32], index: 26, kind: input, shape index: {}]
  %s27 = inlined_call_operand.vmem [shape: f32[1,32], index: 27, kind: input, shape index: {}]
  %s28 = inlined_call_operand.vmem [shape: f32[2,8,32], index: 28, kind: output, shape index: {}]
  %s29 = sld [smem:[#allocation0]]
  $region145: #{bart_decoder_forward.3} parent=0
    _
  %s31 = ssub.s32 1, %s29
  %s32 = scalar_select 0, %s31, %s29
  loop: start=0, step=1, limit=4
  $region2: #{bart_decoder_forward.3} parent=0 // loop_pre_header
    _
  $region3: #{bart_decoder_forward.3} parent=0 // loop_header
    %s34 = sphi 0, %s38
    %p35 = scmp.ge.s32.totalorder %s34, 4
    %s44 = sphi 0, %s46
    %s47 = sphi 0, %s44
    %s48 = sphi 0, %s47
    %s64 = sphi 0, %s48
    %s70 = sphi 0, %s72
    %s73 = sphi 0, %s70
    %s74 = sphi 0, %s73
    %s90 = sphi 0, %s74
    %s94 = sphi 0, %s94
    %s96 = sphi 0, %s94
    %s97 = sphi 0, %s96
    %s111 = sphi 0, %s97
    %s115 = sphi 0, %s115
    %s117 = sphi 0, %s115
    %s118 = sphi 0, %s117
    %s132 = sphi 0, %s118
    %s136 = sphi 0, %s136
    %s138 = sphi 0, %s136
    %s139 = sphi 0, %s138
    %s153 = sphi 0, %s139
    %s157 = sphi 0, %s157
    %s159 = sphi 0, %s157
    %s160 = sphi 0, %s159
    %s174 = sphi 0, %s160
    %s178 = sphi 0, %s178
    %s180 = sphi 0, %s178
    %s181 = sphi 0, %s180
    %s195 = sphi 0, %s181
    %s199 = sphi 0, %s199
    %s201 = sphi 0, %s199
    %s202 = sphi 0, %s201
    %s216 = sphi 0, %s202
    %s220 = sphi 0, %s220
    %s222 = sphi 0, %s220
    %s223 = sphi 0, %s222
    %s237 = sphi 0, %s223
    %s241 = sphi 0, %s241
    %s243 = sphi 0, %s241
    %s244 = sphi 0, %s243
    %s258 = sphi 0, %s244
    %s262 = sphi 0, %s262
    %s264 = sphi 0, %s262
    %s265 = sphi 0, %s264
    %s279 = sphi 0, %s265
    %s283 = sphi 0, %s283
    %s285 = sphi 0, %s283
    %s286 = sphi 0, %s285
    %s300 = sphi 0, %s286
    %s304 = sphi 0, %s304
    %s306 = sphi 0, %s304
    %s307 = sphi 0, %s306
    %s321 = sphi 0, %s307
    %s325 = sphi 0, %s325
    %s327 = sphi 0, %s325
    %s328 = sphi 0, %s327
    %s342 = sphi 0, %s328
    %s346 = sphi 0, %s346
    %s348 = sphi 0, %s346
    %s349 = sphi 0, %s348
    %s363 = sphi 0, %s349
    %s367 = sphi 0, %s367
    %s369 = sphi 0, %s367
    %s370 = sphi 0, %s369
    %s384 = sphi 0, %s370
    %s388 = sphi 0, %s388
    %s390 = sphi 0, %s388
    %s391 = sphi 0, %s390
    %s405 = sphi 0, %s391
    %s409 = sphi 0, %s409
    %s411 = sphi 0, %s409
    %s412 = sphi 0, %s411
    %s426 = sphi 0, %s412
    %s430 = sphi 0, %s430
    %s432 = sphi 0, %s430
    %s433 = sphi 0, %s432
    %s447 = sphi 0, %s433
    %s451 = sphi 0, %s451
    %s453 = sphi 0, %s451
    %s454 = sphi 0, %s453
    %s468 = sphi 0, %s454
    %s472 = sphi 0, %s472
    %s474 = sphi 0, %s472
    %s475 = sphi 0, %s474
    %s489 = sphi 0, %s475
    %s493 = sphi 0, %s493
    %s495 = sphi 0, %s493
    %s496 = sphi 0, %s495
    %s510 = sphi 0, %s496
    %s514 = sphi 0, %s514
    %s516 = sphi 0, %s514
    %s517 = sphi 0, %s516
    %s531 = sphi 0, %s517
    %s535 = sphi 0, %s535
    %s537 = sphi 0, %s535
    %s538 = sphi 0, %s537
    %s552 = sphi 0, %s538
    %s556 = sphi 0, %s556
    %s558 = sphi 0, %s556
    %s559 = sphi 0, %s558
    %s573 = sphi 0, %s559
    %s577 = sphi 0, %s577
    %s579 = sphi 0, %s577
    %s580 = sphi 0, %s579
    %s594 = sphi 0, %s580
    %s598 = sphi 0, %s598
    %s600 = sphi 0, %s598
    %s601 = sphi 0, %s600
    %s615 = sphi 0, %s601
    %s619 = sphi 0, %s619
    %s621 = sphi 0, %s619
    %s622 = sphi 0, %s621
    %s636 = sphi 0, %s622
    %s642 = sphi 0, %s644
    %s645 = sphi 0, %s642
    %s646 = sphi 0, %s645
    %s662 = sphi 0, %s646
  $region4: #{bart_decoder_forward.3} parent=0 // loop_header_branch
    %37 = sbr.rel (%p35) target = $region8
  $region5: #{bart_decoder_forward.3} parent=0 // loop_body
    %s39 = ssub.s32 %s34, 1
    %s40 = ssub.s32 %s34, 2
    %s41 = sadd.s32 %s34, 1
    %s42 = ssub.s32 %s34, %s41
    %p43 = scmp.eq.s32.totalorder %s42, 0
    %s45 = sadd.s32 %s44, 1
    %s46 = scalar_select %p43, %s44, %s45
    %p49 = pneg %p43
    %p50 = scmp.eq.s32.totalorder %s34, 1
    %p51 = por %p49, %p50
    %p52 = scmp.ne.s32.totalorder %s44, %s47
    %p53 = scmp.eq.s32.totalorder %s34, 0
    %p54 = por %p52, %p53
    %p55 = scmp.ne.s32.totalorder %s44, %s47
    %p56 = scmp.eq.s32.totalorder %s39, 1
    %p57 = por %p55, %p56
    %p58 = scmp.ne.s32.totalorder %s47, %s48
    %p59 = scmp.eq.s32.totalorder %s39, 0
    %p60 = por %p58, %p59
    %p61 = scmp.ne.s32.totalorder %s47, %s48
    %p62 = scmp.eq.s32.totalorder %s40, 1
    %p63 = por %p61, %p62
    %p65 = scmp.ne.s32.totalorder %s48, %s64
    %p66 = scmp.eq.s32.totalorder %s40, 0
    %p67 = por %p65, %p66
    %s68 = ssub.s32 %s34, %s41
    %p69 = scmp.eq.s32.totalorder %s68, 0
    %s71 = sadd.s32 %s70, 1
    %s72 = scalar_select %p69, %s70, %s71
    %p75 = pneg %p69
    %p76 = scmp.eq.s32.totalorder %s34, 1
    %p77 = por %p75, %p76
    %p78 = scmp.ne.s32.totalorder %s70, %s73
    %p79 = scmp.eq.s32.totalorder %s34, 0
    %p80 = por %p78, %p79
    %p81 = scmp.ne.s32.totalorder %s70, %s73
    %p82 = scmp.eq.s32.totalorder %s39, 1
    %p83 = por %p81, %p82
    %p84 = scmp.ne.s32.totalorder %s73, %s74
    %p85 = scmp.eq.s32.totalorder %s39, 0
    %p86 = por %p84, %p85
    %p87 = scmp.ne.s32.totalorder %s73, %s74
    %p88 = scmp.eq.s32.totalorder %s40, 1
    %p89 = por %p87, %p88
    %p91 = scmp.ne.s32.totalorder %s74, %s90
    %p92 = scmp.eq.s32.totalorder %s40, 0
    %p93 = por %p91, %p92
    %s95 = sadd.s32 %s94, 1
    %p98 = scmp.eq.s32.totalorder %s34, 1
    %p99 = scmp.ne.s32.totalorder %s94, %s96
    %p100 = scmp.eq.s32.totalorder %s34, 0
    %p101 = por %p99, %p100
    %p102 = scmp.ne.s32.totalorder %s94, %s96
    %p103 = scmp.eq.s32.totalorder %s39, 1
    %p104 = por %p102, %p103
    %p105 = scmp.ne.s32.totalorder %s96, %s97
    %p106 = scmp.eq.s32.totalorder %s39, 0
    %p107 = por %p105, %p106
    %p108 = scmp.ne.s32.totalorder %s96, %s97
    %p109 = scmp.eq.s32.totalorder %s40, 1
    %p110 = por %p108, %p109
    %p112 = scmp.ne.s32.totalorder %s97, %s111
    %p113 = scmp.eq.s32.totalorder %s40, 0
    %p114 = por %p112, %p113
    %s116 = sadd.s32 %s115, 1
    %p119 = scmp.eq.s32.totalorder %s34, 1
    %p120 = scmp.ne.s32.totalorder %s115, %s117
    %p121 = scmp.eq.s32.totalorder %s34, 0
    %p122 = por %p120, %p121
    %p123 = scmp.ne.s32.totalorder %s115, %s117
    %p124 = scmp.eq.s32.totalorder %s39, 1
    %p125 = por %p123, %p124
    %p126 = scmp.ne.s32.totalorder %s117, %s118
    %p127 = scmp.eq.s32.totalorder %s39, 0
    %p128 = por %p126, %p127
    %p129 = scmp.ne.s32.totalorder %s117, %s118
    %p130 = scmp.eq.s32.totalorder %s40, 1
    %p131 = por %p129, %p130
    %p133 = scmp.ne.s32.totalorder %s118, %s132
    %p134 = scmp.eq.s32.totalorder %s40, 0
    %p135 = por %p133, %p134
    %s137 = sadd.s32 %s136, 1
    %p140 = scmp.eq.s32.totalorder %s34, 1
    %p141 = scmp.ne.s32.totalorder %s136, %s138
    %p142 = scmp.eq.s32.totalorder %s34, 0
    %p143 = por %p141, %p142
    %p144 = scmp.ne.s32.totalorder %s136, %s138
    %p145 = scmp.eq.s32.totalorder %s39, 1
    %p146 = por %p144, %p145
    %p147 = scmp.ne.s32.totalorder %s138, %s139
    %p148 = scmp.eq.s32.totalorder %s39, 0
    %p149 = por %p147, %p148
    %p150 = scmp.ne.s32.totalorder %s138, %s139
    %p151 = scmp.eq.s32.totalorder %s40, 1
    %p152 = por %p150, %p151
    %p154 = scmp.ne.s32.totalorder %s139, %s153
    %p155 = scmp.eq.s32.totalorder %s40, 0
    %p156 = por %p154, %p155
    %s158 = sadd.s32 %s157, 1
    %p161 = scmp.eq.s32.totalorder %s34, 1
    %p162 = scmp.ne.s32.totalorder %s157, %s159
    %p163 = scmp.eq.s32.totalorder %s34, 0
    %p164 = por %p162, %p163
    %p165 = scmp.ne.s32.totalorder %s157, %s159
    %p166 = scmp.eq.s32.totalorder %s39, 1
    %p167 = por %p165, %p166
    %p168 = scmp.ne.s32.totalorder %s159, %s160
    %p169 = scmp.eq.s32.totalorder %s39, 0
    %p170 = por %p168, %p169
    %p171 = scmp.ne.s32.totalorder %s159, %s160
    %p172 = scmp.eq.s32.totalorder %s40, 1
    %p173 = por %p171, %p172
    %p175 = scmp.ne.s32.totalorder %s160, %s174
    %p176 = scmp.eq.s32.totalorder %s40, 0
    %p177 = por %p175, %p176
    %s179 = sadd.s32 %s178, 1
    %p182 = scmp.eq.s32.totalorder %s34, 1
    %p183 = scmp.ne.s32.totalorder %s178, %s180
    %p184 = scmp.eq.s32.totalorder %s34, 0
    %p185 = por %p183, %p184
    %p186 = scmp.ne.s32.totalorder %s178, %s180
    %p187 = scmp.eq.s32.totalorder %s39, 1
    %p188 = por %p186, %p187
    %p189 = scmp.ne.s32.totalorder %s180, %s181
    %p190 = scmp.eq.s32.totalorder %s39, 0
    %p191 = por %p189, %p190
    %p192 = scmp.ne.s32.totalorder %s180, %s181
    %p193 = scmp.eq.s32.totalorder %s40, 1
    %p194 = por %p192, %p193
    %p196 = scmp.ne.s32.totalorder %s181, %s195
    %p197 = scmp.eq.s32.totalorder %s40, 0
    %p198 = por %p196, %p197
    %s200 = sadd.s32 %s199, 1
    %p203 = scmp.eq.s32.totalorder %s34, 1
    %p204 = scmp.ne.s32.totalorder %s199, %s201
    %p205 = scmp.eq.s32.totalorder %s34, 0
    %p206 = por %p204, %p205
    %p207 = scmp.ne.s32.totalorder %s199, %s201
    %p208 = scmp.eq.s32.totalorder %s39, 1
    %p209 = por %p207, %p208
    %p210 = scmp.ne.s32.totalorder %s201, %s202
    %p211 = scmp.eq.s32.totalorder %s39, 0
    %p212 = por %p210, %p211
    %p213 = scmp.ne.s32.totalorder %s201, %s202
    %p214 = scmp.eq.s32.totalorder %s40, 1
    %p215 = por %p213, %p214
    %p217 = scmp.ne.s32.totalorder %s202, %s216
    %p218 = scmp.eq.s32.totalorder %s40, 0
    %p219 = por %p217, %p218
    %s221 = sadd.s32 %s220, 1
    %p224 = scmp.eq.s32.totalorder %s34, 1
    %p225 = scmp.ne.s32.totalorder %s220, %s222
    %p226 = scmp.eq.s32.totalorder %s34, 0
    %p227 = por %p225, %p226
    %p228 = scmp.ne.s32.totalorder %s220, %s222
    %p229 = scmp.eq.s32.totalorder %s39, 1
    %p230 = por %p228, %p229
    %p231 = scmp.ne.s32.totalorder %s222, %s223
    %p232 = scmp.eq.s32.totalorder %s39, 0
    %p233 = por %p231, %p232
    %p234 = scmp.ne.s32.totalorder %s222, %s223
    %p235 = scmp.eq.s32.totalorder %s40, 1
    %p236 = por %p234, %p235
    %p238 = scmp.ne.s32.totalorder %s223, %s237
    %p239 = scmp.eq.s32.totalorder %s40, 0
    %p240 = por %p238, %p239
    %s242 = sadd.s32 %s241, 1
    %p245 = scmp.eq.s32.totalorder %s34, 1
    %p246 = scmp.ne.s32.totalorder %s241, %s243
    %p247 = scmp.eq.s32.totalorder %s34, 0
    %p248 = por %p246, %p247
    %p249 = scmp.ne.s32.totalorder %s241, %s243
    %p250 = scmp.eq.s32.totalorder %s39, 1
    %p251 = por %p249, %p250
    %p252 = scmp.ne.s32.totalorder %s243, %s244
    %p253 = scmp.eq.s32.totalorder %s39, 0
    %p254 = por %p252, %p253
    %p255 = scmp.ne.s32.totalorder %s243, %s244
    %p256 = scmp.eq.s32.totalorder %s40, 1
    %p257 = por %p255, %p256
    %p259 = scmp.ne.s32.totalorder %s244, %s258
    %p260 = scmp.eq.s32.totalorder %s40, 0
    %p261 = por %p259, %p260
    %s263 = sadd.s32 %s262, 1
    %p266 = scmp.eq.s32.totalorder %s34, 1
    %p267 = scmp.ne.s32.totalorder %s262, %s264
    %p268 = scmp.eq.s32.totalorder %s34, 0
    %p269 = por %p267, %p268
    %p270 = scmp.ne.s32.totalorder %s262, %s264
    %p271 = scmp.eq.s32.totalorder %s39, 1
    %p272 = por %p270, %p271
    %p273 = scmp.ne.s32.totalorder %s264, %s265
    %p274 = scmp.eq.s32.totalorder %s39, 0
    %p275 = por %p273, %p274
    %p276 = scmp.ne.s32.totalorder %s264, %s265
    %p277 = scmp.eq.s32.totalorder %s40, 1
    %p278 = por %p276, %p277
    %p280 = scmp.ne.s32.totalorder %s265, %s279
    %p281 = scmp.eq.s32.totalorder %s40, 0
    %p282 = por %p280, %p281
    %s284 = sadd.s32 %s283, 1
    %p287 = scmp.eq.s32.totalorder %s34, 1
    %p288 = scmp.ne.s32.totalorder %s283, %s285
    %p289 = scmp.eq.s32.totalorder %s34, 0
    %p290 = por %p288, %p289
    %p291 = scmp.ne.s32.totalorder %s283, %s285
    %p292 = scmp.eq.s32.totalorder %s39, 1
    %p293 = por %p291, %p292
    %p294 = scmp.ne.s32.totalorder %s285, %s286
    %p295 = scmp.eq.s32.totalorder %s39, 0
    %p296 = por %p294, %p295
    %p297 = scmp.ne.s32.totalorder %s285, %s286
    %p298 = scmp.eq.s32.totalorder %s40, 1
    %p299 = por %p297, %p298
    %p301 = scmp.ne.s32.totalorder %s286, %s300
    %p302 = scmp.eq.s32.totalorder %s40, 0
    %p303 = por %p301, %p302
    %s305 = sadd.s32 %s304, 1
    %p308 = scmp.eq.s32.totalorder %s34, 1
    %p309 = scmp.ne.s32.totalorder %s304, %s306
    %p310 = scmp.eq.s32.totalorder %s34, 0
    %p311 = por %p309, %p310
    %p312 = scmp.ne.s32.totalorder %s304, %s306
    %p313 = scmp.eq.s32.totalorder %s39, 1
    %p314 = por %p312, %p313
    %p315 = scmp.ne.s32.totalorder %s306, %s307
    %p316 = scmp.eq.s32.totalorder %s39, 0
    %p317 = por %p315, %p316
    %p318 = scmp.ne.s32.totalorder %s306, %s307
    %p319 = scmp.eq.s32.totalorder %s40, 1
    %p320 = por %p318, %p319
    %p322 = scmp.ne.s32.totalorder %s307, %s321
    %p323 = scmp.eq.s32.totalorder %s40, 0
    %p324 = por %p322, %p323
    %s326 = sadd.s32 %s325, 1
    %p329 = scmp.eq.s32.totalorder %s34, 1
    %p330 = scmp.ne.s32.totalorder %s325, %s327
    %p331 = scmp.eq.s32.totalorder %s34, 0
    %p332 = por %p330, %p331
    %p333 = scmp.ne.s32.totalorder %s325, %s327
    %p334 = scmp.eq.s32.totalorder %s39, 1
    %p335 = por %p333, %p334
    %p336 = scmp.ne.s32.totalorder %s327, %s328
    %p337 = scmp.eq.s32.totalorder %s39, 0
    %p338 = por %p336, %p337
    %p339 = scmp.ne.s32.totalorder %s327, %s328
    %p340 = scmp.eq.s32.totalorder %s40, 1
    %p341 = por %p339, %p340
    %p343 = scmp.ne.s32.totalorder %s328, %s342
    %p344 = scmp.eq.s32.totalorder %s40, 0
    %p345 = por %p343, %p344
    %s347 = sadd.s32 %s346, 1
    %p350 = scmp.eq.s32.totalorder %s34, 1
    %p351 = scmp.ne.s32.totalorder %s346, %s348
    %p352 = scmp.eq.s32.totalorder %s34, 0
    %p353 = por %p351, %p352
    %p354 = scmp.ne.s32.totalorder %s346, %s348
    %p355 = scmp.eq.s32.totalorder %s39, 1
    %p356 = por %p354, %p355
    %p357 = scmp.ne.s32.totalorder %s348, %s349
    %p358 = scmp.eq.s32.totalorder %s39, 0
    %p359 = por %p357, %p358
    %p360 = scmp.ne.s32.totalorder %s348, %s349
    %p361 = scmp.eq.s32.totalorder %s40, 1
    %p362 = por %p360, %p361
    %p364 = scmp.ne.s32.totalorder %s349, %s363
    %p365 = scmp.eq.s32.totalorder %s40, 0
    %p366 = por %p364, %p365
    %s368 = sadd.s32 %s367, 1
    %p371 = scmp.eq.s32.totalorder %s34, 1
    %p372 = scmp.ne.s32.totalorder %s367, %s369
    %p373 = scmp.eq.s32.totalorder %s34, 0
    %p374 = por %p372, %p373
    %p375 = scmp.ne.s32.totalorder %s367, %s369
    %p376 = scmp.eq.s32.totalorder %s39, 1
    %p377 = por %p375, %p376
    %p378 = scmp.ne.s32.totalorder %s369, %s370
    %p379 = scmp.eq.s32.totalorder %s39, 0
    %p380 = por %p378, %p379
    %p381 = scmp.ne.s32.totalorder %s369, %s370
    %p382 = scmp.eq.s32.totalorder %s40, 1
    %p383 = por %p381, %p382
    %p385 = scmp.ne.s32.totalorder %s370, %s384
    %p386 = scmp.eq.s32.totalorder %s40, 0
    %p387 = por %p385, %p386
    %s389 = sadd.s32 %s388, 1
    %p392 = scmp.eq.s32.totalorder %s34, 1
    %p393 = scmp.ne.s32.totalorder %s388, %s390
    %p394 = scmp.eq.s32.totalorder %s34, 0
    %p395 = por %p393, %p394
    %p396 = scmp.ne.s32.totalorder %s388, %s390
    %p397 = scmp.eq.s32.totalorder %s39, 1
    %p398 = por %p396, %p397
    %p399 = scmp.ne.s32.totalorder %s390, %s391
    %p400 = scmp.eq.s32.totalorder %s39, 0
    %p401 = por %p399, %p400
    %p402 = scmp.ne.s32.totalorder %s390, %s391
    %p403 = scmp.eq.s32.totalorder %s40, 1
    %p404 = por %p402, %p403
    %p406 = scmp.ne.s32.totalorder %s391, %s405
    %p407 = scmp.eq.s32.totalorder %s40, 0
    %p408 = por %p406, %p407
    %s410 = sadd.s32 %s409, 1
    %p413 = scmp.eq.s32.totalorder %s34, 1
    %p414 = scmp.ne.s32.totalorder %s409, %s411
    %p415 = scmp.eq.s32.totalorder %s34, 0
    %p416 = por %p414, %p415
    %p417 = scmp.ne.s32.totalorder %s409, %s411
    %p418 = scmp.eq.s32.totalorder %s39, 1
    %p419 = por %p417, %p418
    %p420 = scmp.ne.s32.totalorder %s411, %s412
    %p421 = scmp.eq.s32.totalorder %s39, 0
    %p422 = por %p420, %p421
    %p423 = scmp.ne.s32.totalorder %s411, %s412
    %p424 = scmp.eq.s32.totalorder %s40, 1
    %p425 = por %p423, %p424
    %p427 = scmp.ne.s32.totalorder %s412, %s426
    %p428 = scmp.eq.s32.totalorder %s40, 0
    %p429 = por %p427, %p428
    %s431 = sadd.s32 %s430, 1
    %p434 = scmp.eq.s32.totalorder %s34, 1
    %p435 = scmp.ne.s32.totalorder %s430, %s432
    %p436 = scmp.eq.s32.totalorder %s34, 0
    %p437 = por %p435, %p436
    %p438 = scmp.ne.s32.totalorder %s430, %s432
    %p439 = scmp.eq.s32.totalorder %s39, 1
    %p440 = por %p438, %p439
    %p441 = scmp.ne.s32.totalorder %s432, %s433
    %p442 = scmp.eq.s32.totalorder %s39, 0
    %p443 = por %p441, %p442
    %p444 = scmp.ne.s32.totalorder %s432, %s433
    %p445 = scmp.eq.s32.totalorder %s40, 1
    %p446 = por %p444, %p445
    %p448 = scmp.ne.s32.totalorder %s433, %s447
    %p449 = scmp.eq.s32.totalorder %s40, 0
    %p450 = por %p448, %p449
    %s452 = sadd.s32 %s451, 1
    %p455 = scmp.eq.s32.totalorder %s34, 1
    %p456 = scmp.ne.s32.totalorder %s451, %s453
    %p457 = scmp.eq.s32.totalorder %s34, 0
    %p458 = por %p456, %p457
    %p459 = scmp.ne.s32.totalorder %s451, %s453
    %p460 = scmp.eq.s32.totalorder %s39, 1
    %p461 = por %p459, %p460
    %p462 = scmp.ne.s32.totalorder %s453, %s454
    %p463 = scmp.eq.s32.totalorder %s39, 0
    %p464 = por %p462, %p463
    %p465 = scmp.ne.s32.totalorder %s453, %s454
    %p466 = scmp.eq.s32.totalorder %s40, 1
    %p467 = por %p465, %p466
    %p469 = scmp.ne.s32.totalorder %s454, %s468
    %p470 = scmp.eq.s32.totalorder %s40, 0
    %p471 = por %p469, %p470
    %s473 = sadd.s32 %s472, 1
    %p476 = scmp.eq.s32.totalorder %s34, 1
    %p477 = scmp.ne.s32.totalorder %s472, %s474
    %p478 = scmp.eq.s32.totalorder %s34, 0
    %p479 = por %p477, %p478
    %p480 = scmp.ne.s32.totalorder %s472, %s474
    %p481 = scmp.eq.s32.totalorder %s39, 1
    %p482 = por %p480, %p481
    %p483 = scmp.ne.s32.totalorder %s474, %s475
    %p484 = scmp.eq.s32.totalorder %s39, 0
    %p485 = por %p483, %p484
    %p486 = scmp.ne.s32.totalorder %s474, %s475
    %p487 = scmp.eq.s32.totalorder %s40, 1
    %p488 = por %p486, %p487
    %p490 = scmp.ne.s32.totalorder %s475, %s489
    %p491 = scmp.eq.s32.totalorder %s40, 0
    %p492 = por %p490, %p491
    %s494 = sadd.s32 %s493, 1
    %p497 = scmp.eq.s32.totalorder %s34, 1
    %p498 = scmp.ne.s32.totalorder %s493, %s495
    %p499 = scmp.eq.s32.totalorder %s34, 0
    %p500 = por %p498, %p499
    %p501 = scmp.ne.s32.totalorder %s493, %s495
    %p502 = scmp.eq.s32.totalorder %s39, 1
    %p503 = por %p501, %p502
    %p504 = scmp.ne.s32.totalorder %s495, %s496
    %p505 = scmp.eq.s32.totalorder %s39, 0
    %p506 = por %p504, %p505
    %p507 = scmp.ne.s32.totalorder %s495, %s496
    %p508 = scmp.eq.s32.totalorder %s40, 1
    %p509 = por %p507, %p508
    %p511 = scmp.ne.s32.totalorder %s496, %s510
    %p512 = scmp.eq.s32.totalorder %s40, 0
    %p513 = por %p511, %p512
    %s515 = sadd.s32 %s514, 1
    %p518 = scmp.eq.s32.totalorder %s34, 1
    %p519 = scmp.ne.s32.totalorder %s514, %s516
    %p520 = scmp.eq.s32.totalorder %s34, 0
    %p521 = por %p519, %p520
    %p522 = scmp.ne.s32.totalorder %s514, %s516
    %p523 = scmp.eq.s32.totalorder %s39, 1
    %p524 = por %p522, %p523
    %p525 = scmp.ne.s32.totalorder %s516, %s517
    %p526 = scmp.eq.s32.totalorder %s39, 0
    %p527 = por %p525, %p526
    %p528 = scmp.ne.s32.totalorder %s516, %s517
    %p529 = scmp.eq.s32.totalorder %s40, 1
    %p530 = por %p528, %p529
    %p532 = scmp.ne.s32.totalorder %s517, %s531
    %p533 = scmp.eq.s32.totalorder %s40, 0
    %p534 = por %p532, %p533
    %s536 = sadd.s32 %s535, 1
    %p539 = scmp.eq.s32.totalorder %s34, 1
    %p540 = scmp.ne.s32.totalorder %s535, %s537
    %p541 = scmp.eq.s32.totalorder %s34, 0
    %p542 = por %p540, %p541
    %p543 = scmp.ne.s32.totalorder %s535, %s537
    %p544 = scmp.eq.s32.totalorder %s39, 1
    %p545 = por %p543, %p544
    %p546 = scmp.ne.s32.totalorder %s537, %s538
    %p547 = scmp.eq.s32.totalorder %s39, 0
    %p548 = por %p546, %p547
    %p549 = scmp.ne.s32.totalorder %s537, %s538
    %p550 = scmp.eq.s32.totalorder %s40, 1
    %p551 = por %p549, %p550
    %p553 = scmp.ne.s32.totalorder %s538, %s552
    %p554 = scmp.eq.s32.totalorder %s40, 0
    %p555 = por %p553, %p554
    %s557 = sadd.s32 %s556, 1
    %p560 = scmp.eq.s32.totalorder %s34, 1
    %p561 = scmp.ne.s32.totalorder %s556, %s558
    %p562 = scmp.eq.s32.totalorder %s34, 0
    %p563 = por %p561, %p562
    %p564 = scmp.ne.s32.totalorder %s556, %s558
    %p565 = scmp.eq.s32.totalorder %s39, 1
    %p566 = por %p564, %p565
    %p567 = scmp.ne.s32.totalorder %s558, %s559
    %p568 = scmp.eq.s32.totalorder %s39, 0
    %p569 = por %p567, %p568
    %p570 = scmp.ne.s32.totalorder %s558, %s559
    %p571 = scmp.eq.s32.totalorder %s40, 1
    %p572 = por %p570, %p571
    %p574 = scmp.ne.s32.totalorder %s559, %s573
    %p575 = scmp.eq.s32.totalorder %s40, 0
    %p576 = por %p574, %p575
    %s578 = sadd.s32 %s577, 1
    %p581 = scmp.eq.s32.totalorder %s34, 1
    %p582 = scmp.ne.s32.totalorder %s577, %s579
    %p583 = scmp.eq.s32.totalorder %s34, 0
    %p584 = por %p582, %p583
    %p585 = scmp.ne.s32.totalorder %s577, %s579
    %p586 = scmp.eq.s32.totalorder %s39, 1
    %p587 = por %p585, %p586
    %p588 = scmp.ne.s32.totalorder %s579, %s580
    %p589 = scmp.eq.s32.totalorder %s39, 0
    %p590 = por %p588, %p589
    %p591 = scmp.ne.s32.totalorder %s579, %s580
    %p592 = scmp.eq.s32.totalorder %s40, 1
    %p593 = por %p591, %p592
    %p595 = scmp.ne.s32.totalorder %s580, %s594
    %p596 = scmp.eq.s32.totalorder %s40, 0
    %p597 = por %p595, %p596
    %s599 = sadd.s32 %s598, 1
    %p602 = scmp.eq.s32.totalorder %s34, 1
    %p603 = scmp.ne.s32.totalorder %s598, %s600
    %p604 = scmp.eq.s32.totalorder %s34, 0
    %p605 = por %p603, %p604
    %p606 = scmp.ne.s32.totalorder %s598, %s600
    %p607 = scmp.eq.s32.totalorder %s39, 1
    %p608 = por %p606, %p607
    %p609 = scmp.ne.s32.totalorder %s600, %s601
    %p610 = scmp.eq.s32.totalorder %s39, 0
    %p611 = por %p609, %p610
    %p612 = scmp.ne.s32.totalorder %s600, %s601
    %p613 = scmp.eq.s32.totalorder %s40, 1
    %p614 = por %p612, %p613
    %p616 = scmp.ne.s32.totalorder %s601, %s615
    %p617 = scmp.eq.s32.totalorder %s40, 0
    %p618 = por %p616, %p617
    %s620 = sadd.s32 %s619, 1
    %p623 = scmp.eq.s32.totalorder %s34, 1
    %p624 = scmp.ne.s32.totalorder %s619, %s621
    %p625 = scmp.eq.s32.totalorder %s34, 0
    %p626 = por %p624, %p625
    %p627 = scmp.ne.s32.totalorder %s619, %s621
    %p628 = scmp.eq.s32.totalorder %s39, 1
    %p629 = por %p627, %p628
    %p630 = scmp.ne.s32.totalorder %s621, %s622
    %p631 = scmp.eq.s32.totalorder %s39, 0
    %p632 = por %p630, %p631
    %p633 = scmp.ne.s32.totalorder %s621, %s622
    %p634 = scmp.eq.s32.totalorder %s40, 1
    %p635 = por %p633, %p634
    %p637 = scmp.ne.s32.totalorder %s622, %s636
    %p638 = scmp.eq.s32.totalorder %s40, 0
    %p639 = por %p637, %p638
    %s640 = ssub.s32 %s34, %s41
    %p641 = scmp.eq.s32.totalorder %s640, 0
    %s643 = sadd.s32 %s642, 1
    %s644 = scalar_select %p641, %s642, %s643
    %p647 = pneg %p641
    %p648 = scmp.eq.s32.totalorder %s34, 1
    %p649 = por %p647, %p648
    %p650 = scmp.ne.s32.totalorder %s642, %s645
    %p651 = scmp.eq.s32.totalorder %s34, 0
    %p652 = por %p650, %p651
    %p653 = scmp.ne.s32.totalorder %s642, %s645
    %p654 = scmp.eq.s32.totalorder %s39, 1
    %p655 = por %p653, %p654
    %p656 = scmp.ne.s32.totalorder %s645, %s646
    %p657 = scmp.eq.s32.totalorder %s39, 0
    %p658 = por %p656, %p657
    %p659 = scmp.ne.s32.totalorder %s645, %s646
    %p660 = scmp.eq.s32.totalorder %s40, 1
    %p661 = por %p659, %p660
    %p663 = scmp.ne.s32.totalorder %s646, %s662
    %p664 = scmp.eq.s32.totalorder %s40, 0
    %p665 = por %p663, %p664
    %p666 = scmp.le.s32.totalorder 1, %s34
    %p667 = scmp.lt.s32.totalorder %s34, 3
    %p668 = pnand %p666, %p667
    %p669 = pneg %p668
    // Predicated region
    $region9: #{bart_decoder_forward.3} parent=5 // pred_check
      _
    $region10: #{bart_decoder_forward.3} parent=5 // pred_check_branch
      %671 = sbr.rel (%p668) target = $region12
    $region11: #{bart_decoder_forward.3} parent=5 // pred_region
      %s672 = ssub.s32 %s34, 1
      // Predicated region
      $region13: #{bart_decoder_forward.3} parent=11 // pred_check
        %p673 = pneg %p107
      $region14: #{bart_decoder_forward.3} parent=11 // pred_check_branch
        %675 = sbr.rel (%p673) target = $region16
      $region15: #{bart_decoder_forward.3} parent=11 // pred_region
        _
      $region16: #{bart_decoder_forward.3} parent=11 // pred_fallthru
        _
      // Predicated region
      $region17: #{bart_decoder_forward.3} parent=11 // pred_check
        %p676 = pneg %p128
      $region18: #{bart_decoder_forward.3} parent=11 // pred_check_branch
        %678 = sbr.rel (%p676) target = $region20
      $region19: #{bart_decoder_forward.3} parent=11 // pred_region
        _
      $region20: #{bart_decoder_forward.3} parent=11 // pred_fallthru
        _
      // Predicated region
      $region21: #{bart_decoder_forward.3} parent=11 // pred_check
        %p679 = pneg %p149
      $region22: #{bart_decoder_forward.3} parent=11 // pred_check_branch
        %681 = sbr.rel (%p679) target = $region24
      $region23: #{bart_decoder_forward.3} parent=11 // pred_region
        _
      $region24: #{bart_decoder_forward.3} parent=11 // pred_fallthru
        _
      // Predicated region
      $region25: #{bart_decoder_forward.3} parent=11 // pred_check
        %p682 = pneg %p170
      $region26: #{bart_decoder_forward.3} parent=11 // pred_check_branch
        %684 = sbr.rel (%p682) target = $region28
      $region27: #{bart_decoder_forward.3} parent=11 // pred_region
        _
      $region28: #{bart_decoder_forward.3} parent=11 // pred_fallthru
        _
      // Predicated region
      $region29: #{bart_decoder_forward.3} parent=11 // pred_check
        %p685 = pneg %p191
      $region30: #{bart_decoder_forward.3} parent=11 // pred_check_branch
        %687 = sbr.rel (%p685) target = $region32
      $region31: #{bart_decoder_forward.3} parent=11 // pred_region
        _
      $region32: #{bart_decoder_forward.3} parent=11 // pred_fallthru
        _
      // Predicated region
      $region33: #{bart_decoder_forward.3} parent=11 // pred_check
        %p688 = pneg %p212
      $region34: #{bart_decoder_forward.3} parent=11 // pred_check_branch
        %690 = sbr.rel (%p688) target = $region36
      $region35: #{bart_decoder_forward.3} parent=11 // pred_region
        _
      $region36: #{bart_decoder_forward.3} parent=11 // pred_fallthru
        _
      // Predicated region
      $region37: #{bart_decoder_forward.3} parent=11 // pred_check
        %p691 = pneg %p233
      $region38: #{bart_decoder_forward.3} parent=11 // pred_check_branch
        %693 = sbr.rel (%p691) target = $region40
      $region39: #{bart_decoder_forward.3} parent=11 // pred_region
        _
      $region40: #{bart_decoder_forward.3} parent=11 // pred_fallthru
        _
      // Predicated region
      $region41: #{bart_decoder_forward.3} parent=11 // pred_check
        %p694 = pneg %p254
      $region42: #{bart_decoder_forward.3} parent=11 // pred_check_branch
        %696 = sbr.rel (%p694) target = $region44
      $region43: #{bart_decoder_forward.3} parent=11 // pred_region
        _
      $region44: #{bart_decoder_forward.3} parent=11 // pred_fallthru
        _
      // Predicated region
      $region45: #{bart_decoder_forward.3} parent=11 // pred_check
        %p697 = pneg %p275
      $region46: #{bart_decoder_forward.3} parent=11 // pred_check_branch
        %699 = sbr.rel (%p697) target = $region48
      $region47: #{bart_decoder_forward.3} parent=11 // pred_region
        _
      $region48: #{bart_decoder_forward.3} parent=11 // pred_fallthru
        _
      // Predicated region
      $region49: #{bart_decoder_forward.3} parent=11 // pred_check
        %p700 = pneg %p296
      $region50: #{bart_decoder_forward.3} parent=11 // pred_check_branch
        %702 = sbr.rel (%p700) target = $region52
      $region51: #{bart_decoder_forward.3} parent=11 // pred_region
        _
      $region52: #{bart_decoder_forward.3} parent=11 // pred_fallthru
        _
      // Predicated region
      $region53: #{bart_decoder_forward.3} parent=11 // pred_check
        %p703 = pneg %p317
      $region54: #{bart_decoder_forward.3} parent=11 // pred_check_branch
        %705 = sbr.rel (%p703) target = $region56
      $region55: #{bart_decoder_forward.3} parent=11 // pred_region
        _
      $region56: #{bart_decoder_forward.3} parent=11 // pred_fallthru
        _
      // Predicated region
      $region57: #{bart_decoder_forward.3} parent=11 // pred_check
        %p706 = pneg %p338
      $region58: #{bart_decoder_forward.3} parent=11 // pred_check_branch
        %708 = sbr.rel (%p706) target = $region60
      $region59: #{bart_decoder_forward.3} parent=11 // pred_region
        _
      $region60: #{bart_decoder_forward.3} parent=11 // pred_fallthru
        _
      // Predicated region
      $region61: #{bart_decoder_forward.3} parent=11 // pred_check
        %p709 = pneg %p359
      $region62: #{bart_decoder_forward.3} parent=11 // pred_check_branch
        %711 = sbr.rel (%p709) target = $region64
      $region63: #{bart_decoder_forward.3} parent=11 // pred_region
        _
      $region64: #{bart_decoder_forward.3} parent=11 // pred_fallthru
        _
      // Predicated region
      $region65: #{bart_decoder_forward.3} parent=11 // pred_check
        %p712 = pneg %p380
      $region66: #{bart_decoder_forward.3} parent=11 // pred_check_branch
        %714 = sbr.rel (%p712) target = $region68
      $region67: #{bart_decoder_forward.3} parent=11 // pred_region
        _
      $region68: #{bart_decoder_forward.3} parent=11 // pred_fallthru
        _
      // Predicated region
      $region69: #{bart_decoder_forward.3} parent=11 // pred_check
        %p715 = pneg %p401
      $region70: #{bart_decoder_forward.3} parent=11 // pred_check_branch
        %717 = sbr.rel (%p715) target = $region72
      $region71: #{bart_decoder_forward.3} parent=11 // pred_region
        _
      $region72: #{bart_decoder_forward.3} parent=11 // pred_fallthru
        _
      // Predicated region
      $region73: #{bart_decoder_forward.3} parent=11 // pred_check
        %p718 = pneg %p422
      $region74: #{bart_decoder_forward.3} parent=11 // pred_check_branch
        %720 = sbr.rel (%p718) target = $region76
      $region75: #{bart_decoder_forward.3} parent=11 // pred_region
        _
      $region76: #{bart_decoder_forward.3} parent=11 // pred_fallthru
        _
      // Predicated region
      $region77: #{bart_decoder_forward.3} parent=11 // pred_check
        %p721 = pneg %p443
      $region78: #{bart_decoder_forward.3} parent=11 // pred_check_branch
        %723 = sbr.rel (%p721) target = $region80
      $region79: #{bart_decoder_forward.3} parent=11 // pred_region
        _
      $region80: #{bart_decoder_forward.3} parent=11 // pred_fallthru
        _
      // Predicated region
      $region81: #{bart_decoder_forward.3} parent=11 // pred_check
        %p724 = pneg %p464
      $region82: #{bart_decoder_forward.3} parent=11 // pred_check_branch
        %726 = sbr.rel (%p724) target = $region84
      $region83: #{bart_decoder_forward.3} parent=11 // pred_region
        _
      $region84: #{bart_decoder_forward.3} parent=11 // pred_fallthru
        _
      // Predicated region
      $region85: #{bart_decoder_forward.3} parent=11 // pred_check
        %p727 = pneg %p485
      $region86: #{bart_decoder_forward.3} parent=11 // pred_check_branch
        %729 = sbr.rel (%p727) target = $region88
      $region87: #{bart_decoder_forward.3} parent=11 // pred_region
        _
      $region88: #{bart_decoder_forward.3} parent=11 // pred_fallthru
        _
      // Predicated region
      $region89: #{bart_decoder_forward.3} parent=11 // pred_check
        %p730 = pneg %p506
      $region90: #{bart_decoder_forward.3} parent=11 // pred_check_branch
        %732 = sbr.rel (%p730) target = $region92
      $region91: #{bart_decoder_forward.3} parent=11 // pred_region
        _
      $region92: #{bart_decoder_forward.3} parent=11 // pred_fallthru
        _
      // Predicated region
      $region93: #{bart_decoder_forward.3} parent=11 // pred_check
        %p733 = pneg %p527
      $region94: #{bart_decoder_forward.3} parent=11 // pred_check_branch
        %735 = sbr.rel (%p733) target = $region96
      $region95: #{bart_decoder_forward.3} parent=11 // pred_region
        _
      $region96: #{bart_decoder_forward.3} parent=11 // pred_fallthru
        _
      // Predicated region
      $region97: #{bart_decoder_forward.3} parent=11 // pred_check
        %p736 = pneg %p548
      $region98: #{bart_decoder_forward.3} parent=11 // pred_check_branch
        %738 = sbr.rel (%p736) target = $region100
      $region99: #{bart_decoder_forward.3} parent=11 // pred_region
        _
      $region100: #{bart_decoder_forward.3} parent=11 // pred_fallthru
        _
      // Predicated region
      $region101: #{bart_decoder_forward.3} parent=11 // pred_check
        %p739 = pneg %p569
      $region102: #{bart_decoder_forward.3} parent=11 // pred_check_branch
        %741 = sbr.rel (%p739) target = $region104
      $region103: #{bart_decoder_forward.3} parent=11 // pred_region
        _
      $region104: #{bart_decoder_forward.3} parent=11 // pred_fallthru
        _
      // Predicated region
      $region105: #{bart_decoder_forward.3} parent=11 // pred_check
        %p742 = pneg %p590
      $region106: #{bart_decoder_forward.3} parent=11 // pred_check_branch
        %744 = sbr.rel (%p742) target = $region108
      $region107: #{bart_decoder_forward.3} parent=11 // pred_region
        _
      $region108: #{bart_decoder_forward.3} parent=11 // pred_fallthru
        _
      // Predicated region
      $region109: #{bart_decoder_forward.3} parent=11 // pred_check
        %p745 = pneg %p611
      $region110: #{bart_decoder_forward.3} parent=11 // pred_check_branch
        %747 = sbr.rel (%p745) target = $region112
      $region111: #{bart_decoder_forward.3} parent=11 // pred_region
        _
      $region112: #{bart_decoder_forward.3} parent=11 // pred_fallthru
        _
      // Predicated region
      $region113: #{bart_decoder_forward.3} parent=11 // pred_check
        %p748 = pneg %p632
      $region114: #{bart_decoder_forward.3} parent=11 // pred_check_branch
        %750 = sbr.rel (%p748) target = $region116
      $region115: #{bart_decoder_forward.3} parent=11 // pred_region
        _
      $region116: #{bart_decoder_forward.3} parent=11 // pred_fallthru
        _
    $region12: #{bart_decoder_forward.3} parent=5 // pred_fallthru
      _
    %p751 = scmp.lt.s32.totalorder %s34, 2
    // Predicated region
    $region117: #{bart_decoder_forward.3} parent=5 // pred_check
      %p752 = pneg %p751
    $region118: #{bart_decoder_forward.3} parent=5 // pred_check_branch
      %754 = sbr.rel (%p752) target = $region120
    $region119: #{bart_decoder_forward.3} parent=5 // pred_region
      // Predicated region
      $region121: #{bart_decoder_forward.3} parent=119 // pred_check
        %p755 = pneg %p54
      $region122: #{bart_decoder_forward.3} parent=119 // pred_check_branch
        %757 = sbr.rel (%p755) target = $region124
      $region123: #{bart_decoder_forward.3} parent=119 // pred_region
        %p758 = scmp.lt.s32.totalorder %s34, 1
        %s759 = scalar_select %p758, %s34, 1
        %s760 = smul.addr %s759, 8
        %s761 = scalar_lea.vmem %s0, %s760
      $region124: #{bart_decoder_forward.3} parent=119 // pred_fallthru
        _
      // Predicated region
      $region125: #{bart_decoder_forward.3} parent=119 // pred_check
        %p762 = pneg %p80
      $region126: #{bart_decoder_forward.3} parent=119 // pred_check_branch
        %764 = sbr.rel (%p762) target = $region128
      $region127: #{bart_decoder_forward.3} parent=119 // pred_region
        %p765 = scmp.lt.s32.totalorder %s34, 1
        %s766 = scalar_select %p765, %s34, 1
        %s767 = smul.addr %s766, 8
        %s768 = scalar_lea.vmem %s1, %s767
      $region128: #{bart_decoder_forward.3} parent=119 // pred_fallthru
        _
    $region120: #{bart_decoder_forward.3} parent=5 // pred_fallthru
      _
    %p769 = scmp.le.s32.totalorder 1, %s34
    %p770 = scmp.lt.s32.totalorder %s34, 3
    %p771 = pnand %p769, %p770
    %p772 = pneg %p771
    // Predicated region
    $region129: #{bart_decoder_forward.3} parent=5 // pred_check
      _
    $region130: #{bart_decoder_forward.3} parent=5 // pred_check_branch
      %774 = sbr.rel (%p771) target = $region132
    $region131: #{bart_decoder_forward.3} parent=5 // pred_region
      %s775 = ssub.s32 %s34, 1
      %p776 = scmp.lt.s32.totalorder %s39, 1
      %s777 = scalar_select %p776, %s39, 1
      %s778 = smul.addr %s777, 8
      %s779 = scalar_lea.vmem %s0, %s778
      %p780 = pneg %p60
      %p781 = pneg %p57
      %p782 = scmp.lt.s32.totalorder %s39, 1
      %s783 = scalar_select %p782, %s39, 1
      %s784 = smul.addr %s783, 8
      %s785 = scalar_lea.vmem %s1, %s784
      %p786 = pneg %p86
      %p787 = pneg %p83
      %p788 = pneg %p107
      %p789 = pneg %p104
      %p790 = pneg %p128
      %p791 = pneg %p125
      %p792 = pneg %p149
      %p793 = pneg %p146
      %p794 = pneg %p170
      %p795 = pneg %p167
      %p796 = pneg %p191
      %p797 = pneg %p188
      %p798 = pneg %p212
      %p799 = pneg %p209
      %p800 = pneg %p233
      %p801 = pneg %p230
      %p802 = pneg %p254
      %p803 = pneg %p251
      %p804 = pneg %p275
      %p805 = pneg %p272
      %p806 = pneg %p296
      %p807 = pneg %p293
      %p808 = pneg %p317
      %p809 = pneg %p314
      %p810 = pneg %p338
      %p811 = pneg %p335
      %p812 = pneg %p359
      %p813 = pneg %p356
      %p814 = pneg %p380
      %p815 = pneg %p377
      %p816 = pneg %p401
      %p817 = pneg %p398
      %p818 = pneg %p422
      %p819 = pneg %p419
      %p820 = pneg %p443
      %p821 = pneg %p440
      %p822 = pneg %p464
      %p823 = pneg %p461
      %p824 = pneg %p485
      %p825 = pneg %p482
      %p826 = pneg %p506
      %p827 = pneg %p503
      %p828 = pneg %p527
      %p829 = pneg %p524
      %p830 = pneg %p548
      %p831 = pneg %p545
      %p832 = pneg %p569
      %p833 = pneg %p566
      %p834 = pneg %p590
      %p835 = pneg %p587
      %p836 = pneg %p611
      %p837 = pneg %p608
      %p838 = pneg %p632
      %p839 = pneg %p629
      %p840 = pneg %p658
      %p841 = pneg %p655
      %p842 = scmp.lt.s32.totalorder %s39, 1
      %s843 = scalar_select %p842, %s39, 1
      %s844 = smul.addr %s843, 8
      %s845 = scalar_lea.vmem %s28, %s844
      %p846 = scmp.lt.s32.totalorder %s39, 1
      %s847 = scalar_select %p846, %s39, 1
      %s848 = smul.addr %s847, 8
      %s849 = scalar_lea.vmem %s0, %s848
      %p850 = scmp.lt.s32.totalorder %s39, 1
      %s851 = scalar_select %p850, %s39, 1
      %s852 = smul.addr %s851, 8
      %s853 = scalar_lea.vmem %s1, %s852
      %p854 = scmp.lt.s32.totalorder %s39, 1
      %s855 = scalar_select %p854, %s39, 1
      %s856 = smul.addr %s855, 8
      %s857 = scalar_lea.vmem %s28, %s856
      %v859 = vld [vmem:[%s849] sm:$0xff]
      %v860 = vld [vmem:[%s853] sm:$0xff]
      %v861 = vld [vmem:[%s2] sm:$0x1]
      %v862 = vld [vmem:[%s3] sm:$0x1]
      %vm863 = vcmask 261120
      %v864 = vsel %vm863, %v859, 0.0
      %865 = vadd.xlane.f32.xlu0 %v864
      %v866 = vpop.xlane.xlu0 %865
      %v867 = vrcp.pop 32.0
      %v868 = vmul.f32 %v866, %v867
      %v869 = vsub.f32 %v859, %v868
      %v870 = vmul.f32 %v869, %v869
      %v871 = vsel %vm863, %v870, 0.0
      %872 = vadd.xlane.f32.xlu0 %v871
      %v873 = vpop.xlane.xlu0 %872
      %v874 = vmul.f32 %v873, %v867
      %v875 = vadd.f32 %v874, 1e-05
      %v876 = vrsqrt.pop %v875
      %v877 = vmul.f32 %v869, %v876
      %v879 = vlaneseq
      %v880 = vshrl.u32 %v879, 7
      %v881 = vsub.s32 0, %v880
      %v882 = vrot.slane %v861, %v881
      %v884 = vmul.f32 %v877, %v882
      %v886 = vlaneseq
      %v887 = vshrl.u32 %v886, 7
      %v888 = vsub.s32 0, %v887
      %v889 = vrot.slane %v862, %v888
      %v891 = vadd.f32 %v884, %v889
      %v892 = vld [vmem:[%s7] sm:$0x1]
      %v893 = vld [vmem:[%s8] sm:$0x1]
      %v894 = vld [vmem:[%s9] sm:$0x1]
      %v895 = vld [vmem:[%s11] sm:$0x1]
      %v896 = vpack.c.bf16 %v891, %v891
      %v897 = vld [vmem:[%s4] sm:$0xf]
      %v898 = vld [vmem:[%s4 + $0x4] sm:$0xf]
      %v899 = vld [vmem:[%s4 + $0x8] sm:$0xf]
      %v900 = vld [vmem:[%s4 + $0xc] sm:$0xf]
      %v902 = vlaneseq
      %v903 = vshrl.u32 %v902, 7
      %v904 = vsub.s32 0, %v903
      %v905 = vrot.slane %v892, %v904
      %v911 = vunpack.c.l.b16 %v897
      %v912 = vunpack.c.l.b16 %v898
      %v913 = vunpack.c.l.b16 %v899
      %v914 = vunpack.c.l.b16 %v900
      %v915 = vpack.c.b16 %v912, %v911
      %v916 = vpack.c.b16 %v914, %v913
      %v920 = vsel %vm863, %v896, 0
      %922 = vmatprep.subr.bf16.mxu0 0
      %923 = vmatpush1.bf16.msra.mxu0 %v915
      %924 = vmatprep.subr.bf16.mxu0 0
      %925 = vmatpush1.bf16.msra.mxu0 %v916
      %926 = vmatprep.subr.bf16.mxu0 0
      %927 = vmatpush1.bf16.msra.mxu0 0
      %928 = vmatprep.subr.bf16.mxu0 0
      %929 = vmatpush1.bf16.msra.mxu0 0
      %930 = vmatprep.subr.bf16.mxu0 0
      %931 = vmatpush1.bf16.msra.mxu0 0
      %932 = vmatprep.subr.bf16.mxu0 0
      %933 = vmatpush1.bf16.msra.mxu0 0
      %934 = vmatprep.subr.bf16.mxu0 0
      %935 = vmatpush1.bf16.msra.mxu0 0
      %936 = vmatprep.subr.bf16.mxu0 0
      %937 = vmatpush1.bf16.msra.mxu0 0
      %938 = vmatprep.subr.bf16.mxu0 0
      %939 = vmatpush1.bf16.msra.mxu0 0
      %940 = vmatprep.subr.bf16.mxu0 0
      %941 = vmatpush1.bf16.msra.mxu0 0
      %942 = vmatprep.subr.bf16.mxu0 0
      %943 = vmatpush1.bf16.msra.mxu0 0
      %944 = vmatprep.subr.bf16.mxu0 0
      %945 = vmatpush1.bf16.msra.mxu0 0
      %946 = vmatprep.subr.bf16.mxu0 0
      %947 = vmatpush1.bf16.msra.mxu0 0
      %948 = vmatprep.subr.bf16.mxu0 0
      %949 = vmatpush1.bf16.msra.mxu0 0
      %950 = vmatprep.subr.bf16.mxu0 0
      %951 = vmatpush1.bf16.msra.mxu0 0
      %952 = vmatprep.subr.bf16.mxu0 0
      %953 = vmatpush1.bf16.msra.mxu0 0
      %954 = vmatprep.mubr.bf16.mxu0 0
      %955 = vmatmul.mubr.bf16.gmra.mrb[0].mxu0 %v920
      %v956 = vpop.f32.mrb[0].mxu0
      %v957 = vadd.f32 %v905, %v956
      %v958 = vpop.f32.mrb[0].mxu0
      %v959 = vpop.f32.mrb[0].mxu0
      %v960 = vpop.f32.mrb[0].mxu0
      %961 = vdwg.mxu0
      %v962 = vmul.f32 %v957, 0.35355338
      %963 = vst.msk [vmem:[#allocation2] sm:$0xff] %vm863, %v962
      %v964 = vld [vmem:[%s5] sm:$0xf]
      %v965 = vld [vmem:[%s5 + $0x4] sm:$0xf]
      %v966 = vld [vmem:[%s5 + $0x8] sm:$0xf]
      %v967 = vld [vmem:[%s5 + $0xc] sm:$0xf]
      %v969 = vlaneseq
      %v970 = vshrl.u32 %v969, 7
      %v971 = vsub.s32 0, %v970
      %v972 = vrot.slane %v893, %v971
      %v978 = vunpack.c.l.b16 %v964
      %v979 = vunpack.c.l.b16 %v965
      %v980 = vunpack.c.l.b16 %v966
      %v981 = vunpack.c.l.b16 %v967
      %v982 = vpack.c.b16 %v979, %v978
      %v983 = vpack.c.b16 %v981, %v980
      %986 = vmatprep.subr.bf16.mxu0 0
      %987 = vmatpush1.bf16.msra.mxu0 %v982
      %988 = vmatprep.subr.bf16.mxu0 0
      %989 = vmatpush1.bf16.msra.mxu0 %v983
      %990 = vmatprep.subr.bf16.mxu0 0
      %991 = vmatpush1.bf16.msra.mxu0 0
      %992 = vmatprep.subr.bf16.mxu0 0
      %993 = vmatpush1.bf16.msra.mxu0 0
      %994 = vmatprep.subr.bf16.mxu0 0
      %995 = vmatpush1.bf16.msra.mxu0 0
      %996 = vmatprep.subr.bf16.mxu0 0
      %997 = vmatpush1.bf16.msra.mxu0 0
      %998 = vmatprep.subr.bf16.mxu0 0
      %999 = vmatpush1.bf16.msra.mxu0 0
      %1000 = vmatprep.subr.bf16.mxu0 0
      %1001 = vmatpush1.bf16.msra.mxu0 0
      %1002 = vmatprep.subr.bf16.mxu0 0
      %1003 = vmatpush1.bf16.msra.mxu0 0
      %1004 = vmatprep.subr.bf16.mxu0 0
      %1005 = vmatpush1.bf16.msra.mxu0 0
      %1006 = vmatprep.subr.bf16.mxu0 0
      %1007 = vmatpush1.bf16.msra.mxu0 0
      %1008 = vmatprep.subr.bf16.mxu0 0
      %1009 = vmatpush1.bf16.msra.mxu0 0
      %1010 = vmatprep.subr.bf16.mxu0 0
      %1011 = vmatpush1.bf16.msra.mxu0 0
      %1012 = vmatprep.subr.bf16.mxu0 0
      %1013 = vmatpush1.bf16.msra.mxu0 0
      %1014 = vmatprep.subr.bf16.mxu0 0
      %1015 = vmatpush1.bf16.msra.mxu0 0
      %1016 = vmatprep.subr.bf16.mxu0 0
      %1017 = vmatpush1.bf16.msra.mxu0 0
      %1018 = vmatprep.mubr.bf16.mxu0 0
      %1019 = vmatmul.mubr.bf16.gmra.mrb[0].mxu0 %v920
      %v1020 = vpop.f32.mrb[0].mxu0
      %v1021 = vadd.f32 %v972, %v1020
      %v1022 = vpop.f32.mrb[0].mxu0
      %v1023 = vpop.f32.mrb[0].mxu0
      %v1024 = vpop.f32.mrb[0].mxu0
      %1025 = vdwg.mxu0
      %1026 = vst.msk [vmem:[#allocation3] sm:$0xff] %vm863, %v1021
      %v1027 = vld [vmem:[%s6] sm:$0xf]
      %v1028 = vld [vmem:[%s6 + $0x4] sm:$0xf]
      %v1029 = vld [vmem:[%s6 + $0x8] sm:$0xf]
      %v1030 = vld [vmem:[%s6 + $0xc] sm:$0xf]
      %v1032 = vlaneseq
      %v1033 = vshrl.u32 %v1032, 7
      %v1034 = vsub.s32 0, %v1033
      %v1035 = vrot.slane %v894, %v1034
      %v1041 = vunpack.c.l.b16 %v1027
      %v1042 = vunpack.c.l.b16 %v1028
      %v1043 = vunpack.c.l.b16 %v1029
      %v1044 = vunpack.c.l.b16 %v1030
      %v1045 = vpack.c.b16 %v1042, %v1041
      %v1046 = vpack.c.b16 %v1044, %v1043
      %1049 = vmatprep.subr.bf16.mxu0 0
      %1050 = vmatpush1.bf16.msra.mxu0 %v1045
      %1051 = vmatprep.subr.bf16.mxu0 0
      %1052 = vmatpush1.bf16.msra.mxu0 %v1046
      %1053 = vmatprep.subr.bf16.mxu0 0
      %1054 = vmatpush1.bf16.msra.mxu0 0
      %1055 = vmatprep.subr.bf16.mxu0 0
      %1056 = vmatpush1.bf16.msra.mxu0 0
      %1057 = vmatprep.subr.bf16.mxu0 0
      %1058 = vmatpush1.bf16.msra.mxu0 0
      %1059 = vmatprep.subr.bf16.mxu0 0
      %1060 = vmatpush1.bf16.msra.mxu0 0
      %1061 = vmatprep.subr.bf16.mxu0 0
      %1062 = vmatpush1.bf16.msra.mxu0 0
      %1063 = vmatprep.subr.bf16.mxu0 0
      %1064 = vmatpush1.bf16.msra.mxu0 0
      %1065 = vmatprep.subr.bf16.mxu0 0
      %1066 = vmatpush1.bf16.msra.mxu0 0
      %1067 = vmatprep.subr.bf16.mxu0 0
      %1068 = vmatpush1.bf16.msra.mxu0 0
      %1069 = vmatprep.subr.bf16.mxu0 0
      %1070 = vmatpush1.bf16.msra.mxu0 0
      %1071 = vmatprep.subr.bf16.mxu0 0
      %1072 = vmatpush1.bf16.msra.mxu0 0
      %1073 = vmatprep.subr.bf16.mxu0 0
      %1074 = vmatpush1.bf16.msra.mxu0 0
      %1075 = vmatprep.subr.bf16.mxu0 0
      %1076 = vmatpush1.bf16.msra.mxu0 0
      %1077 = vmatprep.subr.bf16.mxu0 0
      %1078 = vmatpush1.bf16.msra.mxu0 0
      %1079 = vmatprep.subr.bf16.mxu0 0
      %1080 = vmatpush1.bf16.msra.mxu0 0
      %1081 = vmatprep.mubr.bf16.mxu0 0
      %1082 = vmatmul.mubr.bf16.gmra.mrb[0].mxu0 %v920
      %v1083 = vpop.f32.mrb[0].mxu0
      %v1084 = vadd.f32 %v1035, %v1083
      %v1085 = vpop.f32.mrb[0].mxu0
      %v1086 = vpop.f32.mrb[0].mxu0
      %v1087 = vpop.f32.mrb[0].mxu0
      %1088 = vdwg.mxu0
      %1089 = vst.msk [vmem:[#allocation4] sm:$0xff] %vm863, %v1084
      %v1090 = vlaneseq
      %v1091 = vshrl.u32 %v1090, 7
      %v1092 = vlaneseq
      %v1093 = vand.u32 %v1092, 127
      %vm1094 = vcmp.gt.s32.totalorder %v1093, %v1091
      %v1095 = vsel %vm1094, -1e+30, 0.0
      %v1096 = vld [vmem:[#allocation2] sm:$0xff]
      %v1097 = vpack.c.bf16 %v1096, %v1096
      %v1098 = vld [vmem:[#allocation3] sm:$0xff]
      %v1099 = vpack.c.bf16 %v1098, %v1098
      %v1100 = vld [vmem:[#allocation4] sm:$0xff]
      %v1101 = vpack.c.bf16 %v1100, %v1100
      %vm1102 = vcmask 64512
      %v1104 = vsel %vm1102, %v1097, 0
      %v1107 = vsel %vm1102, %v1099, 0
      %1109 = vmatprep.subr.bf16.mxu0 0
      %1110 = vmatpush1.bf16.xpose.msra.mxu0 %v1107
      %1111 = vmatprep.subr.bf16.mxu0 0
      %1112 = vmatpush1.bf16.xpose.msra.mxu0 0
      %1113 = vmatprep.subr.bf16.mxu0 0
      %1114 = vmatpush1.bf16.xpose.msra.mxu0 0
      %1115 = vmatprep.subr.bf16.mxu0 0
      %1116 = vmatpush1.bf16.xpose.msra.mxu0 0
      %1117 = vmatprep.subr.bf16.mxu0 0
      %1118 = vmatpush1.bf16.xpose.msra.mxu0 0
      %1119 = vmatprep.subr.bf16.mxu0 0
      %1120 = vmatpush1.bf16.xpose.msra.mxu0 0
      %1121 = vmatprep.subr.bf16.mxu0 0
      %1122 = vmatpush1.bf16.xpose.msra.mxu0 0
      %1123 = vmatprep.subr.bf16.mxu0 0
      %1124 = vmatpush1.bf16.xpose.msra.mxu0 0
      %1125 = vmatprep.subr.bf16.mxu0 0
      %1126 = vmatpush1.bf16.xpose.msra.mxu0 0
      %1127 = vmatprep.subr.bf16.mxu0 0
      %1128 = vmatpush1.bf16.xpose.msra.mxu0 0
      %1129 = vmatprep.subr.bf16.mxu0 0
      %1130 = vmatpush1.bf16.xpose.msra.mxu0 0
      %1131 = vmatprep.subr.bf16.mxu0 0
      %1132 = vmatpush1.bf16.xpose.msra.mxu0 0
      %1133 = vmatprep.subr.bf16.mxu0 0
      %1134 = vmatpush1.bf16.xpose.msra.mxu0 0
      %1135 = vmatprep.subr.bf16.mxu0 0
      %1136 = vmatpush1.bf16.xpose.msra.mxu0 0
      %1137 = vmatprep.subr.bf16.mxu0 0
      %1138 = vmatpush1.bf16.xpose.msra.mxu0 0
      %1139 = vmatprep.subr.bf16.mxu0 0
      %1140 = vmatpush1.bf16.xpose.msra.mxu0 0
      %1141 = vmatprep.mubr.bf16.mxu0 0
      %1142 = vmatmul.mubr.bf16.gmra.mrb[0].mxu0 %v1104
      %v1143 = vpop.f32.mrb[0].mxu0
      %v1144 = vadd.f32 %v1095, %v1143
      %v1145 = vpop.f32.mrb[0].mxu0
      %v1146 = vpop.f32.mrb[0].mxu0
      %v1147 = vpop.f32.mrb[0].mxu0
      %1148 = vdwg.mxu0
      %v1149 = vsel %vm1102, %v1144, -inf
      %1150 = vmax.xlane.f32.xlu0 %v1149
      %v1151 = vpop.xlane.xlu0 %1150
      %v1152 = vsub.f32 %v1144, %v1151
      %v1153 = vmul.f32 %v1152, 1.442695
      %v1154 = vpow.pop %v1153
      %v1155 = vsel %vm1102, %v1154, 0.0
      %1156 = vadd.xlane.f32.xlu0 %v1155
      %v1157 = vpop.xlane.xlu0 %1156
      %v1158 = vrcp.pop %v1157
      %v1159 = vmul.f32 %v1154, %v1158
      %v1160 = vpack.c.bf16 %v1159, %v1159
      %v1162 = vsel %vm1102, %v1160, 0
      %vm1164 = vcmask 1043456
      %v1166 = vsel %vm1164, %v1101, 0
      %1168 = vmatprep.subr.bf16.mxu0 0
      %1169 = vmatpush1.bf16.msra.mxu0 %v1166
      %1170 = vmatprep.subr.bf16.mxu0 0
      %1171 = vmatpush1.bf16.msra.mxu0 0
      %1172 = vmatprep.subr.bf16.mxu0 0
      %1173 = vmatpush1.bf16.msra.mxu0 0
      %1174 = vmatprep.subr.bf16.mxu0 0
      %1175 = vmatpush1.bf16.msra.mxu0 0
      %1176 = vmatprep.subr.bf16.mxu0 0
      %1177 = vmatpush1.bf16.msra.mxu0 0
      %1178 = vmatprep.subr.bf16.mxu0 0
      %1179 = vmatpush1.bf16.msra.mxu0 0
      %1180 = vmatprep.subr.bf16.mxu0 0
      %1181 = vmatpush1.bf16.msra.mxu0 0
      %1182 = vmatprep.subr.bf16.mxu0 0
      %1183 = vmatpush1.bf16.msra.mxu0 0
      %1184 = vmatprep.subr.bf16.mxu0 0
      %1185 = vmatpush1.bf16.msra.mxu0 0
      %1186 = vmatprep.subr.bf16.mxu0 0
      %1187 = vmatpush1.bf16.msra.mxu0 0
      %1188 = vmatprep.subr.bf16.mxu0 0
      %1189 = vmatpush1.bf16.msra.mxu0 0
      %1190 = vmatprep.subr.bf16.mxu0 0
      %1191 = vmatpush1.bf16.msra.mxu0 0
      %1192 = vmatprep.subr.bf16.mxu0 0
      %1193 = vmatpush1.bf16.msra.mxu0 0
      %1194 = vmatprep.subr.bf16.mxu0 0
      %1195 = vmatpush1.bf16.msra.mxu0 0
      %1196 = vmatprep.subr.bf16.mxu0 0
      %1197 = vmatpush1.bf16.msra.mxu0 0
      %1198 = vmatprep.subr.bf16.mxu0 0
      %1199 = vmatpush1.bf16.msra.mxu0 0
      %1200 = vmatprep.mubr.bf16.mxu0 0
      %1201 = vmatmul.mubr.bf16.gmra.mrb[0].mxu0 %v1162
      %v1202 = vpop.f32.mrb[0].mxu0
      %v1203 = vadd.f32 0.0, %v1202
      %v1204 = vpop.f32.mrb[0].mxu0
      %v1205 = vpop.f32.mrb[0].mxu0
      %v1206 = vpop.f32.mrb[0].mxu0
      %1207 = vdwg.mxu0
      %1208 = vst.msk [vmem:[#allocation7] sm:$0xff] %vm1102, %v1203
      %v1209 = vld [vmem:[#allocation2] sm:$0xff]
      %v1210 = vpack.c.bf16 %v1209, %v1209
      %v1211 = vld [vmem:[#allocation3] sm:$0xff]
      %v1212 = vpack.c.bf16 %v1211, %v1211
      %v1213 = vld [vmem:[#allocation4] sm:$0xff]
      %v1214 = vpack.c.bf16 %v1213, %v1213
      %1216 = vrot.lane.b32.xlu0 %v1210, 120
      %v1217 = vpop.permute.xlu0 %1216
      %1219 = vrot.lane.b32.xlu0 %v1212, 120
      %v1220 = vpop.permute.xlu0 %1219
      %v1222 = vsel %vm1102, %v1217, 0
      %v1225 = vsel %vm1102, %v1220, 0
      %1227 = vmatprep.subr.bf16.mxu0 0
      %1228 = vmatpush1.bf16.xpose.msra.mxu0 %v1225
      %1229 = vmatprep.subr.bf16.mxu0 0
      %1230 = vmatpush1.bf16.xpose.msra.mxu0 0
      %1231 = vmatprep.subr.bf16.mxu0 0
      %1232 = vmatpush1.bf16.xpose.msra.mxu0 0
      %1233 = vmatprep.subr.bf16.mxu0 0
      %1234 = vmatpush1.bf16.xpose.msra.mxu0 0
      %1235 = vmatprep.subr.bf16.mxu0 0
      %1236 = vmatpush1.bf16.xpose.msra.mxu0 0
      %1237 = vmatprep.subr.bf16.mxu0 0
      %1238 = vmatpush1.bf16.xpose.msra.mxu0 0
      %1239 = vmatprep.subr.bf16.mxu0 0
      %1240 = vmatpush1.bf16.xpose.msra.mxu0 0
      %1241 = vmatprep.subr.bf16.mxu0 0
      %1242 = vmatpush1.bf16.xpose.msra.mxu0 0
      %1243 = vmatprep.subr.bf16.mxu0 0
      %1244 = vmatpush1.bf16.xpose.msra.mxu0 0
      %1245 = vmatprep.subr.bf16.mxu0 0
      %1246 = vmatpush1.bf16.xpose.msra.mxu0 0
      %1247 = vmatprep.subr.bf16.mxu0 0
      %1248 = vmatpush1.bf16.xpose.msra.mxu0 0
      %1249 = vmatprep.subr.bf16.mxu0 0
      %1250 = vmatpush1.bf16.xpose.msra.mxu0 0
      %1251 = vmatprep.subr.bf16.mxu0 0
      %1252 = vmatpush1.bf16.xpose.msra.mxu0 0
      %1253 = vmatprep.subr.bf16.mxu0 0
      %1254 = vmatpush1.bf16.xpose.msra.mxu0 0
      %1255 = vmatprep.subr.bf16.mxu0 0
      %1256 = vmatpush1.bf16.xpose.msra.mxu0 0
      %1257 = vmatprep.subr.bf16.mxu0 0
      %1258 = vmatpush1.bf16.xpose.msra.mxu0 0
      %1259 = vmatprep.mubr.bf16.mxu0 0
      %1260 = vmatmul.mubr.bf16.gmra.mrb[0].mxu0 %v1222
      %v1261 = vpop.f32.mrb[0].mxu0
      %v1262 = vadd.f32 %v1095, %v1261
      %v1263 = vpop.f32.mrb[0].mxu0
      %v1264 = vpop.f32.mrb[0].mxu0
      %v1265 = vpop.f32.mrb[0].mxu0
      %1266 = vdwg.mxu0
      %v1267 = vsel %vm1102, %v1262, -inf
      %1268 = vmax.xlane.f32.xlu0 %v1267
      %v1269 = vpop.xlane.xlu0 %1268
      %v1270 = vsub.f32 %v1262, %v1269
      %v1271 = vmul.f32 %v1270, 1.442695
      %v1272 = vpow.pop %v1271
      %v1273 = vsel %vm1102, %v1272, 0.0
      %1274 = vadd.xlane.f32.xlu0 %v1273
      %v1275 = vpop.xlane.xlu0 %1274
      %v1276 = vrcp.pop %v1275
      %v1277 = vmul.f32 %v1272, %v1276
      %v1278 = vpack.c.bf16 %v1277, %v1277
      %1280 = vrot.lane.b32.xlu0 %v1214, 120
      %v1281 = vpop.permute.xlu0 %1280
      %v1283 = vsel %vm1102, %v1278, 0
      %v1286 = vsel %vm1164, %v1281, 0
      %1288 = vmatprep.subr.bf16.mxu0 0
      %1289 = vmatpush1.bf16.msra.mxu0 %v1286
      %1290 = vmatprep.subr.bf16.mxu0 0
      %1291 = vmatpush1.bf16.msra.mxu0 0
      %1292 = vmatprep.subr.bf16.mxu0 0
      %1293 = vmatpush1.bf16.msra.mxu0 0
      %1294 = vmatprep.subr.bf16.mxu0 0
      %1295 = vmatpush1.bf16.msra.mxu0 0
      %1296 = vmatprep.subr.bf16.mxu0 0
      %1297 = vmatpush1.bf16.msra.mxu0 0
      %1298 = vmatprep.subr.bf16.mxu0 0
      %1299 = vmatpush1.bf16.msra.mxu0 0
      %1300 = vmatprep.subr.bf16.mxu0 0
      %1301 = vmatpush1.bf16.msra.mxu0 0
      %1302 = vmatprep.subr.bf16.mxu0 0
      %1303 = vmatpush1.bf16.msra.mxu0 0
      %1304 = vmatprep.subr.bf16.mxu0 0
      %1305 = vmatpush1.bf16.msra.mxu0 0
      %1306 = vmatprep.subr.bf16.mxu0 0
      %1307 = vmatpush1.bf16.msra.mxu0 0
      %1308 = vmatprep.subr.bf16.mxu0 0
      %1309 = vmatpush1.bf16.msra.mxu0 0
      %1310 = vmatprep.subr.bf16.mxu0 0
      %1311 = vmatpush1.bf16.msra.mxu0 0
      %1312 = vmatprep.subr.bf16.mxu0 0
      %1313 = vmatpush1.bf16.msra.mxu0 0
      %1314 = vmatprep.subr.bf16.mxu0 0
      %1315 = vmatpush1.bf16.msra.mxu0 0
      %1316 = vmatprep.subr.bf16.mxu0 0
      %1317 = vmatpush1.bf16.msra.mxu0 0
      %1318 = vmatprep.subr.bf16.mxu0 0
      %1319 = vmatpush1.bf16.msra.mxu0 0
      %1320 = vmatprep.mubr.bf16.mxu0 0
      %1321 = vmatmul.mubr.bf16.gmra.mrb[0].mxu0 %v1283
      %v1322 = vpop.f32.mrb[0].mxu0
      %v1323 = vadd.f32 0.0, %v1322
      %v1324 = vpop.f32.mrb[0].mxu0
      %v1325 = vpop.f32.mrb[0].mxu0
      %v1326 = vpop.f32.mrb[0].mxu0
      %1327 = vdwg.mxu0
      %1329 = vrot.lane.b32.xlu0 %v1323, 8
      %v1330 = vpop.permute.xlu0 %1329
      %vm1332 = vcmask 130112
      %1333 = vst.msk [vmem:[#allocation7] sm:$0xff] %vm1332, %v1330
      %v1334 = vld [vmem:[#allocation2] sm:$0xff]
      %v1335 = vpack.c.bf16 %v1334, %v1334
      %v1336 = vld [vmem:[#allocation3] sm:$0xff]
      %v1337 = vpack.c.bf16 %v1336, %v1336
      %v1338 = vld [vmem:[#allocation4] sm:$0xff]
      %v1339 = vpack.c.bf16 %v1338, %v1338
      %1341 = vrot.lane.b32.xlu0 %v1335, 112
      %v1342 = vpop.permute.xlu0 %1341
      %1344 = vrot.lane.b32.xlu0 %v1337, 112
      %v1345 = vpop.permute.xlu0 %1344
      %v1347 = vsel %vm1102, %v1342, 0
      %v1350 = vsel %vm1102, %v1345, 0
      %1352 = vmatprep.subr.bf16.mxu0 0
      %1353 = vmatpush1.bf16.xpose.msra.mxu0 %v1350
      %1354 = vmatprep.subr.bf16.mxu0 0
      %1355 = vmatpush1.bf16.xpose.msra.mxu0 0
      %1356 = vmatprep.subr.bf16.mxu0 0
      %1357 = vmatpush1.bf16.xpose.msra.mxu0 0
      %1358 = vmatprep.subr.bf16.mxu0 0
      %1359 = vmatpush1.bf16.xpose.msra.mxu0 0
      %1360 = vmatprep.subr.bf16.mxu0 0
      %1361 = vmatpush1.bf16.xpose.msra.mxu0 0
      %1362 = vmatprep.subr.bf16.mxu0 0
      %1363 = vmatpush1.bf16.xpose.msra.mxu0 0
      %1364 = vmatprep.subr.bf16.mxu0 0
      %1365 = vmatpush1.bf16.xpose.msra.mxu0 0
      %1366 = vmatprep.subr.bf16.mxu0 0
      %1367 = vmatpush1.bf16.xpose.msra.mxu0 0
      %1368 = vmatprep.subr.bf16.mxu0 0
      %1369 = vmatpush1.bf16.xpose.msra.mxu0 0
      %1370 = vmatprep.subr.bf16.mxu0 0
      %1371 = vmatpush1.bf16.xpose.msra.mxu0 0
      %1372 = vmatprep.subr.bf16.mxu0 0
      %1373 = vmatpush1.bf16.xpose.msra.mxu0 0
      %1374 = vmatprep.subr.bf16.mxu0 0
      %1375 = vmatpush1.bf16.xpose.msra.mxu0 0
      %1376 = vmatprep.subr.bf16.mxu0 0
      %1377 = vmatpush1.bf16.xpose.msra.mxu0 0
      %1378 = vmatprep.subr.bf16.mxu0 0
      %1379 = vmatpush1.bf16.xpose.msra.mxu0 0
      %1380 = vmatprep.subr.bf16.mxu0 0
      %1381 = vmatpush1.bf16.xpose.msra.mxu0 0
      %1382 = vmatprep.subr.bf16.mxu0 0
      %1383 = vmatpush1.bf16.xpose.msra.mxu0 0
      %1384 = vmatprep.mubr.bf16.mxu0 0
      %1385 = vmatmul.mubr.bf16.gmra.mrb[0].mxu0 %v1347
      %v1386 = vpop.f32.mrb[0].mxu0
      %v1387 = vadd.f32 %v1095, %v1386
      %v1388 = vpop.f32.mrb[0].mxu0
      %v1389 = vpop.f32.mrb[0].mxu0
      %v1390 = vpop.f32.mrb[0].mxu0
      %1391 = vdwg.mxu0
      %v1392 = vsel %vm1102, %v1387, -inf
      %1393 = vmax.xlane.f32.xlu0 %v1392
      %v1394 = vpop.xlane.xlu0 %1393
      %v1395 = vsub.f32 %v1387, %v1394
      %v1396 = vmul.f32 %v1395, 1.442695
      %v1397 = vpow.pop %v1396
      %v1398 = vsel %vm1102, %v1397, 0.0
      %1399 = vadd.xlane.f32.xlu0 %v1398
      %v1400 = vpop.xlane.xlu0 %1399
      %v1401 = vrcp.pop %v1400
      %v1402 = vmul.f32 %v1397, %v1401
      %v1403 = vpack.c.bf16 %v1402, %v1402
      %1405 = vrot.lane.b32.xlu0 %v1339, 112
      %v1406 = vpop.permute.xlu0 %1405
      %v1408 = vsel %vm1102, %v1403, 0
      %v1411 = vsel %vm1164, %v1406, 0
      %1413 = vmatprep.subr.bf16.mxu0 0
      %1414 = vmatpush1.bf16.msra.mxu0 %v1411
      %1415 = vmatprep.subr.bf16.mxu0 0
      %1416 = vmatpush1.bf16.msra.mxu0 0
      %1417 = vmatprep.subr.bf16.mxu0 0
      %1418 = vmatpush1.bf16.msra.mxu0 0
      %1419 = vmatprep.subr.bf16.mxu0 0
      %1420 = vmatpush1.bf16.msra.mxu0 0
      %1421 = vmatprep.subr.bf16.mxu0 0
      %1422 = vmatpush1.bf16.msra.mxu0 0
      %1423 = vmatprep.subr.bf16.mxu0 0
      %1424 = vmatpush1.bf16.msra.mxu0 0
      %1425 = vmatprep.subr.bf16.mxu0 0
      %1426 = vmatpush1.bf16.msra.mxu0 0
      %1427 = vmatprep.subr.bf16.mxu0 0
      %1428 = vmatpush1.bf16.msra.mxu0 0
      %1429 = vmatprep.subr.bf16.mxu0 0
      %1430 = vmatpush1.bf16.msra.mxu0 0
      %1431 = vmatprep.subr.bf16.mxu0 0
      %1432 = vmatpush1.bf16.msra.mxu0 0
      %1433 = vmatprep.subr.bf16.mxu0 0
      %1434 = vmatpush1.bf16.msra.mxu0 0
      %1435 = vmatprep.subr.bf16.mxu0 0
      %1436 = vmatpush1.bf16.msra.mxu0 0
      %1437 = vmatprep.subr.bf16.mxu0 0
      %1438 = vmatpush1.bf16.msra.mxu0 0
      %1439 = vmatprep.subr.bf16.mxu0 0
      %1440 = vmatpush1.bf16.msra.mxu0 0
      %1441 = vmatprep.subr.bf16.mxu0 0
      %1442 = vmatpush1.bf16.msra.mxu0 0
      %1443 = vmatprep.subr.bf16.mxu0 0
      %1444 = vmatpush1.bf16.msra.mxu0 0
      %1445 = vmatprep.mubr.bf16.mxu0 0
      %1446 = vmatmul.mubr.bf16.gmra.mrb[0].mxu0 %v1408
      %v1447 = vpop.f32.mrb[0].mxu0
      %v1448 = vadd.f32 0.0, %v1447
      %v1449 = vpop.f32.mrb[0].mxu0
      %v1450 = vpop.f32.mrb[0].mxu0
      %v1451 = vpop.f32.mrb[0].mxu0
      %1452 = vdwg.mxu0
      %1454 = vrot.lane.b32.xlu0 %v1448, 16
      %v1455 = vpop.permute.xlu0 %1454
      %vm1457 = vcmask 195712
      %1458 = vst.msk [vmem:[#allocation7] sm:$0xff] %vm1457, %v1455
      %v1459 = vld [vmem:[#allocation2] sm:$0xff]
      %v1460 = vpack.c.bf16 %v1459, %v1459
      %v1461 = vld [vmem:[#allocation3] sm:$0xff]
      %v1462 = vpack.c.bf16 %v1461, %v1461
      %v1463 = vld [vmem:[#allocation4] sm:$0xff]
      %v1464 = vpack.c.bf16 %v1463, %v1463
      %1466 = vrot.lane.b32.xlu0 %v1460, 104
      %v1467 = vpop.permute.xlu0 %1466
      %1469 = vrot.lane.b32.xlu0 %v1462, 104
      %v1470 = vpop.permute.xlu0 %1469
      %v1472 = vsel %vm1102, %v1467, 0
      %v1475 = vsel %vm1102, %v1470, 0
      %1477 = vmatprep.subr.bf16.mxu0 0
      %1478 = vmatpush1.bf16.xpose.msra.mxu0 %v1475
      %1479 = vmatprep.subr.bf16.mxu0 0
      %1480 = vmatpush1.bf16.xpose.msra.mxu0 0
      %1481 = vmatprep.subr.bf16.mxu0 0
      %1482 = vmatpush1.bf16.xpose.msra.mxu0 0
      %1483 = vmatprep.subr.bf16.mxu0 0
      %1484 = vmatpush1.bf16.xpose.msra.mxu0 0
      %1485 = vmatprep.subr.bf16.mxu0 0
      %1486 = vmatpush1.bf16.xpose.msra.mxu0 0
      %1487 = vmatprep.subr.bf16.mxu0 0
      %1488 = vmatpush1.bf16.xpose.msra.mxu0 0
      %1489 = vmatprep.subr.bf16.mxu0 0
      %1490 = vmatpush1.bf16.xpose.msra.mxu0 0
      %1491 = vmatprep.subr.bf16.mxu0 0
      %1492 = vmatpush1.bf16.xpose.msra.mxu0 0
      %1493 = vmatprep.subr.bf16.mxu0 0
      %1494 = vmatpush1.bf16.xpose.msra.mxu0 0
      %1495 = vmatprep.subr.bf16.mxu0 0
      %1496 = vmatpush1.bf16.xpose.msra.mxu0 0
      %1497 = vmatprep.subr.bf16.mxu0 0
      %1498 = vmatpush1.bf16.xpose.msra.mxu0 0
      %1499 = vmatprep.subr.bf16.mxu0 0
      %1500 = vmatpush1.bf16.xpose.msra.mxu0 0
      %1501 = vmatprep.subr.bf16.mxu0 0
      %1502 = vmatpush1.bf16.xpose.msra.mxu0 0
      %1503 = vmatprep.subr.bf16.mxu0 0
      %1504 = vmatpush1.bf16.xpose.msra.mxu0 0
      %1505 = vmatprep.subr.bf16.mxu0 0
      %1506 = vmatpush1.bf16.xpose.msra.mxu0 0
      %1507 = vmatprep.subr.bf16.mxu0 0
      %1508 = vmatpush1.bf16.xpose.msra.mxu0 0
      %1509 = vmatprep.mubr.bf16.mxu0 0
      %1510 = vmatmul.mubr.bf16.gmra.mrb[0].mxu0 %v1472
      %v1511 = vpop.f32.mrb[0].mxu0
      %v1512 = vadd.f32 %v1095, %v1511
      %v1513 = vpop.f32.mrb[0].mxu0
      %v1514 = vpop.f32.mrb[0].mxu0
      %v1515 = vpop.f32.mrb[0].mxu0
      %1516 = vdwg.mxu0
      %v1517 = vsel %vm1102, %v1512, -inf
      %1518 = vmax.xlane.f32.xlu0 %v1517
      %v1519 = vpop.xlane.xlu0 %1518
      %v1520 = vsub.f32 %v1512, %v1519
      %v1521 = vmul.f32 %v1520, 1.442695
      %v1522 = vpow.pop %v1521
      %v1523 = vsel %vm1102, %v1522, 0.0
      %1524 = vadd.xlane.f32.xlu0 %v1523
      %v1525 = vpop.xlane.xlu0 %1524
      %v1526 = vrcp.pop %v1525
      %v1527 = vmul.f32 %v1522, %v1526
      %v1528 = vpack.c.bf16 %v1527, %v1527
      %1530 = vrot.lane.b32.xlu0 %v1464, 104
      %v1531 = vpop.permute.xlu0 %1530
      %v1533 = vsel %vm1102, %v1528, 0
      %v1536 = vsel %vm1164, %v1531, 0
      %1538 = vmatprep.subr.bf16.mxu0 0
      %1539 = vmatpush1.bf16.msra.mxu0 %v1536
      %1540 = vmatprep.subr.bf16.mxu0 0
      %1541 = vmatpush1.bf16.msra.mxu0 0
      %1542 = vmatprep.subr.bf16.mxu0 0
      %1543 = vmatpush1.bf16.msra.mxu0 0
      %1544 = vmatprep.subr.bf16.mxu0 0
      %1545 = vmatpush1.bf16.msra.mxu0 0
      %1546 = vmatprep.subr.bf16.mxu0 0
      %1547 = vmatpush1.bf16.msra.mxu0 0
      %1548 = vmatprep.subr.bf16.mxu0 0
      %1549 = vmatpush1.bf16.msra.mxu0 0
      %1550 = vmatprep.subr.bf16.mxu0 0
      %1551 = vmatpush1.bf16.msra.mxu0 0
      %1552 = vmatprep.subr.bf16.mxu0 0
      %1553 = vmatpush1.bf16.msra.mxu0 0
      %1554 = vmatprep.subr.bf16.mxu0 0
      %1555 = vmatpush1.bf16.msra.mxu0 0
      %1556 = vmatprep.subr.bf16.mxu0 0
      %1557 = vmatpush1.bf16.msra.mxu0 0
      %1558 = vmatprep.subr.bf16.mxu0 0
      %1559 = vmatpush1.bf16.msra.mxu0 0
      %1560 = vmatprep.subr.bf16.mxu0 0
      %1561 = vmatpush1.bf16.msra.mxu0 0
      %1562 = vmatprep.subr.bf16.mxu0 0
      %1563 = vmatpush1.bf16.msra.mxu0 0
      %1564 = vmatprep.subr.bf16.mxu0 0
      %1565 = vmatpush1.bf16.msra.mxu0 0
      %1566 = vmatprep.subr.bf16.mxu0 0
      %1567 = vmatpush1.bf16.msra.mxu0 0
      %1568 = vmatprep.subr.bf16.mxu0 0
      %1569 = vmatpush1.bf16.msra.mxu0 0
      %1570 = vmatprep.mubr.bf16.mxu0 0
      %1571 = vmatmul.mubr.bf16.gmra.mrb[0].mxu0 %v1533
      %v1572 = vpop.f32.mrb[0].mxu0
      %v1573 = vadd.f32 0.0, %v1572
      %v1574 = vpop.f32.mrb[0].mxu0
      %v1575 = vpop.f32.mrb[0].mxu0
      %v1576 = vpop.f32.mrb[0].mxu0
      %1577 = vdwg.mxu0
      %1579 = vrot.lane.b32.xlu0 %v1573, 24
      %v1580 = vpop.permute.xlu0 %1579
      %vm1582 = vcmask 261312
      %1583 = vst.msk [vmem:[#allocation7] sm:$0xff] %vm1582, %v1580
      %v1584 = vld [vmem:[#allocation7] sm:$0xff]
      %v1585 = vpack.c.bf16 %v1584, %v1584
      %v1586 = vld [vmem:[%s10] sm:$0xf]
      %v1587 = vld [vmem:[%s10 + $0x4] sm:$0xf]
      %v1588 = vld [vmem:[%s10 + $0x8] sm:$0xf]
      %v1589 = vld [vmem:[%s10 + $0xc] sm:$0xf]
      %v1591 = vlaneseq
      %v1592 = vshrl.u32 %v1591, 7
      %v1593 = vsub.s32 0, %v1592
      %v1594 = vrot.slane %v895, %v1593
      %v1600 = vunpack.c.l.b16 %v1586
      %v1601 = vunpack.c.l.b16 %v1587
      %v1602 = vunpack.c.l.b16 %v1588
      %v1603 = vunpack.c.l.b16 %v1589
      %v1604 = vpack.c.b16 %v1601, %v1600
      %v1605 = vpack.c.b16 %v1603, %v1602
      %v1609 = vsel %vm863, %v1585, 0
      %1611 = vmatprep.subr.bf16.mxu0 0
      %1612 = vmatpush1.bf16.msra.mxu0 %v1604
      %1613 = vmatprep.subr.bf16.mxu0 0
      %1614 = vmatpush1.bf16.msra.mxu0 %v1605
      %1615 = vmatprep.subr.bf16.mxu0 0
      %1616 = vmatpush1.bf16.msra.mxu0 0
      %1617 = vmatprep.subr.bf16.mxu0 0
      %1618 = vmatpush1.bf16.msra.mxu0 0
      %1619 = vmatprep.subr.bf16.mxu0 0
      %1620 = vmatpush1.bf16.msra.mxu0 0
      %1621 = vmatprep.subr.bf16.mxu0 0
      %1622 = vmatpush1.bf16.msra.mxu0 0
      %1623 = vmatprep.subr.bf16.mxu0 0
      %1624 = vmatpush1.bf16.msra.mxu0 0
      %1625 = vmatprep.subr.bf16.mxu0 0
      %1626 = vmatpush1.bf16.msra.mxu0 0
      %1627 = vmatprep.subr.bf16.mxu0 0
      %1628 = vmatpush1.bf16.msra.mxu0 0
      %1629 = vmatprep.subr.bf16.mxu0 0
      %1630 = vmatpush1.bf16.msra.mxu0 0
      %1631 = vmatprep.subr.bf16.mxu0 0
      %1632 = vmatpush1.bf16.msra.mxu0 0
      %1633 = vmatprep.subr.bf16.mxu0 0
      %1634 = vmatpush1.bf16.msra.mxu0 0
      %1635 = vmatprep.subr.bf16.mxu0 0
      %1636 = vmatpush1.bf16.msra.mxu0 0
      %1637 = vmatprep.subr.bf16.mxu0 0
      %1638 = vmatpush1.bf16.msra.mxu0 0
      %1639 = vmatprep.subr.bf16.mxu0 0
      %1640 = vmatpush1.bf16.msra.mxu0 0
      %1641 = vmatprep.subr.bf16.mxu0 0
      %1642 = vmatpush1.bf16.msra.mxu0 0
      %1643 = vmatprep.mubr.bf16.mxu0 0
      %1644 = vmatmul.mubr.bf16.gmra.mrb[0].mxu0 %v1609
      %v1645 = vpop.f32.mrb[0].mxu0
      %v1646 = vadd.f32 %v1594, %v1645
      %v1647 = vpop.f32.mrb[0].mxu0
      %v1648 = vpop.f32.mrb[0].mxu0
      %v1649 = vpop.f32.mrb[0].mxu0
      %1650 = vdwg.mxu0
      %v1651 = vadd.f32 %v859, %v1646
      %v1652 = vld [vmem:[%s12] sm:$0x1]
      %v1653 = vld [vmem:[%s13] sm:$0x1]
      %v1654 = vsel %vm863, %v1651, 0.0
      %1655 = vadd.xlane.f32.xlu0 %v1654
      %v1656 = vpop.xlane.xlu0 %1655
      %v1657 = vmul.f32 %v1656, %v867
      %v1658 = vsub.f32 %v1651, %v1657
      %v1659 = vmul.f32 %v1658, %v1658
      %v1660 = vsel %vm863, %v1659, 0.0
      %1661 = vadd.xlane.f32.xlu0 %v1660
      %v1662 = vpop.xlane.xlu0 %1661
      %v1663 = vmul.f32 %v1662, %v867
      %v1664 = vadd.f32 %v1663, 1e-05
      %v1665 = vrsqrt.pop %v1664
      %v1666 = vmul.f32 %v1658, %v1665
      %v1668 = vlaneseq
      %v1669 = vshrl.u32 %v1668, 7
      %v1670 = vsub.s32 0, %v1669
      %v1671 = vrot.slane %v1652, %v1670
      %v1673 = vmul.f32 %v1666, %v1671
      %v1675 = vlaneseq
      %v1676 = vshrl.u32 %v1675, 7
      %v1677 = vsub.s32 0, %v1676
      %v1678 = vrot.slane %v1653, %v1677
      %v1680 = vadd.f32 %v1673, %v1678
      %v1681 = vld [vmem:[%s17] sm:$0x1]
      %v1682 = vld [vmem:[%s18] sm:$0x1]
      %v1683 = vld [vmem:[%s19] sm:$0x1]
      %v1684 = vld [vmem:[%s21] sm:$0x1]
      %v1685 = vpack.c.bf16 %v1680, %v1680
      %v1686 = vpack.c.bf16 %v860, %v860
      %v1687 = vld [vmem:[%s14] sm:$0xf]
      %v1688 = vld [vmem:[%s14 + $0x4] sm:$0xf]
      %v1689 = vld [vmem:[%s14 + $0x8] sm:$0xf]
      %v1690 = vld [vmem:[%s14 + $0xc] sm:$0xf]
      %v1692 = vlaneseq
      %v1693 = vshrl.u32 %v1692, 7
      %v1694 = vsub.s32 0, %v1693
      %v1695 = vrot.slane %v1681, %v1694
      %v1701 = vunpack.c.l.b16 %v1687
      %v1702 = vunpack.c.l.b16 %v1688
      %v1703 = vunpack.c.l.b16 %v1689
      %v1704 = vunpack.c.l.b16 %v1690
      %v1705 = vpack.c.b16 %v1702, %v1701
      %v1706 = vpack.c.b16 %v1704, %v1703
      %v1710 = vsel %vm863, %v1685, 0
      %1712 = vmatprep.subr.bf16.mxu0 0
      %1713 = vmatpush1.bf16.msra.mxu0 %v1705
      %1714 = vmatprep.subr.bf16.mxu0 0
      %1715 = vmatpush1.bf16.msra.mxu0 %v1706
      %1716 = vmatprep.subr.bf16.mxu0 0
      %1717 = vmatpush1.bf16.msra.mxu0 0
      %1718 = vmatprep.subr.bf16.mxu0 0
      %1719 = vmatpush1.bf16.msra.mxu0 0
      %1720 = vmatprep.subr.bf16.mxu0 0
      %1721 = vmatpush1.bf16.msra.mxu0 0
      %1722 = vmatprep.subr.bf16.mxu0 0
      %1723 = vmatpush1.bf16.msra.mxu0 0
      %1724 = vmatprep.subr.bf16.mxu0 0
      %1725 = vmatpush1.bf16.msra.mxu0 0
      %1726 = vmatprep.subr.bf16.mxu0 0
      %1727 = vmatpush1.bf16.msra.mxu0 0
      %1728 = vmatprep.subr.bf16.mxu0 0
      %1729 = vmatpush1.bf16.msra.mxu0 0
      %1730 = vmatprep.subr.bf16.mxu0 0
      %1731 = vmatpush1.bf16.msra.mxu0 0
      %1732 = vmatprep.subr.bf16.mxu0 0
      %1733 = vmatpush1.bf16.msra.mxu0 0
      %1734 = vmatprep.subr.bf16.mxu0 0
      %1735 = vmatpush1.bf16.msra.mxu0 0
      %1736 = vmatprep.subr.bf16.mxu0 0
      %1737 = vmatpush1.bf16.msra.mxu0 0
      %1738 = vmatprep.subr.bf16.mxu0 0
      %1739 = vmatpush1.bf16.msra.mxu0 0
      %1740 = vmatprep.subr.bf16.mxu0 0
      %1741 = vmatpush1.bf16.msra.mxu0 0
      %1742 = vmatprep.subr.bf16.mxu0 0
      %1743 = vmatpush1.bf16.msra.mxu0 0
      %1744 = vmatprep.mubr.bf16.mxu0 0
      %1745 = vmatmul.mubr.bf16.gmra.mrb[0].mxu0 %v1710
      %v1746 = vpop.f32.mrb[0].mxu0
      %v1747 = vadd.f32 %v1695, %v1746
      %v1748 = vpop.f32.mrb[0].mxu0
      %v1749 = vpop.f32.mrb[0].mxu0
      %v1750 = vpop.f32.mrb[0].mxu0
      %1751 = vdwg.mxu0
      %v1752 = vmul.f32 %v1747, 0.35355338
      %1753 = vst.msk [vmem:[#allocation2] sm:$0xff] %vm863, %v1752
      %v1754 = vld [vmem:[%s15] sm:$0xf]
      %v1755 = vld [vmem:[%s15 + $0x4] sm:$0xf]
      %v1756 = vld [vmem:[%s15 + $0x8] sm:$0xf]
      %v1757 = vld [vmem:[%s15 + $0xc] sm:$0xf]
      %v1759 = vlaneseq
      %v1760 = vshrl.u32 %v1759, 7
      %v1761 = vsub.s32 0, %v1760
      %v1762 = vrot.slane %v1682, %v1761
      %v1768 = vunpack.c.l.b16 %v1754
      %v1769 = vunpack.c.l.b16 %v1755
      %v1770 = vunpack.c.l.b16 %v1756
      %v1771 = vunpack.c.l.b16 %v1757
      %v1772 = vpack.c.b16 %v1769, %v1768
      %v1773 = vpack.c.b16 %v1771, %v1770
      %v1777 = vsel %vm863, %v1686, 0
      %1779 = vmatprep.subr.bf16.mxu0 0
      %1780 = vmatpush1.bf16.msra.mxu0 %v1772
      %1781 = vmatprep.subr.bf16.mxu0 0
      %1782 = vmatpush1.bf16.msra.mxu0 %v1773
      %1783 = vmatprep.subr.bf16.mxu0 0
      %1784 = vmatpush1.bf16.msra.mxu0 0
      %1785 = vmatprep.subr.bf16.mxu0 0
      %1786 = vmatpush1.bf16.msra.mxu0 0
      %1787 = vmatprep.subr.bf16.mxu0 0
      %1788 = vmatpush1.bf16.msra.mxu0 0
      %1789 = vmatprep.subr.bf16.mxu0 0
      %1790 = vmatpush1.bf16.msra.mxu0 0
      %1791 = vmatprep.subr.bf16.mxu0 0
      %1792 = vmatpush1.bf16.msra.mxu0 0
      %1793 = vmatprep.subr.bf16.mxu0 0
      %1794 = vmatpush1.bf16.msra.mxu0 0
      %1795 = vmatprep.subr.bf16.mxu0 0
      %1796 = vmatpush1.bf16.msra.mxu0 0
      %1797 = vmatprep.subr.bf16.mxu0 0
      %1798 = vmatpush1.bf16.msra.mxu0 0
      %1799 = vmatprep.subr.bf16.mxu0 0
      %1800 = vmatpush1.bf16.msra.mxu0 0
      %1801 = vmatprep.subr.bf16.mxu0 0
      %1802 = vmatpush1.bf16.msra.mxu0 0
      %1803 = vmatprep.subr.bf16.mxu0 0
      %1804 = vmatpush1.bf16.msra.mxu0 0
      %1805 = vmatprep.subr.bf16.mxu0 0
      %1806 = vmatpush1.bf16.msra.mxu0 0
      %1807 = vmatprep.subr.bf16.mxu0 0
      %1808 = vmatpush1.bf16.msra.mxu0 0
      %1809 = vmatprep.subr.bf16.mxu0 0
      %1810 = vmatpush1.bf16.msra.mxu0 0
      %1811 = vmatprep.mubr.bf16.mxu0 0
      %1812 = vmatmul.mubr.bf16.gmra.mrb[0].mxu0 %v1777
      %v1813 = vpop.f32.mrb[0].mxu0
      %v1814 = vadd.f32 %v1762, %v1813
      %v1815 = vpop.f32.mrb[0].mxu0
      %v1816 = vpop.f32.mrb[0].mxu0
      %v1817 = vpop.f32.mrb[0].mxu0
      %1818 = vdwg.mxu0
      %1819 = vst.msk [vmem:[#allocation5] sm:$0xff] %vm863, %v1814
      %v1820 = vld [vmem:[%s16] sm:$0xf]
      %v1821 = vld [vmem:[%s16 + $0x4] sm:$0xf]
      %v1822 = vld [vmem:[%s16 + $0x8] sm:$0xf]
      %v1823 = vld [vmem:[%s16 + $0xc] sm:$0xf]
      %v1825 = vlaneseq
      %v1826 = vshrl.u32 %v1825, 7
      %v1827 = vsub.s32 0, %v1826
      %v1828 = vrot.slane %v1683, %v1827
      %v1834 = vunpack.c.l.b16 %v1820
      %v1835 = vunpack.c.l.b16 %v1821
      %v1836 = vunpack.c.l.b16 %v1822
      %v1837 = vunpack.c.l.b16 %v1823
      %v1838 = vpack.c.b16 %v1835, %v1834
      %v1839 = vpack.c.b16 %v1837, %v1836
      %1842 = vmatprep.subr.bf16.mxu0 0
      %1843 = vmatpush1.bf16.msra.mxu0 %v1838
      %1844 = vmatprep.subr.bf16.mxu0 0
      %1845 = vmatpush1.bf16.msra.mxu0 %v1839
      %1846 = vmatprep.subr.bf16.mxu0 0
      %1847 = vmatpush1.bf16.msra.mxu0 0
      %1848 = vmatprep.subr.bf16.mxu0 0
      %1849 = vmatpush1.bf16.msra.mxu0 0
      %1850 = vmatprep.subr.bf16.mxu0 0
      %1851 = vmatpush1.bf16.msra.mxu0 0
      %1852 = vmatprep.subr.bf16.mxu0 0
      %1853 = vmatpush1.bf16.msra.mxu0 0
      %1854 = vmatprep.subr.bf16.mxu0 0
      %1855 = vmatpush1.bf16.msra.mxu0 0
      %1856 = vmatprep.subr.bf16.mxu0 0
      %1857 = vmatpush1.bf16.msra.mxu0 0
      %1858 = vmatprep.subr.bf16.mxu0 0
      %1859 = vmatpush1.bf16.msra.mxu0 0
      %1860 = vmatprep.subr.bf16.mxu0 0
      %1861 = vmatpush1.bf16.msra.mxu0 0
      %1862 = vmatprep.subr.bf16.mxu0 0
      %1863 = vmatpush1.bf16.msra.mxu0 0
      %1864 = vmatprep.subr.bf16.mxu0 0
      %1865 = vmatpush1.bf16.msra.mxu0 0
      %1866 = vmatprep.subr.bf16.mxu0 0
      %1867 = vmatpush1.bf16.msra.mxu0 0
      %1868 = vmatprep.subr.bf16.mxu0 0
      %1869 = vmatpush1.bf16.msra.mxu0 0
      %1870 = vmatprep.subr.bf16.mxu0 0
      %1871 = vmatpush1.bf16.msra.mxu0 0
      %1872 = vmatprep.subr.bf16.mxu0 0
      %1873 = vmatpush1.bf16.msra.mxu0 0
      %1874 = vmatprep.mubr.bf16.mxu0 0
      %1875 = vmatmul.mubr.bf16.gmra.mrb[0].mxu0 %v1777
      %v1876 = vpop.f32.mrb[0].mxu0
      %v1877 = vadd.f32 %v1828, %v1876
      %v1878 = vpop.f32.mrb[0].mxu0
      %v1879 = vpop.f32.mrb[0].mxu0
      %v1880 = vpop.f32.mrb[0].mxu0
      %1881 = vdwg.mxu0
      %1882 = vst.msk [vmem:[#allocation6] sm:$0xff] %vm863, %v1877
      %v1883 = vld [vmem:[#allocation2] sm:$0xff]
      %v1884 = vpack.c.bf16 %v1883, %v1883
      %v1885 = vld [vmem:[#allocation5] sm:$0xff]
      %v1886 = vpack.c.bf16 %v1885, %v1885
      %v1887 = vld [vmem:[#allocation6] sm:$0xff]
      %v1888 = vpack.c.bf16 %v1887, %v1887
      %v1890 = vsel %vm1102, %v1884, 0
      %v1893 = vsel %vm1102, %v1886, 0
      %1895 = vmatprep.subr.bf16.mxu0 0
      %1896 = vmatpush1.bf16.xpose.msra.mxu0 %v1893
      %1897 = vmatprep.subr.bf16.mxu0 0
      %1898 = vmatpush1.bf16.xpose.msra.mxu0 0
      %1899 = vmatprep.subr.bf16.mxu0 0
      %1900 = vmatpush1.bf16.xpose.msra.mxu0 0
      %1901 = vmatprep.subr.bf16.mxu0 0
      %1902 = vmatpush1.bf16.xpose.msra.mxu0 0
      %1903 = vmatprep.subr.bf16.mxu0 0
      %1904 = vmatpush1.bf16.xpose.msra.mxu0 0
      %1905 = vmatprep.subr.bf16.mxu0 0
      %1906 = vmatpush1.bf16.xpose.msra.mxu0 0
      %1907 = vmatprep.subr.bf16.mxu0 0
      %1908 = vmatpush1.bf16.xpose.msra.mxu0 0
      %1909 = vmatprep.subr.bf16.mxu0 0
      %1910 = vmatpush1.bf16.xpose.msra.mxu0 0
      %1911 = vmatprep.subr.bf16.mxu0 0
      %1912 = vmatpush1.bf16.xpose.msra.mxu0 0
      %1913 = vmatprep.subr.bf16.mxu0 0
      %1914 = vmatpush1.bf16.xpose.msra.mxu0 0
      %1915 = vmatprep.subr.bf16.mxu0 0
      %1916 = vmatpush1.bf16.xpose.msra.mxu0 0
      %1917 = vmatprep.subr.bf16.mxu0 0
      %1918 = vmatpush1.bf16.xpose.msra.mxu0 0
      %1919 = vmatprep.subr.bf16.mxu0 0
      %1920 = vmatpush1.bf16.xpose.msra.mxu0 0
      %1921 = vmatprep.subr.bf16.mxu0 0
      %1922 = vmatpush1.bf16.xpose.msra.mxu0 0
      %1923 = vmatprep.subr.bf16.mxu0 0
      %1924 = vmatpush1.bf16.xpose.msra.mxu0 0
      %1925 = vmatprep.subr.bf16.mxu0 0
      %1926 = vmatpush1.bf16.xpose.msra.mxu0 0
      %1927 = vmatprep.mubr.bf16.mxu0 0
      %1928 = vmatmul.mubr.bf16.gmra.mrb[0].mxu0 %v1890
      %v1929 = vpop.f32.mrb[0].mxu0
      %v1930 = vadd.f32 0.0, %v1929
      %v1931 = vpop.f32.mrb[0].mxu0
      %v1932 = vpop.f32.mrb[0].mxu0
      %v1933 = vpop.f32.mrb[0].mxu0
      %1934 = vdwg.mxu0
      %v1935 = vsel %vm1102, %v1930, -inf
      %1936 = vmax.xlane.f32.xlu0 %v1935
      %v1937 = vpop.xlane.xlu0 %1936
      %v1938 = vsub.f32 %v1930, %v1937
      %v1939 = vmul.f32 %v1938, 1.442695
      %v1940 = vpow.pop %v1939
      %v1941 = vsel %vm1102, %v1940, 0.0
      %1942 = vadd.xlane.f32.xlu0 %v1941
      %v1943 = vpop.xlane.xlu0 %1942
      %v1944 = vrcp.pop %v1943
      %v1945 = vmul.f32 %v1940, %v1944
      %v1946 = vpack.c.bf16 %v1945, %v1945
      %v1948 = vsel %vm1102, %v1946, 0
      %v1951 = vsel %vm1164, %v1888, 0
      %1953 = vmatprep.subr.bf16.mxu0 0
      %1954 = vmatpush1.bf16.msra.mxu0 %v1951
      %1955 = vmatprep.subr.bf16.mxu0 0
      %1956 = vmatpush1.bf16.msra.mxu0 0
      %1957 = vmatprep.subr.bf16.mxu0 0
      %1958 = vmatpush1.bf16.msra.mxu0 0
      %1959 = vmatprep.subr.bf16.mxu0 0
      %1960 = vmatpush1.bf16.msra.mxu0 0
      %1961 = vmatprep.subr.bf16.mxu0 0
      %1962 = vmatpush1.bf16.msra.mxu0 0
      %1963 = vmatprep.subr.bf16.mxu0 0
      %1964 = vmatpush1.bf16.msra.mxu0 0
      %1965 = vmatprep.subr.bf16.mxu0 0
      %1966 = vmatpush1.bf16.msra.mxu0 0
      %1967 = vmatprep.subr.bf16.mxu0 0
      %1968 = vmatpush1.bf16.msra.mxu0 0
      %1969 = vmatprep.subr.bf16.mxu0 0
      %1970 = vmatpush1.bf16.msra.mxu0 0
      %1971 = vmatprep.subr.bf16.mxu0 0
      %1972 = vmatpush1.bf16.msra.mxu0 0
      %1973 = vmatprep.subr.bf16.mxu0 0
      %1974 = vmatpush1.bf16.msra.mxu0 0
      %1975 = vmatprep.subr.bf16.mxu0 0
      %1976 = vmatpush1.bf16.msra.mxu0 0
      %1977 = vmatprep.subr.bf16.mxu0 0
      %1978 = vmatpush1.bf16.msra.mxu0 0
      %1979 = vmatprep.subr.bf16.mxu0 0
      %1980 = vmatpush1.bf16.msra.mxu0 0
      %1981 = vmatprep.subr.bf16.mxu0 0
      %1982 = vmatpush1.bf16.msra.mxu0 0
      %1983 = vmatprep.subr.bf16.mxu0 0
      %1984 = vmatpush1.bf16.msra.mxu0 0
      %1985 = vmatprep.mubr.bf16.mxu0 0
      %1986 = vmatmul.mubr.bf16.gmra.mrb[0].mxu0 %v1948
      %v1987 = vpop.f32.mrb[0].mxu0
      %v1988 = vadd.f32 0.0, %v1987
      %v1989 = vpop.f32.mrb[0].mxu0
      %v1990 = vpop.f32.mrb[0].mxu0
      %v1991 = vpop.f32.mrb[0].mxu0
      %1992 = vdwg.mxu0
      %1993 = vst.msk [vmem:[#allocation7] sm:$0xff] %vm1102, %v1988
      %v1994 = vld [vmem:[#allocation2] sm:$0xff]
      %v1995 = vpack.c.bf16 %v1994, %v1994
      %v1996 = vld [vmem:[#allocation5] sm:$0xff]
      %v1997 = vpack.c.bf16 %v1996, %v1996
      %v1998 = vld [vmem:[#allocation6] sm:$0xff]
      %v1999 = vpack.c.bf16 %v1998, %v1998
      %2001 = vrot.lane.b32.xlu0 %v1995, 120
      %v2002 = vpop.permute.xlu0 %2001
      %2004 = vrot.lane.b32.xlu0 %v1997, 120
      %v2005 = vpop.permute.xlu0 %2004
      %v2007 = vsel %vm1102, %v2002, 0
      %v2010 = vsel %vm1102, %v2005, 0
      %2012 = vmatprep.subr.bf16.mxu0 0
      %2013 = vmatpush1.bf16.xpose.msra.mxu0 %v2010
      %2014 = vmatprep.subr.bf16.mxu0 0
      %2015 = vmatpush1.bf16.xpose.msra.mxu0 0
      %2016 = vmatprep.subr.bf16.mxu0 0
      %2017 = vmatpush1.bf16.xpose.msra.mxu0 0
      %2018 = vmatprep.subr.bf16.mxu0 0
      %2019 = vmatpush1.bf16.xpose.msra.mxu0 0
      %2020 = vmatprep.subr.bf16.mxu0 0
      %2021 = vmatpush1.bf16.xpose.msra.mxu0 0
      %2022 = vmatprep.subr.bf16.mxu0 0
      %2023 = vmatpush1.bf16.xpose.msra.mxu0 0
      %2024 = vmatprep.subr.bf16.mxu0 0
      %2025 = vmatpush1.bf16.xpose.msra.mxu0 0
      %2026 = vmatprep.subr.bf16.mxu0 0
      %2027 = vmatpush1.bf16.xpose.msra.mxu0 0
      %2028 = vmatprep.subr.bf16.mxu0 0
      %2029 = vmatpush1.bf16.xpose.msra.mxu0 0
      %2030 = vmatprep.subr.bf16.mxu0 0
      %2031 = vmatpush1.bf16.xpose.msra.mxu0 0
      %2032 = vmatprep.subr.bf16.mxu0 0
      %2033 = vmatpush1.bf16.xpose.msra.mxu0 0
      %2034 = vmatprep.subr.bf16.mxu0 0
      %2035 = vmatpush1.bf16.xpose.msra.mxu0 0
      %2036 = vmatprep.subr.bf16.mxu0 0
      %2037 = vmatpush1.bf16.xpose.msra.mxu0 0
      %2038 = vmatprep.subr.bf16.mxu0 0
      %2039 = vmatpush1.bf16.xpose.msra.mxu0 0
      %2040 = vmatprep.subr.bf16.mxu0 0
      %2041 = vmatpush1.bf16.xpose.msra.mxu0 0
      %2042 = vmatprep.subr.bf16.mxu0 0
      %2043 = vmatpush1.bf16.xpose.msra.mxu0 0
      %2044 = vmatprep.mubr.bf16.mxu0 0
      %2045 = vmatmul.mubr.bf16.gmra.mrb[0].mxu0 %v2007
      %v2046 = vpop.f32.mrb[0].mxu0
      %v2047 = vadd.f32 0.0, %v2046
      %v2048 = vpop.f32.mrb[0].mxu0
      %v2049 = vpop.f32.mrb[0].mxu0
      %v2050 = vpop.f32.mrb[0].mxu0
      %2051 = vdwg.mxu0
      %v2052 = vsel %vm1102, %v2047, -inf
      %2053 = vmax.xlane.f32.xlu0 %v2052
      %v2054 = vpop.xlane.xlu0 %2053
      %v2055 = vsub.f32 %v2047, %v2054
      %v2056 = vmul.f32 %v2055, 1.442695
      %v2057 = vpow.pop %v2056
      %v2058 = vsel %vm1102, %v2057, 0.0
      %2059 = vadd.xlane.f32.xlu0 %v2058
      %v2060 = vpop.xlane.xlu0 %2059
      %v2061 = vrcp.pop %v2060
      %v2062 = vmul.f32 %v2057, %v2061
      %v2063 = vpack.c.bf16 %v2062, %v2062
      %2065 = vrot.lane.b32.xlu0 %v1999, 120
      %v2066 = vpop.permute.xlu0 %2065
      %v2068 = vsel %vm1102, %v2063, 0
      %v2071 = vsel %vm1164, %v2066, 0
      %2073 = vmatprep.subr.bf16.mxu0 0
      %2074 = vmatpush1.bf16.msra.mxu0 %v2071
      %2075 = vmatprep.subr.bf16.mxu0 0
      %2076 = vmatpush1.bf16.msra.mxu0 0
      %2077 = vmatprep.subr.bf16.mxu0 0
      %2078 = vmatpush1.bf16.msra.mxu0 0
      %2079 = vmatprep.subr.bf16.mxu0 0
      %2080 = vmatpush1.bf16.msra.mxu0 0
      %2081 = vmatprep.subr.bf16.mxu0 0
      %2082 = vmatpush1.bf16.msra.mxu0 0
      %2083 = vmatprep.subr.bf16.mxu0 0
      %2084 = vmatpush1.bf16.msra.mxu0 0
      %2085 = vmatprep.subr.bf16.mxu0 0
      %2086 = vmatpush1.bf16.msra.mxu0 0
      %2087 = vmatprep.subr.bf16.mxu0 0
      %2088 = vmatpush1.bf16.msra.mxu0 0
      %2089 = vmatprep.subr.bf16.mxu0 0
      %2090 = vmatpush1.bf16.msra.mxu0 0
      %2091 = vmatprep.subr.bf16.mxu0 0
      %2092 = vmatpush1.bf16.msra.mxu0 0
      %2093 = vmatprep.subr.bf16.mxu0 0
      %2094 = vmatpush1.bf16.msra.mxu0 0
      %2095 = vmatprep.subr.bf16.mxu0 0
      %2096 = vmatpush1.bf16.msra.mxu0 0
      %2097 = vmatprep.subr.bf16.mxu0 0
      %2098 = vmatpush1.bf16.msra.mxu0 0
      %2099 = vmatprep.subr.bf16.mxu0 0
      %2100 = vmatpush1.bf16.msra.mxu0 0
      %2101 = vmatprep.subr.bf16.mxu0 0
      %2102 = vmatpush1.bf16.msra.mxu0 0
      %2103 = vmatprep.subr.bf16.mxu0 0
      %2104 = vmatpush1.bf16.msra.mxu0 0
      %2105 = vmatprep.mubr.bf16.mxu0 0
      %2106 = vmatmul.mubr.bf16.gmra.mrb[0].mxu0 %v2068
      %v2107 = vpop.f32.mrb[0].mxu0
      %v2108 = vadd.f32 0.0, %v2107
      %v2109 = vpop.f32.mrb[0].mxu0
      %v2110 = vpop.f32.mrb[0].mxu0
      %v2111 = vpop.f32.mrb[0].mxu0
      %2112 = vdwg.mxu0
      %2114 = vrot.lane.b32.xlu0 %v2108, 8
      %v2115 = vpop.permute.xlu0 %2114
      %2117 = vst.msk [vmem:[#allocation7] sm:$0xff] %vm1332, %v2115
      %v2118 = vld [vmem:[#allocation2] sm:$0xff]
      %v2119 = vpack.c.bf16 %v2118, %v2118
      %v2120 = vld [vmem:[#allocation5] sm:$0xff]
      %v2121 = vpack.c.bf16 %v2120, %v2120
      %v2122 = vld [vmem:[#allocation6] sm:$0xff]
      %v2123 = vpack.c.bf16 %v2122, %v2122
      %2125 = vrot.lane.b32.xlu0 %v2119, 112
      %v2126 = vpop.permute.xlu0 %2125
      %2128 = vrot.lane.b32.xlu0 %v2121, 112
      %v2129 = vpop.permute.xlu0 %2128
      %v2131 = vsel %vm1102, %v2126, 0
      %v2134 = vsel %vm1102, %v2129, 0
      %2136 = vmatprep.subr.bf16.mxu0 0
      %2137 = vmatpush1.bf16.xpose.msra.mxu0 %v2134
      %2138 = vmatprep.subr.bf16.mxu0 0
      %2139 = vmatpush1.bf16.xpose.msra.mxu0 0
      %2140 = vmatprep.subr.bf16.mxu0 0
      %2141 = vmatpush1.bf16.xpose.msra.mxu0 0
      %2142 = vmatprep.subr.bf16.mxu0 0
      %2143 = vmatpush1.bf16.xpose.msra.mxu0 0
      %2144 = vmatprep.subr.bf16.mxu0 0
      %2145 = vmatpush1.bf16.xpose.msra.mxu0 0
      %2146 = vmatprep.subr.bf16.mxu0 0
      %2147 = vmatpush1.bf16.xpose.msra.mxu0 0
      %2148 = vmatprep.subr.bf16.mxu0 0
      %2149 = vmatpush1.bf16.xpose.msra.mxu0 0
      %2150 = vmatprep.subr.bf16.mxu0 0
      %2151 = vmatpush1.bf16.xpose.msra.mxu0 0
      %2152 = vmatprep.subr.bf16.mxu0 0
      %2153 = vmatpush1.bf16.xpose.msra.mxu0 0
      %2154 = vmatprep.subr.bf16.mxu0 0
      %2155 = vmatpush1.bf16.xpose.msra.mxu0 0
      %2156 = vmatprep.subr.bf16.mxu0 0
      %2157 = vmatpush1.bf16.xpose.msra.mxu0 0
      %2158 = vmatprep.subr.bf16.mxu0 0
      %2159 = vmatpush1.bf16.xpose.msra.mxu0 0
      %2160 = vmatprep.subr.bf16.mxu0 0
      %2161 = vmatpush1.bf16.xpose.msra.mxu0 0
      %2162 = vmatprep.subr.bf16.mxu0 0
      %2163 = vmatpush1.bf16.xpose.msra.mxu0 0
      %2164 = vmatprep.subr.bf16.mxu0 0
      %2165 = vmatpush1.bf16.xpose.msra.mxu0 0
      %2166 = vmatprep.subr.bf16.mxu0 0
      %2167 = vmatpush1.bf16.xpose.msra.mxu0 0
      %2168 = vmatprep.mubr.bf16.mxu0 0
      %2169 = vmatmul.mubr.bf16.gmra.mrb[0].mxu0 %v2131
      %v2170 = vpop.f32.mrb[0].mxu0
      %v2171 = vadd.f32 0.0, %v2170
      %v2172 = vpop.f32.mrb[0].mxu0
      %v2173 = vpop.f32.mrb[0].mxu0
      %v2174 = vpop.f32.mrb[0].mxu0
      %2175 = vdwg.mxu0
      %v2176 = vsel %vm1102, %v2171, -inf
      %2177 = vmax.xlane.f32.xlu0 %v2176
      %v2178 = vpop.xlane.xlu0 %2177
      %v2179 = vsub.f32 %v2171, %v2178
      %v2180 = vmul.f32 %v2179, 1.442695
      %v2181 = vpow.pop %v2180
      %v2182 = vsel %vm1102, %v2181, 0.0
      %2183 = vadd.xlane.f32.xlu0 %v2182
      %v2184 = vpop.xlane.xlu0 %2183
      %v2185 = vrcp.pop %v2184
      %v2186 = vmul.f32 %v2181, %v2185
      %v2187 = vpack.c.bf16 %v2186, %v2186
      %2189 = vrot.lane.b32.xlu0 %v2123, 112
      %v2190 = vpop.permute.xlu0 %2189
      %v2192 = vsel %vm1102, %v2187, 0
      %v2195 = vsel %vm1164, %v2190, 0
      %2197 = vmatprep.subr.bf16.mxu0 0
      %2198 = vmatpush1.bf16.msra.mxu0 %v2195
      %2199 = vmatprep.subr.bf16.mxu0 0
      %2200 = vmatpush1.bf16.msra.mxu0 0
      %2201 = vmatprep.subr.bf16.mxu0 0
      %2202 = vmatpush1.bf16.msra.mxu0 0
      %2203 = vmatprep.subr.bf16.mxu0 0
      %2204 = vmatpush1.bf16.msra.mxu0 0
      %2205 = vmatprep.subr.bf16.mxu0 0
      %2206 = vmatpush1.bf16.msra.mxu0 0
      %2207 = vmatprep.subr.bf16.mxu0 0
      %2208 = vmatpush1.bf16.msra.mxu0 0
      %2209 = vmatprep.subr.bf16.mxu0 0
      %2210 = vmatpush1.bf16.msra.mxu0 0
      %2211 = vmatprep.subr.bf16.mxu0 0
      %2212 = vmatpush1.bf16.msra.mxu0 0
      %2213 = vmatprep.subr.bf16.mxu0 0
      %2214 = vmatpush1.bf16.msra.mxu0 0
      %2215 = vmatprep.subr.bf16.mxu0 0
      %2216 = vmatpush1.bf16.msra.mxu0 0
      %2217 = vmatprep.subr.bf16.mxu0 0
      %2218 = vmatpush1.bf16.msra.mxu0 0
      %2219 = vmatprep.subr.bf16.mxu0 0
      %2220 = vmatpush1.bf16.msra.mxu0 0
      %2221 = vmatprep.subr.bf16.mxu0 0
      %2222 = vmatpush1.bf16.msra.mxu0 0
      %2223 = vmatprep.subr.bf16.mxu0 0
      %2224 = vmatpush1.bf16.msra.mxu0 0
      %2225 = vmatprep.subr.bf16.mxu0 0
      %2226 = vmatpush1.bf16.msra.mxu0 0
      %2227 = vmatprep.subr.bf16.mxu0 0
      %2228 = vmatpush1.bf16.msra.mxu0 0
      %2229 = vmatprep.mubr.bf16.mxu0 0
      %2230 = vmatmul.mubr.bf16.gmra.mrb[0].mxu0 %v2192
      %v2231 = vpop.f32.mrb[0].mxu0
      %v2232 = vadd.f32 0.0, %v2231
      %v2233 = vpop.f32.mrb[0].mxu0
      %v2234 = vpop.f32.mrb[0].mxu0
      %v2235 = vpop.f32.mrb[0].mxu0
      %2236 = vdwg.mxu0
      %2238 = vrot.lane.b32.xlu0 %v2232, 16
      %v2239 = vpop.permute.xlu0 %2238
      %2241 = vst.msk [vmem:[#allocation7] sm:$0xff] %vm1457, %v2239
      %v2242 = vld [vmem:[#allocation2] sm:$0xff]
      %v2243 = vpack.c.bf16 %v2242, %v2242
      %v2244 = vld [vmem:[#allocation5] sm:$0xff]
      %v2245 = vpack.c.bf16 %v2244, %v2244
      %v2246 = vld [vmem:[#allocation6] sm:$0xff]
      %v2247 = vpack.c.bf16 %v2246, %v2246
      %2249 = vrot.lane.b32.xlu0 %v2243, 104
      %v2250 = vpop.permute.xlu0 %2249
      %2252 = vrot.lane.b32.xlu0 %v2245, 104
      %v2253 = vpop.permute.xlu0 %2252
      %v2255 = vsel %vm1102, %v2250, 0
      %v2258 = vsel %vm1102, %v2253, 0
      %2260 = vmatprep.subr.bf16.mxu0 0
      %2261 = vmatpush1.bf16.xpose.msra.mxu0 %v2258
      %2262 = vmatprep.subr.bf16.mxu0 0
      %2263 = vmatpush1.bf16.xpose.msra.mxu0 0
      %2264 = vmatprep.subr.bf16.mxu0 0
      %2265 = vmatpush1.bf16.xpose.msra.mxu0 0
      %2266 = vmatprep.subr.bf16.mxu0 0
      %2267 = vmatpush1.bf16.xpose.msra.mxu0 0
      %2268 = vmatprep.subr.bf16.mxu0 0
      %2269 = vmatpush1.bf16.xpose.msra.mxu0 0
      %2270 = vmatprep.subr.bf16.mxu0 0
      %2271 = vmatpush1.bf16.xpose.msra.mxu0 0
      %2272 = vmatprep.subr.bf16.mxu0 0
      %2273 = vmatpush1.bf16.xpose.msra.mxu0 0
      %2274 = vmatprep.subr.bf16.mxu0 0
      %2275 = vmatpush1.bf16.xpose.msra.mxu0 0
      %2276 = vmatprep.subr.bf16.mxu0 0
      %2277 = vmatpush1.bf16.xpose.msra.mxu0 0
      %2278 = vmatprep.subr.bf16.mxu0 0
      %2279 = vmatpush1.bf16.xpose.msra.mxu0 0
      %2280 = vmatprep.subr.bf16.mxu0 0
      %2281 = vmatpush1.bf16.xpose.msra.mxu0 0
      %2282 = vmatprep.subr.bf16.mxu0 0
      %2283 = vmatpush1.bf16.xpose.msra.mxu0 0
      %2284 = vmatprep.subr.bf16.mxu0 0
      %2285 = vmatpush1.bf16.xpose.msra.mxu0 0
      %2286 = vmatprep.subr.bf16.mxu0 0
      %2287 = vmatpush1.bf16.xpose.msra.mxu0 0
      %2288 = vmatprep.subr.bf16.mxu0 0
      %2289 = vmatpush1.bf16.xpose.msra.mxu0 0
      %2290 = vmatprep.subr.bf16.mxu0 0
      %2291 = vmatpush1.bf16.xpose.msra.mxu0 0
      %2292 = vmatprep.mubr.bf16.mxu0 0
      %2293 = vmatmul.mubr.bf16.gmra.mrb[0].mxu0 %v2255
      %v2294 = vpop.f32.mrb[0].mxu0
      %v2295 = vadd.f32 0.0, %v2294
      %v2296 = vpop.f32.mrb[0].mxu0
      %v2297 = vpop.f32.mrb[0].mxu0
      %v2298 = vpop.f32.mrb[0].mxu0
      %2299 = vdwg.mxu0
      %v2300 = vsel %vm1102, %v2295, -inf
      %2301 = vmax.xlane.f32.xlu0 %v2300
      %v2302 = vpop.xlane.xlu0 %2301
      %v2303 = vsub.f32 %v2295, %v2302
      %v2304 = vmul.f32 %v2303, 1.442695
      %v2305 = vpow.pop %v2304
      %v2306 = vsel %vm1102, %v2305, 0.0
      %2307 = vadd.xlane.f32.xlu0 %v2306
      %v2308 = vpop.xlane.xlu0 %2307
      %v2309 = vrcp.pop %v2308
      %v2310 = vmul.f32 %v2305, %v2309
      %v2311 = vpack.c.bf16 %v2310, %v2310
      %2313 = vrot.lane.b32.xlu0 %v2247, 104
      %v2314 = vpop.permute.xlu0 %2313
      %v2316 = vsel %vm1102, %v2311, 0
      %v2319 = vsel %vm1164, %v2314, 0
      %2321 = vmatprep.subr.bf16.mxu0 0
      %2322 = vmatpush1.bf16.msra.mxu0 %v2319
      %2323 = vmatprep.subr.bf16.mxu0 0
      %2324 = vmatpush1.bf16.msra.mxu0 0
      %2325 = vmatprep.subr.bf16.mxu0 0
      %2326 = vmatpush1.bf16.msra.mxu0 0
      %2327 = vmatprep.subr.bf16.mxu0 0
      %2328 = vmatpush1.bf16.msra.mxu0 0
      %2329 = vmatprep.subr.bf16.mxu0 0
      %2330 = vmatpush1.bf16.msra.mxu0 0
      %2331 = vmatprep.subr.bf16.mxu0 0
      %2332 = vmatpush1.bf16.msra.mxu0 0
      %2333 = vmatprep.subr.bf16.mxu0 0
      %2334 = vmatpush1.bf16.msra.mxu0 0
      %2335 = vmatprep.subr.bf16.mxu0 0
      %2336 = vmatpush1.bf16.msra.mxu0 0
      %2337 = vmatprep.subr.bf16.mxu0 0
      %2338 = vmatpush1.bf16.msra.mxu0 0
      %2339 = vmatprep.subr.bf16.mxu0 0
      %2340 = vmatpush1.bf16.msra.mxu0 0
      %2341 = vmatprep.subr.bf16.mxu0 0
      %2342 = vmatpush1.bf16.msra.mxu0 0
      %2343 = vmatprep.subr.bf16.mxu0 0
      %2344 = vmatpush1.bf16.msra.mxu0 0
      %2345 = vmatprep.subr.bf16.mxu0 0
      %2346 = vmatpush1.bf16.msra.mxu0 0
      %2347 = vmatprep.subr.bf16.mxu0 0
      %2348 = vmatpush1.bf16.msra.mxu0 0
      %2349 = vmatprep.subr.bf16.mxu0 0
      %2350 = vmatpush1.bf16.msra.mxu0 0
      %2351 = vmatprep.subr.bf16.mxu0 0
      %2352 = vmatpush1.bf16.msra.mxu0 0
      %2353 = vmatprep.mubr.bf16.mxu0 0
      %2354 = vmatmul.mubr.bf16.gmra.mrb[0].mxu0 %v2316
      %v2355 = vpop.f32.mrb[0].mxu0
      %v2356 = vadd.f32 0.0, %v2355
      %v2357 = vpop.f32.mrb[0].mxu0
      %v2358 = vpop.f32.mrb[0].mxu0
      %v2359 = vpop.f32.mrb[0].mxu0
      %2360 = vdwg.mxu0
      %2362 = vrot.lane.b32.xlu0 %v2356, 24
      %v2363 = vpop.permute.xlu0 %2362
      %2365 = vst.msk [vmem:[#allocation7] sm:$0xff] %vm1582, %v2363
      %v2366 = vld [vmem:[#allocation7] sm:$0xff]
      %v2367 = vpack.c.bf16 %v2366, %v2366
      %v2368 = vld [vmem:[%s20] sm:$0xf]
      %v2369 = vld [vmem:[%s20 + $0x4] sm:$0xf]
      %v2370 = vld [vmem:[%s20 + $0x8] sm:$0xf]
      %v2371 = vld [vmem:[%s20 + $0xc] sm:$0xf]
      %v2373 = vlaneseq
      %v2374 = vshrl.u32 %v2373, 7
      %v2375 = vsub.s32 0, %v2374
      %v2376 = vrot.slane %v1684, %v2375
      %v2382 = vunpack.c.l.b16 %v2368
      %v2383 = vunpack.c.l.b16 %v2369
      %v2384 = vunpack.c.l.b16 %v2370
      %v2385 = vunpack.c.l.b16 %v2371
      %v2386 = vpack.c.b16 %v2383, %v2382
      %v2387 = vpack.c.b16 %v2385, %v2384
      %v2391 = vsel %vm863, %v2367, 0
      %2393 = vmatprep.subr.bf16.mxu0 0
      %2394 = vmatpush1.bf16.msra.mxu0 %v2386
      %2395 = vmatprep.subr.bf16.mxu0 0
      %2396 = vmatpush1.bf16.msra.mxu0 %v2387
      %2397 = vmatprep.subr.bf16.mxu0 0
      %2398 = vmatpush1.bf16.msra.mxu0 0
      %2399 = vmatprep.subr.bf16.mxu0 0
      %2400 = vmatpush1.bf16.msra.mxu0 0
      %2401 = vmatprep.subr.bf16.mxu0 0
      %2402 = vmatpush1.bf16.msra.mxu0 0
      %2403 = vmatprep.subr.bf16.mxu0 0
      %2404 = vmatpush1.bf16.msra.mxu0 0
      %2405 = vmatprep.subr.bf16.mxu0 0
      %2406 = vmatpush1.bf16.msra.mxu0 0
      %2407 = vmatprep.subr.bf16.mxu0 0
      %2408 = vmatpush1.bf16.msra.mxu0 0
      %2409 = vmatprep.subr.bf16.mxu0 0
      %2410 = vmatpush1.bf16.msra.mxu0 0
      %2411 = vmatprep.subr.bf16.mxu0 0
      %2412 = vmatpush1.bf16.msra.mxu0 0
      %2413 = vmatprep.subr.bf16.mxu0 0
      %2414 = vmatpush1.bf16.msra.mxu0 0
      %2415 = vmatprep.subr.bf16.mxu0 0
      %2416 = vmatpush1.bf16.msra.mxu0 0
      %2417 = vmatprep.subr.bf16.mxu0 0
      %2418 = vmatpush1.bf16.msra.mxu0 0
      %2419 = vmatprep.subr.bf16.mxu0 0
      %2420 = vmatpush1.bf16.msra.mxu0 0
      %2421 = vmatprep.subr.bf16.mxu0 0
      %2422 = vmatpush1.bf16.msra.mxu0 0
      %2423 = vmatprep.subr.bf16.mxu0 0
      %2424 = vmatpush1.bf16.msra.mxu0 0
      %2425 = vmatprep.mubr.bf16.mxu0 0
      %2426 = vmatmul.mubr.bf16.gmra.mrb[0].mxu0 %v2391
      %v2427 = vpop.f32.mrb[0].mxu0
      %v2428 = vadd.f32 %v2376, %v2427
      %v2429 = vpop.f32.mrb[0].mxu0
      %v2430 = vpop.f32.mrb[0].mxu0
      %v2431 = vpop.f32.mrb[0].mxu0
      %2432 = vdwg.mxu0
      %v2433 = vadd.f32 %v1651, %v2428
      %v2434 = vld [vmem:[%s22] sm:$0x1]
      %v2435 = vld [vmem:[%s23] sm:$0x1]
      %v2436 = vsel %vm863, %v2433, 0.0
      %2437 = vadd.xlane.f32.xlu0 %v2436
      %v2438 = vpop.xlane.xlu0 %2437
      %v2439 = vmul.f32 %v2438, %v867
      %v2440 = vsub.f32 %v2433, %v2439
      %v2441 = vmul.f32 %v2440, %v2440
      %v2442 = vsel %vm863, %v2441, 0.0
      %2443 = vadd.xlane.f32.xlu0 %v2442
      %v2444 = vpop.xlane.xlu0 %2443
      %v2445 = vmul.f32 %v2444, %v867
      %v2446 = vadd.f32 %v2445, 1e-05
      %v2447 = vrsqrt.pop %v2446
      %v2448 = vmul.f32 %v2440, %v2447
      %v2450 = vlaneseq
      %v2451 = vshrl.u32 %v2450, 7
      %v2452 = vsub.s32 0, %v2451
      %v2453 = vrot.slane %v2434, %v2452
      %v2455 = vmul.f32 %v2448, %v2453
      %v2457 = vlaneseq
      %v2458 = vshrl.u32 %v2457, 7
      %v2459 = vsub.s32 0, %v2458
      %v2460 = vrot.slane %v2435, %v2459
      %v2462 = vadd.f32 %v2455, %v2460
      %v2463 = vpack.c.bf16 %v2462, %v2462
      %v2464 = vld [vmem:[%s24] sm:$0xf]
      %v2465 = vld [vmem:[%s24 + $0x4] sm:$0xf]
      %v2466 = vld [vmem:[%s24 + $0x8] sm:$0xf]
      %v2467 = vld [vmem:[%s24 + $0xc] sm:$0xf]
      %v2468 = vld [vmem:[%s25] sm:$0x1]
      %v2470 = vlaneseq
      %v2471 = vshrl.u32 %v2470, 7
      %v2472 = vsub.s32 0, %v2471
      %v2473 = vrot.slane %v2468, %v2472
      %v2479 = vunpack.c.l.b16 %v2464
      %v2480 = vunpack.c.l.b16 %v2465
      %v2481 = vunpack.c.l.b16 %v2466
      %v2482 = vunpack.c.l.b16 %v2467
      %v2483 = vpack.c.b16 %v2480, %v2479
      %v2484 = vpack.c.b16 %v2482, %v2481
      %v2488 = vsel %vm863, %v2463, 0
      %2490 = vmatprep.subr.bf16.mxu0 0
      %2491 = vmatpush1.bf16.msra.mxu0 %v2483
      %2492 = vmatprep.subr.bf16.mxu0 0
      %2493 = vmatpush1.bf16.msra.mxu0 %v2484
      %2494 = vmatprep.subr.bf16.mxu0 0
      %2495 = vmatpush1.bf16.msra.mxu0 0
      %2496 = vmatprep.subr.bf16.mxu0 0
      %2497 = vmatpush1.bf16.msra.mxu0 0
      %2498 = vmatprep.subr.bf16.mxu0 0
      %2499 = vmatpush1.bf16.msra.mxu0 0
      %2500 = vmatprep.subr.bf16.mxu0 0
      %2501 = vmatpush1.bf16.msra.mxu0 0
      %2502 = vmatprep.subr.bf16.mxu0 0
      %2503 = vmatpush1.bf16.msra.mxu0 0
      %2504 = vmatprep.subr.bf16.mxu0 0
      %2505 = vmatpush1.bf16.msra.mxu0 0
      %2506 = vmatprep.subr.bf16.mxu0 0
      %2507 = vmatpush1.bf16.msra.mxu0 0
      %2508 = vmatprep.subr.bf16.mxu0 0
      %2509 = vmatpush1.bf16.msra.mxu0 0
      %2510 = vmatprep.subr.bf16.mxu0 0
      %2511 = vmatpush1.bf16.msra.mxu0 0
      %2512 = vmatprep.subr.bf16.mxu0 0
      %2513 = vmatpush1.bf16.msra.mxu0 0
      %2514 = vmatprep.subr.bf16.mxu0 0
      %2515 = vmatpush1.bf16.msra.mxu0 0
      %2516 = vmatprep.subr.bf16.mxu0 0
      %2517 = vmatpush1.bf16.msra.mxu0 0
      %2518 = vmatprep.subr.bf16.mxu0 0
      %2519 = vmatpush1.bf16.msra.mxu0 0
      %2520 = vmatprep.subr.bf16.mxu0 0
      %2521 = vmatpush1.bf16.msra.mxu0 0
      %2522 = vmatprep.mubr.bf16.mxu0 0
      %2523 = vmatmul.mubr.bf16.gmra.mrb[0].mxu0 %v2488
      %v2524 = vpop.f32.mrb[0].mxu0
      %v2525 = vadd.f32 %v2473, %v2524
      %v2526 = vpop.f32.mrb[0].mxu0
      %v2527 = vpop.f32.mrb[0].mxu0
      %v2528 = vpop.f32.mrb[0].mxu0
      %2529 = vdwg.mxu0
      %v2530 = vmul.f32 %v2525, 1.702
      %v2531 = vxor.u32 %v2530, 2147483648
      %v2532 = vmul.f32 %v2531, 1.442695
      %v2533 = vpow.pop %v2532
      %v2534 = vadd.f32 %v2533, 1.0
      %v2535 = vrcp.pop %v2534
      %v2536 = vmul.f32 1.0, %v2535
      %v2537 = vmul.f32 %v2525, %v2536
      %v2538 = vpack.c.bf16 %v2537, %v2537
      %v2539 = vld [vmem:[%s26] sm:$0xf]
      %v2540 = vld [vmem:[%s26 + $0x4] sm:$0xf]
      %v2541 = vld [vmem:[%s26 + $0x8] sm:$0xf]
      %v2542 = vld [vmem:[%s26 + $0xc] sm:$0xf]
      %v2543 = vld [vmem:[%s26 + $0x10] sm:$0xf]
      %v2544 = vld [vmem:[%s26 + $0x14] sm:$0xf]
      %v2545 = vld [vmem:[%s26 + $0x18] sm:$0xf]
      %v2546 = vld [vmem:[%s26 + $0x1c] sm:$0xf]
      %v2547 = vld [vmem:[%s26 + $0x20] sm:$0xf]
      %v2548 = vld [vmem:[%s26 + $0x24] sm:$0xf]
      %v2549 = vld [vmem:[%s26 + $0x28] sm:$0xf]
      %v2550 = vld [vmem:[%s26 + $0x2c] sm:$0xf]
      %v2551 = vld [vmem:[%s26 + $0x30] sm:$0xf]
      %v2552 = vld [vmem:[%s26 + $0x34] sm:$0xf]
      %v2553 = vld [vmem:[%s26 + $0x38] sm:$0xf]
      %v2554 = vld [vmem:[%s26 + $0x3c] sm:$0xf]
      %v2571 = vunpack.c.l.b16 %v2539
      %v2572 = vunpack.c.l.b16 %v2540
      %v2573 = vunpack.c.l.b16 %v2541
      %v2574 = vunpack.c.l.b16 %v2542
      %v2575 = vunpack.c.l.b16 %v2543
      %v2576 = vunpack.c.l.b16 %v2544
      %v2577 = vunpack.c.l.b16 %v2545
      %v2578 = vunpack.c.l.b16 %v2546
      %v2579 = vunpack.c.l.b16 %v2547
      %v2580 = vunpack.c.l.b16 %v2548
      %v2581 = vunpack.c.l.b16 %v2549
      %v2582 = vunpack.c.l.b16 %v2550
      %v2583 = vunpack.c.l.b16 %v2551
      %v2584 = vunpack.c.l.b16 %v2552
      %v2585 = vunpack.c.l.b16 %v2553
      %v2586 = vunpack.c.l.b16 %v2554
      %v2587 = vpack.c.b16 %v2572, %v2571
      %v2588 = vpack.c.b16 %v2574, %v2573
      %v2589 = vpack.c.b16 %v2576, %v2575
      %v2590 = vpack.c.b16 %v2578, %v2577
      %v2591 = vpack.c.b16 %v2580, %v2579
      %v2592 = vpack.c.b16 %v2582, %v2581
      %v2593 = vpack.c.b16 %v2584, %v2583
      %v2594 = vpack.c.b16 %v2586, %v2585
      %2603 = vmatprep.subr.bf16.mxu0 0
      %2604 = vmatpush1.bf16.msra.mxu0 %v2587
      %2605 = vmatprep.subr.bf16.mxu0 0
      %2606 = vmatpush1.bf16.msra.mxu0 %v2588
      %2607 = vmatprep.subr.bf16.mxu0 0
      %2608 = vmatpush1.bf16.msra.mxu0 %v2589
      %2609 = vmatprep.subr.bf16.mxu0 0
      %2610 = vmatpush1.bf16.msra.mxu0 %v2590
      %2611 = vmatprep.subr.bf16.mxu0 0
      %2612 = vmatpush1.bf16.msra.mxu0 %v2591
      %2613 = vmatprep.subr.bf16.mxu0 0
      %2614 = vmatpush1.bf16.msra.mxu0 %v2592
      %2615 = vmatprep.subr.bf16.mxu0 0
      %2616 = vmatpush1.bf16.msra.mxu0 %v2593
      %2617 = vmatprep.subr.bf16.mxu0 0
      %2618 = vmatpush1.bf16.msra.mxu0 %v2594
      %2619 = vmatprep.subr.bf16.mxu0 0
      %2620 = vmatpush1.bf16.msra.mxu0 0
      %2621 = vmatprep.subr.bf16.mxu0 0
      %2622 = vmatpush1.bf16.msra.mxu0 0
      %2623 = vmatprep.subr.bf16.mxu0 0
      %2624 = vmatpush1.bf16.msra.mxu0 0
      %2625 = vmatprep.subr.bf16.mxu0 0
      %2626 = vmatpush1.bf16.msra.mxu0 0
      %2627 = vmatprep.subr.bf16.mxu0 0
      %2628 = vmatpush1.bf16.msra.mxu0 0
      %2629 = vmatprep.subr.bf16.mxu0 0
      %2630 = vmatpush1.bf16.msra.mxu0 0
      %2631 = vmatprep.subr.bf16.mxu0 0
      %2632 = vmatpush1.bf16.msra.mxu0 0
      %2633 = vmatprep.subr.bf16.mxu0 0
      %2634 = vmatpush1.bf16.msra.mxu0 0
      %2635 = vmatprep.mubr.bf16.mxu0 0
      %2636 = vmatmul.mubr.bf16.gmra.mrb[0].mxu0 %v2538
      %v2637 = vpop.f32.mrb[0].mxu0
      %v2638 = vadd.f32 0.0, %v2637
      %v2639 = vpop.f32.mrb[0].mxu0
      %v2640 = vpop.f32.mrb[0].mxu0
      %v2641 = vpop.f32.mrb[0].mxu0
      %2642 = vdwg.mxu0
      %v2643 = vadd.f32 %v2433, %v2638
      %v2644 = vld [vmem:[%s27] sm:$0x1]
      %v2646 = vlaneseq
      %v2647 = vshrl.u32 %v2646, 7
      %v2648 = vsub.s32 0, %v2647
      %v2649 = vrot.slane %v2644, %v2648
      %v2651 = vadd.f32 %v2643, %v2649
      %2652 = vst.msk [vmem:[%s857] sm:$0xff] %vm863, %v2651
      %p2653 = scmp.lt.s32.totalorder %s39, 1
      %s2654 = scalar_select %p2653, %s39, 1
      %s2655 = smul.addr %s2654, 8
      %s2656 = scalar_lea.vmem %s28, %s2655
      // Predicated region
      $region133: #{bart_decoder_forward.3} parent=131 // pred_check
        %p2657 = pneg %p655
      $region134: #{bart_decoder_forward.3} parent=131 // pred_check_branch
        %2659 = sbr.rel (%p2657) target = $region136
      $region135: #{bart_decoder_forward.3} parent=131 // pred_region
        _
      $region136: #{bart_decoder_forward.3} parent=131 // pred_fallthru
        _
    $region132: #{bart_decoder_forward.3} parent=5 // pred_fallthru
      _
    %p2660 = scmp.le.s32.totalorder 2, %s34
    // Predicated region
    $region137: #{bart_decoder_forward.3} parent=5 // pred_check
      %p2661 = pneg %p2660
    $region138: #{bart_decoder_forward.3} parent=5 // pred_check_branch
      %2663 = sbr.rel (%p2661) target = $region140
    $region139: #{bart_decoder_forward.3} parent=5 // pred_region
      %s2664 = ssub.s32 %s34, 2
      // Predicated region
      $region141: #{bart_decoder_forward.3} parent=139 // pred_check
        %p2665 = pneg %p661
      $region142: #{bart_decoder_forward.3} parent=139 // pred_check_branch
        %2667 = sbr.rel (%p2665) target = $region144
      $region143: #{bart_decoder_forward.3} parent=139 // pred_region
        %p2668 = scmp.lt.s32.totalorder %s40, 1
        %s2669 = scalar_select %p2668, %s40, 1
        %s2670 = smul.addr %s2669, 8
        %s2671 = scalar_lea.vmem %s28, %s2670
      $region144: #{bart_decoder_forward.3} parent=139 // pred_fallthru
        _
    $region140: #{bart_decoder_forward.3} parent=5 // pred_fallthru
      _
  $region6: #{bart_decoder_forward.3} parent=0 // loop_footer
    %s38 = sadd.s32 1, %s34
  $region7: #{bart_decoder_forward.3} parent=0 // loop_footer_branch
    %33 = sbr.rel target = $region3
  $region8: #{bart_decoder_forward.3} parent=0 // loop_exit
    _

</llo_original>
